<compile_context>
chip_gen: v6e
topology: v6e:2x2x1
jax: 0.10.0
libtpu: 0.0.40
codegen_flags: <defaults>
</compile_context>

<pallas_src>
import functools

import numpy as np
import jax
import jax.numpy as jnp
from jax.experimental import pallas as pl
from jax.experimental.pallas import tpu as pltpu


# ------------------------------------------------------------------ helpers --

_TM = 128                       # M tile for the large encoder GEMMs
_VMEM_LIMIT = 32 * 1024 * 1024  # fits v5e/v6e (128 MiB) and v7x (64 MiB phys)


def _round_up(v, m):
    return ((v + m - 1) // m) * m


def _tile_m(M):
    """Adaptive M tile: no 128-padding of tiny head GEMMs, TM=128 otherwise."""
    if M <= _TM:
        Mp = _round_up(M, 8)
        return Mp, Mp
    Mp = _round_up(M, _TM)
    return Mp, _TM


def _apply_act(y, act):
    if act == "silu":
        return y * jax.nn.sigmoid(y)
    if act == "relu":
        return jnp.maximum(y, 0.0)
    return y


# ------------------------------------------------------------ GEMM kernels ---

@functools.lru_cache(maxsize=None)
def _gemm_kernel(act):
    def kernel(x_ref, w_ref, b_ref, o_ref):
        y = jnp.dot(x_ref[...], w_ref[...], preferred_element_type=jnp.float32)
        o_ref[...] = _apply_act(y + b_ref[...], act).astype(o_ref.dtype)
    return kernel


@functools.lru_cache(maxsize=None)
def _gemm2_kernel(act1, act2):
    """Fused act2((act1(x@w1+b1)) @ w2 + b2) — conv GEMM + 1x1-conv epilogue."""
    def kernel(x_ref, w1_ref, b1_ref, w2_ref, b2_ref, o_ref):
        y = jnp.dot(x_ref[...], w1_ref[...], preferred_element_type=jnp.float32)
        y = _apply_act(y + b1_ref[...], act1)
        z = jnp.dot(y.astype(jnp.bfloat16), w2_ref[...],
                    preferred_element_type=jnp.float32)
        o_ref[...] = _apply_act(z + b2_ref[...], act2).astype(o_ref.dtype)
    return kernel


def gemm_bias_act(x, w, b, act, out_dtype=jnp.float32):
    """act(x @ w + b): bf16 MXU inputs, f32 accumulation, tiled over rows."""
    M, K = x.shape
    K2, N = w.shape
    assert K == K2
    Mp, TM = _tile_m(M)
    xb = x.astype(jnp.bfloat16)
    if Mp != M:
        xb = jnp.pad(xb, ((0, Mp - M), (0, 0)))
    cost = pl.CostEstimate(
        flops=int(2 * Mp * K * N),
        transcendentals=int(Mp * N) if act == "silu" else 0,
        bytes_accessed=int(Mp * K * 2 + K * N * 2 + N * 4
                           + Mp * N * jnp.dtype(out_dtype).itemsize))
    out = pl.pallas_call(
        _gemm_kernel(act),
        out_shape=jax.ShapeDtypeStruct((Mp, N), out_dtype),
        grid=(Mp // TM,),
        in_specs=[pl.BlockSpec((TM, K), lambda i: (i, 0)),
                  pl.BlockSpec((K, N), lambda i: (0, 0)),
                  pl.BlockSpec((1, N), lambda i: (0, 0))],
        out_specs=pl.BlockSpec((TM, N), lambda i: (i, 0)),
        compiler_params=pltpu.CompilerParams(
            dimension_semantics=("parallel",), vmem_limit_bytes=_VMEM_LIMIT),
        cost_estimate=cost,
    )(xb, w.astype(jnp.bfloat16), b.reshape(1, N).astype(jnp.float32))
    return out[:M] if Mp != M else out


def gemm2_bias_act(x, w1, b1, act1, w2, b2, act2, out_dtype=jnp.float32):
    """Fused two-GEMM (conv + following 1x1 conv) in one launch."""
    M, K = x.shape
    N1 = w1.shape[1]
    N2 = w2.shape[1]
    Mp, TM = _tile_m(M)
    xb = x.astype(jnp.bfloat16)
    if Mp != M:
        xb = jnp.pad(xb, ((0, Mp - M), (0, 0)))
    cost = pl.CostEstimate(
        flops=int(2 * Mp * (K * N1 + N1 * N2)),
        transcendentals=int(Mp * (N1 + N2)),
        bytes_accessed=int(Mp * K * 2 + K * N1 * 2 + N1 * N2 * 2
                           + (N1 + N2) * 4
                           + Mp * N2 * jnp.dtype(out_dtype).itemsize))
    out = pl.pallas_call(
        _gemm2_kernel(act1, act2),
        out_shape=jax.ShapeDtypeStruct((Mp, N2), out_dtype),
        grid=(Mp // TM,),
        in_specs=[pl.BlockSpec((TM, K), lambda i: (i, 0)),
                  pl.BlockSpec((K, N1), lambda i: (0, 0)),
                  pl.BlockSpec((1, N1), lambda i: (0, 0)),
                  pl.BlockSpec((N1, N2), lambda i: (0, 0)),
                  pl.BlockSpec((1, N2), lambda i: (0, 0))],
        out_specs=pl.BlockSpec((TM, N2), lambda i: (i, 0)),
        compiler_params=pltpu.CompilerParams(
            dimension_semantics=("parallel",), vmem_limit_bytes=_VMEM_LIMIT),
        cost_estimate=cost,
    )(xb, w1.astype(jnp.bfloat16), b1.reshape(1, N1).astype(jnp.float32),
      w2.astype(jnp.bfloat16), b2.reshape(1, N2).astype(jnp.float32))
    return out[:M] if Mp != M else out


# --------------------------------------------------------------- conv glue ---

def im2col(x, kh, kw, stride, dilation):
    """x: (N,H,W,C) bf16, PyTorch-style padding = dilation * (k // 2)."""
    N, H, W, C = x.shape
    ph = dilation * (kh // 2)
    pw = dilation * (kw // 2)
    xp = jnp.pad(x, ((0, 0), (ph, ph), (pw, pw), (0, 0)))
    Ho = (H + 2 * ph - dilation * (kh - 1) - 1) // stride + 1
    Wo = (W + 2 * pw - dilation * (kw - 1) - 1) // stride + 1
    patches = []
    for i in range(kh):
        for j in range(kw):
            patches.append(
                xp[:, i * dilation: i * dilation + (Ho - 1) * stride + 1: stride,
                      j * dilation: j * dilation + (Wo - 1) * stride + 1: stride, :])
    # TODO(synk): for real resolutions, do this tap loop inside the kernel on a
    #             halo'd VMEM tile instead of materializing kh*kw copies in HBM.
    return jnp.concatenate(patches, axis=-1), Ho, Wo  # (N, Ho, Wo, kh*kw*C)


def _fold_bn(p, eps=1e-5):
    scale = p["gamma"] / jnp.sqrt(p["var"] + eps)
    return p["w"] * scale, p["beta"] - p["mean"] * scale


def conv_bn_act(x, p, *, stride=1, dilation=1, act="silu",
                out_dtype=jnp.bfloat16):
    """Conv (no bias) + folded eval-BatchNorm + activation, as one GEMM."""
    w, b = _fold_bn(p)
    kh, kw, cin, cout = w.shape
    patches, Ho, Wo = im2col(x.astype(jnp.bfloat16), kh, kw, stride, dilation)
    Nb = x.shape[0]
    y = gemm_bias_act(patches.reshape(Nb * Ho * Wo, kh * kw * cin),
                      w.reshape(kh * kw * cin, cout), b, act,
                      out_dtype=out_dtype)
    return y.reshape(Nb, Ho, Wo, cout)


def conv_bn_act_conv1x1(x, p_conv, p_1x1, *, stride=1, dilation=1,
                        act1="silu", act2="silu", out_dtype=jnp.bfloat16):
    """ConvBNAct followed by a 1x1 ConvBNAct, fused into one Pallas launch."""
    w1, b1 = _fold_bn(p_conv)
    w2, b2 = _fold_bn(p_1x1)
    kh, kw, cin, c_mid = w1.shape
    c_out = w2.shape[-1]
    patches, Ho, Wo = im2col(x.astype(jnp.bfloat16), kh, kw, stride, dilation)
    Nb = x.shape[0]
    y = gemm2_bias_act(patches.reshape(Nb * Ho * Wo, kh * kw * cin),
                       w1.reshape(kh * kw * cin, c_mid), b1, act1,
                       w2.reshape(c_mid, c_out), b2, act2, out_dtype=out_dtype)
    return y.reshape(Nb, Ho, Wo, c_out)


# ----------------------------------------------- fused DeepLabV3 tail kernel -

def _bilinear_matrix_np(out_size, in_size):
    """F.interpolate(mode='bilinear', align_corners=False) weight matrix."""
    A = np.zeros((out_size, in_size), dtype=np.float32)
    if in_size == 1:
        A[:, 0] = 1.0
        return A
    scale = in_size / out_size
    for d in range(out_size):
        src = max((d + 0.5) * scale - 0.5, 0.0)   # PyTorch clamps negative src
        i0 = min(int(np.floor(src)), in_size - 1)
        i1 = min(i0 + 1, in_size - 1)
        l1 = src - i0
        A[d, i0] += 1.0 - l1
        A[d, i1] += l1
    return A


def _shift_matrices_np(Nb, Hf, Wf, dilation):
    """Per-tap 0/1 shift matrices for a 3x3 conv with zero padding = dilation.

    Row r = n*Hf*Wf + h*Wf + w of (S_t @ X) equals X at spatial offset
    ((t//3 - 1)*d, (t%3 - 1)*d), or zero if out of bounds — exactly im2col.
    """
    HW = Hf * Wf
    s = np.zeros((9, HW, HW), np.float32)
    for t in range(9):
        di = (t // 3 - 1) * dilation
        dj = (t % 3 - 1) * dilation
        for h in range(Hf):
            for w in range(Wf):
                hs, ws = h + di, w + dj
                if 0 <= hs < Hf and 0 <= ws < Wf:
                    s[t, h * Wf + w, hs * Wf + ws] = 1.0
    eye = np.eye(Nb, dtype=np.float32)
    return np.stack([np.kron(eye, s[t]) for t in range(9)], axis=0)  # (9, M, M)


def deeplab_tail_fused(feat, params, H_out, W_out, num_classes, rates=(1, 2, 3)):
    """ASPP (5 branches) + projection + head 3x3 + classifier + bilinear resize
    in ONE Pallas kernel.

    * Atrous/head 3x3 convs use per-tap shift matrices (exact 0/1 selection),
      so no im2col tensor is ever written to HBM for the tail.
    * The pooled branch is an in-kernel per-image mean (no O(M^2) GEMM).
    * The 5*aspp concat, ASPP output and 4x4 logits live only in registers.
    """
    Nb, Hf, Wf, C = feat.shape
    HW = Hf * Wf
    M = Nb * HW
    aspp = params["aspp0"]["w"].shape[-1]
    nc = num_classes
    HWo = H_out * W_out

    # ---- host-side constants (folded BN, tap weights, shift & interp mats) --
    w0, b0 = _fold_bn(params["aspp0"])
    wpool, bpool = _fold_bn(params["aspp_pool"])
    wproj, bproj = _fold_bn(params["proj"])
    whead, bhead = _fold_bn(params["head3x3"])
    wat, bat = [], []
    for name in ("aspp1", "aspp2", "aspp3"):
        w, b = _fold_bn(params[name])
        wat.append(w.reshape(9, C, aspp))
        bat.append(b)
    Wat = jnp.stack(wat, 0).astype(jnp.bfloat16)                  # (3, 9, C, aspp)
    S = jnp.asarray(np.stack([_shift_matrices_np(Nb, Hf, Wf, d) for d in rates],
                             axis=0)).astype(jnp.bfloat16)        # (3, 9, M, M)
    Baspp = jnp.stack([b0] + bat + [bpool, bproj], 0).astype(jnp.float32)

    Ah = _bilinear_matrix_np(H_out, Hf)
    Aw = _bilinear_matrix_np(W_out, Wf)
    Bhw = jnp.asarray(np.kron(Ah, Aw))                            # (HWo, HW) f32
    # TODO(synk): for real feature resolutions keep the resize separable
    #             (Ah @ . @ Aw^T per image) and tile this kernel over M.

    def kernel(x_ref, s_ref, w0_ref, wat_ref, wpool_ref, wproj_ref,
               whead_ref, wcls_ref, baspp_ref, bhead_ref, bcls_ref,
               bhw_ref, o_ref):
        xv = x_ref[...]                                           # (M, C) bf16

        def proj_slice(y_f32, k):     # branch output @ its proj-weight K-slice
            return jnp.dot(y_f32.astype(jnp.bfloat16),
                           wproj_ref[k * aspp:(k + 1) * aspp, :],
                           preferred_element_type=jnp.float32)

        # branch 0: 1x1 Conv-BN-ReLU
        y = jnp.maximum(
            jnp.dot(xv, w0_ref[...], preferred_element_type=jnp.float32)
            + baspp_ref[0:1, :], 0.0)
        acc = proj_slice(y, 0)

        # branches 1..3: 3x3 atrous Conv-BN-ReLU via per-tap shift matmuls
        for k in range(3):
            z = jnp.zeros((M, aspp), jnp.float32)
            for t in range(9):
                xs = jnp.dot(s_ref[k, t], xv,                     # exact shift
                             preferred_element_type=jnp.float32
                             ).astype(jnp.bfloat16)
                z = z + jnp.dot(xs, wat_ref[k, t],
                                preferred_element_type=jnp.float32)
            y = jnp.maximum(z + baspp_ref[k + 1:k + 2, :], 0.0)
            acc = acc + proj_slice(y, k + 1)

        # branch 4: per-image global average pool (in-kernel mean, no GEMM)
        pooled = jnp.concatenate(
            [jnp.mean(xv[n * HW:(n + 1) * HW, :].astype(jnp.float32),
                      axis=0, keepdims=True) for n in range(Nb)], axis=0)
        yp = jnp.maximum(
            jnp.dot(pooled.astype(jnp.bfloat16), wpool_ref[...],
                    preferred_element_type=jnp.float32)
            + baspp_ref[4:5, :], 0.0)                             # (Nb, aspp)
        pp = proj_slice(yp, 4)                                    # (Nb, aspp)
        acc = acc + jnp.concatenate(
            [jnp.broadcast_to(pp[n:n + 1, :], (HW, aspp)) for n in range(Nb)],
            axis=0)

        # 1x1 projection (BN folded) + ReLU  (ASPP output, stays in registers)
        y = jnp.maximum(acc + baspp_ref[5:6, :], 0.0)
        yb = y.astype(jnp.bfloat16)

        # head 3x3 Conv-BN-ReLU (dilation 1 -> reuse the d=1 shift matrices)
        zh = jnp.zeros((M, aspp), jnp.float32)
        for t in range(9):
            ys = jnp.dot(s_ref[0, t], yb,
                         preferred_element_type=jnp.float32).astype(jnp.bfloat16)
            zh = zh + jnp.dot(ys, whead_ref[t],
                              preferred_element_type=jnp.float32)
        h = jnp.maximum(zh + bhead_ref[...], 0.0)

        # 1x1 classifier (logits at feature resolution, registers only)
        logits = jnp.dot(h.astype(jnp.bfloat16), wcls_ref[...],
                         preferred_element_type=jnp.float32) + bcls_ref[...]

        # bilinear upsample per image: (HWo, HW) @ (HW, nc), f32 for accuracy
        for n in range(Nb):
            o_ref[n, :, :] = jnp.dot(bhw_ref[...],
                                     logits[n * HW:(n + 1) * HW, :],
                                     preferred_element_type=jnp.float32)

    def full(*shape):
        return pl.BlockSpec(shape, lambda i, s=shape: (0,) * len(s))

    cost = pl.CostEstimate(
        flops=int(2 * (M * C * aspp
                       + 27 * (M * M * C + M * C * aspp)
                       + 9 * (M * M * aspp + M * aspp * aspp)
                       + 6 * M * aspp * aspp + M * aspp * nc
                       + Nb * HWo * HW * nc)),
        transcendentals=0,
        bytes_accessed=int(M * C * 2 + 27 * M * M * 2 + 28 * C * aspp * 2
                           + 9 * aspp * aspp * 2 + 5 * aspp * aspp * 2
                           + HWo * HW * 4 + Nb * HWo * nc * 4))

    out = pl.pallas_call(
        kernel,
        out_shape=jax.ShapeDtypeStruct((Nb, HWo, nc), jnp.float32),
        grid=(1,),
        in_specs=[full(M, C), full(3, 9, M, M), full(C, aspp),
                  full(3, 9, C, aspp), full(C, aspp), full(5 * aspp, aspp),
                  full(9, aspp, aspp), full(aspp, nc), full(6, aspp),
                  full(1, aspp), full(1, nc), full(HWo, HW)],
        out_specs=full(Nb, HWo, nc),
        compiler_params=pltpu.CompilerParams(
            dimension_semantics=("arbitrary",), vmem_limit_bytes=_VMEM_LIMIT),
        cost_estimate=cost,
    )(feat.reshape(M, C).astype(jnp.bfloat16), S,
      w0.reshape(C, aspp).astype(jnp.bfloat16), Wat,
      wpool.reshape(C, aspp).astype(jnp.bfloat16),
      wproj.reshape(5 * aspp, aspp).astype(jnp.bfloat16),
      whead.reshape(9, aspp, aspp).astype(jnp.bfloat16),
      params["cls_w"].reshape(aspp, nc).astype(jnp.bfloat16),
      Baspp, bhead.reshape(1, aspp).astype(jnp.float32),
      params["cls_b"].reshape(1, nc).astype(jnp.float32), Bhw)
    return out.reshape(Nb, H_out, W_out, nc)


# ------------------------------------------------------------------ params ---

def _make_conv_bn(key, kh, kw, cin, cout):
    k1, k2, k3, k4 = jax.random.split(key, 4)
    return dict(
        w=jax.random.normal(k1, (kh, kw, cin, cout), jnp.float32)
          * (0.1 / np.sqrt(kh * kw * cin)),
        gamma=1.0 + 0.1 * jax.random.normal(k2, (cout,), jnp.float32),
        beta=0.1 * jax.random.normal(k3, (cout,), jnp.float32),
        mean=0.1 * jax.random.normal(k4, (cout,), jnp.float32),
        var=jnp.ones((cout,), jnp.float32),
    )


def init_params(key, num_classes, aspp_ch=32, final_ch=64):
    ks = jax.random.split(key, 14)
    p = {}
    # --- (simplified) EfficientNetV2-S encoder ---
    p["stem"] = _make_conv_bn(ks[0], 3, 3, 3, 16)             # stride 2
    p["b1"]   = _make_conv_bn(ks[1], 3, 3, 16, 24)            # stride 1
    p["b2"]   = _make_conv_bn(ks[2], 3, 3, 24, 32)            # stride 2
    p["b3"]   = _make_conv_bn(ks[3], 3, 3, 32, 48)            # stride 2
    p["enc_head"] = _make_conv_bn(ks[4], 1, 1, 48, final_ch)  # final block channels
    # --- DeepLabV3 head (ASPP) ---
    p["aspp0"] = _make_conv_bn(ks[5], 1, 1, final_ch, aspp_ch)
    p["aspp1"] = _make_conv_bn(ks[6], 3, 3, final_ch, aspp_ch)
    p["aspp2"] = _make_conv_bn(ks[7], 3, 3, final_ch, aspp_ch)
    p["aspp3"] = _make_conv_bn(ks[8], 3, 3, final_ch, aspp_ch)
    p["aspp_pool"] = _make_conv_bn(ks[9], 1, 1, final_ch, aspp_ch)
    p["proj"] = _make_conv_bn(ks[10], 1, 1, 5 * aspp_ch, aspp_ch)
    p["head3x3"] = _make_conv_bn(ks[11], 3, 3, aspp_ch, aspp_ch)
    p["cls_w"] = 0.05 * jax.random.normal(ks[12], (1, 1, aspp_ch, num_classes),
                                          jnp.float32)
    p["cls_b"] = 0.05 * jax.random.normal(ks[13], (num_classes,), jnp.float32)
    return p


# ----------------------------------------------------------------- forward ---

def forward(x_nchw, params, num_classes):
    x = jnp.transpose(x_nchw, (0, 2, 3, 1)).astype(jnp.float32)  # NCHW -> NHWC
    H_in, W_in = x.shape[1], x.shape[2]

    # encoder (Conv-BN-SiLU stack, bf16 stage outputs);
    # final 1x1 fused into b3's GEMM epilogue
    x = conv_bn_act(x, params["stem"], stride=2, act="silu",
                    out_dtype=jnp.bfloat16)
    x = conv_bn_act(x, params["b1"], stride=1, act="silu",
                    out_dtype=jnp.bfloat16)
    x = conv_bn_act(x, params["b2"], stride=2, act="silu",
                    out_dtype=jnp.bfloat16)
    feat = conv_bn_act_conv1x1(x, params["b3"], params["enc_head"], stride=2,
                               act1="silu", act2="silu",
                               out_dtype=jnp.bfloat16)

    # ASPP + projection + head 3x3 + classifier + bilinear resize: ONE kernel
    out = deeplab_tail_fused(feat, params, H_in, W_in, num_classes)

    # NHWC -> NCHW (small final tensor; TODO(synk): fold into kernel epilogue)
    return jnp.transpose(out, (0, 3, 1, 2))


# -------------------------------------------------------------------- main ---

if __name__ == "__main__":
    num_classes = 5
    key = jax.random.PRNGKey(0)
    k_params, k_x = jax.random.split(key)

    params = init_params(k_params, num_classes)
    x = jax.random.normal(k_x, (2, 3, 32, 32), jnp.float32)      # NCHW input

    fwd = jax.jit(lambda inp: forward(inp, params, num_classes))
    out = fwd(x)
    jax.block_until_ready(out)

    assert out.shape == (2, num_classes, 32, 32), out.shape
    assert out.dtype == jnp.float32
    assert bool(jnp.all(jnp.isfinite(out)))
    print("KERNEL_OK")
</pallas_src>

<mosaic_0001>
module attributes {stable_mosaic.version = 11 : i64} {
  func.func @kernel(%arg0: i32, %arg1: memref<128x27xbf16, #tpu.memory_space<vmem>>, %arg2: memref<27x16xbf16, #tpu.memory_space<vmem>>, %arg3: memref<1x16xf32, #tpu.memory_space<vmem>>, %arg4: memref<128x16xbf16, #tpu.memory_space<vmem>>) attributes {dimension_semantics = [#tpu.dimension_semantics<parallel>], iteration_bounds = array<i64: 4>, scalar_prefetch = 0 : i64, scratch_operands = 0 : i64, tpu.core_type = #tpu.core_type<tc>, window_params = [{transform_indices = @transform_0, window_bounds = array<i64: 128, 27>}, {pipeline_mode = #tpu.pipeline_mode<synchronous>, transform_indices = @transform_1, window_bounds = array<i64: 27, 16>}, {pipeline_mode = #tpu.pipeline_mode<synchronous>, transform_indices = @transform_2, window_bounds = array<i64: 1, 16>}, {transform_indices = @transform_3, window_bounds = array<i64: 128, 16>}]} {
    %c0 = arith.constant 0 : index
    %c0_0 = arith.constant 0 : index
    %0 = vector.load %arg1[%c0, %c0_0] : memref<128x27xbf16, #tpu.memory_space<vmem>>, vector<128x27xbf16>
    %c0_1 = arith.constant 0 : index
    %c0_2 = arith.constant 0 : index
    %1 = vector.load %arg2[%c0_1, %c0_2] : memref<27x16xbf16, #tpu.memory_space<vmem>>, vector<27x16xbf16>
    %cst = arith.constant dense<0.000000e+00> : vector<128x16xf32>
    %2 = tpu.matmul %0, %1, %cst {dimension_numbers = #tpu.dot_dimension_numbers<[1], [0], [0], [1], [0, 0, 1, 1], [], []>} : vector<128x27xbf16>, vector<27x16xbf16>, vector<128x16xf32> -> vector<128x16xf32>
    %c0_3 = arith.constant 0 : index
    %c0_4 = arith.constant 0 : index
    %3 = vector.load %arg3[%c0_3, %c0_4] : memref<1x16xf32, #tpu.memory_space<vmem>>, vector<1x16xf32>
    %4 = vector.broadcast %3 : vector<1x16xf32> to vector<128x16xf32>
    %5 = arith.addf %2, %4 : vector<128x16xf32>
    %6 = arith.negf %5 : vector<128x16xf32>
    %7 = math.exp %6 : vector<128x16xf32>
    %cst_5 = arith.constant 1.000000e+00 : f32
    %8 = vector.broadcast %cst_5 : f32 to vector<128x16xf32>
    %9 = arith.addf %8, %7 : vector<128x16xf32>
    %10 = arith.divf %8, %9 : vector<128x16xf32>
    %11 = arith.mulf %5, %10 : vector<128x16xf32>
    %12 = arith.truncf %11 : vector<128x16xf32> to vector<128x16xbf16>
    %c0_6 = arith.constant 0 : index
    %c0_7 = arith.constant 0 : index
    %13 = vector.load %arg4[%c0_6, %c0_7] : memref<128x16xbf16, #tpu.memory_space<vmem>>, vector<128x16xbf16>
    tpu.vector_store %arg4[%c0_6, %c0_7], %12 {strides = array<i32>} : memref<128x16xbf16, #tpu.memory_space<vmem>>, vector<128x16xbf16>,
    return
  }
  func.func @transform_0(%arg0: i32) -> (i32, i32) {
    %c0_i32 = arith.constant 0 : i32
    %c0_i32_0 = arith.constant 0 : i32
    return %arg0, %c0_i32 : i32, i32
  }
  func.func @transform_1(%arg0: i32) -> (i32, i32) {
    %c0_i32 = arith.constant 0 : i32
    %c0_i32_0 = arith.constant 0 : i32
    %c0_i32_1 = arith.constant 0 : i32
    return %c0_i32, %c0_i32_0 : i32, i32
  }
  func.func @transform_2(%arg0: i32) -> (i32, i32) {
    %c0_i32 = arith.constant 0 : i32
    %c0_i32_0 = arith.constant 0 : i32
    %c0_i32_1 = arith.constant 0 : i32
    return %c0_i32, %c0_i32_0 : i32, i32
  }
  func.func @transform_3(%arg0: i32) -> (i32, i32) {
    %c0_i32 = arith.constant 0 : i32
    %c0_i32_0 = arith.constant 0 : i32
    return %arg0, %c0_i32 : i32, i32
  }
}

module attributes {stable_mosaic.version = 11 : i64} {
  func.func @kernel(%arg0: i32, %arg1: memref<128x144xbf16, #tpu.memory_space<vmem>>, %arg2: memref<144x24xbf16, #tpu.memory_space<vmem>>, %arg3: memref<1x24xf32, #tpu.memory_space<vmem>>, %arg4: memref<128x24xbf16, #tpu.memory_space<vmem>>) attributes {dimension_semantics = [#tpu.dimension_semantics<parallel>], iteration_bounds = array<i64: 4>, scalar_prefetch = 0 : i64, scratch_operands = 0 : i64, tpu.core_type = #tpu.core_type<tc>, window_params = [{transform_indices = @transform_0, window_bounds = array<i64: 128, 144>}, {pipeline_mode = #tpu.pipeline_mode<synchronous>, transform_indices = @transform_1, window_bounds = array<i64: 144, 24>}, {pipeline_mode = #tpu.pipeline_mode<synchronous>, transform_indices = @transform_2, window_bounds = array<i64: 1, 24>}, {transform_indices = @transform_3, window_bounds = array<i64: 128, 24>}]} {
    %c0 = arith.constant 0 : index
    %c0_0 = arith.constant 0 : index
    %0 = vector.load %arg1[%c0, %c0_0] : memref<128x144xbf16, #tpu.memory_space<vmem>>, vector<128x144xbf16>
    %c0_1 = arith.constant 0 : index
    %c0_2 = arith.constant 0 : index
    %1 = vector.load %arg2[%c0_1, %c0_2] : memref<144x24xbf16, #tpu.memory_space<vmem>>, vector<144x24xbf16>
    %cst = arith.constant dense<0.000000e+00> : vector<128x24xf32>
    %2 = tpu.matmul %0, %1, %cst {dimension_numbers = #tpu.dot_dimension_numbers<[1], [0], [0], [1], [0, 0, 1, 1], [], []>} : vector<128x144xbf16>, vector<144x24xbf16>, vector<128x24xf32> -> vector<128x24xf32>
    %c0_3 = arith.constant 0 : index
    %c0_4 = arith.constant 0 : index
    %3 = vector.load %arg3[%c0_3, %c0_4] : memref<1x24xf32, #tpu.memory_space<vmem>>, vector<1x24xf32>
    %4 = vector.broadcast %3 : vector<1x24xf32> to vector<128x24xf32>
    %5 = arith.addf %2, %4 : vector<128x24xf32>
    %6 = arith.negf %5 : vector<128x24xf32>
    %7 = math.exp %6 : vector<128x24xf32>
    %cst_5 = arith.constant 1.000000e+00 : f32
    %8 = vector.broadcast %cst_5 : f32 to vector<128x24xf32>
    %9 = arith.addf %8, %7 : vector<128x24xf32>
    %10 = arith.divf %8, %9 : vector<128x24xf32>
    %11 = arith.mulf %5, %10 : vector<128x24xf32>
    %12 = arith.truncf %11 : vector<128x24xf32> to vector<128x24xbf16>
    %c0_6 = arith.constant 0 : index
    %c0_7 = arith.constant 0 : index
    %13 = vector.load %arg4[%c0_6, %c0_7] : memref<128x24xbf16, #tpu.memory_space<vmem>>, vector<128x24xbf16>
    tpu.vector_store %arg4[%c0_6, %c0_7], %12 {strides = array<i32>} : memref<128x24xbf16, #tpu.memory_space<vmem>>, vector<128x24xbf16>,
    return
  }
  func.func @transform_0(%arg0: i32) -> (i32, i32) {
    %c0_i32 = arith.constant 0 : i32
    %c0_i32_0 = arith.constant 0 : i32
    return %arg0, %c0_i32 : i32, i32
  }
  func.func @transform_1(%arg0: i32) -> (i32, i32) {
    %c0_i32 = arith.constant 0 : i32
    %c0_i32_0 = arith.constant 0 : i32
    %c0_i32_1 = arith.constant 0 : i32
    return %c0_i32, %c0_i32_0 : i32, i32
  }
  func.func @transform_2(%arg0: i32) -> (i32, i32) {
    %c0_i32 = arith.constant 0 : i32
    %c0_i32_0 = arith.constant 0 : i32
    %c0_i32_1 = arith.constant 0 : i32
    return %c0_i32, %c0_i32_0 : i32, i32
  }
  func.func @transform_3(%arg0: i32) -> (i32, i32) {
    %c0_i32 = arith.constant 0 : i32
    %c0_i32_0 = arith.constant 0 : i32
    return %arg0, %c0_i32 : i32, i32
  }
}

module attributes {stable_mosaic.version = 11 : i64} {
  func.func @kernel(%arg0: i32, %arg1: memref<128x216xbf16, #tpu.memory_space<vmem>>, %arg2: memref<216x32xbf16, #tpu.memory_space<vmem>>, %arg3: memref<1x32xf32, #tpu.memory_space<vmem>>, %arg4: memref<128x32xbf16, #tpu.memory_space<vmem>>) attributes {dimension_semantics = [#tpu.dimension_semantics<parallel>], iteration_bounds = array<i64: 1>, scalar_prefetch = 0 : i64, scratch_operands = 0 : i64, tpu.core_type = #tpu.core_type<tc>, window_params = [{transform_indices = @transform_0, window_bounds = array<i64: 128, 216>}, {pipeline_mode = #tpu.pipeline_mode<synchronous>, transform_indices = @transform_1, window_bounds = array<i64: 216, 32>}, {pipeline_mode = #tpu.pipeline_mode<synchronous>, transform_indices = @transform_2, window_bounds = array<i64: 1, 32>}, {transform_indices = @transform_3, window_bounds = array<i64: 128, 32>}]} {
    %c0 = arith.constant 0 : index
    %c0_0 = arith.constant 0 : index
    %0 = vector.load %arg1[%c0, %c0_0] : memref<128x216xbf16, #tpu.memory_space<vmem>>, vector<128x216xbf16>
    %c0_1 = arith.constant 0 : index
    %c0_2 = arith.constant 0 : index
    %1 = vector.load %arg2[%c0_1, %c0_2] : memref<216x32xbf16, #tpu.memory_space<vmem>>, vector<216x32xbf16>
    %cst = arith.constant dense<0.000000e+00> : vector<128x32xf32>
    %2 = tpu.matmul %0, %1, %cst {dimension_numbers = #tpu.dot_dimension_numbers<[1], [0], [0], [1], [0, 0, 1, 1], [], []>} : vector<128x216xbf16>, vector<216x32xbf16>, vector<128x32xf32> -> vector<128x32xf32>
    %c0_3 = arith.constant 0 : index
    %c0_4 = arith.constant 0 : index
    %3 = vector.load %arg3[%c0_3, %c0_4] : memref<1x32xf32, #tpu.memory_space<vmem>>, vector<1x32xf32>
    %4 = vector.broadcast %3 : vector<1x32xf32> to vector<128x32xf32>
    %5 = arith.addf %2, %4 : vector<128x32xf32>
    %6 = arith.negf %5 : vector<128x32xf32>
    %7 = math.exp %6 : vector<128x32xf32>
    %cst_5 = arith.constant 1.000000e+00 : f32
    %8 = vector.broadcast %cst_5 : f32 to vector<128x32xf32>
    %9 = arith.addf %8, %7 : vector<128x32xf32>
    %10 = arith.divf %8, %9 : vector<128x32xf32>
    %11 = arith.mulf %5, %10 : vector<128x32xf32>
    %12 = arith.truncf %11 : vector<128x32xf32> to vector<128x32xbf16>
    %c0_6 = arith.constant 0 : index
    %c0_7 = arith.constant 0 : index
    %13 = vector.load %arg4[%c0_6, %c0_7] : memref<128x32xbf16, #tpu.memory_space<vmem>>, vector<128x32xbf16>
    tpu.vector_store %arg4[%c0_6, %c0_7], %12 {strides = array<i32>} : memref<128x32xbf16, #tpu.memory_space<vmem>>, vector<128x32xbf16>,
    return
  }
  func.func @transform_0(%arg0: i32) -> (i32, i32) {
    %c0_i32 = arith.constant 0 : i32
    %c0_i32_0 = arith.constant 0 : i32
    return %arg0, %c0_i32 : i32, i32
  }
  func.func @transform_1(%arg0: i32) -> (i32, i32) {
    %c0_i32 = arith.constant 0 : i32
    %c0_i32_0 = arith.constant 0 : i32
    %c0_i32_1 = arith.constant 0 : i32
    return %c0_i32, %c0_i32_0 : i32, i32
  }
  func.func @transform_2(%arg0: i32) -> (i32, i32) {
    %c0_i32 = arith.constant 0 : i32
    %c0_i32_0 = arith.constant 0 : i32
    %c0_i32_1 = arith.constant 0 : i32
    return %c0_i32, %c0_i32_0 : i32, i32
  }
  func.func @transform_3(%arg0: i32) -> (i32, i32) {
    %c0_i32 = arith.constant 0 : i32
    %c0_i32_0 = arith.constant 0 : i32
    return %arg0, %c0_i32 : i32, i32
  }
}

module attributes {stable_mosaic.version = 11 : i64} {
  func.func @kernel(%arg0: i32, %arg1: memref<32x288xbf16, #tpu.memory_space<vmem>>, %arg2: memref<288x48xbf16, #tpu.memory_space<vmem>>, %arg3: memref<1x48xf32, #tpu.memory_space<vmem>>, %arg4: memref<48x64xbf16, #tpu.memory_space<vmem>>, %arg5: memref<1x64xf32, #tpu.memory_space<vmem>>, %arg6: memref<32x64xbf16, #tpu.memory_space<vmem>>) attributes {dimension_semantics = [#tpu.dimension_semantics<parallel>], iteration_bounds = array<i64: 1>, scalar_prefetch = 0 : i64, scratch_operands = 0 : i64, tpu.core_type = #tpu.core_type<tc>, window_params = [{transform_indices = @transform_0, window_bounds = array<i64: 32, 288>}, {pipeline_mode = #tpu.pipeline_mode<synchronous>, transform_indices = @transform_1, window_bounds = array<i64: 288, 48>}, {pipeline_mode = #tpu.pipeline_mode<synchronous>, transform_indices = @transform_2, window_bounds = array<i64: 1, 48>}, {pipeline_mode = #tpu.pipeline_mode<synchronous>, transform_indices = @transform_3, window_bounds = array<i64: 48, 64>}, {pipeline_mode = #tpu.pipeline_mode<synchronous>, transform_indices = @transform_4, window_bounds = array<i64: 1, 64>}, {transform_indices = @transform_5, window_bounds = array<i64: 32, 64>}]} {
    %c0 = arith.constant 0 : index
    %c0_0 = arith.constant 0 : index
    %0 = vector.load %arg1[%c0, %c0_0] : memref<32x288xbf16, #tpu.memory_space<vmem>>, vector<32x288xbf16>
    %c0_1 = arith.constant 0 : index
    %c0_2 = arith.constant 0 : index
    %1 = vector.load %arg2[%c0_1, %c0_2] : memref<288x48xbf16, #tpu.memory_space<vmem>>, vector<288x48xbf16>
    %cst = arith.constant dense<0.000000e+00> : vector<32x48xf32>
    %2 = tpu.matmul %0, %1, %cst {dimension_numbers = #tpu.dot_dimension_numbers<[1], [0], [0], [1], [0, 0, 1, 1], [], []>} : vector<32x288xbf16>, vector<288x48xbf16>, vector<32x48xf32> -> vector<32x48xf32>
    %c0_3 = arith.constant 0 : index
    %c0_4 = arith.constant 0 : index
    %3 = vector.load %arg3[%c0_3, %c0_4] : memref<1x48xf32, #tpu.memory_space<vmem>>, vector<1x48xf32>
    %4 = vector.broadcast %3 : vector<1x48xf32> to vector<32x48xf32>
    %5 = arith.addf %2, %4 : vector<32x48xf32>
    %6 = arith.negf %5 : vector<32x48xf32>
    %7 = math.exp %6 : vector<32x48xf32>
    %cst_5 = arith.constant 1.000000e+00 : f32
    %8 = vector.broadcast %cst_5 : f32 to vector<32x48xf32>
    %9 = arith.addf %8, %7 : vector<32x48xf32>
    %10 = arith.divf %8, %9 : vector<32x48xf32>
    %11 = arith.mulf %5, %10 : vector<32x48xf32>
    %12 = arith.truncf %11 : vector<32x48xf32> to vector<32x48xbf16>
    %c0_6 = arith.constant 0 : index
    %c0_7 = arith.constant 0 : index
    %13 = vector.load %arg4[%c0_6, %c0_7] : memref<48x64xbf16, #tpu.memory_space<vmem>>, vector<48x64xbf16>
    %cst_8 = arith.constant dense<0.000000e+00> : vector<32x64xf32>
    %14 = tpu.matmul %12, %13, %cst_8 {dimension_numbers = #tpu.dot_dimension_numbers<[1], [0], [0], [1], [0, 0, 1, 1], [], []>} : vector<32x48xbf16>, vector<48x64xbf16>, vector<32x64xf32> -> vector<32x64xf32>
    %c0_9 = arith.constant 0 : index
    %c0_10 = arith.constant 0 : index
    %15 = vector.load %arg5[%c0_9, %c0_10] : memref<1x64xf32, #tpu.memory_space<vmem>>, vector<1x64xf32>
    %16 = vector.broadcast %15 : vector<1x64xf32> to vector<32x64xf32>
    %17 = arith.addf %14, %16 : vector<32x64xf32>
    %18 = arith.negf %17 : vector<32x64xf32>
    %19 = math.exp %18 : vector<32x64xf32>
    %cst_11 = arith.constant 1.000000e+00 : f32
    %20 = vector.broadcast %cst_11 : f32 to vector<32x64xf32>
    %21 = arith.addf %20, %19 : vector<32x64xf32>
    %22 = arith.divf %20, %21 : vector<32x64xf32>
    %23 = arith.mulf %17, %22 : vector<32x64xf32>
    %24 = arith.truncf %23 : vector<32x64xf32> to vector<32x64xbf16>
    %c0_12 = arith.constant 0 : index
    %c0_13 = arith.constant 0 : index
    %25 = vector.load %arg6[%c0_12, %c0_13] : memref<32x64xbf16, #tpu.memory_space<vmem>>, vector<32x64xbf16>
    tpu.vector_store %arg6[%c0_12, %c0_13], %24 {strides = array<i32>} : memref<32x64xbf16, #tpu.memory_space<vmem>>, vector<32x64xbf16>,
    return
  }
  func.func @transform_0(%arg0: i32) -> (i32, i32) {
    %c0_i32 = arith.constant 0 : i32
    %c0_i32_0 = arith.constant 0 : i32
    return %arg0, %c0_i32 : i32, i32
  }
  func.func @transform_1(%arg0: i32) -> (i32, i32) {
    %c0_i32 = arith.constant 0 : i32
    %c0_i32_0 = arith.constant 0 : i32
    %c0_i32_1 = arith.constant 0 : i32
    return %c0_i32, %c0_i32_0 : i32, i32
  }
  func.func @transform_2(%arg0: i32) -> (i32, i32) {
    %c0_i32 = arith.constant 0 : i32
    %c0_i32_0 = arith.constant 0 : i32
    %c0_i32_1 = arith.constant 0 : i32
    return %c0_i32, %c0_i32_0 : i32, i32
  }
  func.func @transform_3(%arg0: i32) -> (i32, i32) {
    %c0_i32 = arith.constant 0 : i32
    %c0_i32_0 = arith.constant 0 : i32
    %c0_i32_1 = arith.constant 0 : i32
    return %c0_i32, %c0_i32_0 : i32, i32
  }
  func.func @transform_4(%arg0: i32) -> (i32, i32) {
    %c0_i32 = arith.constant 0 : i32
    %c0_i32_0 = arith.constant 0 : i32
    %c0_i32_1 = arith.constant 0 : i32
    return %c0_i32, %c0_i32_0 : i32, i32
  }
  func.func @transform_5(%arg0: i32) -> (i32, i32) {
    %c0_i32 = arith.constant 0 : i32
    %c0_i32_0 = arith.constant 0 : i32
    return %arg0, %c0_i32 : i32, i32
  }
}

module attributes {stable_mosaic.version = 11 : i64} {
  func.func @kernel(%arg0: i32, %arg1: memref<32x64xbf16, #tpu.memory_space<vmem>>, %arg2: memref<3x9x32x32xbf16, #tpu.memory_space<vmem>>, %arg3: memref<64x32xbf16, #tpu.memory_space<vmem>>, %arg4: memref<3x9x64x32xbf16, #tpu.memory_space<vmem>>, %arg5: memref<64x32xbf16, #tpu.memory_space<vmem>>, %arg6: memref<160x32xbf16, #tpu.memory_space<vmem>>, %arg7: memref<9x32x32xbf16, #tpu.memory_space<vmem>>, %arg8: memref<32x5xbf16, #tpu.memory_space<vmem>>, %arg9: memref<6x32xf32, #tpu.memory_space<vmem>>, %arg10: memref<1x32xf32, #tpu.memory_space<vmem>>, %arg11: memref<1x5xf32, #tpu.memory_space<vmem>>, %arg12: memref<1024x16xf32, #tpu.memory_space<vmem>>, %arg13: memref<2x1024x5xf32, #tpu.memory_space<vmem>>) attributes {dimension_semantics = [#tpu.dimension_semantics<arbitrary>], iteration_bounds = array<i64: 1>, scalar_prefetch = 0 : i64, scratch_operands = 0 : i64, tpu.core_type = #tpu.core_type<tc>, window_params = [{pipeline_mode = #tpu.pipeline_mode<synchronous>, transform_indices = @transform_0, window_bounds = array<i64: 32, 64>}, {pipeline_mode = #tpu.pipeline_mode<synchronous>, transform_indices = @transform_1, window_bounds = array<i64: 3, 9, 32, 32>}, {pipeline_mode = #tpu.pipeline_mode<synchronous>, transform_indices = @transform_2, window_bounds = array<i64: 64, 32>}, {pipeline_mode = #tpu.pipeline_mode<synchronous>, transform_indices = @transform_3, window_bounds = array<i64: 3, 9, 64, 32>}, {pipeline_mode = #tpu.pipeline_mode<synchronous>, transform_indices = @transform_4, window_bounds = array<i64: 64, 32>}, {pipeline_mode = #tpu.pipeline_mode<synchronous>, transform_indices = @transform_5, window_bounds = array<i64: 160, 32>}, {pipeline_mode = #tpu.pipeline_mode<synchronous>, transform_indices = @transform_6, window_bounds = array<i64: 9, 32, 32>}, {pipeline_mode = #tpu.pipeline_mode<synchronous>, transform_indices = @transform_7, window_bounds = array<i64: 32, 5>}, {pipeline_mode = #tpu.pipeline_mode<synchronous>, transform_indices = @transform_8, window_bounds = array<i64: 6, 32>}, {pipeline_mode = #tpu.pipeline_mode<synchronous>, transform_indices = @transform_9, window_bounds = array<i64: 1, 32>}, {pipeline_mode = #tpu.pipeline_mode<synchronous>, transform_indices = @transform_10, window_bounds = array<i64: 1, 5>}, {pipeline_mode = #tpu.pipeline_mode<synchronous>, transform_indices = @transform_11, window_bounds = array<i64: 1024, 16>}, {pipeline_mode = #tpu.pipeline_mode<synchronous>, transform_indices = @transform_12, window_bounds = array<i64: 2, 1024, 5>}]} {
    %c0 = arith.constant 0 : index
    %c0_0 = arith.constant 0 : index
    %0 = vector.load %arg1[%c0, %c0_0] : memref<32x64xbf16, #tpu.memory_space<vmem>>, vector<32x64xbf16>
    %c0_1 = arith.constant 0 : index
    %c0_2 = arith.constant 0 : index
    %1 = vector.load %arg3[%c0_1, %c0_2] : memref<64x32xbf16, #tpu.memory_space<vmem>>, vector<64x32xbf16>
    %cst = arith.constant dense<0.000000e+00> : vector<32x32xf32>
    %2 = tpu.matmul %0, %1, %cst {dimension_numbers = #tpu.dot_dimension_numbers<[1], [0], [0], [1], [0, 0, 1, 1], [], []>} : vector<32x64xbf16>, vector<64x32xbf16>, vector<32x32xf32> -> vector<32x32xf32>
    %c0_3 = arith.constant 0 : index
    %c0_4 = arith.constant 0 : index
    %3 = vector.load %arg9[%c0_3, %c0_4] : memref<6x32xf32, #tpu.memory_space<vmem>>, vector<1x32xf32>
    %4 = vector.broadcast %3 : vector<1x32xf32> to vector<32x32xf32>
    %5 = arith.addf %2, %4 : vector<32x32xf32>
    %cst_5 = arith.constant 0.000000e+00 : f32
    %6 = vector.broadcast %cst_5 : f32 to vector<32x32xf32>
    %7 = arith.maximumf %5, %6 : vector<32x32xf32>
    %8 = arith.truncf %7 : vector<32x32xf32> to vector<32x32xbf16>
    %c0_6 = arith.constant 0 : index
    %c0_7 = arith.constant 0 : index
    %9 = vector.load %arg6[%c0_6, %c0_7] : memref<160x32xbf16, #tpu.memory_space<vmem>>, vector<32x32xbf16>
    %cst_8 = arith.constant dense<0.000000e+00> : vector<32x32xf32>
    %10 = tpu.matmul %8, %9, %cst_8 {dimension_numbers = #tpu.dot_dimension_numbers<[1], [0], [0], [1], [0, 0, 1, 1], [], []>} : vector<32x32xbf16>, vector<32x32xbf16>, vector<32x32xf32> -> vector<32x32xf32>
    %cst_9 = arith.constant 0.000000e+00 : f32
    %11 = vector.broadcast %cst_9 : f32 to vector<32x32xf32>
    %c0_10 = arith.constant 0 : index
    %c0_11 = arith.constant 0 : index
    %c0_12 = arith.constant 0 : index
    %c0_13 = arith.constant 0 : index
    %12 = vector.load %arg2[%c0_10, %c0_11, %c0_12, %c0_13] : memref<3x9x32x32xbf16, #tpu.memory_space<vmem>>, vector<1x1x32x32xbf16>
    %13 = vector.shape_cast %12 : vector<1x1x32x32xbf16> to vector<32x32xbf16>
    %cst_14 = arith.constant dense<0.000000e+00> : vector<32x64xf32>
    %14 = tpu.matmul %13, %0, %cst_14 {dimension_numbers = #tpu.dot_dimension_numbers<[1], [0], [0], [1], [0, 0, 1, 1], [], []>} : vector<32x32xbf16>, vector<32x64xbf16>, vector<32x64xf32> -> vector<32x64xf32>
    %15 = arith.truncf %14 : vector<32x64xf32> to vector<32x64xbf16>
    %c0_15 = arith.constant 0 : index
    %c0_16 = arith.constant 0 : index
    %c0_17 = arith.constant 0 : index
    %c0_18 = arith.constant 0 : index
    %16 = vector.load %arg4[%c0_15, %c0_16, %c0_17, %c0_18] : memref<3x9x64x32xbf16, #tpu.memory_space<vmem>>, vector<1x1x64x32xbf16>
    %17 = vector.shape_cast %16 : vector<1x1x64x32xbf16> to vector<64x32xbf16>
    %cst_19 = arith.constant dense<0.000000e+00> : vector<32x32xf32>
    %18 = tpu.matmul %15, %17, %cst_19 {dimension_numbers = #tpu.dot_dimension_numbers<[1], [0], [0], [1], [0, 0, 1, 1], [], []>} : vector<32x64xbf16>, vector<64x32xbf16>, vector<32x32xf32> -> vector<32x32xf32>
    %19 = arith.addf %11, %18 : vector<32x32xf32>
    %c0_20 = arith.constant 0 : index
    %c1 = arith.constant 1 : index
    %c0_21 = arith.constant 0 : index
    %c0_22 = arith.constant 0 : index
    %20 = vector.load %arg2[%c0_20, %c1, %c0_21, %c0_22] : memref<3x9x32x32xbf16, #tpu.memory_space<vmem>>, vector<1x1x32x32xbf16>
    %21 = vector.shape_cast %20 : vector<1x1x32x32xbf16> to vector<32x32xbf16>
    %cst_23 = arith.constant dense<0.000000e+00> : vector<32x64xf32>
    %22 = tpu.matmul %21, %0, %cst_23 {dimension_numbers = #tpu.dot_dimension_numbers<[1], [0], [0], [1], [0, 0, 1, 1], [], []>} : vector<32x32xbf16>, vector<32x64xbf16>, vector<32x64xf32> -> vector<32x64xf32>
    %23 = arith.truncf %22 : vector<32x64xf32> to vector<32x64xbf16>
    %c0_24 = arith.constant 0 : index
    %c1_25 = arith.constant 1 : index
    %c0_26 = arith.constant 0 : index
    %c0_27 = arith.constant 0 : index
    %24 = vector.load %arg4[%c0_24, %c1_25, %c0_26, %c0_27] : memref<3x9x64x32xbf16, #tpu.memory_space<vmem>>, vector<1x1x64x32xbf16>
    %25 = vector.shape_cast %24 : vector<1x1x64x32xbf16> to vector<64x32xbf16>
    %cst_28 = arith.constant dense<0.000000e+00> : vector<32x32xf32>
    %26 = tpu.matmul %23, %25, %cst_28 {dimension_numbers = #tpu.dot_dimension_numbers<[1], [0], [0], [1], [0, 0, 1, 1], [], []>} : vector<32x64xbf16>, vector<64x32xbf16>, vector<32x32xf32> -> vector<32x32xf32>
    %27 = arith.addf %19, %26 : vector<32x32xf32>
    %c0_29 = arith.constant 0 : index
    %c2 = arith.constant 2 : index
    %c0_30 = arith.constant 0 : index
    %c0_31 = arith.constant 0 : index
    %28 = vector.load %arg2[%c0_29, %c2, %c0_30, %c0_31] : memref<3x9x32x32xbf16, #tpu.memory_space<vmem>>, vector<1x1x32x32xbf16>
    %29 = vector.shape_cast %28 : vector<1x1x32x32xbf16> to vector<32x32xbf16>
    %cst_32 = arith.constant dense<0.000000e+00> : vector<32x64xf32>
    %30 = tpu.matmul %29, %0, %cst_32 {dimension_numbers = #tpu.dot_dimension_numbers<[1], [0], [0], [1], [0, 0, 1, 1], [], []>} : vector<32x32xbf16>, vector<32x64xbf16>, vector<32x64xf32> -> vector<32x64xf32>
    %31 = arith.truncf %30 : vector<32x64xf32> to vector<32x64xbf16>
    %c0_33 = arith.constant 0 : index
    %c2_34 = arith.constant 2 : index
    %c0_35 = arith.constant 0 : index
    %c0_36 = arith.constant 0 : index
    %32 = vector.load %arg4[%c0_33, %c2_34, %c0_35, %c0_36] : memref<3x9x64x32xbf16, #tpu.memory_space<vmem>>, vector<1x1x64x32xbf16>
    %33 = vector.shape_cast %32 : vector<1x1x64x32xbf16> to vector<64x32xbf16>
    %cst_37 = arith.constant dense<0.000000e+00> : vector<32x32xf32>
    %34 = tpu.matmul %31, %33, %cst_37 {dimension_numbers = #tpu.dot_dimension_numbers<[1], [0], [0], [1], [0, 0, 1, 1], [], []>} : vector<32x64xbf16>, vector<64x32xbf16>, vector<32x32xf32> -> vector<32x32xf32>
    %35 = arith.addf %27, %34 : vector<32x32xf32>
    %c0_38 = arith.constant 0 : index
    %c3 = arith.constant 3 : index
    %c0_39 = arith.constant 0 : index
    %c0_40 = arith.constant 0 : index
    %36 = vector.load %arg2[%c0_38, %c3, %c0_39, %c0_40] : memref<3x9x32x32xbf16, #tpu.memory_space<vmem>>, vector<1x1x32x32xbf16>
    %37 = vector.shape_cast %36 : vector<1x1x32x32xbf16> to vector<32x32xbf16>
    %cst_41 = arith.constant dense<0.000000e+00> : vector<32x64xf32>
    %38 = tpu.matmul %37, %0, %cst_41 {dimension_numbers = #tpu.dot_dimension_numbers<[1], [0], [0], [1], [0, 0, 1, 1], [], []>} : vector<32x32xbf16>, vector<32x64xbf16>, vector<32x64xf32> -> vector<32x64xf32>
    %39 = arith.truncf %38 : vector<32x64xf32> to vector<32x64xbf16>
    %c0_42 = arith.constant 0 : index
    %c3_43 = arith.constant 3 : index
    %c0_44 = arith.constant 0 : index
    %c0_45 = arith.constant 0 : index
    %40 = vector.load %arg4[%c0_42, %c3_43, %c0_44, %c0_45] : memref<3x9x64x32xbf16, #tpu.memory_space<vmem>>, vector<1x1x64x32xbf16>
    %41 = vector.shape_cast %40 : vector<1x1x64x32xbf16> to vector<64x32xbf16>
    %cst_46 = arith.constant dense<0.000000e+00> : vector<32x32xf32>
    %42 = tpu.matmul %39, %41, %cst_46 {dimension_numbers = #tpu.dot_dimension_numbers<[1], [0], [0], [1], [0, 0, 1, 1], [], []>} : vector<32x64xbf16>, vector<64x32xbf16>, vector<32x32xf32> -> vector<32x32xf32>
    %43 = arith.addf %35, %42 : vector<32x32xf32>
    %c0_47 = arith.constant 0 : index
    %c4 = arith.constant 4 : index
    %c0_48 = arith.constant 0 : index
    %c0_49 = arith.constant 0 : index
    %44 = vector.load %arg2[%c0_47, %c4, %c0_48, %c0_49] : memref<3x9x32x32xbf16, #tpu.memory_space<vmem>>, vector<1x1x32x32xbf16>
    %45 = vector.shape_cast %44 : vector<1x1x32x32xbf16> to vector<32x32xbf16>
    %cst_50 = arith.constant dense<0.000000e+00> : vector<32x64xf32>
    %46 = tpu.matmul %45, %0, %cst_50 {dimension_numbers = #tpu.dot_dimension_numbers<[1], [0], [0], [1], [0, 0, 1, 1], [], []>} : vector<32x32xbf16>, vector<32x64xbf16>, vector<32x64xf32> -> vector<32x64xf32>
    %47 = arith.truncf %46 : vector<32x64xf32> to vector<32x64xbf16>
    %c0_51 = arith.constant 0 : index
    %c4_52 = arith.constant 4 : index
    %c0_53 = arith.constant 0 : index
    %c0_54 = arith.constant 0 : index
    %48 = vector.load %arg4[%c0_51, %c4_52, %c0_53, %c0_54] : memref<3x9x64x32xbf16, #tpu.memory_space<vmem>>, vector<1x1x64x32xbf16>
    %49 = vector.shape_cast %48 : vector<1x1x64x32xbf16> to vector<64x32xbf16>
    %cst_55 = arith.constant dense<0.000000e+00> : vector<32x32xf32>
    %50 = tpu.matmul %47, %49, %cst_55 {dimension_numbers = #tpu.dot_dimension_numbers<[1], [0], [0], [1], [0, 0, 1, 1], [], []>} : vector<32x64xbf16>, vector<64x32xbf16>, vector<32x32xf32> -> vector<32x32xf32>
    %51 = arith.addf %43, %50 : vector<32x32xf32>
    %c0_56 = arith.constant 0 : index
    %c5 = arith.constant 5 : index
    %c0_57 = arith.constant 0 : index
    %c0_58 = arith.constant 0 : index
    %52 = vector.load %arg2[%c0_56, %c5, %c0_57, %c0_58] : memref<3x9x32x32xbf16, #tpu.memory_space<vmem>>, vector<1x1x32x32xbf16>
    %53 = vector.shape_cast %52 : vector<1x1x32x32xbf16> to vector<32x32xbf16>
    %cst_59 = arith.constant dense<0.000000e+00> : vector<32x64xf32>
    %54 = tpu.matmul %53, %0, %cst_59 {dimension_numbers = #tpu.dot_dimension_numbers<[1], [0], [0], [1], [0, 0, 1, 1], [], []>} : vector<32x32xbf16>, vector<32x64xbf16>, vector<32x64xf32> -> vector<32x64xf32>
    %55 = arith.truncf %54 : vector<32x64xf32> to vector<32x64xbf16>
    %c0_60 = arith.constant 0 : index
    %c5_61 = arith.constant 5 : index
    %c0_62 = arith.constant 0 : index
    %c0_63 = arith.constant 0 : index
    %56 = vector.load %arg4[%c0_60, %c5_61, %c0_62, %c0_63] : memref<3x9x64x32xbf16, #tpu.memory_space<vmem>>, vector<1x1x64x32xbf16>
    %57 = vector.shape_cast %56 : vector<1x1x64x32xbf16> to vector<64x32xbf16>
    %cst_64 = arith.constant dense<0.000000e+00> : vector<32x32xf32>
    %58 = tpu.matmul %55, %57, %cst_64 {dimension_numbers = #tpu.dot_dimension_numbers<[1], [0], [0], [1], [0, 0, 1, 1], [], []>} : vector<32x64xbf16>, vector<64x32xbf16>, vector<32x32xf32> -> vector<32x32xf32>
    %59 = arith.addf %51, %58 : vector<32x32xf32>
    %c0_65 = arith.constant 0 : index
    %c6 = arith.constant 6 : index
    %c0_66 = arith.constant 0 : index
    %c0_67 = arith.constant 0 : index
    %60 = vector.load %arg2[%c0_65, %c6, %c0_66, %c0_67] : memref<3x9x32x32xbf16, #tpu.memory_space<vmem>>, vector<1x1x32x32xbf16>
    %61 = vector.shape_cast %60 : vector<1x1x32x32xbf16> to vector<32x32xbf16>
    %cst_68 = arith.constant dense<0.000000e+00> : vector<32x64xf32>
    %62 = tpu.matmul %61, %0, %cst_68 {dimension_numbers = #tpu.dot_dimension_numbers<[1], [0], [0], [1], [0, 0, 1, 1], [], []>} : vector<32x32xbf16>, vector<32x64xbf16>, vector<32x64xf32> -> vector<32x64xf32>
    %63 = arith.truncf %62 : vector<32x64xf32> to vector<32x64xbf16>
    %c0_69 = arith.constant 0 : index
    %c6_70 = arith.constant 6 : index
    %c0_71 = arith.constant 0 : index
    %c0_72 = arith.constant 0 : index
    %64 = vector.load %arg4[%c0_69, %c6_70, %c0_71, %c0_72] : memref<3x9x64x32xbf16, #tpu.memory_space<vmem>>, vector<1x1x64x32xbf16>
    %65 = vector.shape_cast %64 : vector<1x1x64x32xbf16> to vector<64x32xbf16>
    %cst_73 = arith.constant dense<0.000000e+00> : vector<32x32xf32>
    %66 = tpu.matmul %63, %65, %cst_73 {dimension_numbers = #tpu.dot_dimension_numbers<[1], [0], [0], [1], [0, 0, 1, 1], [], []>} : vector<32x64xbf16>, vector<64x32xbf16>, vector<32x32xf32> -> vector<32x32xf32>
    %67 = arith.addf %59, %66 : vector<32x32xf32>
    %c0_74 = arith.constant 0 : index
    %c7 = arith.constant 7 : index
    %c0_75 = arith.constant 0 : index
    %c0_76 = arith.constant 0 : index
    %68 = vector.load %arg2[%c0_74, %c7, %c0_75, %c0_76] : memref<3x9x32x32xbf16, #tpu.memory_space<vmem>>, vector<1x1x32x32xbf16>
    %69 = vector.shape_cast %68 : vector<1x1x32x32xbf16> to vector<32x32xbf16>
    %cst_77 = arith.constant dense<0.000000e+00> : vector<32x64xf32>
    %70 = tpu.matmul %69, %0, %cst_77 {dimension_numbers = #tpu.dot_dimension_numbers<[1], [0], [0], [1], [0, 0, 1, 1], [], []>} : vector<32x32xbf16>, vector<32x64xbf16>, vector<32x64xf32> -> vector<32x64xf32>
    %71 = arith.truncf %70 : vector<32x64xf32> to vector<32x64xbf16>
    %c0_78 = arith.constant 0 : index
    %c7_79 = arith.constant 7 : index
    %c0_80 = arith.constant 0 : index
    %c0_81 = arith.constant 0 : index
    %72 = vector.load %arg4[%c0_78, %c7_79, %c0_80, %c0_81] : memref<3x9x64x32xbf16, #tpu.memory_space<vmem>>, vector<1x1x64x32xbf16>
    %73 = vector.shape_cast %72 : vector<1x1x64x32xbf16> to vector<64x32xbf16>
    %cst_82 = arith.constant dense<0.000000e+00> : vector<32x32xf32>
    %74 = tpu.matmul %71, %73, %cst_82 {dimension_numbers = #tpu.dot_dimension_numbers<[1], [0], [0], [1], [0, 0, 1, 1], [], []>} : vector<32x64xbf16>, vector<64x32xbf16>, vector<32x32xf32> -> vector<32x32xf32>
    %75 = arith.addf %67, %74 : vector<32x32xf32>
    %c0_83 = arith.constant 0 : index
    %c8 = arith.constant 8 : index
    %c0_84 = arith.constant 0 : index
    %c0_85 = arith.constant 0 : index
    %76 = vector.load %arg2[%c0_83, %c8, %c0_84, %c0_85] : memref<3x9x32x32xbf16, #tpu.memory_space<vmem>>, vector<1x1x32x32xbf16>
    %77 = vector.shape_cast %76 : vector<1x1x32x32xbf16> to vector<32x32xbf16>
    %cst_86 = arith.constant dense<0.000000e+00> : vector<32x64xf32>
    %78 = tpu.matmul %77, %0, %cst_86 {dimension_numbers = #tpu.dot_dimension_numbers<[1], [0], [0], [1], [0, 0, 1, 1], [], []>} : vector<32x32xbf16>, vector<32x64xbf16>, vector<32x64xf32> -> vector<32x64xf32>
    %79 = arith.truncf %78 : vector<32x64xf32> to vector<32x64xbf16>
    %c0_87 = arith.constant 0 : index
    %c8_88 = arith.constant 8 : index
    %c0_89 = arith.constant 0 : index
    %c0_90 = arith.constant 0 : index
    %80 = vector.load %arg4[%c0_87, %c8_88, %c0_89, %c0_90] : memref<3x9x64x32xbf16, #tpu.memory_space<vmem>>, vector<1x1x64x32xbf16>
    %81 = vector.shape_cast %80 : vector<1x1x64x32xbf16> to vector<64x32xbf16>
    %cst_91 = arith.constant dense<0.000000e+00> : vector<32x32xf32>
    %82 = tpu.matmul %79, %81, %cst_91 {dimension_numbers = #tpu.dot_dimension_numbers<[1], [0], [0], [1], [0, 0, 1, 1], [], []>} : vector<32x64xbf16>, vector<64x32xbf16>, vector<32x32xf32> -> vector<32x32xf32>
    %83 = arith.addf %75, %82 : vector<32x32xf32>
    %c1_92 = arith.constant 1 : index
    %c0_93 = arith.constant 0 : index
    %84 = vector.load %arg9[%c1_92, %c0_93] : memref<6x32xf32, #tpu.memory_space<vmem>>, vector<1x32xf32>
    %85 = vector.broadcast %84 : vector<1x32xf32> to vector<32x32xf32>
    %86 = arith.addf %83, %85 : vector<32x32xf32>
    %cst_94 = arith.constant 0.000000e+00 : f32
    %87 = vector.broadcast %cst_94 : f32 to vector<32x32xf32>
    %88 = arith.maximumf %86, %87 : vector<32x32xf32>
    %89 = arith.truncf %88 : vector<32x32xf32> to vector<32x32xbf16>
    %c32 = arith.constant 32 : index
    %c0_95 = arith.constant 0 : index
    %90 = vector.load %arg6[%c32, %c0_95] : memref<160x32xbf16, #tpu.memory_space<vmem>>, vector<32x32xbf16>
    %cst_96 = arith.constant dense<0.000000e+00> : vector<32x32xf32>
    %91 = tpu.matmul %89, %90, %cst_96 {dimension_numbers = #tpu.dot_dimension_numbers<[1], [0], [0], [1], [0, 0, 1, 1], [], []>} : vector<32x32xbf16>, vector<32x32xbf16>, vector<32x32xf32> -> vector<32x32xf32>
    %92 = arith.addf %10, %91 : vector<32x32xf32>
    %cst_97 = arith.constant 0.000000e+00 : f32
    %93 = vector.broadcast %cst_97 : f32 to vector<32x32xf32>
    %c1_98 = arith.constant 1 : index
    %c0_99 = arith.constant 0 : index
    %c0_100 = arith.constant 0 : index
    %c0_101 = arith.constant 0 : index
    %94 = vector.load %arg2[%c1_98, %c0_99, %c0_100, %c0_101] : memref<3x9x32x32xbf16, #tpu.memory_space<vmem>>, vector<1x1x32x32xbf16>
    %95 = vector.shape_cast %94 : vector<1x1x32x32xbf16> to vector<32x32xbf16>
    %cst_102 = arith.constant dense<0.000000e+00> : vector<32x64xf32>
    %96 = tpu.matmul %95, %0, %cst_102 {dimension_numbers = #tpu.dot_dimension_numbers<[1], [0], [0], [1], [0, 0, 1, 1], [], []>} : vector<32x32xbf16>, vector<32x64xbf16>, vector<32x64xf32> -> vector<32x64xf32>
    %97 = arith.truncf %96 : vector<32x64xf32> to vector<32x64xbf16>
    %c1_103 = arith.constant 1 : index
    %c0_104 = arith.constant 0 : index
    %c0_105 = arith.constant 0 : index
    %c0_106 = arith.constant 0 : index
    %98 = vector.load %arg4[%c1_103, %c0_104, %c0_105, %c0_106] : memref<3x9x64x32xbf16, #tpu.memory_space<vmem>>, vector<1x1x64x32xbf16>
    %99 = vector.shape_cast %98 : vector<1x1x64x32xbf16> to vector<64x32xbf16>
    %cst_107 = arith.constant dense<0.000000e+00> : vector<32x32xf32>
    %100 = tpu.matmul %97, %99, %cst_107 {dimension_numbers = #tpu.dot_dimension_numbers<[1], [0], [0], [1], [0, 0, 1, 1], [], []>} : vector<32x64xbf16>, vector<64x32xbf16>, vector<32x32xf32> -> vector<32x32xf32>
    %101 = arith.addf %93, %100 : vector<32x32xf32>
    %c1_108 = arith.constant 1 : index
    %c1_109 = arith.constant 1 : index
    %c0_110 = arith.constant 0 : index
    %c0_111 = arith.constant 0 : index
    %102 = vector.load %arg2[%c1_108, %c1_109, %c0_110, %c0_111] : memref<3x9x32x32xbf16, #tpu.memory_space<vmem>>, vector<1x1x32x32xbf16>
    %103 = vector.shape_cast %102 : vector<1x1x32x32xbf16> to vector<32x32xbf16>
    %cst_112 = arith.constant dense<0.000000e+00> : vector<32x64xf32>
    %104 = tpu.matmul %103, %0, %cst_112 {dimension_numbers = #tpu.dot_dimension_numbers<[1], [0], [0], [1], [0, 0, 1, 1], [], []>} : vector<32x32xbf16>, vector<32x64xbf16>, vector<32x64xf32> -> vector<32x64xf32>
    %105 = arith.truncf %104 : vector<32x64xf32> to vector<32x64xbf16>
    %c1_113 = arith.constant 1 : index
    %c1_114 = arith.constant 1 : index
    %c0_115 = arith.constant 0 : index
    %c0_116 = arith.constant 0 : index
    %106 = vector.load %arg4[%c1_113, %c1_114, %c0_115, %c0_116] : memref<3x9x64x32xbf16, #tpu.memory_space<vmem>>, vector<1x1x64x32xbf16>
    %107 = vector.shape_cast %106 : vector<1x1x64x32xbf16> to vector<64x32xbf16>
    %cst_117 = arith.constant dense<0.000000e+00> : vector<32x32xf32>
    %108 = tpu.matmul %105, %107, %cst_117 {dimension_numbers = #tpu.dot_dimension_numbers<[1], [0], [0], [1], [0, 0, 1, 1], [], []>} : vector<32x64xbf16>, vector<64x32xbf16>, vector<32x32xf32> -> vector<32x32xf32>
    %109 = arith.addf %101, %108 : vector<32x32xf32>
    %c1_118 = arith.constant 1 : index
    %c2_119 = arith.constant 2 : index
    %c0_120 = arith.constant 0 : index
    %c0_121 = arith.constant 0 : index
    %110 = vector.load %arg2[%c1_118, %c2_119, %c0_120, %c0_121] : memref<3x9x32x32xbf16, #tpu.memory_space<vmem>>, vector<1x1x32x32xbf16>
    %111 = vector.shape_cast %110 : vector<1x1x32x32xbf16> to vector<32x32xbf16>
    %cst_122 = arith.constant dense<0.000000e+00> : vector<32x64xf32>
    %112 = tpu.matmul %111, %0, %cst_122 {dimension_numbers = #tpu.dot_dimension_numbers<[1], [0], [0], [1], [0, 0, 1, 1], [], []>} : vector<32x32xbf16>, vector<32x64xbf16>, vector<32x64xf32> -> vector<32x64xf32>
    %113 = arith.truncf %112 : vector<32x64xf32> to vector<32x64xbf16>
    %c1_123 = arith.constant 1 : index
    %c2_124 = arith.constant 2 : index
    %c0_125 = arith.constant 0 : index
    %c0_126 = arith.constant 0 : index
    %114 = vector.load %arg4[%c1_123, %c2_124, %c0_125, %c0_126] : memref<3x9x64x32xbf16, #tpu.memory_space<vmem>>, vector<1x1x64x32xbf16>
    %115 = vector.shape_cast %114 : vector<1x1x64x32xbf16> to vector<64x32xbf16>
    %cst_127 = arith.constant dense<0.000000e+00> : vector<32x32xf32>
    %116 = tpu.matmul %113, %115, %cst_127 {dimension_numbers = #tpu.dot_dimension_numbers<[1], [0], [0], [1], [0, 0, 1, 1], [], []>} : vector<32x64xbf16>, vector<64x32xbf16>, vector<32x32xf32> -> vector<32x32xf32>
    %117 = arith.addf %109, %116 : vector<32x32xf32>
    %c1_128 = arith.constant 1 : index
    %c3_129 = arith.constant 3 : index
    %c0_130 = arith.constant 0 : index
    %c0_131 = arith.constant 0 : index
    %118 = vector.load %arg2[%c1_128, %c3_129, %c0_130, %c0_131] : memref<3x9x32x32xbf16, #tpu.memory_space<vmem>>, vector<1x1x32x32xbf16>
    %119 = vector.shape_cast %118 : vector<1x1x32x32xbf16> to vector<32x32xbf16>
    %cst_132 = arith.constant dense<0.000000e+00> : vector<32x64xf32>
    %120 = tpu.matmul %119, %0, %cst_132 {dimension_numbers = #tpu.dot_dimension_numbers<[1], [0], [0], [1], [0, 0, 1, 1], [], []>} : vector<32x32xbf16>, vector<32x64xbf16>, vector<32x64xf32> -> vector<32x64xf32>
    %121 = arith.truncf %120 : vector<32x64xf32> to vector<32x64xbf16>
    %c1_133 = arith.constant 1 : index
    %c3_134 = arith.constant 3 : index
    %c0_135 = arith.constant 0 : index
    %c0_136 = arith.constant 0 : index
    %122 = vector.load %arg4[%c1_133, %c3_134, %c0_135, %c0_136] : memref<3x9x64x32xbf16, #tpu.memory_space<vmem>>, vector<1x1x64x32xbf16>
    %123 = vector.shape_cast %122 : vector<1x1x64x32xbf16> to vector<64x32xbf16>
    %cst_137 = arith.constant dense<0.000000e+00> : vector<32x32xf32>
    %124 = tpu.matmul %121, %123, %cst_137 {dimension_numbers = #tpu.dot_dimension_numbers<[1], [0], [0], [1], [0, 0, 1, 1], [], []>} : vector<32x64xbf16>, vector<64x32xbf16>, vector<32x32xf32> -> vector<32x32xf32>
    %125 = arith.addf %117, %124 : vector<32x32xf32>
    %c1_138 = arith.constant 1 : index
    %c4_139 = arith.constant 4 : index
    %c0_140 = arith.constant 0 : index
    %c0_141 = arith.constant 0 : index
    %126 = vector.load %arg2[%c1_138, %c4_139, %c0_140, %c0_141] : memref<3x9x32x32xbf16, #tpu.memory_space<vmem>>, vector<1x1x32x32xbf16>
    %127 = vector.shape_cast %126 : vector<1x1x32x32xbf16> to vector<32x32xbf16>
    %cst_142 = arith.constant dense<0.000000e+00> : vector<32x64xf32>
    %128 = tpu.matmul %127, %0, %cst_142 {dimension_numbers = #tpu.dot_dimension_numbers<[1], [0], [0], [1], [0, 0, 1, 1], [], []>} : vector<32x32xbf16>, vector<32x64xbf16>, vector<32x64xf32> -> vector<32x64xf32>
    %129 = arith.truncf %128 : vector<32x64xf32> to vector<32x64xbf16>
    %c1_143 = arith.constant 1 : index
    %c4_144 = arith.constant 4 : index
    %c0_145 = arith.constant 0 : index
    %c0_146 = arith.constant 0 : index
    %130 = vector.load %arg4[%c1_143, %c4_144, %c0_145, %c0_146] : memref<3x9x64x32xbf16, #tpu.memory_space<vmem>>, vector<1x1x64x32xbf16>
    %131 = vector.shape_cast %130 : vector<1x1x64x32xbf16> to vector<64x32xbf16>
    %cst_147 = arith.constant dense<0.000000e+00> : vector<32x32xf32>
    %132 = tpu.matmul %129, %131, %cst_147 {dimension_numbers = #tpu.dot_dimension_numbers<[1], [0], [0], [1], [0, 0, 1, 1], [], []>} : vector<32x64xbf16>, vector<64x32xbf16>, vector<32x32xf32> -> vector<32x32xf32>
    %133 = arith.addf %125, %132 : vector<32x32xf32>
    %c1_148 = arith.constant 1 : index
    %c5_149 = arith.constant 5 : index
    %c0_150 = arith.constant 0 : index
    %c0_151 = arith.constant 0 : index
    %134 = vector.load %arg2[%c1_148, %c5_149, %c0_150, %c0_151] : memref<3x9x32x32xbf16, #tpu.memory_space<vmem>>, vector<1x1x32x32xbf16>
    %135 = vector.shape_cast %134 : vector<1x1x32x32xbf16> to vector<32x32xbf16>
    %cst_152 = arith.constant dense<0.000000e+00> : vector<32x64xf32>
    %136 = tpu.matmul %135, %0, %cst_152 {dimension_numbers = #tpu.dot_dimension_numbers<[1], [0], [0], [1], [0, 0, 1, 1], [], []>} : vector<32x32xbf16>, vector<32x64xbf16>, vector<32x64xf32> -> vector<32x64xf32>
    %137 = arith.truncf %136 : vector<32x64xf32> to vector<32x64xbf16>
    %c1_153 = arith.constant 1 : index
    %c5_154 = arith.constant 5 : index
    %c0_155 = arith.constant 0 : index
    %c0_156 = arith.constant 0 : index
    %138 = vector.load %arg4[%c1_153, %c5_154, %c0_155, %c0_156] : memref<3x9x64x32xbf16, #tpu.memory_space<vmem>>, vector<1x1x64x32xbf16>
    %139 = vector.shape_cast %138 : vector<1x1x64x32xbf16> to vector<64x32xbf16>
    %cst_157 = arith.constant dense<0.000000e+00> : vector<32x32xf32>
    %140 = tpu.matmul %137, %139, %cst_157 {dimension_numbers = #tpu.dot_dimension_numbers<[1], [0], [0], [1], [0, 0, 1, 1], [], []>} : vector<32x64xbf16>, vector<64x32xbf16>, vector<32x32xf32> -> vector<32x32xf32>
    %141 = arith.addf %133, %140 : vector<32x32xf32>
    %c1_158 = arith.constant 1 : index
    %c6_159 = arith.constant 6 : index
    %c0_160 = arith.constant 0 : index
    %c0_161 = arith.constant 0 : index
    %142 = vector.load %arg2[%c1_158, %c6_159, %c0_160, %c0_161] : memref<3x9x32x32xbf16, #tpu.memory_space<vmem>>, vector<1x1x32x32xbf16>
    %143 = vector.shape_cast %142 : vector<1x1x32x32xbf16> to vector<32x32xbf16>
    %cst_162 = arith.constant dense<0.000000e+00> : vector<32x64xf32>
    %144 = tpu.matmul %143, %0, %cst_162 {dimension_numbers = #tpu.dot_dimension_numbers<[1], [0], [0], [1], [0, 0, 1, 1], [], []>} : vector<32x32xbf16>, vector<32x64xbf16>, vector<32x64xf32> -> vector<32x64xf32>
    %145 = arith.truncf %144 : vector<32x64xf32> to vector<32x64xbf16>
    %c1_163 = arith.constant 1 : index
    %c6_164 = arith.constant 6 : index
    %c0_165 = arith.constant 0 : index
    %c0_166 = arith.constant 0 : index
    %146 = vector.load %arg4[%c1_163, %c6_164, %c0_165, %c0_166] : memref<3x9x64x32xbf16, #tpu.memory_space<vmem>>, vector<1x1x64x32xbf16>
    %147 = vector.shape_cast %146 : vector<1x1x64x32xbf16> to vector<64x32xbf16>
    %cst_167 = arith.constant dense<0.000000e+00> : vector<32x32xf32>
    %148 = tpu.matmul %145, %147, %cst_167 {dimension_numbers = #tpu.dot_dimension_numbers<[1], [0], [0], [1], [0, 0, 1, 1], [], []>} : vector<32x64xbf16>, vector<64x32xbf16>, vector<32x32xf32> -> vector<32x32xf32>
    %149 = arith.addf %141, %148 : vector<32x32xf32>
    %c1_168 = arith.constant 1 : index
    %c7_169 = arith.constant 7 : index
    %c0_170 = arith.constant 0 : index
    %c0_171 = arith.constant 0 : index
    %150 = vector.load %arg2[%c1_168, %c7_169, %c0_170, %c0_171] : memref<3x9x32x32xbf16, #tpu.memory_space<vmem>>, vector<1x1x32x32xbf16>
    %151 = vector.shape_cast %150 : vector<1x1x32x32xbf16> to vector<32x32xbf16>
    %cst_172 = arith.constant dense<0.000000e+00> : vector<32x64xf32>
    %152 = tpu.matmul %151, %0, %cst_172 {dimension_numbers = #tpu.dot_dimension_numbers<[1], [0], [0], [1], [0, 0, 1, 1], [], []>} : vector<32x32xbf16>, vector<32x64xbf16>, vector<32x64xf32> -> vector<32x64xf32>
    %153 = arith.truncf %152 : vector<32x64xf32> to vector<32x64xbf16>
    %c1_173 = arith.constant 1 : index
    %c7_174 = arith.constant 7 : index
    %c0_175 = arith.constant 0 : index
    %c0_176 = arith.constant 0 : index
    %154 = vector.load %arg4[%c1_173, %c7_174, %c0_175, %c0_176] : memref<3x9x64x32xbf16, #tpu.memory_space<vmem>>, vector<1x1x64x32xbf16>
    %155 = vector.shape_cast %154 : vector<1x1x64x32xbf16> to vector<64x32xbf16>
    %cst_177 = arith.constant dense<0.000000e+00> : vector<32x32xf32>
    %156 = tpu.matmul %153, %155, %cst_177 {dimension_numbers = #tpu.dot_dimension_numbers<[1], [0], [0], [1], [0, 0, 1, 1], [], []>} : vector<32x64xbf16>, vector<64x32xbf16>, vector<32x32xf32> -> vector<32x32xf32>
    %157 = arith.addf %149, %156 : vector<32x32xf32>
    %c1_178 = arith.constant 1 : index
    %c8_179 = arith.constant 8 : index
    %c0_180 = arith.constant 0 : index
    %c0_181 = arith.constant 0 : index
    %158 = vector.load %arg2[%c1_178, %c8_179, %c0_180, %c0_181] : memref<3x9x32x32xbf16, #tpu.memory_space<vmem>>, vector<1x1x32x32xbf16>
    %159 = vector.shape_cast %158 : vector<1x1x32x32xbf16> to vector<32x32xbf16>
    %cst_182 = arith.constant dense<0.000000e+00> : vector<32x64xf32>
    %160 = tpu.matmul %159, %0, %cst_182 {dimension_numbers = #tpu.dot_dimension_numbers<[1], [0], [0], [1], [0, 0, 1, 1], [], []>} : vector<32x32xbf16>, vector<32x64xbf16>, vector<32x64xf32> -> vector<32x64xf32>
    %161 = arith.truncf %160 : vector<32x64xf32> to vector<32x64xbf16>
    %c1_183 = arith.constant 1 : index
    %c8_184 = arith.constant 8 : index
    %c0_185 = arith.constant 0 : index
    %c0_186 = arith.constant 0 : index
    %162 = vector.load %arg4[%c1_183, %c8_184, %c0_185, %c0_186] : memref<3x9x64x32xbf16, #tpu.memory_space<vmem>>, vector<1x1x64x32xbf16>
    %163 = vector.shape_cast %162 : vector<1x1x64x32xbf16> to vector<64x32xbf16>
    %cst_187 = arith.constant dense<0.000000e+00> : vector<32x32xf32>
    %164 = tpu.matmul %161, %163, %cst_187 {dimension_numbers = #tpu.dot_dimension_numbers<[1], [0], [0], [1], [0, 0, 1, 1], [], []>} : vector<32x64xbf16>, vector<64x32xbf16>, vector<32x32xf32> -> vector<32x32xf32>
    %165 = arith.addf %157, %164 : vector<32x32xf32>
    %c2_188 = arith.constant 2 : index
    %c0_189 = arith.constant 0 : index
    %166 = vector.load %arg9[%c2_188, %c0_189] : memref<6x32xf32, #tpu.memory_space<vmem>>, vector<1x32xf32>
    %167 = vector.broadcast %166 : vector<1x32xf32> to vector<32x32xf32>
    %168 = arith.addf %165, %167 : vector<32x32xf32>
    %cst_190 = arith.constant 0.000000e+00 : f32
    %169 = vector.broadcast %cst_190 : f32 to vector<32x32xf32>
    %170 = arith.maximumf %168, %169 : vector<32x32xf32>
    %171 = arith.truncf %170 : vector<32x32xf32> to vector<32x32xbf16>
    %c64 = arith.constant 64 : index
    %c0_191 = arith.constant 0 : index
    %172 = vector.load %arg6[%c64, %c0_191] : memref<160x32xbf16, #tpu.memory_space<vmem>>, vector<32x32xbf16>
    %cst_192 = arith.constant dense<0.000000e+00> : vector<32x32xf32>
    %173 = tpu.matmul %171, %172, %cst_192 {dimension_numbers = #tpu.dot_dimension_numbers<[1], [0], [0], [1], [0, 0, 1, 1], [], []>} : vector<32x32xbf16>, vector<32x32xbf16>, vector<32x32xf32> -> vector<32x32xf32>
    %174 = arith.addf %92, %173 : vector<32x32xf32>
    %cst_193 = arith.constant 0.000000e+00 : f32
    %175 = vector.broadcast %cst_193 : f32 to vector<32x32xf32>
    %c2_194 = arith.constant 2 : index
    %c0_195 = arith.constant 0 : index
    %c0_196 = arith.constant 0 : index
    %c0_197 = arith.constant 0 : index
    %176 = vector.load %arg2[%c2_194, %c0_195, %c0_196, %c0_197] : memref<3x9x32x32xbf16, #tpu.memory_space<vmem>>, vector<1x1x32x32xbf16>
    %177 = vector.shape_cast %176 : vector<1x1x32x32xbf16> to vector<32x32xbf16>
    %cst_198 = arith.constant dense<0.000000e+00> : vector<32x64xf32>
    %178 = tpu.matmul %177, %0, %cst_198 {dimension_numbers = #tpu.dot_dimension_numbers<[1], [0], [0], [1], [0, 0, 1, 1], [], []>} : vector<32x32xbf16>, vector<32x64xbf16>, vector<32x64xf32> -> vector<32x64xf32>
    %179 = arith.truncf %178 : vector<32x64xf32> to vector<32x64xbf16>
    %c2_199 = arith.constant 2 : index
    %c0_200 = arith.constant 0 : index
    %c0_201 = arith.constant 0 : index
    %c0_202 = arith.constant 0 : index
    %180 = vector.load %arg4[%c2_199, %c0_200, %c0_201, %c0_202] : memref<3x9x64x32xbf16, #tpu.memory_space<vmem>>, vector<1x1x64x32xbf16>
    %181 = vector.shape_cast %180 : vector<1x1x64x32xbf16> to vector<64x32xbf16>
    %cst_203 = arith.constant dense<0.000000e+00> : vector<32x32xf32>
    %182 = tpu.matmul %179, %181, %cst_203 {dimension_numbers = #tpu.dot_dimension_numbers<[1], [0], [0], [1], [0, 0, 1, 1], [], []>} : vector<32x64xbf16>, vector<64x32xbf16>, vector<32x32xf32> -> vector<32x32xf32>
    %183 = arith.addf %175, %182 : vector<32x32xf32>
    %c2_204 = arith.constant 2 : index
    %c1_205 = arith.constant 1 : index
    %c0_206 = arith.constant 0 : index
    %c0_207 = arith.constant 0 : index
    %184 = vector.load %arg2[%c2_204, %c1_205, %c0_206, %c0_207] : memref<3x9x32x32xbf16, #tpu.memory_space<vmem>>, vector<1x1x32x32xbf16>
    %185 = vector.shape_cast %184 : vector<1x1x32x32xbf16> to vector<32x32xbf16>
    %cst_208 = arith.constant dense<0.000000e+00> : vector<32x64xf32>
    %186 = tpu.matmul %185, %0, %cst_208 {dimension_numbers = #tpu.dot_dimension_numbers<[1], [0], [0], [1], [0, 0, 1, 1], [], []>} : vector<32x32xbf16>, vector<32x64xbf16>, vector<32x64xf32> -> vector<32x64xf32>
    %187 = arith.truncf %186 : vector<32x64xf32> to vector<32x64xbf16>
    %c2_209 = arith.constant 2 : index
    %c1_210 = arith.constant 1 : index
    %c0_211 = arith.constant 0 : index
    %c0_212 = arith.constant 0 : index
    %188 = vector.load %arg4[%c2_209, %c1_210, %c0_211, %c0_212] : memref<3x9x64x32xbf16, #tpu.memory_space<vmem>>, vector<1x1x64x32xbf16>
    %189 = vector.shape_cast %188 : vector<1x1x64x32xbf16> to vector<64x32xbf16>
    %cst_213 = arith.constant dense<0.000000e+00> : vector<32x32xf32>
    %190 = tpu.matmul %187, %189, %cst_213 {dimension_numbers = #tpu.dot_dimension_numbers<[1], [0], [0], [1], [0, 0, 1, 1], [], []>} : vector<32x64xbf16>, vector<64x32xbf16>, vector<32x32xf32> -> vector<32x32xf32>
    %191 = arith.addf %183, %190 : vector<32x32xf32>
    %c2_214 = arith.constant 2 : index
    %c2_215 = arith.constant 2 : index
    %c0_216 = arith.constant 0 : index
    %c0_217 = arith.constant 0 : index
    %192 = vector.load %arg2[%c2_214, %c2_215, %c0_216, %c0_217] : memref<3x9x32x32xbf16, #tpu.memory_space<vmem>>, vector<1x1x32x32xbf16>
    %193 = vector.shape_cast %192 : vector<1x1x32x32xbf16> to vector<32x32xbf16>
    %cst_218 = arith.constant dense<0.000000e+00> : vector<32x64xf32>
    %194 = tpu.matmul %193, %0, %cst_218 {dimension_numbers = #tpu.dot_dimension_numbers<[1], [0], [0], [1], [0, 0, 1, 1], [], []>} : vector<32x32xbf16>, vector<32x64xbf16>, vector<32x64xf32> -> vector<32x64xf32>
    %195 = arith.truncf %194 : vector<32x64xf32> to vector<32x64xbf16>
    %c2_219 = arith.constant 2 : index
    %c2_220 = arith.constant 2 : index
    %c0_221 = arith.constant 0 : index
    %c0_222 = arith.constant 0 : index
    %196 = vector.load %arg4[%c2_219, %c2_220, %c0_221, %c0_222] : memref<3x9x64x32xbf16, #tpu.memory_space<vmem>>, vector<1x1x64x32xbf16>
    %197 = vector.shape_cast %196 : vector<1x1x64x32xbf16> to vector<64x32xbf16>
    %cst_223 = arith.constant dense<0.000000e+00> : vector<32x32xf32>
    %198 = tpu.matmul %195, %197, %cst_223 {dimension_numbers = #tpu.dot_dimension_numbers<[1], [0], [0], [1], [0, 0, 1, 1], [], []>} : vector<32x64xbf16>, vector<64x32xbf16>, vector<32x32xf32> -> vector<32x32xf32>
    %199 = arith.addf %191, %198 : vector<32x32xf32>
    %c2_224 = arith.constant 2 : index
    %c3_225 = arith.constant 3 : index
    %c0_226 = arith.constant 0 : index
    %c0_227 = arith.constant 0 : index
    %200 = vector.load %arg2[%c2_224, %c3_225, %c0_226, %c0_227] : memref<3x9x32x32xbf16, #tpu.memory_space<vmem>>, vector<1x1x32x32xbf16>
    %201 = vector.shape_cast %200 : vector<1x1x32x32xbf16> to vector<32x32xbf16>
    %cst_228 = arith.constant dense<0.000000e+00> : vector<32x64xf32>
    %202 = tpu.matmul %201, %0, %cst_228 {dimension_numbers = #tpu.dot_dimension_numbers<[1], [0], [0], [1], [0, 0, 1, 1], [], []>} : vector<32x32xbf16>, vector<32x64xbf16>, vector<32x64xf32> -> vector<32x64xf32>
    %203 = arith.truncf %202 : vector<32x64xf32> to vector<32x64xbf16>
    %c2_229 = arith.constant 2 : index
    %c3_230 = arith.constant 3 : index
    %c0_231 = arith.constant 0 : index
    %c0_232 = arith.constant 0 : index
    %204 = vector.load %arg4[%c2_229, %c3_230, %c0_231, %c0_232] : memref<3x9x64x32xbf16, #tpu.memory_space<vmem>>, vector<1x1x64x32xbf16>
    %205 = vector.shape_cast %204 : vector<1x1x64x32xbf16> to vector<64x32xbf16>
    %cst_233 = arith.constant dense<0.000000e+00> : vector<32x32xf32>
    %206 = tpu.matmul %203, %205, %cst_233 {dimension_numbers = #tpu.dot_dimension_numbers<[1], [0], [0], [1], [0, 0, 1, 1], [], []>} : vector<32x64xbf16>, vector<64x32xbf16>, vector<32x32xf32> -> vector<32x32xf32>
    %207 = arith.addf %199, %206 : vector<32x32xf32>
    %c2_234 = arith.constant 2 : index
    %c4_235 = arith.constant 4 : index
    %c0_236 = arith.constant 0 : index
    %c0_237 = arith.constant 0 : index
    %208 = vector.load %arg2[%c2_234, %c4_235, %c0_236, %c0_237] : memref<3x9x32x32xbf16, #tpu.memory_space<vmem>>, vector<1x1x32x32xbf16>
    %209 = vector.shape_cast %208 : vector<1x1x32x32xbf16> to vector<32x32xbf16>
    %cst_238 = arith.constant dense<0.000000e+00> : vector<32x64xf32>
    %210 = tpu.matmul %209, %0, %cst_238 {dimension_numbers = #tpu.dot_dimension_numbers<[1], [0], [0], [1], [0, 0, 1, 1], [], []>} : vector<32x32xbf16>, vector<32x64xbf16>, vector<32x64xf32> -> vector<32x64xf32>
    %211 = arith.truncf %210 : vector<32x64xf32> to vector<32x64xbf16>
    %c2_239 = arith.constant 2 : index
    %c4_240 = arith.constant 4 : index
    %c0_241 = arith.constant 0 : index
    %c0_242 = arith.constant 0 : index
    %212 = vector.load %arg4[%c2_239, %c4_240, %c0_241, %c0_242] : memref<3x9x64x32xbf16, #tpu.memory_space<vmem>>, vector<1x1x64x32xbf16>
    %213 = vector.shape_cast %212 : vector<1x1x64x32xbf16> to vector<64x32xbf16>
    %cst_243 = arith.constant dense<0.000000e+00> : vector<32x32xf32>
    %214 = tpu.matmul %211, %213, %cst_243 {dimension_numbers = #tpu.dot_dimension_numbers<[1], [0], [0], [1], [0, 0, 1, 1], [], []>} : vector<32x64xbf16>, vector<64x32xbf16>, vector<32x32xf32> -> vector<32x32xf32>
    %215 = arith.addf %207, %214 : vector<32x32xf32>
    %c2_244 = arith.constant 2 : index
    %c5_245 = arith.constant 5 : index
    %c0_246 = arith.constant 0 : index
    %c0_247 = arith.constant 0 : index
    %216 = vector.load %arg2[%c2_244, %c5_245, %c0_246, %c0_247] : memref<3x9x32x32xbf16, #tpu.memory_space<vmem>>, vector<1x1x32x32xbf16>
    %217 = vector.shape_cast %216 : vector<1x1x32x32xbf16> to vector<32x32xbf16>
    %cst_248 = arith.constant dense<0.000000e+00> : vector<32x64xf32>
    %218 = tpu.matmul %217, %0, %cst_248 {dimension_numbers = #tpu.dot_dimension_numbers<[1], [0], [0], [1], [0, 0, 1, 1], [], []>} : vector<32x32xbf16>, vector<32x64xbf16>, vector<32x64xf32> -> vector<32x64xf32>
    %219 = arith.truncf %218 : vector<32x64xf32> to vector<32x64xbf16>
    %c2_249 = arith.constant 2 : index
    %c5_250 = arith.constant 5 : index
    %c0_251 = arith.constant 0 : index
    %c0_252 = arith.constant 0 : index
    %220 = vector.load %arg4[%c2_249, %c5_250, %c0_251, %c0_252] : memref<3x9x64x32xbf16, #tpu.memory_space<vmem>>, vector<1x1x64x32xbf16>
    %221 = vector.shape_cast %220 : vector<1x1x64x32xbf16> to vector<64x32xbf16>
    %cst_253 = arith.constant dense<0.000000e+00> : vector<32x32xf32>
    %222 = tpu.matmul %219, %221, %cst_253 {dimension_numbers = #tpu.dot_dimension_numbers<[1], [0], [0], [1], [0, 0, 1, 1], [], []>} : vector<32x64xbf16>, vector<64x32xbf16>, vector<32x32xf32> -> vector<32x32xf32>
    %223 = arith.addf %215, %222 : vector<32x32xf32>
    %c2_254 = arith.constant 2 : index
    %c6_255 = arith.constant 6 : index
    %c0_256 = arith.constant 0 : index
    %c0_257 = arith.constant 0 : index
    %224 = vector.load %arg2[%c2_254, %c6_255, %c0_256, %c0_257] : memref<3x9x32x32xbf16, #tpu.memory_space<vmem>>, vector<1x1x32x32xbf16>
    %225 = vector.shape_cast %224 : vector<1x1x32x32xbf16> to vector<32x32xbf16>
    %cst_258 = arith.constant dense<0.000000e+00> : vector<32x64xf32>
    %226 = tpu.matmul %225, %0, %cst_258 {dimension_numbers = #tpu.dot_dimension_numbers<[1], [0], [0], [1], [0, 0, 1, 1], [], []>} : vector<32x32xbf16>, vector<32x64xbf16>, vector<32x64xf32> -> vector<32x64xf32>
    %227 = arith.truncf %226 : vector<32x64xf32> to vector<32x64xbf16>
    %c2_259 = arith.constant 2 : index
    %c6_260 = arith.constant 6 : index
    %c0_261 = arith.constant 0 : index
    %c0_262 = arith.constant 0 : index
    %228 = vector.load %arg4[%c2_259, %c6_260, %c0_261, %c0_262] : memref<3x9x64x32xbf16, #tpu.memory_space<vmem>>, vector<1x1x64x32xbf16>
    %229 = vector.shape_cast %228 : vector<1x1x64x32xbf16> to vector<64x32xbf16>
    %cst_263 = arith.constant dense<0.000000e+00> : vector<32x32xf32>
    %230 = tpu.matmul %227, %229, %cst_263 {dimension_numbers = #tpu.dot_dimension_numbers<[1], [0], [0], [1], [0, 0, 1, 1], [], []>} : vector<32x64xbf16>, vector<64x32xbf16>, vector<32x32xf32> -> vector<32x32xf32>
    %231 = arith.addf %223, %230 : vector<32x32xf32>
    %c2_264 = arith.constant 2 : index
    %c7_265 = arith.constant 7 : index
    %c0_266 = arith.constant 0 : index
    %c0_267 = arith.constant 0 : index
    %232 = vector.load %arg2[%c2_264, %c7_265, %c0_266, %c0_267] : memref<3x9x32x32xbf16, #tpu.memory_space<vmem>>, vector<1x1x32x32xbf16>
    %233 = vector.shape_cast %232 : vector<1x1x32x32xbf16> to vector<32x32xbf16>
    %cst_268 = arith.constant dense<0.000000e+00> : vector<32x64xf32>
    %234 = tpu.matmul %233, %0, %cst_268 {dimension_numbers = #tpu.dot_dimension_numbers<[1], [0], [0], [1], [0, 0, 1, 1], [], []>} : vector<32x32xbf16>, vector<32x64xbf16>, vector<32x64xf32> -> vector<32x64xf32>
    %235 = arith.truncf %234 : vector<32x64xf32> to vector<32x64xbf16>
    %c2_269 = arith.constant 2 : index
    %c7_270 = arith.constant 7 : index
    %c0_271 = arith.constant 0 : index
    %c0_272 = arith.constant 0 : index
    %236 = vector.load %arg4[%c2_269, %c7_270, %c0_271, %c0_272] : memref<3x9x64x32xbf16, #tpu.memory_space<vmem>>, vector<1x1x64x32xbf16>
    %237 = vector.shape_cast %236 : vector<1x1x64x32xbf16> to vector<64x32xbf16>
    %cst_273 = arith.constant dense<0.000000e+00> : vector<32x32xf32>
    %238 = tpu.matmul %235, %237, %cst_273 {dimension_numbers = #tpu.dot_dimension_numbers<[1], [0], [0], [1], [0, 0, 1, 1], [], []>} : vector<32x64xbf16>, vector<64x32xbf16>, vector<32x32xf32> -> vector<32x32xf32>
    %239 = arith.addf %231, %238 : vector<32x32xf32>
    %c2_274 = arith.constant 2 : index
    %c8_275 = arith.constant 8 : index
    %c0_276 = arith.constant 0 : index
    %c0_277 = arith.constant 0 : index
    %240 = vector.load %arg2[%c2_274, %c8_275, %c0_276, %c0_277] : memref<3x9x32x32xbf16, #tpu.memory_space<vmem>>, vector<1x1x32x32xbf16>
    %241 = vector.shape_cast %240 : vector<1x1x32x32xbf16> to vector<32x32xbf16>
    %cst_278 = arith.constant dense<0.000000e+00> : vector<32x64xf32>
    %242 = tpu.matmul %241, %0, %cst_278 {dimension_numbers = #tpu.dot_dimension_numbers<[1], [0], [0], [1], [0, 0, 1, 1], [], []>} : vector<32x32xbf16>, vector<32x64xbf16>, vector<32x64xf32> -> vector<32x64xf32>
    %243 = arith.truncf %242 : vector<32x64xf32> to vector<32x64xbf16>
    %c2_279 = arith.constant 2 : index
    %c8_280 = arith.constant 8 : index
    %c0_281 = arith.constant 0 : index
    %c0_282 = arith.constant 0 : index
    %244 = vector.load %arg4[%c2_279, %c8_280, %c0_281, %c0_282] : memref<3x9x64x32xbf16, #tpu.memory_space<vmem>>, vector<1x1x64x32xbf16>
    %245 = vector.shape_cast %244 : vector<1x1x64x32xbf16> to vector<64x32xbf16>
    %cst_283 = arith.constant dense<0.000000e+00> : vector<32x32xf32>
    %246 = tpu.matmul %243, %245, %cst_283 {dimension_numbers = #tpu.dot_dimension_numbers<[1], [0], [0], [1], [0, 0, 1, 1], [], []>} : vector<32x64xbf16>, vector<64x32xbf16>, vector<32x32xf32> -> vector<32x32xf32>
    %247 = arith.addf %239, %246 : vector<32x32xf32>
    %c3_284 = arith.constant 3 : index
    %c0_285 = arith.constant 0 : index
    %248 = vector.load %arg9[%c3_284, %c0_285] : memref<6x32xf32, #tpu.memory_space<vmem>>, vector<1x32xf32>
    %249 = vector.broadcast %248 : vector<1x32xf32> to vector<32x32xf32>
    %250 = arith.addf %247, %249 : vector<32x32xf32>
    %cst_286 = arith.constant 0.000000e+00 : f32
    %251 = vector.broadcast %cst_286 : f32 to vector<32x32xf32>
    %252 = arith.maximumf %250, %251 : vector<32x32xf32>
    %253 = arith.truncf %252 : vector<32x32xf32> to vector<32x32xbf16>
    %c96 = arith.constant 96 : index
    %c0_287 = arith.constant 0 : index
    %254 = vector.load %arg6[%c96, %c0_287] : memref<160x32xbf16, #tpu.memory_space<vmem>>, vector<32x32xbf16>
    %cst_288 = arith.constant dense<0.000000e+00> : vector<32x32xf32>
    %255 = tpu.matmul %253, %254, %cst_288 {dimension_numbers = #tpu.dot_dimension_numbers<[1], [0], [0], [1], [0, 0, 1, 1], [], []>} : vector<32x32xbf16>, vector<32x32xbf16>, vector<32x32xf32> -> vector<32x32xf32>
    %256 = arith.addf %174, %255 : vector<32x32xf32>
    %257 = vector.extract_strided_slice %0 {offsets = [0, 0], sizes = [16, 64], strides = [1, 1]} : vector<32x64xbf16> to vector<16x64xbf16>
    %258 = arith.extf %257 : vector<16x64xbf16> to vector<16x64xf32>
    %cst_289 = arith.constant dense<0.000000e+00> : vector<64xf32>
    %259 = vector.multi_reduction <add>, %258, %cst_289 [0] : vector<16x64xf32> to vector<64xf32>
    %260 = vector.shape_cast %259 : vector<64xf32> to vector<1x64xf32>
    %cst_290 = arith.constant 1.600000e+01 : f32
    %261 = vector.broadcast %cst_290 : f32 to vector<1x64xf32>
    %262 = arith.divf %260, %261 : vector<1x64xf32>
    %263 = vector.extract_strided_slice %0 {offsets = [16, 0], sizes = [16, 64], strides = [1, 1]} : vector<32x64xbf16> to vector<16x64xbf16>
    %264 = arith.extf %263 : vector<16x64xbf16> to vector<16x64xf32>
    %cst_291 = arith.constant dense<0.000000e+00> : vector<64xf32>
    %265 = vector.multi_reduction <add>, %264, %cst_291 [0] : vector<16x64xf32> to vector<64xf32>
    %266 = vector.shape_cast %265 : vector<64xf32> to vector<1x64xf32>
    %cst_292 = arith.constant 1.600000e+01 : f32
    %267 = vector.broadcast %cst_292 : f32 to vector<1x64xf32>
    %268 = arith.divf %266, %267 : vector<1x64xf32>
    %269 = tpu.concatenate %262, %268 in 0 : vector<1x64xf32>, vector<1x64xf32> -> vector<2x64xf32>
    %270 = arith.truncf %269 : vector<2x64xf32> to vector<2x64xbf16>
    %c0_293 = arith.constant 0 : index
    %c0_294 = arith.constant 0 : index
    %271 = vector.load %arg5[%c0_293, %c0_294] : memref<64x32xbf16, #tpu.memory_space<vmem>>, vector<64x32xbf16>
    %cst_295 = arith.constant dense<0.000000e+00> : vector<2x32xf32>
    %272 = tpu.matmul %270, %271, %cst_295 {dimension_numbers = #tpu.dot_dimension_numbers<[1], [0], [0], [1], [0, 0, 1, 1], [], []>} : vector<2x64xbf16>, vector<64x32xbf16>, vector<2x32xf32> -> vector<2x32xf32>
    %c4_296 = arith.constant 4 : index
    %c0_297 = arith.constant 0 : index
    %273 = vector.load %arg9[%c4_296, %c0_297] : memref<6x32xf32, #tpu.memory_space<vmem>>, vector<1x32xf32>
    %274 = vector.broadcast %273 : vector<1x32xf32> to vector<2x32xf32>
    %275 = arith.addf %272, %274 : vector<2x32xf32>
    %cst_298 = arith.constant 0.000000e+00 : f32
    %276 = vector.broadcast %cst_298 : f32 to vector<2x32xf32>
    %277 = arith.maximumf %275, %276 : vector<2x32xf32>
    %278 = arith.truncf %277 : vector<2x32xf32> to vector<2x32xbf16>
    %c128 = arith.constant 128 : index
    %c0_299 = arith.constant 0 : index
    %279 = vector.load %arg6[%c128, %c0_299] : memref<160x32xbf16, #tpu.memory_space<vmem>>, vector<32x32xbf16>
    %cst_300 = arith.constant dense<0.000000e+00> : vector<2x32xf32>
    %280 = tpu.matmul %278, %279, %cst_300 {dimension_numbers = #tpu.dot_dimension_numbers<[1], [0], [0], [1], [0, 0, 1, 1], [], []>} : vector<2x32xbf16>, vector<32x32xbf16>, vector<2x32xf32> -> vector<2x32xf32>
    %281 = vector.extract_strided_slice %280 {offsets = [0, 0], sizes = [1, 32], strides = [1, 1]} : vector<2x32xf32> to vector<1x32xf32>
    %282 = vector.shape_cast %281 : vector<1x32xf32> to vector<1x32xf32>
    %283 = vector.broadcast %282 : vector<1x32xf32> to vector<16x32xf32>
    %284 = vector.extract_strided_slice %280 {offsets = [1, 0], sizes = [1, 32], strides = [1, 1]} : vector<2x32xf32> to vector<1x32xf32>
    %285 = vector.shape_cast %284 : vector<1x32xf32> to vector<1x32xf32>
    %286 = vector.broadcast %285 : vector<1x32xf32> to vector<16x32xf32>
    %287 = tpu.concatenate %283, %286 in 0 : vector<16x32xf32>, vector<16x32xf32> -> vector<32x32xf32>
    %288 = arith.addf %256, %287 : vector<32x32xf32>
    %c5_301 = arith.constant 5 : index
    %c0_302 = arith.constant 0 : index
    %289 = vector.load %arg9[%c5_301, %c0_302] : memref<6x32xf32, #tpu.memory_space<vmem>>, vector<1x32xf32>
    %290 = vector.broadcast %289 : vector<1x32xf32> to vector<32x32xf32>
    %291 = arith.addf %288, %290 : vector<32x32xf32>
    %cst_303 = arith.constant 0.000000e+00 : f32
    %292 = vector.broadcast %cst_303 : f32 to vector<32x32xf32>
    %293 = arith.maximumf %291, %292 : vector<32x32xf32>
    %294 = arith.truncf %293 : vector<32x32xf32> to vector<32x32xbf16>
    %cst_304 = arith.constant 0.000000e+00 : f32
    %295 = vector.broadcast %cst_304 : f32 to vector<32x32xf32>
    %c0_305 = arith.constant 0 : index
    %c0_306 = arith.constant 0 : index
    %c0_307 = arith.constant 0 : index
    %c0_308 = arith.constant 0 : index
    %296 = vector.load %arg2[%c0_305, %c0_306, %c0_307, %c0_308] : memref<3x9x32x32xbf16, #tpu.memory_space<vmem>>, vector<1x1x32x32xbf16>
    %297 = vector.shape_cast %296 : vector<1x1x32x32xbf16> to vector<32x32xbf16>
    %cst_309 = arith.constant dense<0.000000e+00> : vector<32x32xf32>
    %298 = tpu.matmul %297, %294, %cst_309 {dimension_numbers = #tpu.dot_dimension_numbers<[1], [0], [0], [1], [0, 0, 1, 1], [], []>} : vector<32x32xbf16>, vector<32x32xbf16>, vector<32x32xf32> -> vector<32x32xf32>
    %299 = arith.truncf %298 : vector<32x32xf32> to vector<32x32xbf16>
    %c0_310 = arith.constant 0 : index
    %c0_311 = arith.constant 0 : index
    %c0_312 = arith.constant 0 : index
    %300 = vector.load %arg7[%c0_310, %c0_311, %c0_312] : memref<9x32x32xbf16, #tpu.memory_space<vmem>>, vector<1x32x32xbf16>
    %301 = vector.shape_cast %300 : vector<1x32x32xbf16> to vector<32x32xbf16>
    %cst_313 = arith.constant dense<0.000000e+00> : vector<32x32xf32>
    %302 = tpu.matmul %299, %301, %cst_313 {dimension_numbers = #tpu.dot_dimension_numbers<[1], [0], [0], [1], [0, 0, 1, 1], [], []>} : vector<32x32xbf16>, vector<32x32xbf16>, vector<32x32xf32> -> vector<32x32xf32>
    %303 = arith.addf %295, %302 : vector<32x32xf32>
    %c0_314 = arith.constant 0 : index
    %c1_315 = arith.constant 1 : index
    %c0_316 = arith.constant 0 : index
    %c0_317 = arith.constant 0 : index
    %304 = vector.load %arg2[%c0_314, %c1_315, %c0_316, %c0_317] : memref<3x9x32x32xbf16, #tpu.memory_space<vmem>>, vector<1x1x32x32xbf16>
    %305 = vector.shape_cast %304 : vector<1x1x32x32xbf16> to vector<32x32xbf16>
    %cst_318 = arith.constant dense<0.000000e+00> : vector<32x32xf32>
    %306 = tpu.matmul %305, %294, %cst_318 {dimension_numbers = #tpu.dot_dimension_numbers<[1], [0], [0], [1], [0, 0, 1, 1], [], []>} : vector<32x32xbf16>, vector<32x32xbf16>, vector<32x32xf32> -> vector<32x32xf32>
    %307 = arith.truncf %306 : vector<32x32xf32> to vector<32x32xbf16>
    %c1_319 = arith.constant 1 : index
    %c0_320 = arith.constant 0 : index
    %c0_321 = arith.constant 0 : index
    %308 = vector.load %arg7[%c1_319, %c0_320, %c0_321] : memref<9x32x32xbf16, #tpu.memory_space<vmem>>, vector<1x32x32xbf16>
    %309 = vector.shape_cast %308 : vector<1x32x32xbf16> to vector<32x32xbf16>
    %cst_322 = arith.constant dense<0.000000e+00> : vector<32x32xf32>
    %310 = tpu.matmul %307, %309, %cst_322 {dimension_numbers = #tpu.dot_dimension_numbers<[1], [0], [0], [1], [0, 0, 1, 1], [], []>} : vector<32x32xbf16>, vector<32x32xbf16>, vector<32x32xf32> -> vector<32x32xf32>
    %311 = arith.addf %303, %310 : vector<32x32xf32>
    %c0_323 = arith.constant 0 : index
    %c2_324 = arith.constant 2 : index
    %c0_325 = arith.constant 0 : index
    %c0_326 = arith.constant 0 : index
    %312 = vector.load %arg2[%c0_323, %c2_324, %c0_325, %c0_326] : memref<3x9x32x32xbf16, #tpu.memory_space<vmem>>, vector<1x1x32x32xbf16>
    %313 = vector.shape_cast %312 : vector<1x1x32x32xbf16> to vector<32x32xbf16>
    %cst_327 = arith.constant dense<0.000000e+00> : vector<32x32xf32>
    %314 = tpu.matmul %313, %294, %cst_327 {dimension_numbers = #tpu.dot_dimension_numbers<[1], [0], [0], [1], [0, 0, 1, 1], [], []>} : vector<32x32xbf16>, vector<32x32xbf16>, vector<32x32xf32> -> vector<32x32xf32>
    %315 = arith.truncf %314 : vector<32x32xf32> to vector<32x32xbf16>
    %c2_328 = arith.constant 2 : index
    %c0_329 = arith.constant 0 : index
    %c0_330 = arith.constant 0 : index
    %316 = vector.load %arg7[%c2_328, %c0_329, %c0_330] : memref<9x32x32xbf16, #tpu.memory_space<vmem>>, vector<1x32x32xbf16>
    %317 = vector.shape_cast %316 : vector<1x32x32xbf16> to vector<32x32xbf16>
    %cst_331 = arith.constant dense<0.000000e+00> : vector<32x32xf32>
    %318 = tpu.matmul %315, %317, %cst_331 {dimension_numbers = #tpu.dot_dimension_numbers<[1], [0], [0], [1], [0, 0, 1, 1], [], []>} : vector<32x32xbf16>, vector<32x32xbf16>, vector<32x32xf32> -> vector<32x32xf32>
    %319 = arith.addf %311, %318 : vector<32x32xf32>
    %c0_332 = arith.constant 0 : index
    %c3_333 = arith.constant 3 : index
    %c0_334 = arith.constant 0 : index
    %c0_335 = arith.constant 0 : index
    %320 = vector.load %arg2[%c0_332, %c3_333, %c0_334, %c0_335] : memref<3x9x32x32xbf16, #tpu.memory_space<vmem>>, vector<1x1x32x32xbf16>
    %321 = vector.shape_cast %320 : vector<1x1x32x32xbf16> to vector<32x32xbf16>
    %cst_336 = arith.constant dense<0.000000e+00> : vector<32x32xf32>
    %322 = tpu.matmul %321, %294, %cst_336 {dimension_numbers = #tpu.dot_dimension_numbers<[1], [0], [0], [1], [0, 0, 1, 1], [], []>} : vector<32x32xbf16>, vector<32x32xbf16>, vector<32x32xf32> -> vector<32x32xf32>
    %323 = arith.truncf %322 : vector<32x32xf32> to vector<32x32xbf16>
    %c3_337 = arith.constant 3 : index
    %c0_338 = arith.constant 0 : index
    %c0_339 = arith.constant 0 : index
    %324 = vector.load %arg7[%c3_337, %c0_338, %c0_339] : memref<9x32x32xbf16, #tpu.memory_space<vmem>>, vector<1x32x32xbf16>
    %325 = vector.shape_cast %324 : vector<1x32x32xbf16> to vector<32x32xbf16>
    %cst_340 = arith.constant dense<0.000000e+00> : vector<32x32xf32>
    %326 = tpu.matmul %323, %325, %cst_340 {dimension_numbers = #tpu.dot_dimension_numbers<[1], [0], [0], [1], [0, 0, 1, 1], [], []>} : vector<32x32xbf16>, vector<32x32xbf16>, vector<32x32xf32> -> vector<32x32xf32>
    %327 = arith.addf %319, %326 : vector<32x32xf32>
    %c0_341 = arith.constant 0 : index
    %c4_342 = arith.constant 4 : index
    %c0_343 = arith.constant 0 : index
    %c0_344 = arith.constant 0 : index
    %328 = vector.load %arg2[%c0_341, %c4_342, %c0_343, %c0_344] : memref<3x9x32x32xbf16, #tpu.memory_space<vmem>>, vector<1x1x32x32xbf16>
    %329 = vector.shape_cast %328 : vector<1x1x32x32xbf16> to vector<32x32xbf16>
    %cst_345 = arith.constant dense<0.000000e+00> : vector<32x32xf32>
    %330 = tpu.matmul %329, %294, %cst_345 {dimension_numbers = #tpu.dot_dimension_numbers<[1], [0], [0], [1], [0, 0, 1, 1], [], []>} : vector<32x32xbf16>, vector<32x32xbf16>, vector<32x32xf32> -> vector<32x32xf32>
    %331 = arith.truncf %330 : vector<32x32xf32> to vector<32x32xbf16>
    %c4_346 = arith.constant 4 : index
    %c0_347 = arith.constant 0 : index
    %c0_348 = arith.constant 0 : index
    %332 = vector.load %arg7[%c4_346, %c0_347, %c0_348] : memref<9x32x32xbf16, #tpu.memory_space<vmem>>, vector<1x32x32xbf16>
    %333 = vector.shape_cast %332 : vector<1x32x32xbf16> to vector<32x32xbf16>
    %cst_349 = arith.constant dense<0.000000e+00> : vector<32x32xf32>
    %334 = tpu.matmul %331, %333, %cst_349 {dimension_numbers = #tpu.dot_dimension_numbers<[1], [0], [0], [1], [0, 0, 1, 1], [], []>} : vector<32x32xbf16>, vector<32x32xbf16>, vector<32x32xf32> -> vector<32x32xf32>
    %335 = arith.addf %327, %334 : vector<32x32xf32>
    %c0_350 = arith.constant 0 : index
    %c5_351 = arith.constant 5 : index
    %c0_352 = arith.constant 0 : index
    %c0_353 = arith.constant 0 : index
    %336 = vector.load %arg2[%c0_350, %c5_351, %c0_352, %c0_353] : memref<3x9x32x32xbf16, #tpu.memory_space<vmem>>, vector<1x1x32x32xbf16>
    %337 = vector.shape_cast %336 : vector<1x1x32x32xbf16> to vector<32x32xbf16>
    %cst_354 = arith.constant dense<0.000000e+00> : vector<32x32xf32>
    %338 = tpu.matmul %337, %294, %cst_354 {dimension_numbers = #tpu.dot_dimension_numbers<[1], [0], [0], [1], [0, 0, 1, 1], [], []>} : vector<32x32xbf16>, vector<32x32xbf16>, vector<32x32xf32> -> vector<32x32xf32>
    %339 = arith.truncf %338 : vector<32x32xf32> to vector<32x32xbf16>
    %c5_355 = arith.constant 5 : index
    %c0_356 = arith.constant 0 : index
    %c0_357 = arith.constant 0 : index
    %340 = vector.load %arg7[%c5_355, %c0_356, %c0_357] : memref<9x32x32xbf16, #tpu.memory_space<vmem>>, vector<1x32x32xbf16>
    %341 = vector.shape_cast %340 : vector<1x32x32xbf16> to vector<32x32xbf16>
    %cst_358 = arith.constant dense<0.000000e+00> : vector<32x32xf32>
    %342 = tpu.matmul %339, %341, %cst_358 {dimension_numbers = #tpu.dot_dimension_numbers<[1], [0], [0], [1], [0, 0, 1, 1], [], []>} : vector<32x32xbf16>, vector<32x32xbf16>, vector<32x32xf32> -> vector<32x32xf32>
    %343 = arith.addf %335, %342 : vector<32x32xf32>
    %c0_359 = arith.constant 0 : index
    %c6_360 = arith.constant 6 : index
    %c0_361 = arith.constant 0 : index
    %c0_362 = arith.constant 0 : index
    %344 = vector.load %arg2[%c0_359, %c6_360, %c0_361, %c0_362] : memref<3x9x32x32xbf16, #tpu.memory_space<vmem>>, vector<1x1x32x32xbf16>
    %345 = vector.shape_cast %344 : vector<1x1x32x32xbf16> to vector<32x32xbf16>
    %cst_363 = arith.constant dense<0.000000e+00> : vector<32x32xf32>
    %346 = tpu.matmul %345, %294, %cst_363 {dimension_numbers = #tpu.dot_dimension_numbers<[1], [0], [0], [1], [0, 0, 1, 1], [], []>} : vector<32x32xbf16>, vector<32x32xbf16>, vector<32x32xf32> -> vector<32x32xf32>
    %347 = arith.truncf %346 : vector<32x32xf32> to vector<32x32xbf16>
    %c6_364 = arith.constant 6 : index
    %c0_365 = arith.constant 0 : index
    %c0_366 = arith.constant 0 : index
    %348 = vector.load %arg7[%c6_364, %c0_365, %c0_366] : memref<9x32x32xbf16, #tpu.memory_space<vmem>>, vector<1x32x32xbf16>
    %349 = vector.shape_cast %348 : vector<1x32x32xbf16> to vector<32x32xbf16>
    %cst_367 = arith.constant dense<0.000000e+00> : vector<32x32xf32>
    %350 = tpu.matmul %347, %349, %cst_367 {dimension_numbers = #tpu.dot_dimension_numbers<[1], [0], [0], [1], [0, 0, 1, 1], [], []>} : vector<32x32xbf16>, vector<32x32xbf16>, vector<32x32xf32> -> vector<32x32xf32>
    %351 = arith.addf %343, %350 : vector<32x32xf32>
    %c0_368 = arith.constant 0 : index
    %c7_369 = arith.constant 7 : index
    %c0_370 = arith.constant 0 : index
    %c0_371 = arith.constant 0 : index
    %352 = vector.load %arg2[%c0_368, %c7_369, %c0_370, %c0_371] : memref<3x9x32x32xbf16, #tpu.memory_space<vmem>>, vector<1x1x32x32xbf16>
    %353 = vector.shape_cast %352 : vector<1x1x32x32xbf16> to vector<32x32xbf16>
    %cst_372 = arith.constant dense<0.000000e+00> : vector<32x32xf32>
    %354 = tpu.matmul %353, %294, %cst_372 {dimension_numbers = #tpu.dot_dimension_numbers<[1], [0], [0], [1], [0, 0, 1, 1], [], []>} : vector<32x32xbf16>, vector<32x32xbf16>, vector<32x32xf32> -> vector<32x32xf32>
    %355 = arith.truncf %354 : vector<32x32xf32> to vector<32x32xbf16>
    %c7_373 = arith.constant 7 : index
    %c0_374 = arith.constant 0 : index
    %c0_375 = arith.constant 0 : index
    %356 = vector.load %arg7[%c7_373, %c0_374, %c0_375] : memref<9x32x32xbf16, #tpu.memory_space<vmem>>, vector<1x32x32xbf16>
    %357 = vector.shape_cast %356 : vector<1x32x32xbf16> to vector<32x32xbf16>
    %cst_376 = arith.constant dense<0.000000e+00> : vector<32x32xf32>
    %358 = tpu.matmul %355, %357, %cst_376 {dimension_numbers = #tpu.dot_dimension_numbers<[1], [0], [0], [1], [0, 0, 1, 1], [], []>} : vector<32x32xbf16>, vector<32x32xbf16>, vector<32x32xf32> -> vector<32x32xf32>
    %359 = arith.addf %351, %358 : vector<32x32xf32>
    %c0_377 = arith.constant 0 : index
    %c8_378 = arith.constant 8 : index
    %c0_379 = arith.constant 0 : index
    %c0_380 = arith.constant 0 : index
    %360 = vector.load %arg2[%c0_377, %c8_378, %c0_379, %c0_380] : memref<3x9x32x32xbf16, #tpu.memory_space<vmem>>, vector<1x1x32x32xbf16>
    %361 = vector.shape_cast %360 : vector<1x1x32x32xbf16> to vector<32x32xbf16>
    %cst_381 = arith.constant dense<0.000000e+00> : vector<32x32xf32>
    %362 = tpu.matmul %361, %294, %cst_381 {dimension_numbers = #tpu.dot_dimension_numbers<[1], [0], [0], [1], [0, 0, 1, 1], [], []>} : vector<32x32xbf16>, vector<32x32xbf16>, vector<32x32xf32> -> vector<32x32xf32>
    %363 = arith.truncf %362 : vector<32x32xf32> to vector<32x32xbf16>
    %c8_382 = arith.constant 8 : index
    %c0_383 = arith.constant 0 : index
    %c0_384 = arith.constant 0 : index
    %364 = vector.load %arg7[%c8_382, %c0_383, %c0_384] : memref<9x32x32xbf16, #tpu.memory_space<vmem>>, vector<1x32x32xbf16>
    %365 = vector.shape_cast %364 : vector<1x32x32xbf16> to vector<32x32xbf16>
    %cst_385 = arith.constant dense<0.000000e+00> : vector<32x32xf32>
    %366 = tpu.matmul %363, %365, %cst_385 {dimension_numbers = #tpu.dot_dimension_numbers<[1], [0], [0], [1], [0, 0, 1, 1], [], []>} : vector<32x32xbf16>, vector<32x32xbf16>, vector<32x32xf32> -> vector<32x32xf32>
    %367 = arith.addf %359, %366 : vector<32x32xf32>
    %c0_386 = arith.constant 0 : index
    %c0_387 = arith.constant 0 : index
    %368 = vector.load %arg10[%c0_386, %c0_387] : memref<1x32xf32, #tpu.memory_space<vmem>>, vector<1x32xf32>
    %369 = vector.broadcast %368 : vector<1x32xf32> to vector<32x32xf32>
    %370 = arith.addf %367, %369 : vector<32x32xf32>
    %cst_388 = arith.constant 0.000000e+00 : f32
    %371 = vector.broadcast %cst_388 : f32 to vector<32x32xf32>
    %372 = arith.maximumf %370, %371 : vector<32x32xf32>
    %373 = arith.truncf %372 : vector<32x32xf32> to vector<32x32xbf16>
    %c0_389 = arith.constant 0 : index
    %c0_390 = arith.constant 0 : index
    %374 = vector.load %arg8[%c0_389, %c0_390] : memref<32x5xbf16, #tpu.memory_space<vmem>>, vector<32x5xbf16>
    %cst_391 = arith.constant dense<0.000000e+00> : vector<32x5xf32>
    %375 = tpu.matmul %373, %374, %cst_391 {dimension_numbers = #tpu.dot_dimension_numbers<[1], [0], [0], [1], [0, 0, 1, 1], [], []>} : vector<32x32xbf16>, vector<32x5xbf16>, vector<32x5xf32> -> vector<32x5xf32>
    %c0_392 = arith.constant 0 : index
    %c0_393 = arith.constant 0 : index
    %376 = vector.load %arg11[%c0_392, %c0_393] : memref<1x5xf32, #tpu.memory_space<vmem>>, vector<1x5xf32>
    %377 = vector.broadcast %376 : vector<1x5xf32> to vector<32x5xf32>
    %378 = arith.addf %375, %377 : vector<32x5xf32>
    %c0_394 = arith.constant 0 : index
    %c0_395 = arith.constant 0 : index
    %379 = vector.load %arg12[%c0_394, %c0_395] : memref<1024x16xf32, #tpu.memory_space<vmem>>, vector<1024x16xf32>
    %380 = vector.extract_strided_slice %378 {offsets = [0, 0], sizes = [16, 5], strides = [1, 1]} : vector<32x5xf32> to vector<16x5xf32>
    %cst_396 = arith.constant dense<0.000000e+00> : vector<1024x5xf32>
    %381 = tpu.matmul %379, %380, %cst_396 {dimension_numbers = #tpu.dot_dimension_numbers<[1], [0], [0], [1], [0, 0, 1, 1], [], []>} : vector<1024x16xf32>, vector<16x5xf32>, vector<1024x5xf32> -> vector<1024x5xf32>
    %c0_397 = arith.constant 0 : index
    %c0_398 = arith.constant 0 : index
    %c0_399 = arith.constant 0 : index
    %382 = vector.load %arg13[%c0_397, %c0_398, %c0_399] : memref<2x1024x5xf32, #tpu.memory_space<vmem>>, vector<1x1024x5xf32>
    %383 = vector.shape_cast %382 : vector<1x1024x5xf32> to vector<1024x5xf32>
    %384 = vector.shape_cast %381 : vector<1024x5xf32> to vector<1x1024x5xf32>
    tpu.vector_store %arg13[%c0_397, %c0_398, %c0_399], %384 {strides = array<i32>} : memref<2x1024x5xf32, #tpu.memory_space<vmem>>, vector<1x1024x5xf32>,
    %c0_400 = arith.constant 0 : index
    %c0_401 = arith.constant 0 : index
    %385 = vector.load %arg12[%c0_400, %c0_401] : memref<1024x16xf32, #tpu.memory_space<vmem>>, vector<1024x16xf32>
    %386 = vector.extract_strided_slice %378 {offsets = [16, 0], sizes = [16, 5], strides = [1, 1]} : vector<32x5xf32> to vector<16x5xf32>
    %cst_402 = arith.constant dense<0.000000e+00> : vector<1024x5xf32>
    %387 = tpu.matmul %385, %386, %cst_402 {dimension_numbers = #tpu.dot_dimension_numbers<[1], [0], [0], [1], [0, 0, 1, 1], [], []>} : vector<1024x16xf32>, vector<16x5xf32>, vector<1024x5xf32> -> vector<1024x5xf32>
    %c1_403 = arith.constant 1 : index
    %c0_404 = arith.constant 0 : index
    %c0_405 = arith.constant 0 : index
    %388 = vector.load %arg13[%c1_403, %c0_404, %c0_405] : memref<2x1024x5xf32, #tpu.memory_space<vmem>>, vector<1x1024x5xf32>
    %389 = vector.shape_cast %388 : vector<1x1024x5xf32> to vector<1024x5xf32>
    %390 = vector.shape_cast %387 : vector<1024x5xf32> to vector<1x1024x5xf32>
    tpu.vector_store %arg13[%c1_403, %c0_404, %c0_405], %390 {strides = array<i32>} : memref<2x1024x5xf32, #tpu.memory_space<vmem>>, vector<1x1024x5xf32>,
    return
  }
  func.func @transform_0(%arg0: i32) -> (i32, i32) {
    %c0_i32 = arith.constant 0 : i32
    %c0_i32_0 = arith.constant 0 : i32
    %c0_i32_1 = arith.constant 0 : i32
    return %c0_i32, %c0_i32_0 : i32, i32
  }
  func.func @transform_1(%arg0: i32) -> (i32, i32, i32, i32) {
    %c0_i32 = arith.constant 0 : i32
    %c0_i32_0 = arith.constant 0 : i32
    %c0_i32_1 = arith.constant 0 : i32
    %c0_i32_2 = arith.constant 0 : i32
    %c0_i32_3 = arith.constant 0 : i32
    return %c0_i32, %c0_i32_0, %c0_i32_1, %c0_i32_2 : i32, i32, i32, i32
  }
  func.func @transform_2(%arg0: i32) -> (i32, i32) {
    %c0_i32 = arith.constant 0 : i32
    %c0_i32_0 = arith.constant 0 : i32
    %c0_i32_1 = arith.constant 0 : i32
    return %c0_i32, %c0_i32_0 : i32, i32
  }
  func.func @transform_3(%arg0: i32) -> (i32, i32, i32, i32) {
    %c0_i32 = arith.constant 0 : i32
    %c0_i32_0 = arith.constant 0 : i32
    %c0_i32_1 = arith.constant 0 : i32
    %c0_i32_2 = arith.constant 0 : i32
    %c0_i32_3 = arith.constant 0 : i32
    return %c0_i32, %c0_i32_0, %c0_i32_1, %c0_i32_2 : i32, i32, i32, i32
  }
  func.func @transform_4(%arg0: i32) -> (i32, i32) {
    %c0_i32 = arith.constant 0 : i32
    %c0_i32_0 = arith.constant 0 : i32
    %c0_i32_1 = arith.constant 0 : i32
    return %c0_i32, %c0_i32_0 : i32, i32
  }
  func.func @transform_5(%arg0: i32) -> (i32, i32) {
    %c0_i32 = arith.constant 0 : i32
    %c0_i32_0 = arith.constant 0 : i32
    %c0_i32_1 = arith.constant 0 : i32
    return %c0_i32, %c0_i32_0 : i32, i32
  }
  func.func @transform_6(%arg0: i32) -> (i32, i32, i32) {
    %c0_i32 = arith.constant 0 : i32
    %c0_i32_0 = arith.constant 0 : i32
    %c0_i32_1 = arith.constant 0 : i32
    %c0_i32_2 = arith.constant 0 : i32
    return %c0_i32, %c0_i32_0, %c0_i32_1 : i32, i32, i32
  }
  func.func @transform_7(%arg0: i32) -> (i32, i32) {
    %c0_i32 = arith.constant 0 : i32
    %c0_i32_0 = arith.constant 0 : i32
    %c0_i32_1 = arith.constant 0 : i32
    return %c0_i32, %c0_i32_0 : i32, i32
  }
  func.func @transform_8(%arg0: i32) -> (i32, i32) {
    %c0_i32 = arith.constant 0 : i32
    %c0_i32_0 = arith.constant 0 : i32
    %c0_i32_1 = arith.constant 0 : i32
    return %c0_i32, %c0_i32_0 : i32, i32
  }
  func.func @transform_9(%arg0: i32) -> (i32, i32) {
    %c0_i32 = arith.constant 0 : i32
    %c0_i32_0 = arith.constant 0 : i32
    %c0_i32_1 = arith.constant 0 : i32
    return %c0_i32, %c0_i32_0 : i32, i32
  }
  func.func @transform_10(%arg0: i32) -> (i32, i32) {
    %c0_i32 = arith.constant 0 : i32
    %c0_i32_0 = arith.constant 0 : i32
    %c0_i32_1 = arith.constant 0 : i32
    return %c0_i32, %c0_i32_0 : i32, i32
  }
  func.func @transform_11(%arg0: i32) -> (i32, i32) {
    %c0_i32 = arith.constant 0 : i32
    %c0_i32_0 = arith.constant 0 : i32
    %c0_i32_1 = arith.constant 0 : i32
    return %c0_i32, %c0_i32_0 : i32, i32
  }
  func.func @transform_12(%arg0: i32) -> (i32, i32, i32) {
    %c0_i32 = arith.constant 0 : i32
    %c0_i32_0 = arith.constant 0 : i32
    %c0_i32_1 = arith.constant 0 : i32
    %c0_i32_2 = arith.constant 0 : i32
    return %c0_i32, %c0_i32_0, %c0_i32_1 : i32, i32, i32
  }
}

</mosaic_0001>

<llo_original>
// kernel: _lambda_.5
$region0: #{_lambda_.5}
  #allocation0 [shape = 'u32[]', space=smem, size = 0x4, offset = 0x4, fixed_abs, tag = 'smem constant byte address 0x4 - core index']
  #allocation1 [shape = 'u32[144,128]{1,0:T(1,128)}', space=vmem, size = 0x12000, scoped, tag = 'internal scratch']
  %s0 = inlined_call_operand.vmem [shape: bf16[512,27], index: 0, kind: input, shape index: {}]
  %s1 = inlined_call_operand.vmem [shape: bf16[27,16], index: 1, kind: input, shape index: {}]
  %s2 = inlined_call_operand.vmem [shape: f32[1,16], index: 2, kind: input, shape index: {}]
  %s3 = inlined_call_operand.vmem [shape: bf16[512,16], index: 3, kind: output, shape index: {}]
  %s4 = sld [smem:[#allocation0]]
  $region45: #{_lambda_.5} parent=0
    _
  %s6 = ssub.s32 1, %s4
  %s7 = scalar_select 0, %s6, %s4
  loop: start=0, step=1, limit=6
  $region2: #{_lambda_.5} parent=0 // loop_pre_header
    _
  $region3: #{_lambda_.5} parent=0 // loop_header
    %s9 = sphi 0, %s13
    %p10 = scmp.ge.s32.totalorder %s9, 6
    %s19 = sphi 0, %s21
    %s22 = sphi 0, %s19
    %s23 = sphi 0, %s22
    %s39 = sphi 0, %s23
    %s43 = sphi 0, %s43
    %s45 = sphi 0, %s43
    %s46 = sphi 0, %s45
    %s60 = sphi 0, %s46
    %s64 = sphi 0, %s64
    %s66 = sphi 0, %s64
    %s67 = sphi 0, %s66
    %s81 = sphi 0, %s67
    %s87 = sphi 0, %s89
    %s90 = sphi 0, %s87
    %s91 = sphi 0, %s90
    %s107 = sphi 0, %s91
  $region4: #{_lambda_.5} parent=0 // loop_header_branch
    %12 = sbr.rel (%p10) target = $region8
  $region5: #{_lambda_.5} parent=0 // loop_body
    %s14 = ssub.s32 %s9, 1
    %s15 = ssub.s32 %s9, 2
    %s16 = sadd.s32 %s9, 1
    %s17 = ssub.s32 %s9, %s16
    %p18 = scmp.eq.s32.totalorder %s17, 0
    %s20 = sadd.s32 %s19, 1
    %s21 = scalar_select %p18, %s19, %s20
    %p24 = pneg %p18
    %p25 = scmp.eq.s32.totalorder %s9, 3
    %p26 = por %p24, %p25
    %p27 = scmp.ne.s32.totalorder %s19, %s22
    %p28 = scmp.eq.s32.totalorder %s9, 0
    %p29 = por %p27, %p28
    %p30 = scmp.ne.s32.totalorder %s19, %s22
    %p31 = scmp.eq.s32.totalorder %s14, 3
    %p32 = por %p30, %p31
    %p33 = scmp.ne.s32.totalorder %s22, %s23
    %p34 = scmp.eq.s32.totalorder %s14, 0
    %p35 = por %p33, %p34
    %p36 = scmp.ne.s32.totalorder %s22, %s23
    %p37 = scmp.eq.s32.totalorder %s15, 3
    %p38 = por %p36, %p37
    %p40 = scmp.ne.s32.totalorder %s23, %s39
    %p41 = scmp.eq.s32.totalorder %s15, 0
    %p42 = por %p40, %p41
    %s44 = sadd.s32 %s43, 1
    %p47 = scmp.eq.s32.totalorder %s9, 3
    %p48 = scmp.ne.s32.totalorder %s43, %s45
    %p49 = scmp.eq.s32.totalorder %s9, 0
    %p50 = por %p48, %p49
    %p51 = scmp.ne.s32.totalorder %s43, %s45
    %p52 = scmp.eq.s32.totalorder %s14, 3
    %p53 = por %p51, %p52
    %p54 = scmp.ne.s32.totalorder %s45, %s46
    %p55 = scmp.eq.s32.totalorder %s14, 0
    %p56 = por %p54, %p55
    %p57 = scmp.ne.s32.totalorder %s45, %s46
    %p58 = scmp.eq.s32.totalorder %s15, 3
    %p59 = por %p57, %p58
    %p61 = scmp.ne.s32.totalorder %s46, %s60
    %p62 = scmp.eq.s32.totalorder %s15, 0
    %p63 = por %p61, %p62
    %s65 = sadd.s32 %s64, 1
    %p68 = scmp.eq.s32.totalorder %s9, 3
    %p69 = scmp.ne.s32.totalorder %s64, %s66
    %p70 = scmp.eq.s32.totalorder %s9, 0
    %p71 = por %p69, %p70
    %p72 = scmp.ne.s32.totalorder %s64, %s66
    %p73 = scmp.eq.s32.totalorder %s14, 3
    %p74 = por %p72, %p73
    %p75 = scmp.ne.s32.totalorder %s66, %s67
    %p76 = scmp.eq.s32.totalorder %s14, 0
    %p77 = por %p75, %p76
    %p78 = scmp.ne.s32.totalorder %s66, %s67
    %p79 = scmp.eq.s32.totalorder %s15, 3
    %p80 = por %p78, %p79
    %p82 = scmp.ne.s32.totalorder %s67, %s81
    %p83 = scmp.eq.s32.totalorder %s15, 0
    %p84 = por %p82, %p83
    %s85 = ssub.s32 %s9, %s16
    %p86 = scmp.eq.s32.totalorder %s85, 0
    %s88 = sadd.s32 %s87, 1
    %s89 = scalar_select %p86, %s87, %s88
    %p92 = pneg %p86
    %p93 = scmp.eq.s32.totalorder %s9, 3
    %p94 = por %p92, %p93
    %p95 = scmp.ne.s32.totalorder %s87, %s90
    %p96 = scmp.eq.s32.totalorder %s9, 0
    %p97 = por %p95, %p96
    %p98 = scmp.ne.s32.totalorder %s87, %s90
    %p99 = scmp.eq.s32.totalorder %s14, 3
    %p100 = por %p98, %p99
    %p101 = scmp.ne.s32.totalorder %s90, %s91
    %p102 = scmp.eq.s32.totalorder %s14, 0
    %p103 = por %p101, %p102
    %p104 = scmp.ne.s32.totalorder %s90, %s91
    %p105 = scmp.eq.s32.totalorder %s15, 3
    %p106 = por %p104, %p105
    %p108 = scmp.ne.s32.totalorder %s91, %s107
    %p109 = scmp.eq.s32.totalorder %s15, 0
    %p110 = por %p108, %p109
    %p111 = scmp.le.s32.totalorder 1, %s9
    %p112 = scmp.lt.s32.totalorder %s9, 5
    %p113 = pnand %p111, %p112
    %p114 = pneg %p113
    // Predicated region
    $region9: #{_lambda_.5} parent=5 // pred_check
      _
    $region10: #{_lambda_.5} parent=5 // pred_check_branch
      %116 = sbr.rel (%p113) target = $region12
    $region11: #{_lambda_.5} parent=5 // pred_region
      %s117 = ssub.s32 %s9, 1
      // Predicated region
      $region13: #{_lambda_.5} parent=11 // pred_check
        %p118 = pneg %p56
      $region14: #{_lambda_.5} parent=11 // pred_check_branch
        %120 = sbr.rel (%p118) target = $region16
      $region15: #{_lambda_.5} parent=11 // pred_region
        _
      $region16: #{_lambda_.5} parent=11 // pred_fallthru
        _
      // Predicated region
      $region17: #{_lambda_.5} parent=11 // pred_check
        %p121 = pneg %p77
      $region18: #{_lambda_.5} parent=11 // pred_check_branch
        %123 = sbr.rel (%p121) target = $region20
      $region19: #{_lambda_.5} parent=11 // pred_region
        _
      $region20: #{_lambda_.5} parent=11 // pred_fallthru
        _
    $region12: #{_lambda_.5} parent=5 // pred_fallthru
      _
    %p124 = scmp.lt.s32.totalorder %s9, 4
    // Predicated region
    $region21: #{_lambda_.5} parent=5 // pred_check
      %p125 = pneg %p124
    $region22: #{_lambda_.5} parent=5 // pred_check_branch
      %127 = sbr.rel (%p125) target = $region24
    $region23: #{_lambda_.5} parent=5 // pred_region
      // Predicated region
      $region25: #{_lambda_.5} parent=23 // pred_check
        %p128 = pneg %p29
      $region26: #{_lambda_.5} parent=23 // pred_check_branch
        %130 = sbr.rel (%p128) target = $region28
      $region27: #{_lambda_.5} parent=23 // pred_region
        %s131 = smul.u32 16, %s9
        %p132 = scmp.lt.s32.totalorder %s131, 63
        %s133 = scalar_select %p132, %s131, 63
        %s134 = smul.addr %s133, 4
        %s135 = scalar_lea.vmem %s0, %s134
        %s136 = smul.u32 16, %s9
      $region28: #{_lambda_.5} parent=23 // pred_fallthru
        _
    $region24: #{_lambda_.5} parent=5 // pred_fallthru
      _
    %p137 = scmp.le.s32.totalorder 1, %s9
    %p138 = scmp.lt.s32.totalorder %s9, 5
    %p139 = pnand %p137, %p138
    %p140 = pneg %p139
    // Predicated region
    $region29: #{_lambda_.5} parent=5 // pred_check
      _
    $region30: #{_lambda_.5} parent=5 // pred_check_branch
      %142 = sbr.rel (%p139) target = $region32
    $region31: #{_lambda_.5} parent=5 // pred_region
      %s143 = ssub.s32 %s9, 1
      %s144 = smul.u32 16, %s14
      %p145 = scmp.lt.s32.totalorder %s144, 63
      %s146 = scalar_select %p145, %s144, 63
      %s147 = smul.addr %s146, 4
      %s148 = scalar_lea.vmem %s0, %s147
      %p149 = pneg %p35
      %p150 = pneg %p32
      %p151 = pneg %p56
      %p152 = pneg %p53
      %p153 = pneg %p77
      %p154 = pneg %p74
      %p155 = pneg %p103
      %p156 = pneg %p100
      %s157 = smul.u32 16, %s14
      %p158 = scmp.lt.s32.totalorder %s157, 63
      %s159 = scalar_select %p158, %s157, 63
      %s160 = smul.addr %s159, 4
      %s161 = scalar_lea.vmem %s3, %s160
      %s162 = smul.u32 16, %s14
      %p163 = scmp.lt.s32.totalorder %s162, 63
      %s164 = scalar_select %p163, %s162, 63
      %s165 = smul.addr %s164, 4
      %s166 = scalar_lea.vmem %s0, %s165
      %s167 = smul.u32 16, %s14
      %s168 = smul.u32 16, %s14
      %p169 = scmp.lt.s32.totalorder %s168, 63
      %s170 = scalar_select %p169, %s168, 63
      %s171 = smul.addr %s170, 4
      %s172 = scalar_lea.vmem %s3, %s171
      %s173 = smul.u32 16, %s14
      %v175 = vld [vmem:[%s166] sm:$0xf]
      %v176 = vld [vmem:[%s166 + $0x4] sm:$0xf]
      %v177 = vld [vmem:[%s166 + $0x8] sm:$0xf]
      %v178 = vld [vmem:[%s166 + $0xc] sm:$0xf]
      %v179 = vld [vmem:[%s166 + $0x10] sm:$0xf]
      %v180 = vld [vmem:[%s166 + $0x14] sm:$0xf]
      %v181 = vld [vmem:[%s166 + $0x18] sm:$0xf]
      %v182 = vld [vmem:[%s166 + $0x1c] sm:$0xf]
      %v183 = vld [vmem:[%s166 + $0x20] sm:$0xf]
      %v184 = vld [vmem:[%s166 + $0x24] sm:$0xf]
      %v185 = vld [vmem:[%s166 + $0x28] sm:$0xf]
      %v186 = vld [vmem:[%s166 + $0x2c] sm:$0xf]
      %v187 = vld [vmem:[%s166 + $0x30] sm:$0xf]
      %v188 = vld [vmem:[%s166 + $0x34] sm:$0xf]
      %v189 = vld [vmem:[%s166 + $0x38] sm:$0xf]
      %v190 = vld [vmem:[%s166 + $0x3c] sm:$0xf]
      %v191 = vld [vmem:[%s1] sm:$0xf]
      %v192 = vld [vmem:[%s1 + $0x4] sm:$0xf]
      %v193 = vld [vmem:[%s1 + $0x8] sm:$0xf]
      %v194 = vld [vmem:[%s1 + $0xc] sm:$0x3]
      %v195 = vld [vmem:[%s2] sm:$0x1]
      %v197 = vlaneseq
      %v198 = vshrl.u32 %v197, 7
      %v199 = vsub.s32 0, %v198
      %v200 = vrot.slane %v195, %v199
      %v218 = vunpack.c.l.b16 %v175
      %v219 = vunpack.c.l.b16 %v176
      %v220 = vunpack.c.l.b16 %v177
      %v221 = vunpack.c.l.b16 %v178
      %v222 = vunpack.c.l.b16 %v179
      %v223 = vunpack.c.l.b16 %v180
      %v224 = vunpack.c.l.b16 %v181
      %v225 = vunpack.c.l.b16 %v182
      %v226 = vunpack.c.l.b16 %v183
      %v227 = vunpack.c.l.b16 %v184
      %v228 = vunpack.c.l.b16 %v185
      %v229 = vunpack.c.l.b16 %v186
      %v230 = vunpack.c.l.b16 %v187
      %v231 = vunpack.c.l.b16 %v188
      %v232 = vunpack.c.l.b16 %v189
      %v233 = vunpack.c.l.b16 %v190
      %v234 = vpack.c.b16 %v219, %v218
      %v235 = vpack.c.b16 %v221, %v220
      %v236 = vpack.c.b16 %v223, %v222
      %v237 = vpack.c.b16 %v225, %v224
      %v238 = vpack.c.b16 %v227, %v226
      %v239 = vpack.c.b16 %v229, %v228
      %v240 = vpack.c.b16 %v231, %v230
      %v241 = vpack.c.b16 %v233, %v232
      %v246 = vunpack.c.l.b16 %v191
      %v247 = vunpack.c.l.b16 %v192
      %v248 = vunpack.c.l.b16 %v193
      %v249 = vunpack.c.l.b16 %v194
      %v250 = vpack.c.b16 %v247, %v246
      %v251 = vpack.c.b16 %v249, %v248
      %vm253 = vcmask 220160
      %v255 = vsel %vm253, %v234, 0
      %v258 = vsel %vm253, %v235, 0
      %v261 = vsel %vm253, %v236, 0
      %v264 = vsel %vm253, %v237, 0
      %v267 = vsel %vm253, %v238, 0
      %v270 = vsel %vm253, %v239, 0
      %v273 = vsel %vm253, %v240, 0
      %v276 = vsel %vm253, %v241, 0
      %vm278 = vcmask 1044480
      %vm279 = vcmask 1045504
      %v280 = vsel %vm278, 4294967295, 65535
      %v281 = vsel %vm279, %v280, 0
      %v283 = vand.u32 %v251, %v281
      %285 = vmatprep.subr.bf16.mxu0 0
      %286 = vmatpush1.bf16.msra.mxu0 0
      %287 = vmatprep.subr.bf16.mxu0 0
      %288 = vmatpush1.bf16.msra.mxu0 0
      %289 = vmatprep.subr.bf16.mxu0 0
      %290 = vmatpush1.bf16.msra.mxu0 0
      %291 = vmatprep.subr.bf16.mxu0 0
      %292 = vmatpush1.bf16.msra.mxu0 0
      %293 = vmatprep.subr.bf16.mxu0 0
      %294 = vmatpush1.bf16.msra.mxu0 0
      %295 = vmatprep.subr.bf16.mxu0 0
      %296 = vmatpush1.bf16.msra.mxu0 0
      %297 = vmatprep.subr.bf16.mxu0 0
      %298 = vmatpush1.bf16.msra.mxu0 %v283
      %299 = vmatprep.subr.bf16.mxu0 0
      %300 = vmatpush1.bf16.msra.mxu0 %v250
      %301 = vmatprep.subr.bf16.mxu0 0
      %302 = vmatpush2.bf16.msra.mxu0 0
      %303 = vmatprep.subr.bf16.mxu0 0
      %304 = vmatpush2.bf16.msra.mxu0 0
      %305 = vmatprep.subr.bf16.mxu0 0
      %306 = vmatpush2.bf16.msra.mxu0 0
      %307 = vmatprep.subr.bf16.mxu0 0
      %308 = vmatpush2.bf16.msra.mxu0 0
      %309 = vmatprep.subr.bf16.mxu0 0
      %310 = vmatpush2.bf16.msra.mxu0 0
      %311 = vmatprep.subr.bf16.mxu0 0
      %312 = vmatpush2.bf16.msra.mxu0 0
      %313 = vmatprep.subr.bf16.mxu0 0
      %314 = vmatpush2.bf16.msra.mxu0 0
      %315 = vmatprep.subr.bf16.mxu0 0
      %316 = vmatpush2.bf16.msra.mxu0 0
      %317 = vmatprep.mubr.bf16.mxu0 0
      %318 = vmatmul.mubr.bf16.gmra.mxu0 %v255
      %v319 = vpop.f32.mrf.mxu0
      %v320 = vadd.f32 %v200, %v319
      %v321 = vpop.f32.mrf.mxu0
      %v322 = vpop.f32.mrf.mxu0
      %v323 = vadd.f32 %v200, %v322
      %v324 = vpop.f32.mrf.mxu0
      %325 = vmatprep.mubr.bf16.mxu0 0
      %326 = vmatmul.mubr.bf16.gmra.mxu0 %v258
      %v327 = vpop.f32.mrf.mxu0
      %v328 = vadd.f32 %v200, %v327
      %v329 = vpop.f32.mrf.mxu0
      %v330 = vpop.f32.mrf.mxu0
      %v331 = vadd.f32 %v200, %v330
      %v332 = vpop.f32.mrf.mxu0
      %333 = vmatprep.mubr.bf16.mxu0 0
      %334 = vmatmul.mubr.bf16.gmra.mxu0 %v261
      %v335 = vpop.f32.mrf.mxu0
      %v336 = vadd.f32 %v200, %v335
      %v337 = vpop.f32.mrf.mxu0
      %v338 = vpop.f32.mrf.mxu0
      %v339 = vadd.f32 %v200, %v338
      %v340 = vpop.f32.mrf.mxu0
      %341 = vmatprep.mubr.bf16.mxu0 0
      %342 = vmatmul.mubr.bf16.gmra.mxu0 %v264
      %v343 = vpop.f32.mrf.mxu0
      %v344 = vadd.f32 %v200, %v343
      %v345 = vpop.f32.mrf.mxu0
      %v346 = vpop.f32.mrf.mxu0
      %v347 = vadd.f32 %v200, %v346
      %v348 = vpop.f32.mrf.mxu0
      %349 = vmatprep.mubr.bf16.mxu0 0
      %350 = vmatmul.mubr.bf16.gmra.mxu0 %v267
      %v351 = vpop.f32.mrf.mxu0
      %v352 = vadd.f32 %v200, %v351
      %v353 = vpop.f32.mrf.mxu0
      %v354 = vpop.f32.mrf.mxu0
      %v355 = vadd.f32 %v200, %v354
      %v356 = vpop.f32.mrf.mxu0
      %357 = vmatprep.mubr.bf16.mxu0 0
      %358 = vmatmul.mubr.bf16.gmra.mxu0 %v270
      %v359 = vpop.f32.mrf.mxu0
      %v360 = vadd.f32 %v200, %v359
      %v361 = vpop.f32.mrf.mxu0
      %v362 = vpop.f32.mrf.mxu0
      %v363 = vadd.f32 %v200, %v362
      %v364 = vpop.f32.mrf.mxu0
      %365 = vmatprep.mubr.bf16.mxu0 0
      %366 = vmatmul.mubr.bf16.gmra.mxu0 %v273
      %v367 = vpop.f32.mrf.mxu0
      %v368 = vadd.f32 %v200, %v367
      %v369 = vpop.f32.mrf.mxu0
      %v370 = vpop.f32.mrf.mxu0
      %v371 = vadd.f32 %v200, %v370
      %v372 = vpop.f32.mrf.mxu0
      %373 = vmatprep.mubr.bf16.mxu0 0
      %374 = vmatmul.mubr.bf16.gmra.mxu0 %v276
      %v375 = vpop.f32.mrf.mxu0
      %v376 = vadd.f32 %v200, %v375
      %v377 = vpop.f32.mrf.mxu0
      %v378 = vpop.f32.mrf.mxu0
      %v379 = vadd.f32 %v200, %v378
      %v380 = vpop.f32.mrf.mxu0
      %381 = vdwg.mxu0
      %v382 = vxor.u32 %v320, 2147483648
      %v383 = vxor.u32 %v323, 2147483648
      %v384 = vxor.u32 %v328, 2147483648
      %v385 = vxor.u32 %v331, 2147483648
      %v386 = vxor.u32 %v336, 2147483648
      %v387 = vxor.u32 %v339, 2147483648
      %v388 = vxor.u32 %v344, 2147483648
      %v389 = vxor.u32 %v347, 2147483648
      %v390 = vxor.u32 %v352, 2147483648
      %v391 = vxor.u32 %v355, 2147483648
      %v392 = vxor.u32 %v360, 2147483648
      %v393 = vxor.u32 %v363, 2147483648
      %v394 = vxor.u32 %v368, 2147483648
      %v395 = vxor.u32 %v371, 2147483648
      %v396 = vxor.u32 %v376, 2147483648
      %v397 = vxor.u32 %v379, 2147483648
      %v398 = vmul.f32 %v382, 1.442695
      %v399 = vpow.pop %v398
      %v400 = vmul.f32 %v383, 1.442695
      %v401 = vpow.pop %v400
      %v402 = vmul.f32 %v384, 1.442695
      %v403 = vpow.pop %v402
      %v404 = vmul.f32 %v385, 1.442695
      %v405 = vpow.pop %v404
      %v406 = vmul.f32 %v386, 1.442695
      %v407 = vpow.pop %v406
      %v408 = vmul.f32 %v387, 1.442695
      %v409 = vpow.pop %v408
      %v410 = vmul.f32 %v388, 1.442695
      %v411 = vpow.pop %v410
      %v412 = vmul.f32 %v389, 1.442695
      %v413 = vpow.pop %v412
      %v414 = vmul.f32 %v390, 1.442695
      %v415 = vpow.pop %v414
      %v416 = vmul.f32 %v391, 1.442695
      %v417 = vpow.pop %v416
      %v418 = vmul.f32 %v392, 1.442695
      %v419 = vpow.pop %v418
      %v420 = vmul.f32 %v393, 1.442695
      %v421 = vpow.pop %v420
      %v422 = vmul.f32 %v394, 1.442695
      %v423 = vpow.pop %v422
      %v424 = vmul.f32 %v395, 1.442695
      %v425 = vpow.pop %v424
      %v426 = vmul.f32 %v396, 1.442695
      %v427 = vpow.pop %v426
      %v428 = vmul.f32 %v397, 1.442695
      %v429 = vpow.pop %v428
      %v430 = vadd.f32 %v399, 1.0
      %v431 = vadd.f32 %v401, 1.0
      %v432 = vadd.f32 %v403, 1.0
      %v433 = vadd.f32 %v405, 1.0
      %v434 = vadd.f32 %v407, 1.0
      %v435 = vadd.f32 %v409, 1.0
      %v436 = vadd.f32 %v411, 1.0
      %v437 = vadd.f32 %v413, 1.0
      %v438 = vadd.f32 %v415, 1.0
      %v439 = vadd.f32 %v417, 1.0
      %v440 = vadd.f32 %v419, 1.0
      %v441 = vadd.f32 %v421, 1.0
      %v442 = vadd.f32 %v423, 1.0
      %v443 = vadd.f32 %v425, 1.0
      %v444 = vadd.f32 %v427, 1.0
      %v445 = vadd.f32 %v429, 1.0
      %v446 = vrcp.pop %v430
      %v447 = vmul.f32 1.0, %v446
      %v448 = vrcp.pop %v431
      %v449 = vmul.f32 1.0, %v448
      %v450 = vrcp.pop %v432
      %v451 = vmul.f32 1.0, %v450
      %v452 = vrcp.pop %v433
      %v453 = vmul.f32 1.0, %v452
      %v454 = vrcp.pop %v434
      %v455 = vmul.f32 1.0, %v454
      %v456 = vrcp.pop %v435
      %v457 = vmul.f32 1.0, %v456
      %v458 = vrcp.pop %v436
      %v459 = vmul.f32 1.0, %v458
      %v460 = vrcp.pop %v437
      %v461 = vmul.f32 1.0, %v460
      %v462 = vrcp.pop %v438
      %v463 = vmul.f32 1.0, %v462
      %v464 = vrcp.pop %v439
      %v465 = vmul.f32 1.0, %v464
      %v466 = vrcp.pop %v440
      %v467 = vmul.f32 1.0, %v466
      %v468 = vrcp.pop %v441
      %v469 = vmul.f32 1.0, %v468
      %v470 = vrcp.pop %v442
      %v471 = vmul.f32 1.0, %v470
      %v472 = vrcp.pop %v443
      %v473 = vmul.f32 1.0, %v472
      %v474 = vrcp.pop %v444
      %v475 = vmul.f32 1.0, %v474
      %v476 = vrcp.pop %v445
      %v477 = vmul.f32 1.0, %v476
      %v478 = vmul.f32 %v320, %v447
      %v479 = vmul.f32 %v323, %v449
      %v480 = vmul.f32 %v328, %v451
      %v481 = vmul.f32 %v331, %v453
      %v482 = vmul.f32 %v336, %v455
      %v483 = vmul.f32 %v339, %v457
      %v484 = vmul.f32 %v344, %v459
      %v485 = vmul.f32 %v347, %v461
      %v486 = vmul.f32 %v352, %v463
      %v487 = vmul.f32 %v355, %v465
      %v488 = vmul.f32 %v360, %v467
      %v489 = vmul.f32 %v363, %v469
      %v490 = vmul.f32 %v368, %v471
      %v491 = vmul.f32 %v371, %v473
      %v492 = vmul.f32 %v376, %v475
      %v493 = vmul.f32 %v379, %v477
      %v494 = vpack.c.bf16 %v479, %v478
      %v495 = vpack.c.bf16 %v481, %v480
      %v496 = vpack.c.bf16 %v483, %v482
      %v497 = vpack.c.bf16 %v485, %v484
      %v498 = vpack.c.bf16 %v487, %v486
      %v499 = vpack.c.bf16 %v489, %v488
      %v500 = vpack.c.bf16 %v491, %v490
      %v501 = vpack.c.bf16 %v493, %v492
      %v510 = vunpack.c.l.b16 %v494
      %v511 = vunpack.c.h.b16 %v494
      %v512 = vunpack.c.l.b16 %v495
      %v513 = vunpack.c.h.b16 %v495
      %v514 = vunpack.c.l.b16 %v496
      %v515 = vunpack.c.h.b16 %v496
      %v516 = vunpack.c.l.b16 %v497
      %v517 = vunpack.c.h.b16 %v497
      %v518 = vunpack.c.l.b16 %v498
      %v519 = vunpack.c.h.b16 %v498
      %v520 = vunpack.c.l.b16 %v499
      %v521 = vunpack.c.h.b16 %v499
      %v522 = vunpack.c.l.b16 %v500
      %v523 = vunpack.c.h.b16 %v500
      %v524 = vunpack.c.l.b16 %v501
      %v525 = vunpack.c.h.b16 %v501
      %v526 = vpack.c.b16 %v510, %v510
      %v527 = vpack.c.b16 %v511, %v511
      %v528 = vpack.c.b16 %v512, %v512
      %v529 = vpack.c.b16 %v513, %v513
      %v530 = vpack.c.b16 %v514, %v514
      %v531 = vpack.c.b16 %v515, %v515
      %v532 = vpack.c.b16 %v516, %v516
      %v533 = vpack.c.b16 %v517, %v517
      %v534 = vpack.c.b16 %v518, %v518
      %v535 = vpack.c.b16 %v519, %v519
      %v536 = vpack.c.b16 %v520, %v520
      %v537 = vpack.c.b16 %v521, %v521
      %v538 = vpack.c.b16 %v522, %v522
      %v539 = vpack.c.b16 %v523, %v523
      %v540 = vpack.c.b16 %v524, %v524
      %v541 = vpack.c.b16 %v525, %v525
      %vm558 = vcmask 125952
      %559 = vst.msk [vmem:[%s172] sm:$0xf] %vm558, %v526
      %560 = vst.msk [vmem:[%s172 + $0x4] sm:$0xf] %vm558, %v527
      %561 = vst.msk [vmem:[%s172 + $0x8] sm:$0xf] %vm558, %v528
      %562 = vst.msk [vmem:[%s172 + $0xc] sm:$0xf] %vm558, %v529
      %563 = vst.msk [vmem:[%s172 + $0x10] sm:$0xf] %vm558, %v530
      %564 = vst.msk [vmem:[%s172 + $0x14] sm:$0xf] %vm558, %v531
      %565 = vst.msk [vmem:[%s172 + $0x18] sm:$0xf] %vm558, %v532
      %566 = vst.msk [vmem:[%s172 + $0x1c] sm:$0xf] %vm558, %v533
      %567 = vst.msk [vmem:[%s172 + $0x20] sm:$0xf] %vm558, %v534
      %568 = vst.msk [vmem:[%s172 + $0x24] sm:$0xf] %vm558, %v535
      %569 = vst.msk [vmem:[%s172 + $0x28] sm:$0xf] %vm558, %v536
      %570 = vst.msk [vmem:[%s172 + $0x2c] sm:$0xf] %vm558, %v537
      %571 = vst.msk [vmem:[%s172 + $0x30] sm:$0xf] %vm558, %v538
      %572 = vst.msk [vmem:[%s172 + $0x34] sm:$0xf] %vm558, %v539
      %573 = vst.msk [vmem:[%s172 + $0x38] sm:$0xf] %vm558, %v540
      %574 = vst.msk [vmem:[%s172 + $0x3c] sm:$0xf] %vm558, %v541
      %s575 = smul.u32 16, %s14
      %p576 = scmp.lt.s32.totalorder %s575, 63
      %s577 = scalar_select %p576, %s575, 63
      %s578 = smul.addr %s577, 4
      %s579 = scalar_lea.vmem %s3, %s578
      // Predicated region
      $region33: #{_lambda_.5} parent=31 // pred_check
        %p580 = pneg %p100
      $region34: #{_lambda_.5} parent=31 // pred_check_branch
        %582 = sbr.rel (%p580) target = $region36
      $region35: #{_lambda_.5} parent=31 // pred_region
        %s583 = smul.u32 16, %s14
      $region36: #{_lambda_.5} parent=31 // pred_fallthru
        _
    $region32: #{_lambda_.5} parent=5 // pred_fallthru
      _
    %p584 = scmp.le.s32.totalorder 2, %s9
    // Predicated region
    $region37: #{_lambda_.5} parent=5 // pred_check
      %p585 = pneg %p584
    $region38: #{_lambda_.5} parent=5 // pred_check_branch
      %587 = sbr.rel (%p585) target = $region40
    $region39: #{_lambda_.5} parent=5 // pred_region
      %s588 = ssub.s32 %s9, 2
      // Predicated region
      $region41: #{_lambda_.5} parent=39 // pred_check
        %p589 = pneg %p106
      $region42: #{_lambda_.5} parent=39 // pred_check_branch
        %591 = sbr.rel (%p589) target = $region44
      $region43: #{_lambda_.5} parent=39 // pred_region
        %s592 = smul.u32 16, %s15
        %p593 = scmp.lt.s32.totalorder %s592, 63
        %s594 = scalar_select %p593, %s592, 63
        %s595 = smul.addr %s594, 4
        %s596 = scalar_lea.vmem %s3, %s595
      $region44: #{_lambda_.5} parent=39 // pred_fallthru
        _
    $region40: #{_lambda_.5} parent=5 // pred_fallthru
      _
  $region6: #{_lambda_.5} parent=0 // loop_footer
    %s13 = sadd.s32 1, %s9
  $region7: #{_lambda_.5} parent=0 // loop_footer_branch
    %8 = sbr.rel target = $region3
  $region8: #{_lambda_.5} parent=0 // loop_exit
    _

// kernel: _lambda_.6
$region0: #{_lambda_.6}
  #allocation0 [shape = 'u32[]', space=smem, size = 0x4, offset = 0x4, fixed_abs, tag = 'smem constant byte address 0x4 - core index']
  #allocation1 [shape = 'u32[144,128]{1,0:T(1,128)}', space=vmem, size = 0x12000, scoped, tag = 'internal scratch']
  %s0 = inlined_call_operand.vmem [shape: bf16[512,144], index: 0, kind: input, shape index: {}]
  %s1 = inlined_call_operand.vmem [shape: bf16[144,24], index: 1, kind: input, shape index: {}]
  %s2 = inlined_call_operand.vmem [shape: f32[1,24], index: 2, kind: input, shape index: {}]
  %s3 = inlined_call_operand.vmem [shape: bf16[512,24], index: 3, kind: output, shape index: {}]
  %s4 = sld [smem:[#allocation0]]
  $region45: #{_lambda_.6} parent=0
    _
  %s6 = ssub.s32 1, %s4
  %s7 = scalar_select 0, %s6, %s4
  loop: start=0, step=1, limit=6
  $region2: #{_lambda_.6} parent=0 // loop_pre_header
    _
  $region3: #{_lambda_.6} parent=0 // loop_header
    %s9 = sphi 0, %s13
    %p10 = scmp.ge.s32.totalorder %s9, 6
    %s19 = sphi 0, %s21
    %s22 = sphi 0, %s19
    %s23 = sphi 0, %s22
    %s39 = sphi 0, %s23
    %s43 = sphi 0, %s43
    %s45 = sphi 0, %s43
    %s46 = sphi 0, %s45
    %s60 = sphi 0, %s46
    %s64 = sphi 0, %s64
    %s66 = sphi 0, %s64
    %s67 = sphi 0, %s66
    %s81 = sphi 0, %s67
    %s87 = sphi 0, %s89
    %s90 = sphi 0, %s87
    %s91 = sphi 0, %s90
    %s107 = sphi 0, %s91
  $region4: #{_lambda_.6} parent=0 // loop_header_branch
    %12 = sbr.rel (%p10) target = $region8
  $region5: #{_lambda_.6} parent=0 // loop_body
    %s14 = ssub.s32 %s9, 1
    %s15 = ssub.s32 %s9, 2
    %s16 = sadd.s32 %s9, 1
    %s17 = ssub.s32 %s9, %s16
    %p18 = scmp.eq.s32.totalorder %s17, 0
    %s20 = sadd.s32 %s19, 1
    %s21 = scalar_select %p18, %s19, %s20
    %p24 = pneg %p18
    %p25 = scmp.eq.s32.totalorder %s9, 3
    %p26 = por %p24, %p25
    %p27 = scmp.ne.s32.totalorder %s19, %s22
    %p28 = scmp.eq.s32.totalorder %s9, 0
    %p29 = por %p27, %p28
    %p30 = scmp.ne.s32.totalorder %s19, %s22
    %p31 = scmp.eq.s32.totalorder %s14, 3
    %p32 = por %p30, %p31
    %p33 = scmp.ne.s32.totalorder %s22, %s23
    %p34 = scmp.eq.s32.totalorder %s14, 0
    %p35 = por %p33, %p34
    %p36 = scmp.ne.s32.totalorder %s22, %s23
    %p37 = scmp.eq.s32.totalorder %s15, 3
    %p38 = por %p36, %p37
    %p40 = scmp.ne.s32.totalorder %s23, %s39
    %p41 = scmp.eq.s32.totalorder %s15, 0
    %p42 = por %p40, %p41
    %s44 = sadd.s32 %s43, 1
    %p47 = scmp.eq.s32.totalorder %s9, 3
    %p48 = scmp.ne.s32.totalorder %s43, %s45
    %p49 = scmp.eq.s32.totalorder %s9, 0
    %p50 = por %p48, %p49
    %p51 = scmp.ne.s32.totalorder %s43, %s45
    %p52 = scmp.eq.s32.totalorder %s14, 3
    %p53 = por %p51, %p52
    %p54 = scmp.ne.s32.totalorder %s45, %s46
    %p55 = scmp.eq.s32.totalorder %s14, 0
    %p56 = por %p54, %p55
    %p57 = scmp.ne.s32.totalorder %s45, %s46
    %p58 = scmp.eq.s32.totalorder %s15, 3
    %p59 = por %p57, %p58
    %p61 = scmp.ne.s32.totalorder %s46, %s60
    %p62 = scmp.eq.s32.totalorder %s15, 0
    %p63 = por %p61, %p62
    %s65 = sadd.s32 %s64, 1
    %p68 = scmp.eq.s32.totalorder %s9, 3
    %p69 = scmp.ne.s32.totalorder %s64, %s66
    %p70 = scmp.eq.s32.totalorder %s9, 0
    %p71 = por %p69, %p70
    %p72 = scmp.ne.s32.totalorder %s64, %s66
    %p73 = scmp.eq.s32.totalorder %s14, 3
    %p74 = por %p72, %p73
    %p75 = scmp.ne.s32.totalorder %s66, %s67
    %p76 = scmp.eq.s32.totalorder %s14, 0
    %p77 = por %p75, %p76
    %p78 = scmp.ne.s32.totalorder %s66, %s67
    %p79 = scmp.eq.s32.totalorder %s15, 3
    %p80 = por %p78, %p79
    %p82 = scmp.ne.s32.totalorder %s67, %s81
    %p83 = scmp.eq.s32.totalorder %s15, 0
    %p84 = por %p82, %p83
    %s85 = ssub.s32 %s9, %s16
    %p86 = scmp.eq.s32.totalorder %s85, 0
    %s88 = sadd.s32 %s87, 1
    %s89 = scalar_select %p86, %s87, %s88
    %p92 = pneg %p86
    %p93 = scmp.eq.s32.totalorder %s9, 3
    %p94 = por %p92, %p93
    %p95 = scmp.ne.s32.totalorder %s87, %s90
    %p96 = scmp.eq.s32.totalorder %s9, 0
    %p97 = por %p95, %p96
    %p98 = scmp.ne.s32.totalorder %s87, %s90
    %p99 = scmp.eq.s32.totalorder %s14, 3
    %p100 = por %p98, %p99
    %p101 = scmp.ne.s32.totalorder %s90, %s91
    %p102 = scmp.eq.s32.totalorder %s14, 0
    %p103 = por %p101, %p102
    %p104 = scmp.ne.s32.totalorder %s90, %s91
    %p105 = scmp.eq.s32.totalorder %s15, 3
    %p106 = por %p104, %p105
    %p108 = scmp.ne.s32.totalorder %s91, %s107
    %p109 = scmp.eq.s32.totalorder %s15, 0
    %p110 = por %p108, %p109
    %p111 = scmp.le.s32.totalorder 1, %s9
    %p112 = scmp.lt.s32.totalorder %s9, 5
    %p113 = pnand %p111, %p112
    %p114 = pneg %p113
    // Predicated region
    $region9: #{_lambda_.6} parent=5 // pred_check
      _
    $region10: #{_lambda_.6} parent=5 // pred_check_branch
      %116 = sbr.rel (%p113) target = $region12
    $region11: #{_lambda_.6} parent=5 // pred_region
      %s117 = ssub.s32 %s9, 1
      // Predicated region
      $region13: #{_lambda_.6} parent=11 // pred_check
        %p118 = pneg %p56
      $region14: #{_lambda_.6} parent=11 // pred_check_branch
        %120 = sbr.rel (%p118) target = $region16
      $region15: #{_lambda_.6} parent=11 // pred_region
        _
      $region16: #{_lambda_.6} parent=11 // pred_fallthru
        _
      // Predicated region
      $region17: #{_lambda_.6} parent=11 // pred_check
        %p121 = pneg %p77
      $region18: #{_lambda_.6} parent=11 // pred_check_branch
        %123 = sbr.rel (%p121) target = $region20
      $region19: #{_lambda_.6} parent=11 // pred_region
        _
      $region20: #{_lambda_.6} parent=11 // pred_fallthru
        _
    $region12: #{_lambda_.6} parent=5 // pred_fallthru
      _
    %p124 = scmp.lt.s32.totalorder %s9, 4
    // Predicated region
    $region21: #{_lambda_.6} parent=5 // pred_check
      %p125 = pneg %p124
    $region22: #{_lambda_.6} parent=5 // pred_check_branch
      %127 = sbr.rel (%p125) target = $region24
    $region23: #{_lambda_.6} parent=5 // pred_region
      // Predicated region
      $region25: #{_lambda_.6} parent=23 // pred_check
        %p128 = pneg %p29
      $region26: #{_lambda_.6} parent=23 // pred_check_branch
        %130 = sbr.rel (%p128) target = $region28
      $region27: #{_lambda_.6} parent=23 // pred_region
        %s131 = smul.u32 16, %s9
        %p132 = scmp.lt.s32.totalorder %s131, 63
        %s133 = scalar_select %p132, %s131, 63
        %s134 = smul.addr %s133, 2
        %s135 = smul.addr %s134, 4
        %s136 = scalar_lea.vmem %s0, %s135
        %s137 = smul.u32 16, %s9
      $region28: #{_lambda_.6} parent=23 // pred_fallthru
        _
    $region24: #{_lambda_.6} parent=5 // pred_fallthru
      _
    %p138 = scmp.le.s32.totalorder 1, %s9
    %p139 = scmp.lt.s32.totalorder %s9, 5
    %p140 = pnand %p138, %p139
    %p141 = pneg %p140
    // Predicated region
    $region29: #{_lambda_.6} parent=5 // pred_check
      _
    $region30: #{_lambda_.6} parent=5 // pred_check_branch
      %143 = sbr.rel (%p140) target = $region32
    $region31: #{_lambda_.6} parent=5 // pred_region
      %s144 = ssub.s32 %s9, 1
      %s145 = smul.u32 16, %s14
      %p146 = scmp.lt.s32.totalorder %s145, 63
      %s147 = scalar_select %p146, %s145, 63
      %s148 = smul.addr %s147, 2
      %s149 = smul.addr %s148, 4
      %s150 = scalar_lea.vmem %s0, %s149
      %p151 = pneg %p35
      %p152 = pneg %p32
      %p153 = pneg %p56
      %p154 = pneg %p53
      %p155 = pneg %p77
      %p156 = pneg %p74
      %p157 = pneg %p103
      %p158 = pneg %p100
      %s159 = smul.u32 16, %s14
      %p160 = scmp.lt.s32.totalorder %s159, 63
      %s161 = scalar_select %p160, %s159, 63
      %s162 = smul.addr %s161, 4
      %s163 = scalar_lea.vmem %s3, %s162
      %s164 = smul.u32 16, %s14
      %p165 = scmp.lt.s32.totalorder %s164, 63
      %s166 = scalar_select %p165, %s164, 63
      %s167 = smul.addr %s166, 2
      %s168 = smul.addr %s167, 4
      %s169 = scalar_lea.vmem %s0, %s168
      %s170 = smul.u32 16, %s14
      %s171 = smul.u32 16, %s14
      %p172 = scmp.lt.s32.totalorder %s171, 63
      %s173 = scalar_select %p172, %s171, 63
      %s174 = smul.addr %s173, 4
      %s175 = scalar_lea.vmem %s3, %s174
      %s176 = smul.u32 16, %s14
      %v178 = vld [vmem:[%s169] sm:$0xff]
      %v179 = vld [vmem:[%s169 + $0x8] sm:$0xff]
      %v180 = vld [vmem:[%s169 + $0x10] sm:$0xff]
      %v181 = vld [vmem:[%s169 + $0x18] sm:$0xff]
      %v182 = vld [vmem:[%s169 + $0x20] sm:$0xff]
      %v183 = vld [vmem:[%s169 + $0x28] sm:$0xff]
      %v184 = vld [vmem:[%s169 + $0x30] sm:$0xff]
      %v185 = vld [vmem:[%s169 + $0x38] sm:$0xff]
      %v186 = vld [vmem:[%s169 + $0x40] sm:$0xff]
      %v187 = vld [vmem:[%s169 + $0x48] sm:$0xff]
      %v188 = vld [vmem:[%s169 + $0x50] sm:$0xff]
      %v189 = vld [vmem:[%s169 + $0x58] sm:$0xff]
      %v190 = vld [vmem:[%s169 + $0x60] sm:$0xff]
      %v191 = vld [vmem:[%s169 + $0x68] sm:$0xff]
      %v192 = vld [vmem:[%s169 + $0x70] sm:$0xff]
      %v193 = vld [vmem:[%s169 + $0x78] sm:$0xff]
      %v194 = vld [vmem:[%s1] sm:$0xf]
      %v195 = vld [vmem:[%s1 + $0x4] sm:$0xf]
      %v196 = vld [vmem:[%s1 + $0x8] sm:$0xf]
      %v197 = vld [vmem:[%s1 + $0xc] sm:$0xf]
      %v198 = vld [vmem:[%s1 + $0x10] sm:$0xf]
      %v199 = vld [vmem:[%s1 + $0x14] sm:$0xf]
      %v200 = vld [vmem:[%s1 + $0x18] sm:$0xf]
      %v201 = vld [vmem:[%s1 + $0x1c] sm:$0xf]
      %v202 = vld [vmem:[%s1 + $0x20] sm:$0xf]
      %v203 = vld [vmem:[%s1 + $0x24] sm:$0xf]
      %v204 = vld [vmem:[%s1 + $0x28] sm:$0xf]
      %v205 = vld [vmem:[%s1 + $0x2c] sm:$0xf]
      %v206 = vld [vmem:[%s1 + $0x30] sm:$0xf]
      %v207 = vld [vmem:[%s1 + $0x34] sm:$0xf]
      %v208 = vld [vmem:[%s1 + $0x38] sm:$0xf]
      %v209 = vld [vmem:[%s1 + $0x3c] sm:$0xf]
      %v210 = vld [vmem:[%s1 + $0x40] sm:$0xf]
      %v211 = vld [vmem:[%s1 + $0x44] sm:$0xf]
      %v212 = vld [vmem:[%s2] sm:$0x1]
      %v214 = vlaneseq
      %v215 = vshrl.u32 %v214, 7
      %v216 = vsub.s32 0, %v215
      %v217 = vrot.slane %v212, %v216
      %v235 = vunpack.c.l.b16 %v178
      %v236 = vunpack.c.h.b16 %v178
      %v237 = vunpack.c.l.b16 %v179
      %v238 = vunpack.c.h.b16 %v179
      %v239 = vunpack.c.l.b16 %v180
      %v240 = vunpack.c.h.b16 %v180
      %v241 = vunpack.c.l.b16 %v181
      %v242 = vunpack.c.h.b16 %v181
      %v243 = vunpack.c.l.b16 %v182
      %v244 = vunpack.c.h.b16 %v182
      %v245 = vunpack.c.l.b16 %v183
      %v246 = vunpack.c.h.b16 %v183
      %v247 = vunpack.c.l.b16 %v184
      %v248 = vunpack.c.h.b16 %v184
      %v249 = vunpack.c.l.b16 %v185
      %v250 = vunpack.c.h.b16 %v185
      %v251 = vunpack.c.l.b16 %v186
      %v252 = vunpack.c.h.b16 %v186
      %v253 = vunpack.c.l.b16 %v187
      %v254 = vunpack.c.h.b16 %v187
      %v255 = vunpack.c.l.b16 %v188
      %v256 = vunpack.c.h.b16 %v188
      %v257 = vunpack.c.l.b16 %v189
      %v258 = vunpack.c.h.b16 %v189
      %v259 = vunpack.c.l.b16 %v190
      %v260 = vunpack.c.h.b16 %v190
      %v261 = vunpack.c.l.b16 %v191
      %v262 = vunpack.c.h.b16 %v191
      %v263 = vunpack.c.l.b16 %v192
      %v264 = vunpack.c.h.b16 %v192
      %v265 = vunpack.c.l.b16 %v193
      %v266 = vunpack.c.h.b16 %v193
      %v267 = vpack.c.b16 %v237, %v235
      %v268 = vpack.c.b16 %v238, %v236
      %v269 = vpack.c.b16 %v241, %v239
      %v270 = vpack.c.b16 %v242, %v240
      %v271 = vpack.c.b16 %v245, %v243
      %v272 = vpack.c.b16 %v246, %v244
      %v273 = vpack.c.b16 %v249, %v247
      %v274 = vpack.c.b16 %v250, %v248
      %v275 = vpack.c.b16 %v253, %v251
      %v276 = vpack.c.b16 %v254, %v252
      %v277 = vpack.c.b16 %v257, %v255
      %v278 = vpack.c.b16 %v258, %v256
      %v279 = vpack.c.b16 %v261, %v259
      %v280 = vpack.c.b16 %v262, %v260
      %v281 = vpack.c.b16 %v265, %v263
      %v282 = vpack.c.b16 %v266, %v264
      %v309 = vunpack.c.l.b16 %v194
      %v310 = vunpack.c.l.b16 %v195
      %v311 = vunpack.c.l.b16 %v196
      %v312 = vunpack.c.l.b16 %v197
      %v313 = vunpack.c.l.b16 %v198
      %v314 = vunpack.c.l.b16 %v199
      %v315 = vunpack.c.l.b16 %v200
      %v316 = vunpack.c.l.b16 %v201
      %v317 = vunpack.c.l.b16 %v202
      %v318 = vunpack.c.l.b16 %v203
      %v319 = vunpack.c.l.b16 %v204
      %v320 = vunpack.c.l.b16 %v205
      %v321 = vunpack.c.l.b16 %v206
      %v322 = vunpack.c.l.b16 %v207
      %v323 = vunpack.c.l.b16 %v208
      %v324 = vunpack.c.l.b16 %v209
      %v325 = vunpack.c.l.b16 %v210
      %v326 = vunpack.c.l.b16 %v211
      %v327 = vpack.c.b16 %v310, %v309
      %v328 = vpack.c.b16 %v312, %v311
      %v329 = vpack.c.b16 %v314, %v313
      %v330 = vpack.c.b16 %v316, %v315
      %v331 = vpack.c.b16 %v318, %v317
      %v332 = vpack.c.b16 %v320, %v319
      %v333 = vpack.c.b16 %v322, %v321
      %v334 = vpack.c.b16 %v324, %v323
      %v335 = vpack.c.b16 %v326, %v325
      %vm345 = vcmask 130048
      %v347 = vsel %vm345, %v268, 0
      %v350 = vsel %vm345, %v270, 0
      %v353 = vsel %vm345, %v272, 0
      %v356 = vsel %vm345, %v274, 0
      %v359 = vsel %vm345, %v276, 0
      %v362 = vsel %vm345, %v278, 0
      %v365 = vsel %vm345, %v280, 0
      %v368 = vsel %vm345, %v282, 0
      %370 = vmatprep.subr.bf16.mxu0 0
      %371 = vmatpush1.bf16.msra.mxu0 %v334
      %372 = vmatprep.subr.bf16.mxu0 0
      %373 = vmatpush1.bf16.msra.mxu0 %v333
      %374 = vmatprep.subr.bf16.mxu0 0
      %375 = vmatpush1.bf16.msra.mxu0 %v332
      %376 = vmatprep.subr.bf16.mxu0 0
      %377 = vmatpush1.bf16.msra.mxu0 %v331
      %378 = vmatprep.subr.bf16.mxu0 0
      %379 = vmatpush1.bf16.msra.mxu0 %v330
      %380 = vmatprep.subr.bf16.mxu0 0
      %381 = vmatpush1.bf16.msra.mxu0 %v329
      %382 = vmatprep.subr.bf16.mxu0 0
      %383 = vmatpush1.bf16.msra.mxu0 %v328
      %384 = vmatprep.subr.bf16.mxu0 0
      %385 = vmatpush1.bf16.msra.mxu0 %v327
      %386 = vmatprep.subr.bf16.mxu0 0
      %387 = vmatpush2.bf16.msra.mxu0 0
      %388 = vmatprep.subr.bf16.mxu0 0
      %389 = vmatpush2.bf16.msra.mxu0 0
      %390 = vmatprep.subr.bf16.mxu0 0
      %391 = vmatpush2.bf16.msra.mxu0 0
      %392 = vmatprep.subr.bf16.mxu0 0
      %393 = vmatpush2.bf16.msra.mxu0 0
      %394 = vmatprep.subr.bf16.mxu0 0
      %395 = vmatpush2.bf16.msra.mxu0 0
      %396 = vmatprep.subr.bf16.mxu0 0
      %397 = vmatpush2.bf16.msra.mxu0 0
      %398 = vmatprep.subr.bf16.mxu0 0
      %399 = vmatpush2.bf16.msra.mxu0 0
      %400 = vmatprep.subr.bf16.mxu0 0
      %401 = vmatpush2.bf16.msra.mxu0 %v335
      %402 = vmatprep.mubr.bf16.mxu0 %v347
      %403 = vmatmul.mubr.bf16.gmra.mxu0 %v267
      %v404 = vpop.f32.mrf.mxu0
      %v405 = vadd.f32 %v217, %v404
      %v406 = vpop.f32.mrf.mxu0
      %v407 = vpop.f32.mrf.mxu0
      %v408 = vadd.f32 %v217, %v407
      %v409 = vpop.f32.mrf.mxu0
      %410 = vmatprep.mubr.bf16.mxu0 %v350
      %411 = vmatmul.mubr.bf16.gmra.mxu0 %v269
      %v412 = vpop.f32.mrf.mxu0
      %v413 = vadd.f32 %v217, %v412
      %v414 = vpop.f32.mrf.mxu0
      %v415 = vpop.f32.mrf.mxu0
      %v416 = vadd.f32 %v217, %v415
      %v417 = vpop.f32.mrf.mxu0
      %418 = vmatprep.mubr.bf16.mxu0 %v353
      %419 = vmatmul.mubr.bf16.gmra.mxu0 %v271
      %v420 = vpop.f32.mrf.mxu0
      %v421 = vadd.f32 %v217, %v420
      %v422 = vpop.f32.mrf.mxu0
      %v423 = vpop.f32.mrf.mxu0
      %v424 = vadd.f32 %v217, %v423
      %v425 = vpop.f32.mrf.mxu0
      %426 = vmatprep.mubr.bf16.mxu0 %v356
      %427 = vmatmul.mubr.bf16.gmra.mxu0 %v273
      %v428 = vpop.f32.mrf.mxu0
      %v429 = vadd.f32 %v217, %v428
      %v430 = vpop.f32.mrf.mxu0
      %v431 = vpop.f32.mrf.mxu0
      %v432 = vadd.f32 %v217, %v431
      %v433 = vpop.f32.mrf.mxu0
      %434 = vmatprep.mubr.bf16.mxu0 %v359
      %435 = vmatmul.mubr.bf16.gmra.mxu0 %v275
      %v436 = vpop.f32.mrf.mxu0
      %v437 = vadd.f32 %v217, %v436
      %v438 = vpop.f32.mrf.mxu0
      %v439 = vpop.f32.mrf.mxu0
      %v440 = vadd.f32 %v217, %v439
      %v441 = vpop.f32.mrf.mxu0
      %442 = vmatprep.mubr.bf16.mxu0 %v362
      %443 = vmatmul.mubr.bf16.gmra.mxu0 %v277
      %v444 = vpop.f32.mrf.mxu0
      %v445 = vadd.f32 %v217, %v444
      %v446 = vpop.f32.mrf.mxu0
      %v447 = vpop.f32.mrf.mxu0
      %v448 = vadd.f32 %v217, %v447
      %v449 = vpop.f32.mrf.mxu0
      %450 = vmatprep.mubr.bf16.mxu0 %v365
      %451 = vmatmul.mubr.bf16.gmra.mxu0 %v279
      %v452 = vpop.f32.mrf.mxu0
      %v453 = vadd.f32 %v217, %v452
      %v454 = vpop.f32.mrf.mxu0
      %v455 = vpop.f32.mrf.mxu0
      %v456 = vadd.f32 %v217, %v455
      %v457 = vpop.f32.mrf.mxu0
      %458 = vmatprep.mubr.bf16.mxu0 %v368
      %459 = vmatmul.mubr.bf16.gmra.mxu0 %v281
      %v460 = vpop.f32.mrf.mxu0
      %v461 = vadd.f32 %v217, %v460
      %v462 = vpop.f32.mrf.mxu0
      %v463 = vpop.f32.mrf.mxu0
      %v464 = vadd.f32 %v217, %v463
      %v465 = vpop.f32.mrf.mxu0
      %466 = vdwg.mxu0
      %v467 = vxor.u32 %v405, 2147483648
      %v468 = vxor.u32 %v408, 2147483648
      %v469 = vxor.u32 %v413, 2147483648
      %v470 = vxor.u32 %v416, 2147483648
      %v471 = vxor.u32 %v421, 2147483648
      %v472 = vxor.u32 %v424, 2147483648
      %v473 = vxor.u32 %v429, 2147483648
      %v474 = vxor.u32 %v432, 2147483648
      %v475 = vxor.u32 %v437, 2147483648
      %v476 = vxor.u32 %v440, 2147483648
      %v477 = vxor.u32 %v445, 2147483648
      %v478 = vxor.u32 %v448, 2147483648
      %v479 = vxor.u32 %v453, 2147483648
      %v480 = vxor.u32 %v456, 2147483648
      %v481 = vxor.u32 %v461, 2147483648
      %v482 = vxor.u32 %v464, 2147483648
      %v483 = vmul.f32 %v467, 1.442695
      %v484 = vpow.pop %v483
      %v485 = vmul.f32 %v468, 1.442695
      %v486 = vpow.pop %v485
      %v487 = vmul.f32 %v469, 1.442695
      %v488 = vpow.pop %v487
      %v489 = vmul.f32 %v470, 1.442695
      %v490 = vpow.pop %v489
      %v491 = vmul.f32 %v471, 1.442695
      %v492 = vpow.pop %v491
      %v493 = vmul.f32 %v472, 1.442695
      %v494 = vpow.pop %v493
      %v495 = vmul.f32 %v473, 1.442695
      %v496 = vpow.pop %v495
      %v497 = vmul.f32 %v474, 1.442695
      %v498 = vpow.pop %v497
      %v499 = vmul.f32 %v475, 1.442695
      %v500 = vpow.pop %v499
      %v501 = vmul.f32 %v476, 1.442695
      %v502 = vpow.pop %v501
      %v503 = vmul.f32 %v477, 1.442695
      %v504 = vpow.pop %v503
      %v505 = vmul.f32 %v478, 1.442695
      %v506 = vpow.pop %v505
      %v507 = vmul.f32 %v479, 1.442695
      %v508 = vpow.pop %v507
      %v509 = vmul.f32 %v480, 1.442695
      %v510 = vpow.pop %v509
      %v511 = vmul.f32 %v481, 1.442695
      %v512 = vpow.pop %v511
      %v513 = vmul.f32 %v482, 1.442695
      %v514 = vpow.pop %v513
      %v515 = vadd.f32 %v484, 1.0
      %v516 = vadd.f32 %v486, 1.0
      %v517 = vadd.f32 %v488, 1.0
      %v518 = vadd.f32 %v490, 1.0
      %v519 = vadd.f32 %v492, 1.0
      %v520 = vadd.f32 %v494, 1.0
      %v521 = vadd.f32 %v496, 1.0
      %v522 = vadd.f32 %v498, 1.0
      %v523 = vadd.f32 %v500, 1.0
      %v524 = vadd.f32 %v502, 1.0
      %v525 = vadd.f32 %v504, 1.0
      %v526 = vadd.f32 %v506, 1.0
      %v527 = vadd.f32 %v508, 1.0
      %v528 = vadd.f32 %v510, 1.0
      %v529 = vadd.f32 %v512, 1.0
      %v530 = vadd.f32 %v514, 1.0
      %v531 = vrcp.pop %v515
      %v532 = vmul.f32 1.0, %v531
      %v533 = vrcp.pop %v516
      %v534 = vmul.f32 1.0, %v533
      %v535 = vrcp.pop %v517
      %v536 = vmul.f32 1.0, %v535
      %v537 = vrcp.pop %v518
      %v538 = vmul.f32 1.0, %v537
      %v539 = vrcp.pop %v519
      %v540 = vmul.f32 1.0, %v539
      %v541 = vrcp.pop %v520
      %v542 = vmul.f32 1.0, %v541
      %v543 = vrcp.pop %v521
      %v544 = vmul.f32 1.0, %v543
      %v545 = vrcp.pop %v522
      %v546 = vmul.f32 1.0, %v545
      %v547 = vrcp.pop %v523
      %v548 = vmul.f32 1.0, %v547
      %v549 = vrcp.pop %v524
      %v550 = vmul.f32 1.0, %v549
      %v551 = vrcp.pop %v525
      %v552 = vmul.f32 1.0, %v551
      %v553 = vrcp.pop %v526
      %v554 = vmul.f32 1.0, %v553
      %v555 = vrcp.pop %v527
      %v556 = vmul.f32 1.0, %v555
      %v557 = vrcp.pop %v528
      %v558 = vmul.f32 1.0, %v557
      %v559 = vrcp.pop %v529
      %v560 = vmul.f32 1.0, %v559
      %v561 = vrcp.pop %v530
      %v562 = vmul.f32 1.0, %v561
      %v563 = vmul.f32 %v405, %v532
      %v564 = vmul.f32 %v408, %v534
      %v565 = vmul.f32 %v413, %v536
      %v566 = vmul.f32 %v416, %v538
      %v567 = vmul.f32 %v421, %v540
      %v568 = vmul.f32 %v424, %v542
      %v569 = vmul.f32 %v429, %v544
      %v570 = vmul.f32 %v432, %v546
      %v571 = vmul.f32 %v437, %v548
      %v572 = vmul.f32 %v440, %v550
      %v573 = vmul.f32 %v445, %v552
      %v574 = vmul.f32 %v448, %v554
      %v575 = vmul.f32 %v453, %v556
      %v576 = vmul.f32 %v456, %v558
      %v577 = vmul.f32 %v461, %v560
      %v578 = vmul.f32 %v464, %v562
      %v579 = vpack.c.bf16 %v564, %v563
      %v580 = vpack.c.bf16 %v566, %v565
      %v581 = vpack.c.bf16 %v568, %v567
      %v582 = vpack.c.bf16 %v570, %v569
      %v583 = vpack.c.bf16 %v572, %v571
      %v584 = vpack.c.bf16 %v574, %v573
      %v585 = vpack.c.bf16 %v576, %v575
      %v586 = vpack.c.bf16 %v578, %v577
      %v595 = vunpack.c.l.b16 %v579
      %v596 = vunpack.c.h.b16 %v579
      %v597 = vunpack.c.l.b16 %v580
      %v598 = vunpack.c.h.b16 %v580
      %v599 = vunpack.c.l.b16 %v581
      %v600 = vunpack.c.h.b16 %v581
      %v601 = vunpack.c.l.b16 %v582
      %v602 = vunpack.c.h.b16 %v582
      %v603 = vunpack.c.l.b16 %v583
      %v604 = vunpack.c.h.b16 %v583
      %v605 = vunpack.c.l.b16 %v584
      %v606 = vunpack.c.h.b16 %v584
      %v607 = vunpack.c.l.b16 %v585
      %v608 = vunpack.c.h.b16 %v585
      %v609 = vunpack.c.l.b16 %v586
      %v610 = vunpack.c.h.b16 %v586
      %v611 = vpack.c.b16 %v595, %v595
      %v612 = vpack.c.b16 %v596, %v596
      %v613 = vpack.c.b16 %v597, %v597
      %v614 = vpack.c.b16 %v598, %v598
      %v615 = vpack.c.b16 %v599, %v599
      %v616 = vpack.c.b16 %v600, %v600
      %v617 = vpack.c.b16 %v601, %v601
      %v618 = vpack.c.b16 %v602, %v602
      %v619 = vpack.c.b16 %v603, %v603
      %v620 = vpack.c.b16 %v604, %v604
      %v621 = vpack.c.b16 %v605, %v605
      %v622 = vpack.c.b16 %v606, %v606
      %v623 = vpack.c.b16 %v607, %v607
      %v624 = vpack.c.b16 %v608, %v608
      %v625 = vpack.c.b16 %v609, %v609
      %v626 = vpack.c.b16 %v610, %v610
      %vm643 = vcmask 191488
      %644 = vst.msk [vmem:[%s175] sm:$0xf] %vm643, %v611
      %645 = vst.msk [vmem:[%s175 + $0x4] sm:$0xf] %vm643, %v612
      %646 = vst.msk [vmem:[%s175 + $0x8] sm:$0xf] %vm643, %v613
      %647 = vst.msk [vmem:[%s175 + $0xc] sm:$0xf] %vm643, %v614
      %648 = vst.msk [vmem:[%s175 + $0x10] sm:$0xf] %vm643, %v615
      %649 = vst.msk [vmem:[%s175 + $0x14] sm:$0xf] %vm643, %v616
      %650 = vst.msk [vmem:[%s175 + $0x18] sm:$0xf] %vm643, %v617
      %651 = vst.msk [vmem:[%s175 + $0x1c] sm:$0xf] %vm643, %v618
      %652 = vst.msk [vmem:[%s175 + $0x20] sm:$0xf] %vm643, %v619
      %653 = vst.msk [vmem:[%s175 + $0x24] sm:$0xf] %vm643, %v620
      %654 = vst.msk [vmem:[%s175 + $0x28] sm:$0xf] %vm643, %v621
      %655 = vst.msk [vmem:[%s175 + $0x2c] sm:$0xf] %vm643, %v622
      %656 = vst.msk [vmem:[%s175 + $0x30] sm:$0xf] %vm643, %v623
      %657 = vst.msk [vmem:[%s175 + $0x34] sm:$0xf] %vm643, %v624
      %658 = vst.msk [vmem:[%s175 + $0x38] sm:$0xf] %vm643, %v625
      %659 = vst.msk [vmem:[%s175 + $0x3c] sm:$0xf] %vm643, %v626
      %s660 = smul.u32 16, %s14
      %p661 = scmp.lt.s32.totalorder %s660, 63
      %s662 = scalar_select %p661, %s660, 63
      %s663 = smul.addr %s662, 4
      %s664 = scalar_lea.vmem %s3, %s663
      // Predicated region
      $region33: #{_lambda_.6} parent=31 // pred_check
        %p665 = pneg %p100
      $region34: #{_lambda_.6} parent=31 // pred_check_branch
        %667 = sbr.rel (%p665) target = $region36
      $region35: #{_lambda_.6} parent=31 // pred_region
        %s668 = smul.u32 16, %s14
      $region36: #{_lambda_.6} parent=31 // pred_fallthru
        _
    $region32: #{_lambda_.6} parent=5 // pred_fallthru
      _
    %p669 = scmp.le.s32.totalorder 2, %s9
    // Predicated region
    $region37: #{_lambda_.6} parent=5 // pred_check
      %p670 = pneg %p669
    $region38: #{_lambda_.6} parent=5 // pred_check_branch
      %672 = sbr.rel (%p670) target = $region40
    $region39: #{_lambda_.6} parent=5 // pred_region
      %s673 = ssub.s32 %s9, 2
      // Predicated region
      $region41: #{_lambda_.6} parent=39 // pred_check
        %p674 = pneg %p106
      $region42: #{_lambda_.6} parent=39 // pred_check_branch
        %676 = sbr.rel (%p674) target = $region44
      $region43: #{_lambda_.6} parent=39 // pred_region
        %s677 = smul.u32 16, %s15
        %p678 = scmp.lt.s32.totalorder %s677, 63
        %s679 = scalar_select %p678, %s677, 63
        %s680 = smul.addr %s679, 4
        %s681 = scalar_lea.vmem %s3, %s680
      $region44: #{_lambda_.6} parent=39 // pred_fallthru
        _
    $region40: #{_lambda_.6} parent=5 // pred_fallthru
      _
  $region6: #{_lambda_.6} parent=0 // loop_footer
    %s13 = sadd.s32 1, %s9
  $region7: #{_lambda_.6} parent=0 // loop_footer_branch
    %8 = sbr.rel target = $region3
  $region8: #{_lambda_.6} parent=0 // loop_exit
    _

// kernel: _lambda_.7
$region0: #{_lambda_.7}
  #allocation0 [shape = 'u32[]', space=smem, size = 0x4, offset = 0x4, fixed_abs, tag = 'smem constant byte address 0x4 - core index']
  #allocation1 [shape = 'u32[144,128]{1,0:T(1,128)}', space=vmem, size = 0x12000, scoped, tag = 'internal scratch']
  %s0 = inlined_call_operand.vmem [shape: bf16[128,216], index: 0, kind: input, shape index: {}]
  %s1 = inlined_call_operand.vmem [shape: bf16[216,32], index: 1, kind: input, shape index: {}]
  %s2 = inlined_call_operand.vmem [shape: f32[1,32], index: 2, kind: input, shape index: {}]
  %s3 = inlined_call_operand.vmem [shape: bf16[128,32], index: 3, kind: output, shape index: {}]
  %s4 = sld [smem:[#allocation0]]
  $region22: #{_lambda_.7} parent=0
    _
  %s6 = ssub.s32 1, %s4
  %s7 = scalar_select 0, %s6, %s4
  // Predicated region
  $region2: #{_lambda_.7} parent=0 // pred_check
    _
  $region3: #{_lambda_.7} parent=0 // pred_check_branch
    %9 = sbr.rel (0) target = $region5
  $region4: #{_lambda_.7} parent=0 // pred_region
    _
  $region5: #{_lambda_.7} parent=0 // pred_fallthru
    _
  // Predicated region
  $region6: #{_lambda_.7} parent=0 // pred_check
    _
  $region7: #{_lambda_.7} parent=0 // pred_check_branch
    %11 = sbr.rel (0) target = $region9
  $region8: #{_lambda_.7} parent=0 // pred_region
    _
  $region9: #{_lambda_.7} parent=0 // pred_fallthru
    _
  // Predicated region
  $region10: #{_lambda_.7} parent=0 // pred_check
    _
  $region11: #{_lambda_.7} parent=0 // pred_check_branch
    %13 = sbr.rel (0) target = $region13
  $region12: #{_lambda_.7} parent=0 // pred_region
    _
  $region13: #{_lambda_.7} parent=0 // pred_fallthru
    _
  %v15 = vld [vmem:[%s0] sm:$0xff]
  %v16 = vld [vmem:[%s0 + $0x8] sm:$0xff]
  %v17 = vld [vmem:[%s0 + $0x10] sm:$0xff]
  %v18 = vld [vmem:[%s0 + $0x18] sm:$0xff]
  %v19 = vld [vmem:[%s0 + $0x20] sm:$0xff]
  %v20 = vld [vmem:[%s0 + $0x28] sm:$0xff]
  %v21 = vld [vmem:[%s0 + $0x30] sm:$0xff]
  %v22 = vld [vmem:[%s0 + $0x38] sm:$0xff]
  %v23 = vld [vmem:[%s0 + $0x40] sm:$0xff]
  %v24 = vld [vmem:[%s0 + $0x48] sm:$0xff]
  %v25 = vld [vmem:[%s0 + $0x50] sm:$0xff]
  %v26 = vld [vmem:[%s0 + $0x58] sm:$0xff]
  %v27 = vld [vmem:[%s0 + $0x60] sm:$0xff]
  %v28 = vld [vmem:[%s0 + $0x68] sm:$0xff]
  %v29 = vld [vmem:[%s0 + $0x70] sm:$0xff]
  %v30 = vld [vmem:[%s0 + $0x78] sm:$0xff]
  %v31 = vld [vmem:[%s1] sm:$0xf]
  %v32 = vld [vmem:[%s1 + $0x4] sm:$0xf]
  %v33 = vld [vmem:[%s1 + $0x8] sm:$0xf]
  %v34 = vld [vmem:[%s1 + $0xc] sm:$0xf]
  %v35 = vld [vmem:[%s1 + $0x10] sm:$0xf]
  %v36 = vld [vmem:[%s1 + $0x14] sm:$0xf]
  %v37 = vld [vmem:[%s1 + $0x18] sm:$0xf]
  %v38 = vld [vmem:[%s1 + $0x1c] sm:$0xf]
  %v39 = vld [vmem:[%s1 + $0x20] sm:$0xf]
  %v40 = vld [vmem:[%s1 + $0x24] sm:$0xf]
  %v41 = vld [vmem:[%s1 + $0x28] sm:$0xf]
  %v42 = vld [vmem:[%s1 + $0x2c] sm:$0xf]
  %v43 = vld [vmem:[%s1 + $0x30] sm:$0xf]
  %v44 = vld [vmem:[%s1 + $0x34] sm:$0xf]
  %v45 = vld [vmem:[%s1 + $0x38] sm:$0xf]
  %v46 = vld [vmem:[%s1 + $0x3c] sm:$0xf]
  %v47 = vld [vmem:[%s1 + $0x40] sm:$0xf]
  %v48 = vld [vmem:[%s1 + $0x44] sm:$0xf]
  %v49 = vld [vmem:[%s1 + $0x48] sm:$0xf]
  %v50 = vld [vmem:[%s1 + $0x4c] sm:$0xf]
  %v51 = vld [vmem:[%s1 + $0x50] sm:$0xf]
  %v52 = vld [vmem:[%s1 + $0x54] sm:$0xf]
  %v53 = vld [vmem:[%s1 + $0x58] sm:$0xf]
  %v54 = vld [vmem:[%s1 + $0x5c] sm:$0xf]
  %v55 = vld [vmem:[%s1 + $0x60] sm:$0xf]
  %v56 = vld [vmem:[%s1 + $0x64] sm:$0xf]
  %v57 = vld [vmem:[%s1 + $0x68] sm:$0xf]
  %v58 = vld [vmem:[%s2] sm:$0x1]
  %v60 = vlaneseq
  %v61 = vshrl.u32 %v60, 7
  %v62 = vsub.s32 0, %v61
  %v63 = vrot.slane %v58, %v62
  %v81 = vunpack.c.l.b16 %v15
  %v82 = vunpack.c.h.b16 %v15
  %v83 = vunpack.c.l.b16 %v16
  %v84 = vunpack.c.h.b16 %v16
  %v85 = vunpack.c.l.b16 %v17
  %v86 = vunpack.c.h.b16 %v17
  %v87 = vunpack.c.l.b16 %v18
  %v88 = vunpack.c.h.b16 %v18
  %v89 = vunpack.c.l.b16 %v19
  %v90 = vunpack.c.h.b16 %v19
  %v91 = vunpack.c.l.b16 %v20
  %v92 = vunpack.c.h.b16 %v20
  %v93 = vunpack.c.l.b16 %v21
  %v94 = vunpack.c.h.b16 %v21
  %v95 = vunpack.c.l.b16 %v22
  %v96 = vunpack.c.h.b16 %v22
  %v97 = vunpack.c.l.b16 %v23
  %v98 = vunpack.c.h.b16 %v23
  %v99 = vunpack.c.l.b16 %v24
  %v100 = vunpack.c.h.b16 %v24
  %v101 = vunpack.c.l.b16 %v25
  %v102 = vunpack.c.h.b16 %v25
  %v103 = vunpack.c.l.b16 %v26
  %v104 = vunpack.c.h.b16 %v26
  %v105 = vunpack.c.l.b16 %v27
  %v106 = vunpack.c.h.b16 %v27
  %v107 = vunpack.c.l.b16 %v28
  %v108 = vunpack.c.h.b16 %v28
  %v109 = vunpack.c.l.b16 %v29
  %v110 = vunpack.c.h.b16 %v29
  %v111 = vunpack.c.l.b16 %v30
  %v112 = vunpack.c.h.b16 %v30
  %v113 = vpack.c.b16 %v83, %v81
  %v114 = vpack.c.b16 %v84, %v82
  %v115 = vpack.c.b16 %v87, %v85
  %v116 = vpack.c.b16 %v88, %v86
  %v117 = vpack.c.b16 %v91, %v89
  %v118 = vpack.c.b16 %v92, %v90
  %v119 = vpack.c.b16 %v95, %v93
  %v120 = vpack.c.b16 %v96, %v94
  %v121 = vpack.c.b16 %v99, %v97
  %v122 = vpack.c.b16 %v100, %v98
  %v123 = vpack.c.b16 %v103, %v101
  %v124 = vpack.c.b16 %v104, %v102
  %v125 = vpack.c.b16 %v107, %v105
  %v126 = vpack.c.b16 %v108, %v106
  %v127 = vpack.c.b16 %v111, %v109
  %v128 = vpack.c.b16 %v112, %v110
  %v164 = vunpack.c.l.b16 %v31
  %v165 = vunpack.c.l.b16 %v32
  %v166 = vunpack.c.l.b16 %v33
  %v167 = vunpack.c.l.b16 %v34
  %v168 = vunpack.c.l.b16 %v35
  %v169 = vunpack.c.l.b16 %v36
  %v170 = vunpack.c.l.b16 %v37
  %v171 = vunpack.c.l.b16 %v38
  %v172 = vunpack.c.l.b16 %v39
  %v173 = vunpack.c.l.b16 %v40
  %v174 = vunpack.c.l.b16 %v41
  %v175 = vunpack.c.l.b16 %v42
  %v176 = vunpack.c.l.b16 %v43
  %v177 = vunpack.c.l.b16 %v44
  %v178 = vunpack.c.l.b16 %v45
  %v179 = vunpack.c.l.b16 %v46
  %v180 = vunpack.c.l.b16 %v47
  %v181 = vunpack.c.l.b16 %v48
  %v182 = vunpack.c.l.b16 %v49
  %v183 = vunpack.c.l.b16 %v50
  %v184 = vunpack.c.l.b16 %v51
  %v185 = vunpack.c.l.b16 %v52
  %v186 = vunpack.c.l.b16 %v53
  %v187 = vunpack.c.l.b16 %v54
  %v188 = vunpack.c.l.b16 %v55
  %v189 = vunpack.c.l.b16 %v56
  %v190 = vunpack.c.l.b16 %v57
  %v191 = vpack.c.b16 %v165, %v164
  %v192 = vpack.c.b16 %v167, %v166
  %v193 = vpack.c.b16 %v169, %v168
  %v194 = vpack.c.b16 %v171, %v170
  %v195 = vpack.c.b16 %v173, %v172
  %v196 = vpack.c.b16 %v175, %v174
  %v197 = vpack.c.b16 %v177, %v176
  %v198 = vpack.c.b16 %v179, %v178
  %v199 = vpack.c.b16 %v181, %v180
  %v200 = vpack.c.b16 %v183, %v182
  %v201 = vpack.c.b16 %v185, %v184
  %v202 = vpack.c.b16 %v187, %v186
  %v203 = vpack.c.b16 %v189, %v188
  %v204 = vpack.c.b16 %v190, %v190
  %vm218 = vcmask 719872
  %v220 = vsel %vm218, %v114, 0
  %v223 = vsel %vm218, %v116, 0
  %v226 = vsel %vm218, %v118, 0
  %v229 = vsel %vm218, %v120, 0
  %v232 = vsel %vm218, %v122, 0
  %v235 = vsel %vm218, %v124, 0
  %v238 = vsel %vm218, %v126, 0
  %v241 = vsel %vm218, %v128, 0
  %vm243 = vcmask 1043456
  %v245 = vsel %vm243, %v204, 0
  %247 = vmatprep.subr.bf16.mxu0 0
  %248 = vmatpush1.bf16.msra.mxu0 %v198
  %249 = vmatprep.subr.bf16.mxu0 0
  %250 = vmatpush1.bf16.msra.mxu0 %v197
  %251 = vmatprep.subr.bf16.mxu0 0
  %252 = vmatpush1.bf16.msra.mxu0 %v196
  %253 = vmatprep.subr.bf16.mxu0 0
  %254 = vmatpush1.bf16.msra.mxu0 %v195
  %255 = vmatprep.subr.bf16.mxu0 0
  %256 = vmatpush1.bf16.msra.mxu0 %v194
  %257 = vmatprep.subr.bf16.mxu0 0
  %258 = vmatpush1.bf16.msra.mxu0 %v193
  %259 = vmatprep.subr.bf16.mxu0 0
  %260 = vmatpush1.bf16.msra.mxu0 %v192
  %261 = vmatprep.subr.bf16.mxu0 0
  %262 = vmatpush1.bf16.msra.mxu0 %v191
  %263 = vmatprep.subr.bf16.mxu0 0
  %264 = vmatpush2.bf16.msra.mxu0 0
  %265 = vmatprep.subr.bf16.mxu0 0
  %266 = vmatpush2.bf16.msra.mxu0 0
  %267 = vmatprep.subr.bf16.mxu0 0
  %268 = vmatpush2.bf16.msra.mxu0 %v245
  %269 = vmatprep.subr.bf16.mxu0 0
  %270 = vmatpush2.bf16.msra.mxu0 %v203
  %271 = vmatprep.subr.bf16.mxu0 0
  %272 = vmatpush2.bf16.msra.mxu0 %v202
  %273 = vmatprep.subr.bf16.mxu0 0
  %274 = vmatpush2.bf16.msra.mxu0 %v201
  %275 = vmatprep.subr.bf16.mxu0 0
  %276 = vmatpush2.bf16.msra.mxu0 %v200
  %277 = vmatprep.subr.bf16.mxu0 0
  %278 = vmatpush2.bf16.msra.mxu0 %v199
  %279 = vmatprep.mubr.bf16.mxu0 %v220
  %280 = vmatmul.mubr.bf16.gmra.mxu0 %v113
  %v281 = vpop.f32.mrf.mxu0
  %v282 = vadd.f32 %v63, %v281
  %v283 = vpop.f32.mrf.mxu0
  %v284 = vpop.f32.mrf.mxu0
  %v285 = vadd.f32 %v63, %v284
  %v286 = vpop.f32.mrf.mxu0
  %287 = vmatprep.mubr.bf16.mxu0 %v223
  %288 = vmatmul.mubr.bf16.gmra.mxu0 %v115
  %v289 = vpop.f32.mrf.mxu0
  %v290 = vadd.f32 %v63, %v289
  %v291 = vpop.f32.mrf.mxu0
  %v292 = vpop.f32.mrf.mxu0
  %v293 = vadd.f32 %v63, %v292
  %v294 = vpop.f32.mrf.mxu0
  %295 = vmatprep.mubr.bf16.mxu0 %v226
  %296 = vmatmul.mubr.bf16.gmra.mxu0 %v117
  %v297 = vpop.f32.mrf.mxu0
  %v298 = vadd.f32 %v63, %v297
  %v299 = vpop.f32.mrf.mxu0
  %v300 = vpop.f32.mrf.mxu0
  %v301 = vadd.f32 %v63, %v300
  %v302 = vpop.f32.mrf.mxu0
  %303 = vmatprep.mubr.bf16.mxu0 %v229
  %304 = vmatmul.mubr.bf16.gmra.mxu0 %v119
  %v305 = vpop.f32.mrf.mxu0
  %v306 = vadd.f32 %v63, %v305
  %v307 = vpop.f32.mrf.mxu0
  %v308 = vpop.f32.mrf.mxu0
  %v309 = vadd.f32 %v63, %v308
  %v310 = vpop.f32.mrf.mxu0
  %311 = vmatprep.mubr.bf16.mxu0 %v232
  %312 = vmatmul.mubr.bf16.gmra.mxu0 %v121
  %v313 = vpop.f32.mrf.mxu0
  %v314 = vadd.f32 %v63, %v313
  %v315 = vpop.f32.mrf.mxu0
  %v316 = vpop.f32.mrf.mxu0
  %v317 = vadd.f32 %v63, %v316
  %v318 = vpop.f32.mrf.mxu0
  %319 = vmatprep.mubr.bf16.mxu0 %v235
  %320 = vmatmul.mubr.bf16.gmra.mxu0 %v123
  %v321 = vpop.f32.mrf.mxu0
  %v322 = vadd.f32 %v63, %v321
  %v323 = vpop.f32.mrf.mxu0
  %v324 = vpop.f32.mrf.mxu0
  %v325 = vadd.f32 %v63, %v324
  %v326 = vpop.f32.mrf.mxu0
  %327 = vmatprep.mubr.bf16.mxu0 %v238
  %328 = vmatmul.mubr.bf16.gmra.mxu0 %v125
  %v329 = vpop.f32.mrf.mxu0
  %v330 = vadd.f32 %v63, %v329
  %v331 = vpop.f32.mrf.mxu0
  %v332 = vpop.f32.mrf.mxu0
  %v333 = vadd.f32 %v63, %v332
  %v334 = vpop.f32.mrf.mxu0
  %335 = vmatprep.mubr.bf16.mxu0 %v241
  %336 = vmatmul.mubr.bf16.gmra.mxu0 %v127
  %v337 = vpop.f32.mrf.mxu0
  %v338 = vadd.f32 %v63, %v337
  %v339 = vpop.f32.mrf.mxu0
  %v340 = vpop.f32.mrf.mxu0
  %v341 = vadd.f32 %v63, %v340
  %v342 = vpop.f32.mrf.mxu0
  %343 = vdwg.mxu0
  %v344 = vxor.u32 %v282, 2147483648
  %v345 = vxor.u32 %v285, 2147483648
  %v346 = vxor.u32 %v290, 2147483648
  %v347 = vxor.u32 %v293, 2147483648
  %v348 = vxor.u32 %v298, 2147483648
  %v349 = vxor.u32 %v301, 2147483648
  %v350 = vxor.u32 %v306, 2147483648
  %v351 = vxor.u32 %v309, 2147483648
  %v352 = vxor.u32 %v314, 2147483648
  %v353 = vxor.u32 %v317, 2147483648
  %v354 = vxor.u32 %v322, 2147483648
  %v355 = vxor.u32 %v325, 2147483648
  %v356 = vxor.u32 %v330, 2147483648
  %v357 = vxor.u32 %v333, 2147483648
  %v358 = vxor.u32 %v338, 2147483648
  %v359 = vxor.u32 %v341, 2147483648
  %v360 = vmul.f32 %v344, 1.442695
  %v361 = vpow.pop %v360
  %v362 = vmul.f32 %v345, 1.442695
  %v363 = vpow.pop %v362
  %v364 = vmul.f32 %v346, 1.442695
  %v365 = vpow.pop %v364
  %v366 = vmul.f32 %v347, 1.442695
  %v367 = vpow.pop %v366
  %v368 = vmul.f32 %v348, 1.442695
  %v369 = vpow.pop %v368
  %v370 = vmul.f32 %v349, 1.442695
  %v371 = vpow.pop %v370
  %v372 = vmul.f32 %v350, 1.442695
  %v373 = vpow.pop %v372
  %v374 = vmul.f32 %v351, 1.442695
  %v375 = vpow.pop %v374
  %v376 = vmul.f32 %v352, 1.442695
  %v377 = vpow.pop %v376
  %v378 = vmul.f32 %v353, 1.442695
  %v379 = vpow.pop %v378
  %v380 = vmul.f32 %v354, 1.442695
  %v381 = vpow.pop %v380
  %v382 = vmul.f32 %v355, 1.442695
  %v383 = vpow.pop %v382
  %v384 = vmul.f32 %v356, 1.442695
  %v385 = vpow.pop %v384
  %v386 = vmul.f32 %v357, 1.442695
  %v387 = vpow.pop %v386
  %v388 = vmul.f32 %v358, 1.442695
  %v389 = vpow.pop %v388
  %v390 = vmul.f32 %v359, 1.442695
  %v391 = vpow.pop %v390
  %v392 = vadd.f32 %v361, 1.0
  %v393 = vadd.f32 %v363, 1.0
  %v394 = vadd.f32 %v365, 1.0
  %v395 = vadd.f32 %v367, 1.0
  %v396 = vadd.f32 %v369, 1.0
  %v397 = vadd.f32 %v371, 1.0
  %v398 = vadd.f32 %v373, 1.0
  %v399 = vadd.f32 %v375, 1.0
  %v400 = vadd.f32 %v377, 1.0
  %v401 = vadd.f32 %v379, 1.0
  %v402 = vadd.f32 %v381, 1.0
  %v403 = vadd.f32 %v383, 1.0
  %v404 = vadd.f32 %v385, 1.0
  %v405 = vadd.f32 %v387, 1.0
  %v406 = vadd.f32 %v389, 1.0
  %v407 = vadd.f32 %v391, 1.0
  %v408 = vrcp.pop %v392
  %v409 = vmul.f32 1.0, %v408
  %v410 = vrcp.pop %v393
  %v411 = vmul.f32 1.0, %v410
  %v412 = vrcp.pop %v394
  %v413 = vmul.f32 1.0, %v412
  %v414 = vrcp.pop %v395
  %v415 = vmul.f32 1.0, %v414
  %v416 = vrcp.pop %v396
  %v417 = vmul.f32 1.0, %v416
  %v418 = vrcp.pop %v397
  %v419 = vmul.f32 1.0, %v418
  %v420 = vrcp.pop %v398
  %v421 = vmul.f32 1.0, %v420
  %v422 = vrcp.pop %v399
  %v423 = vmul.f32 1.0, %v422
  %v424 = vrcp.pop %v400
  %v425 = vmul.f32 1.0, %v424
  %v426 = vrcp.pop %v401
  %v427 = vmul.f32 1.0, %v426
  %v428 = vrcp.pop %v402
  %v429 = vmul.f32 1.0, %v428
  %v430 = vrcp.pop %v403
  %v431 = vmul.f32 1.0, %v430
  %v432 = vrcp.pop %v404
  %v433 = vmul.f32 1.0, %v432
  %v434 = vrcp.pop %v405
  %v435 = vmul.f32 1.0, %v434
  %v436 = vrcp.pop %v406
  %v437 = vmul.f32 1.0, %v436
  %v438 = vrcp.pop %v407
  %v439 = vmul.f32 1.0, %v438
  %v440 = vmul.f32 %v282, %v409
  %v441 = vmul.f32 %v285, %v411
  %v442 = vmul.f32 %v290, %v413
  %v443 = vmul.f32 %v293, %v415
  %v444 = vmul.f32 %v298, %v417
  %v445 = vmul.f32 %v301, %v419
  %v446 = vmul.f32 %v306, %v421
  %v447 = vmul.f32 %v309, %v423
  %v448 = vmul.f32 %v314, %v425
  %v449 = vmul.f32 %v317, %v427
  %v450 = vmul.f32 %v322, %v429
  %v451 = vmul.f32 %v325, %v431
  %v452 = vmul.f32 %v330, %v433
  %v453 = vmul.f32 %v333, %v435
  %v454 = vmul.f32 %v338, %v437
  %v455 = vmul.f32 %v341, %v439
  %v456 = vpack.c.bf16 %v441, %v440
  %v457 = vpack.c.bf16 %v443, %v442
  %v458 = vpack.c.bf16 %v445, %v444
  %v459 = vpack.c.bf16 %v447, %v446
  %v460 = vpack.c.bf16 %v449, %v448
  %v461 = vpack.c.bf16 %v451, %v450
  %v462 = vpack.c.bf16 %v453, %v452
  %v463 = vpack.c.bf16 %v455, %v454
  %v472 = vunpack.c.l.b16 %v456
  %v473 = vunpack.c.h.b16 %v456
  %v474 = vunpack.c.l.b16 %v457
  %v475 = vunpack.c.h.b16 %v457
  %v476 = vunpack.c.l.b16 %v458
  %v477 = vunpack.c.h.b16 %v458
  %v478 = vunpack.c.l.b16 %v459
  %v479 = vunpack.c.h.b16 %v459
  %v480 = vunpack.c.l.b16 %v460
  %v481 = vunpack.c.h.b16 %v460
  %v482 = vunpack.c.l.b16 %v461
  %v483 = vunpack.c.h.b16 %v461
  %v484 = vunpack.c.l.b16 %v462
  %v485 = vunpack.c.h.b16 %v462
  %v486 = vunpack.c.l.b16 %v463
  %v487 = vunpack.c.h.b16 %v463
  %v488 = vpack.c.b16 %v472, %v472
  %v489 = vpack.c.b16 %v473, %v473
  %v490 = vpack.c.b16 %v474, %v474
  %v491 = vpack.c.b16 %v475, %v475
  %v492 = vpack.c.b16 %v476, %v476
  %v493 = vpack.c.b16 %v477, %v477
  %v494 = vpack.c.b16 %v478, %v478
  %v495 = vpack.c.b16 %v479, %v479
  %v496 = vpack.c.b16 %v480, %v480
  %v497 = vpack.c.b16 %v481, %v481
  %v498 = vpack.c.b16 %v482, %v482
  %v499 = vpack.c.b16 %v483, %v483
  %v500 = vpack.c.b16 %v484, %v484
  %v501 = vpack.c.b16 %v485, %v485
  %v502 = vpack.c.b16 %v486, %v486
  %v503 = vpack.c.b16 %v487, %v487
  %vm520 = vcmask 257024
  %521 = vst.msk [vmem:[%s3] sm:$0xf] %vm520, %v488
  %522 = vst.msk [vmem:[%s3 + $0x4] sm:$0xf] %vm520, %v489
  %523 = vst.msk [vmem:[%s3 + $0x8] sm:$0xf] %vm520, %v490
  %524 = vst.msk [vmem:[%s3 + $0xc] sm:$0xf] %vm520, %v491
  %525 = vst.msk [vmem:[%s3 + $0x10] sm:$0xf] %vm520, %v492
  %526 = vst.msk [vmem:[%s3 + $0x14] sm:$0xf] %vm520, %v493
  %527 = vst.msk [vmem:[%s3 + $0x18] sm:$0xf] %vm520, %v494
  %528 = vst.msk [vmem:[%s3 + $0x1c] sm:$0xf] %vm520, %v495
  %529 = vst.msk [vmem:[%s3 + $0x20] sm:$0xf] %vm520, %v496
  %530 = vst.msk [vmem:[%s3 + $0x24] sm:$0xf] %vm520, %v497
  %531 = vst.msk [vmem:[%s3 + $0x28] sm:$0xf] %vm520, %v498
  %532 = vst.msk [vmem:[%s3 + $0x2c] sm:$0xf] %vm520, %v499
  %533 = vst.msk [vmem:[%s3 + $0x30] sm:$0xf] %vm520, %v500
  %534 = vst.msk [vmem:[%s3 + $0x34] sm:$0xf] %vm520, %v501
  %535 = vst.msk [vmem:[%s3 + $0x38] sm:$0xf] %vm520, %v502
  %536 = vst.msk [vmem:[%s3 + $0x3c] sm:$0xf] %vm520, %v503
  // Predicated region
  $region14: #{_lambda_.7} parent=0 // pred_check
    _
  $region15: #{_lambda_.7} parent=0 // pred_check_branch
    %538 = sbr.rel (0) target = $region17
  $region16: #{_lambda_.7} parent=0 // pred_region
    _
  $region17: #{_lambda_.7} parent=0 // pred_fallthru
    _
  // Predicated region
  $region18: #{_lambda_.7} parent=0 // pred_check
    _
  $region19: #{_lambda_.7} parent=0 // pred_check_branch
    %540 = sbr.rel (0) target = $region21
  $region20: #{_lambda_.7} parent=0 // pred_region
    _
  $region21: #{_lambda_.7} parent=0 // pred_fallthru
    _

// kernel: _lambda_.8
$region0: #{_lambda_.8}
  #allocation0 [shape = 'u32[]', space=smem, size = 0x4, offset = 0x4, fixed_abs, tag = 'smem constant byte address 0x4 - core index']
  #allocation1 [shape = 'u32[144,128]{1,0:T(1,128)}', space=vmem, size = 0x12000, scoped, tag = 'internal scratch']
  %s0 = inlined_call_operand.vmem [shape: bf16[32,288], index: 0, kind: input, shape index: {}]
  %s1 = inlined_call_operand.vmem [shape: bf16[288,48], index: 1, kind: input, shape index: {}]
  %s2 = inlined_call_operand.vmem [shape: f32[1,48], index: 2, kind: input, shape index: {}]
  %s3 = inlined_call_operand.vmem [shape: bf16[48,64], index: 3, kind: input, shape index: {}]
  %s4 = inlined_call_operand.vmem [shape: f32[1,64], index: 4, kind: input, shape index: {}]
  %s5 = inlined_call_operand.vmem [shape: bf16[32,64], index: 5, kind: output, shape index: {}]
  %s6 = sld [smem:[#allocation0]]
  $region30: #{_lambda_.8} parent=0
    _
  %s8 = ssub.s32 1, %s6
  %s9 = scalar_select 0, %s8, %s6
  // Predicated region
  $region2: #{_lambda_.8} parent=0 // pred_check
    _
  $region3: #{_lambda_.8} parent=0 // pred_check_branch
    %11 = sbr.rel (0) target = $region5
  $region4: #{_lambda_.8} parent=0 // pred_region
    _
  $region5: #{_lambda_.8} parent=0 // pred_fallthru
    _
  // Predicated region
  $region6: #{_lambda_.8} parent=0 // pred_check
    _
  $region7: #{_lambda_.8} parent=0 // pred_check_branch
    %13 = sbr.rel (0) target = $region9
  $region8: #{_lambda_.8} parent=0 // pred_region
    _
  $region9: #{_lambda_.8} parent=0 // pred_fallthru
    _
  // Predicated region
  $region10: #{_lambda_.8} parent=0 // pred_check
    _
  $region11: #{_lambda_.8} parent=0 // pred_check_branch
    %15 = sbr.rel (0) target = $region13
  $region12: #{_lambda_.8} parent=0 // pred_region
    _
  $region13: #{_lambda_.8} parent=0 // pred_fallthru
    _
  // Predicated region
  $region14: #{_lambda_.8} parent=0 // pred_check
    _
  $region15: #{_lambda_.8} parent=0 // pred_check_branch
    %17 = sbr.rel (0) target = $region17
  $region16: #{_lambda_.8} parent=0 // pred_region
    _
  $region17: #{_lambda_.8} parent=0 // pred_fallthru
    _
  // Predicated region
  $region18: #{_lambda_.8} parent=0 // pred_check
    _
  $region19: #{_lambda_.8} parent=0 // pred_check_branch
    %19 = sbr.rel (0) target = $region21
  $region20: #{_lambda_.8} parent=0 // pred_region
    _
  $region21: #{_lambda_.8} parent=0 // pred_fallthru
    _
  %v21 = vld [vmem:[%s0] sm:$0xff]
  %v22 = vld [vmem:[%s0 + $0x8] sm:$0xf]
  %v23 = vld [vmem:[%s0 + $0xc] sm:$0xff]
  %v24 = vld [vmem:[%s0 + $0x14] sm:$0xf]
  %v25 = vld [vmem:[%s0 + $0x18] sm:$0xff]
  %v26 = vld [vmem:[%s0 + $0x20] sm:$0xf]
  %v27 = vld [vmem:[%s0 + $0x24] sm:$0xff]
  %v28 = vld [vmem:[%s0 + $0x2c] sm:$0xf]
  %v29 = vld [vmem:[%s1] sm:$0xf]
  %v30 = vld [vmem:[%s1 + $0x4] sm:$0xf]
  %v31 = vld [vmem:[%s1 + $0x8] sm:$0xf]
  %v32 = vld [vmem:[%s1 + $0xc] sm:$0xf]
  %v33 = vld [vmem:[%s1 + $0x10] sm:$0xf]
  %v34 = vld [vmem:[%s1 + $0x14] sm:$0xf]
  %v35 = vld [vmem:[%s1 + $0x18] sm:$0xf]
  %v36 = vld [vmem:[%s1 + $0x1c] sm:$0xf]
  %v37 = vld [vmem:[%s1 + $0x20] sm:$0xf]
  %v38 = vld [vmem:[%s1 + $0x24] sm:$0xf]
  %v39 = vld [vmem:[%s1 + $0x28] sm:$0xf]
  %v40 = vld [vmem:[%s1 + $0x2c] sm:$0xf]
  %v41 = vld [vmem:[%s1 + $0x30] sm:$0xf]
  %v42 = vld [vmem:[%s1 + $0x34] sm:$0xf]
  %v43 = vld [vmem:[%s1 + $0x38] sm:$0xf]
  %v44 = vld [vmem:[%s1 + $0x3c] sm:$0xf]
  %v45 = vld [vmem:[%s1 + $0x40] sm:$0xf]
  %v46 = vld [vmem:[%s1 + $0x44] sm:$0xf]
  %v47 = vld [vmem:[%s1 + $0x48] sm:$0xf]
  %v48 = vld [vmem:[%s1 + $0x4c] sm:$0xf]
  %v49 = vld [vmem:[%s1 + $0x50] sm:$0xf]
  %v50 = vld [vmem:[%s1 + $0x54] sm:$0xf]
  %v51 = vld [vmem:[%s1 + $0x58] sm:$0xf]
  %v52 = vld [vmem:[%s1 + $0x5c] sm:$0xf]
  %v53 = vld [vmem:[%s1 + $0x60] sm:$0xf]
  %v54 = vld [vmem:[%s1 + $0x64] sm:$0xf]
  %v55 = vld [vmem:[%s1 + $0x68] sm:$0xf]
  %v56 = vld [vmem:[%s1 + $0x6c] sm:$0xf]
  %v57 = vld [vmem:[%s1 + $0x70] sm:$0xf]
  %v58 = vld [vmem:[%s1 + $0x74] sm:$0xf]
  %v59 = vld [vmem:[%s1 + $0x78] sm:$0xf]
  %v60 = vld [vmem:[%s1 + $0x7c] sm:$0xf]
  %v61 = vld [vmem:[%s1 + $0x80] sm:$0xf]
  %v62 = vld [vmem:[%s1 + $0x84] sm:$0xf]
  %v63 = vld [vmem:[%s1 + $0x88] sm:$0xf]
  %v64 = vld [vmem:[%s1 + $0x8c] sm:$0xf]
  %v65 = vld [vmem:[%s2] sm:$0x1]
  %v67 = vlaneseq
  %v68 = vshrl.u32 %v67, 7
  %v69 = vsub.s32 0, %v68
  %v70 = vrot.slane %v65, %v69
  %v80 = vunpack.c.l.b16 %v21
  %v81 = vunpack.c.h.b16 %v21
  %v82 = vunpack.c.l.b16 %v22
  %v83 = vunpack.c.l.b16 %v23
  %v84 = vunpack.c.h.b16 %v23
  %v85 = vunpack.c.l.b16 %v24
  %v86 = vunpack.c.l.b16 %v25
  %v87 = vunpack.c.h.b16 %v25
  %v88 = vunpack.c.l.b16 %v26
  %v89 = vunpack.c.l.b16 %v27
  %v90 = vunpack.c.h.b16 %v27
  %v91 = vunpack.c.l.b16 %v28
  %v92 = vpack.c.b16 %v83, %v80
  %v93 = vpack.c.b16 %v84, %v81
  %v94 = vpack.c.b16 %v85, %v82
  %v95 = vpack.c.b16 %v89, %v86
  %v96 = vpack.c.b16 %v90, %v87
  %v97 = vpack.c.b16 %v91, %v88
  %v138 = vunpack.c.l.b16 %v29
  %v139 = vunpack.c.l.b16 %v30
  %v140 = vunpack.c.l.b16 %v31
  %v141 = vunpack.c.l.b16 %v32
  %v142 = vunpack.c.l.b16 %v33
  %v143 = vunpack.c.l.b16 %v34
  %v144 = vunpack.c.l.b16 %v35
  %v145 = vunpack.c.l.b16 %v36
  %v146 = vunpack.c.l.b16 %v37
  %v147 = vunpack.c.l.b16 %v38
  %v148 = vunpack.c.l.b16 %v39
  %v149 = vunpack.c.l.b16 %v40
  %v150 = vunpack.c.l.b16 %v41
  %v151 = vunpack.c.l.b16 %v42
  %v152 = vunpack.c.l.b16 %v43
  %v153 = vunpack.c.l.b16 %v44
  %v154 = vunpack.c.l.b16 %v45
  %v155 = vunpack.c.l.b16 %v46
  %v156 = vunpack.c.l.b16 %v47
  %v157 = vunpack.c.l.b16 %v48
  %v158 = vunpack.c.l.b16 %v49
  %v159 = vunpack.c.l.b16 %v50
  %v160 = vunpack.c.l.b16 %v51
  %v161 = vunpack.c.l.b16 %v52
  %v162 = vunpack.c.l.b16 %v53
  %v163 = vunpack.c.l.b16 %v54
  %v164 = vunpack.c.l.b16 %v55
  %v165 = vunpack.c.l.b16 %v56
  %v166 = vunpack.c.l.b16 %v57
  %v167 = vunpack.c.l.b16 %v58
  %v168 = vunpack.c.l.b16 %v59
  %v169 = vunpack.c.l.b16 %v60
  %v170 = vunpack.c.l.b16 %v61
  %v171 = vunpack.c.l.b16 %v62
  %v172 = vunpack.c.l.b16 %v63
  %v173 = vunpack.c.l.b16 %v64
  %v174 = vpack.c.b16 %v139, %v138
  %v175 = vpack.c.b16 %v141, %v140
  %v176 = vpack.c.b16 %v143, %v142
  %v177 = vpack.c.b16 %v145, %v144
  %v178 = vpack.c.b16 %v147, %v146
  %v179 = vpack.c.b16 %v149, %v148
  %v180 = vpack.c.b16 %v151, %v150
  %v181 = vpack.c.b16 %v153, %v152
  %v182 = vpack.c.b16 %v155, %v154
  %v183 = vpack.c.b16 %v157, %v156
  %v184 = vpack.c.b16 %v159, %v158
  %v185 = vpack.c.b16 %v161, %v160
  %v186 = vpack.c.b16 %v163, %v162
  %v187 = vpack.c.b16 %v165, %v164
  %v188 = vpack.c.b16 %v167, %v166
  %v189 = vpack.c.b16 %v169, %v168
  %v190 = vpack.c.b16 %v171, %v170
  %v191 = vpack.c.b16 %v173, %v172
  %vm210 = vcmask 261120
  %v212 = vsel %vm210, %v94, 0
  %v215 = vsel %vm210, %v97, 0
  %217 = vmatprep.subr.bf16.mxu0 0
  %218 = vmatpush1.bf16.msra.mxu0 %v181
  %219 = vmatprep.subr.bf16.mxu0 0
  %220 = vmatpush1.bf16.msra.mxu0 %v180
  %221 = vmatprep.subr.bf16.mxu0 0
  %222 = vmatpush1.bf16.msra.mxu0 %v179
  %223 = vmatprep.subr.bf16.mxu0 0
  %224 = vmatpush1.bf16.msra.mxu0 %v178
  %225 = vmatprep.subr.bf16.mxu0 0
  %226 = vmatpush1.bf16.msra.mxu0 %v177
  %227 = vmatprep.subr.bf16.mxu0 0
  %228 = vmatpush1.bf16.msra.mxu0 %v176
  %229 = vmatprep.subr.bf16.mxu0 0
  %230 = vmatpush1.bf16.msra.mxu0 %v175
  %231 = vmatprep.subr.bf16.mxu0 0
  %232 = vmatpush1.bf16.msra.mxu0 %v174
  %233 = vmatprep.subr.bf16.mxu0 0
  %234 = vmatpush2.bf16.msra.mxu0 %v189
  %235 = vmatprep.subr.bf16.mxu0 0
  %236 = vmatpush2.bf16.msra.mxu0 %v188
  %237 = vmatprep.subr.bf16.mxu0 0
  %238 = vmatpush2.bf16.msra.mxu0 %v187
  %239 = vmatprep.subr.bf16.mxu0 0
  %240 = vmatpush2.bf16.msra.mxu0 %v186
  %241 = vmatprep.subr.bf16.mxu0 0
  %242 = vmatpush2.bf16.msra.mxu0 %v185
  %243 = vmatprep.subr.bf16.mxu0 0
  %244 = vmatpush2.bf16.msra.mxu0 %v184
  %245 = vmatprep.subr.bf16.mxu0 0
  %246 = vmatpush2.bf16.msra.mxu0 %v183
  %247 = vmatprep.subr.bf16.mxu0 0
  %248 = vmatpush2.bf16.msra.mxu0 %v182
  %249 = vmatprep.mubr.bf16.mxu0 %v93
  %250 = vmatmul.mubr.bf16.gmra.mxu0 %v92
  %v251 = vpop.f32.mrf.mxu0
  %v252 = vadd.f32 %v70, %v251
  %v253 = vpop.f32.mrf.mxu0
  %v254 = vpop.f32.mrf.mxu0
  %v255 = vadd.f32 %v70, %v254
  %v256 = vpop.f32.mrf.mxu0
  %257 = vmatprep.mubr.bf16.mxu0 %v96
  %258 = vmatmul.mubr.bf16.gmra.mxu0 %v95
  %v259 = vpop.f32.mrf.mxu0
  %v260 = vadd.f32 %v70, %v259
  %v261 = vpop.f32.mrf.mxu0
  %v262 = vpop.f32.mrf.mxu0
  %v263 = vadd.f32 %v70, %v262
  %v264 = vpop.f32.mrf.mxu0
  %265 = vdwg.mxu0
  %266 = vmatprep.subr.bf16.mxu0 0
  %267 = vmatpush1.bf16.msra.mxu0 0
  %268 = vmatprep.subr.bf16.mxu0 0
  %269 = vmatpush1.bf16.msra.mxu0 0
  %270 = vmatprep.subr.bf16.mxu0 0
  %271 = vmatpush1.bf16.msra.mxu0 0
  %272 = vmatprep.subr.bf16.mxu0 0
  %273 = vmatpush1.bf16.msra.mxu0 0
  %274 = vmatprep.subr.bf16.mxu0 0
  %275 = vmatpush1.bf16.msra.mxu0 0
  %276 = vmatprep.subr.bf16.mxu0 0
  %277 = vmatpush1.bf16.msra.mxu0 0
  %278 = vmatprep.subr.bf16.mxu0 0
  %279 = vmatpush1.bf16.msra.mxu0 %v191
  %280 = vmatprep.subr.bf16.mxu0 0
  %281 = vmatpush1.bf16.msra.mxu0 %v190
  %282 = vmatprep.subr.bf16.mxu0 0
  %283 = vmatpush2.bf16.msra.mxu0 0
  %284 = vmatprep.subr.bf16.mxu0 0
  %285 = vmatpush2.bf16.msra.mxu0 0
  %286 = vmatprep.subr.bf16.mxu0 0
  %287 = vmatpush2.bf16.msra.mxu0 0
  %288 = vmatprep.subr.bf16.mxu0 0
  %289 = vmatpush2.bf16.msra.mxu0 0
  %290 = vmatprep.subr.bf16.mxu0 0
  %291 = vmatpush2.bf16.msra.mxu0 0
  %292 = vmatprep.subr.bf16.mxu0 0
  %293 = vmatpush2.bf16.msra.mxu0 0
  %294 = vmatprep.subr.bf16.mxu0 0
  %295 = vmatpush2.bf16.msra.mxu0 0
  %296 = vmatprep.subr.bf16.mxu0 0
  %297 = vmatpush2.bf16.msra.mxu0 0
  %298 = vmatprep.mubr.bf16.mxu0 0
  %299 = vmatmul.mubr.bf16.gmra.mxu0 %v212
  %v300 = vpop.f32.mrf.mxu0
  %v301 = vadd.f32 %v252, %v300
  %v302 = vpop.f32.mrf.mxu0
  %v303 = vpop.f32.mrf.mxu0
  %v304 = vadd.f32 %v255, %v303
  %v305 = vpop.f32.mrf.mxu0
  %306 = vmatprep.mubr.bf16.mxu0 0
  %307 = vmatmul.mubr.bf16.gmra.mxu0 %v215
  %v308 = vpop.f32.mrf.mxu0
  %v309 = vadd.f32 %v260, %v308
  %v310 = vpop.f32.mrf.mxu0
  %v311 = vpop.f32.mrf.mxu0
  %v312 = vadd.f32 %v263, %v311
  %v313 = vpop.f32.mrf.mxu0
  %314 = vdwg.mxu0
  %v315 = vxor.u32 %v301, 2147483648
  %v316 = vxor.u32 %v304, 2147483648
  %v317 = vxor.u32 %v309, 2147483648
  %v318 = vxor.u32 %v312, 2147483648
  %v319 = vmul.f32 %v315, 1.442695
  %v320 = vpow.pop %v319
  %v321 = vmul.f32 %v316, 1.442695
  %v322 = vpow.pop %v321
  %v323 = vmul.f32 %v317, 1.442695
  %v324 = vpow.pop %v323
  %v325 = vmul.f32 %v318, 1.442695
  %v326 = vpow.pop %v325
  %v327 = vadd.f32 %v320, 1.0
  %v328 = vadd.f32 %v322, 1.0
  %v329 = vadd.f32 %v324, 1.0
  %v330 = vadd.f32 %v326, 1.0
  %v331 = vrcp.pop %v327
  %v332 = vmul.f32 1.0, %v331
  %v333 = vrcp.pop %v328
  %v334 = vmul.f32 1.0, %v333
  %v335 = vrcp.pop %v329
  %v336 = vmul.f32 1.0, %v335
  %v337 = vrcp.pop %v330
  %v338 = vmul.f32 1.0, %v337
  %v339 = vmul.f32 %v301, %v332
  %v340 = vmul.f32 %v304, %v334
  %v341 = vmul.f32 %v309, %v336
  %v342 = vmul.f32 %v312, %v338
  %v343 = vpack.c.bf16 %v340, %v339
  %v344 = vpack.c.bf16 %v342, %v341
  %v345 = vld [vmem:[%s3] sm:$0xf]
  %v346 = vld [vmem:[%s3 + $0x4] sm:$0xf]
  %v347 = vld [vmem:[%s3 + $0x8] sm:$0xf]
  %v348 = vld [vmem:[%s3 + $0xc] sm:$0xf]
  %v349 = vld [vmem:[%s3 + $0x10] sm:$0xf]
  %v350 = vld [vmem:[%s3 + $0x14] sm:$0xf]
  %v351 = vld [vmem:[%s4] sm:$0x1]
  %v353 = vlaneseq
  %v354 = vshrl.u32 %v353, 7
  %v355 = vsub.s32 0, %v354
  %v356 = vrot.slane %v351, %v355
  %v364 = vunpack.c.l.b16 %v345
  %v365 = vunpack.c.l.b16 %v346
  %v366 = vunpack.c.l.b16 %v347
  %v367 = vunpack.c.l.b16 %v348
  %v368 = vunpack.c.l.b16 %v349
  %v369 = vunpack.c.l.b16 %v350
  %v370 = vpack.c.b16 %v365, %v364
  %v371 = vpack.c.b16 %v367, %v366
  %v372 = vpack.c.b16 %v369, %v368
  %vm376 = vcmask 392192
  %v378 = vsel %vm376, %v343, 0
  %v381 = vsel %vm376, %v344, 0
  %383 = vmatprep.subr.bf16.mxu0 0
  %384 = vmatpush1.bf16.msra.mxu0 0
  %385 = vmatprep.subr.bf16.mxu0 0
  %386 = vmatpush1.bf16.msra.mxu0 0
  %387 = vmatprep.subr.bf16.mxu0 0
  %388 = vmatpush1.bf16.msra.mxu0 0
  %389 = vmatprep.subr.bf16.mxu0 0
  %390 = vmatpush1.bf16.msra.mxu0 0
  %391 = vmatprep.subr.bf16.mxu0 0
  %392 = vmatpush1.bf16.msra.mxu0 0
  %393 = vmatprep.subr.bf16.mxu0 0
  %394 = vmatpush1.bf16.msra.mxu0 %v372
  %395 = vmatprep.subr.bf16.mxu0 0
  %396 = vmatpush1.bf16.msra.mxu0 %v371
  %397 = vmatprep.subr.bf16.mxu0 0
  %398 = vmatpush1.bf16.msra.mxu0 %v370
  %399 = vmatprep.subr.bf16.mxu0 0
  %400 = vmatpush2.bf16.msra.mxu0 0
  %401 = vmatprep.subr.bf16.mxu0 0
  %402 = vmatpush2.bf16.msra.mxu0 0
  %403 = vmatprep.subr.bf16.mxu0 0
  %404 = vmatpush2.bf16.msra.mxu0 0
  %405 = vmatprep.subr.bf16.mxu0 0
  %406 = vmatpush2.bf16.msra.mxu0 0
  %407 = vmatprep.subr.bf16.mxu0 0
  %408 = vmatpush2.bf16.msra.mxu0 0
  %409 = vmatprep.subr.bf16.mxu0 0
  %410 = vmatpush2.bf16.msra.mxu0 0
  %411 = vmatprep.subr.bf16.mxu0 0
  %412 = vmatpush2.bf16.msra.mxu0 0
  %413 = vmatprep.subr.bf16.mxu0 0
  %414 = vmatpush2.bf16.msra.mxu0 0
  %415 = vmatprep.mubr.bf16.mxu0 0
  %416 = vmatmul.mubr.bf16.gmra.mxu0 %v378
  %v417 = vpop.f32.mrf.mxu0
  %v418 = vadd.f32 %v356, %v417
  %v419 = vpop.f32.mrf.mxu0
  %v420 = vpop.f32.mrf.mxu0
  %v421 = vadd.f32 %v356, %v420
  %v422 = vpop.f32.mrf.mxu0
  %423 = vmatprep.mubr.bf16.mxu0 0
  %424 = vmatmul.mubr.bf16.gmra.mxu0 %v381
  %v425 = vpop.f32.mrf.mxu0
  %v426 = vadd.f32 %v356, %v425
  %v427 = vpop.f32.mrf.mxu0
  %v428 = vpop.f32.mrf.mxu0
  %v429 = vadd.f32 %v356, %v428
  %v430 = vpop.f32.mrf.mxu0
  %431 = vdwg.mxu0
  %v432 = vxor.u32 %v418, 2147483648
  %v433 = vxor.u32 %v421, 2147483648
  %v434 = vxor.u32 %v426, 2147483648
  %v435 = vxor.u32 %v429, 2147483648
  %v436 = vmul.f32 %v432, 1.442695
  %v437 = vpow.pop %v436
  %v438 = vmul.f32 %v433, 1.442695
  %v439 = vpow.pop %v438
  %v440 = vmul.f32 %v434, 1.442695
  %v441 = vpow.pop %v440
  %v442 = vmul.f32 %v435, 1.442695
  %v443 = vpow.pop %v442
  %v444 = vadd.f32 %v437, 1.0
  %v445 = vadd.f32 %v439, 1.0
  %v446 = vadd.f32 %v441, 1.0
  %v447 = vadd.f32 %v443, 1.0
  %v448 = vrcp.pop %v444
  %v449 = vmul.f32 1.0, %v448
  %v450 = vrcp.pop %v445
  %v451 = vmul.f32 1.0, %v450
  %v452 = vrcp.pop %v446
  %v453 = vmul.f32 1.0, %v452
  %v454 = vrcp.pop %v447
  %v455 = vmul.f32 1.0, %v454
  %v456 = vmul.f32 %v418, %v449
  %v457 = vmul.f32 %v421, %v451
  %v458 = vmul.f32 %v426, %v453
  %v459 = vmul.f32 %v429, %v455
  %v460 = vpack.c.bf16 %v457, %v456
  %v461 = vpack.c.bf16 %v459, %v458
  %v464 = vunpack.c.l.b16 %v460
  %v465 = vunpack.c.h.b16 %v460
  %v466 = vunpack.c.l.b16 %v461
  %v467 = vunpack.c.h.b16 %v461
  %v468 = vpack.c.b16 %v464, %v464
  %v469 = vpack.c.b16 %v465, %v465
  %v470 = vpack.c.b16 %v466, %v466
  %v471 = vpack.c.b16 %v467, %v467
  %vm476 = vcmask 519168
  %477 = vst.msk [vmem:[%s5] sm:$0xf] %vm476, %v468
  %478 = vst.msk [vmem:[%s5 + $0x4] sm:$0xf] %vm476, %v469
  %479 = vst.msk [vmem:[%s5 + $0x8] sm:$0xf] %vm476, %v470
  %480 = vst.msk [vmem:[%s5 + $0xc] sm:$0xf] %vm476, %v471
  // Predicated region
  $region22: #{_lambda_.8} parent=0 // pred_check
    _
  $region23: #{_lambda_.8} parent=0 // pred_check_branch
    %482 = sbr.rel (0) target = $region25
  $region24: #{_lambda_.8} parent=0 // pred_region
    _
  $region25: #{_lambda_.8} parent=0 // pred_fallthru
    _
  // Predicated region
  $region26: #{_lambda_.8} parent=0 // pred_check
    _
  $region27: #{_lambda_.8} parent=0 // pred_check_branch
    %484 = sbr.rel (0) target = $region29
  $region28: #{_lambda_.8} parent=0 // pred_region
    _
  $region29: #{_lambda_.8} parent=0 // pred_fallthru
    _

// kernel: _lambda_.9
$region0: #{_lambda_.9}
  #allocation0 [shape = 'u32[]', space=smem, size = 0x4, offset = 0x4, fixed_abs, tag = 'smem constant byte address 0x4 - core index']
  #allocation1 [shape = 'u32[144,128]{1,0:T(1,128)}', space=vmem, size = 0x12000, scoped, tag = 'internal scratch']
  %s0 = inlined_call_operand.vmem [shape: bf16[32,64], index: 0, kind: input, shape index: {}]
  %s1 = inlined_call_operand.vmem [shape: bf16[3,9,32,32], index: 1, kind: input, shape index: {}]
  %s2 = inlined_call_operand.vmem [shape: bf16[64,32], index: 2, kind: input, shape index: {}]
  %s3 = inlined_call_operand.vmem [shape: bf16[3,9,64,32], index: 3, kind: input, shape index: {}]
  %s4 = inlined_call_operand.vmem [shape: bf16[64,32], index: 4, kind: input, shape index: {}]
  %s5 = inlined_call_operand.vmem [shape: bf16[160,32], index: 5, kind: input, shape index: {}]
  %s6 = inlined_call_operand.vmem [shape: bf16[9,32,32], index: 6, kind: input, shape index: {}]
  %s7 = inlined_call_operand.vmem [shape: bf16[32,5], index: 7, kind: input, shape index: {}]
  %s8 = inlined_call_operand.vmem [shape: f32[6,32], index: 8, kind: input, shape index: {}]
  %s9 = inlined_call_operand.vmem [shape: f32[1,32], index: 9, kind: input, shape index: {}]
  %s10 = inlined_call_operand.vmem [shape: f32[1,5], index: 10, kind: input, shape index: {}]
  %s11 = inlined_call_operand.vmem [shape: f32[1024,16], index: 11, kind: input, shape index: {}]
  %s12 = inlined_call_operand.vmem [shape: f32[2,1024,5], index: 12, kind: output, shape index: {}]
  %s13 = sld [smem:[#allocation0]]
  $region58: #{_lambda_.9} parent=0
    _
  %s15 = ssub.s32 1, %s13
  %s16 = scalar_select 0, %s15, %s13
  // Predicated region
  $region2: #{_lambda_.9} parent=0 // pred_check
    _
  $region3: #{_lambda_.9} parent=0 // pred_check_branch
    %18 = sbr.rel (0) target = $region5
  $region4: #{_lambda_.9} parent=0 // pred_region
    _
  $region5: #{_lambda_.9} parent=0 // pred_fallthru
    _
  // Predicated region
  $region6: #{_lambda_.9} parent=0 // pred_check
    _
  $region7: #{_lambda_.9} parent=0 // pred_check_branch
    %20 = sbr.rel (0) target = $region9
  $region8: #{_lambda_.9} parent=0 // pred_region
    _
  $region9: #{_lambda_.9} parent=0 // pred_fallthru
    _
  // Predicated region
  $region10: #{_lambda_.9} parent=0 // pred_check
    _
  $region11: #{_lambda_.9} parent=0 // pred_check_branch
    %22 = sbr.rel (0) target = $region13
  $region12: #{_lambda_.9} parent=0 // pred_region
    _
  $region13: #{_lambda_.9} parent=0 // pred_fallthru
    _
  // Predicated region
  $region14: #{_lambda_.9} parent=0 // pred_check
    _
  $region15: #{_lambda_.9} parent=0 // pred_check_branch
    %24 = sbr.rel (0) target = $region17
  $region16: #{_lambda_.9} parent=0 // pred_region
    _
  $region17: #{_lambda_.9} parent=0 // pred_fallthru
    _
  // Predicated region
  $region18: #{_lambda_.9} parent=0 // pred_check
    _
  $region19: #{_lambda_.9} parent=0 // pred_check_branch
    %26 = sbr.rel (0) target = $region21
  $region20: #{_lambda_.9} parent=0 // pred_region
    _
  $region21: #{_lambda_.9} parent=0 // pred_fallthru
    _
  // Predicated region
  $region22: #{_lambda_.9} parent=0 // pred_check
    _
  $region23: #{_lambda_.9} parent=0 // pred_check_branch
    %28 = sbr.rel (0) target = $region25
  $region24: #{_lambda_.9} parent=0 // pred_region
    _
  $region25: #{_lambda_.9} parent=0 // pred_fallthru
    _
  // Predicated region
  $region26: #{_lambda_.9} parent=0 // pred_check
    _
  $region27: #{_lambda_.9} parent=0 // pred_check_branch
    %30 = sbr.rel (0) target = $region29
  $region28: #{_lambda_.9} parent=0 // pred_region
    _
  $region29: #{_lambda_.9} parent=0 // pred_fallthru
    _
  // Predicated region
  $region30: #{_lambda_.9} parent=0 // pred_check
    _
  $region31: #{_lambda_.9} parent=0 // pred_check_branch
    %32 = sbr.rel (0) target = $region33
  $region32: #{_lambda_.9} parent=0 // pred_region
    _
  $region33: #{_lambda_.9} parent=0 // pred_fallthru
    _
  // Predicated region
  $region34: #{_lambda_.9} parent=0 // pred_check
    _
  $region35: #{_lambda_.9} parent=0 // pred_check_branch
    %34 = sbr.rel (0) target = $region37
  $region36: #{_lambda_.9} parent=0 // pred_region
    _
  $region37: #{_lambda_.9} parent=0 // pred_fallthru
    _
  // Predicated region
  $region38: #{_lambda_.9} parent=0 // pred_check
    _
  $region39: #{_lambda_.9} parent=0 // pred_check_branch
    %36 = sbr.rel (0) target = $region41
  $region40: #{_lambda_.9} parent=0 // pred_region
    _
  $region41: #{_lambda_.9} parent=0 // pred_fallthru
    _
  // Predicated region
  $region42: #{_lambda_.9} parent=0 // pred_check
    _
  $region43: #{_lambda_.9} parent=0 // pred_check_branch
    %38 = sbr.rel (0) target = $region45
  $region44: #{_lambda_.9} parent=0 // pred_region
    _
  $region45: #{_lambda_.9} parent=0 // pred_fallthru
    _
  // Predicated region
  $region46: #{_lambda_.9} parent=0 // pred_check
    _
  $region47: #{_lambda_.9} parent=0 // pred_check_branch
    %40 = sbr.rel (0) target = $region49
  $region48: #{_lambda_.9} parent=0 // pred_region
    _
  $region49: #{_lambda_.9} parent=0 // pred_fallthru
    _
  %v42 = vld [vmem:[%s0] sm:$0xf]
  %v43 = vld [vmem:[%s0 + $0x4] sm:$0xf]
  %v44 = vld [vmem:[%s0 + $0x8] sm:$0xf]
  %v45 = vld [vmem:[%s0 + $0xc] sm:$0xf]
  %v46 = vld [vmem:[%s2] sm:$0xf]
  %v47 = vld [vmem:[%s2 + $0x4] sm:$0xf]
  %v48 = vld [vmem:[%s2 + $0x8] sm:$0xf]
  %v49 = vld [vmem:[%s2 + $0xc] sm:$0xf]
  %v50 = vld [vmem:[%s2 + $0x10] sm:$0xf]
  %v51 = vld [vmem:[%s2 + $0x14] sm:$0xf]
  %v52 = vld [vmem:[%s2 + $0x18] sm:$0xf]
  %v53 = vld [vmem:[%s2 + $0x1c] sm:$0xf]
  %v54 = vld [vmem:[%s8] sm:$0x1]
  %v55 = vlaneseq
  %v56 = vshrl.u32 %v55, 7
  %v57 = vsub.s32 0, %v56
  %v58 = vrot.slane %v54, %v57
  %v63 = vunpack.c.l.b16 %v42
  %v64 = vunpack.c.l.b16 %v43
  %v65 = vunpack.c.l.b16 %v44
  %v66 = vunpack.c.l.b16 %v45
  %v67 = vpack.c.b16 %v64, %v63
  %v68 = vpack.c.b16 %v66, %v65
  %v77 = vunpack.c.l.b16 %v46
  %v78 = vunpack.c.l.b16 %v47
  %v79 = vunpack.c.l.b16 %v48
  %v80 = vunpack.c.l.b16 %v49
  %v81 = vunpack.c.l.b16 %v50
  %v82 = vunpack.c.l.b16 %v51
  %v83 = vunpack.c.l.b16 %v52
  %v84 = vunpack.c.l.b16 %v53
  %v85 = vpack.c.b16 %v78, %v77
  %v86 = vpack.c.b16 %v80, %v79
  %v87 = vpack.c.b16 %v82, %v81
  %v88 = vpack.c.b16 %v84, %v83
  %vm93 = vcmask 523264
  %v95 = vsel %vm93, %v67, 0
  %v98 = vsel %vm93, %v68, 0
  %100 = vmatprep.subr.bf16.mxu0 0
  %101 = vmatpush1.bf16.msra.mxu0 0
  %102 = vmatprep.subr.bf16.mxu0 0
  %103 = vmatpush1.bf16.msra.mxu0 0
  %104 = vmatprep.subr.bf16.mxu0 0
  %105 = vmatpush1.bf16.msra.mxu0 0
  %106 = vmatprep.subr.bf16.mxu0 0
  %107 = vmatpush1.bf16.msra.mxu0 0
  %108 = vmatprep.subr.bf16.mxu0 0
  %109 = vmatpush1.bf16.msra.mxu0 %v88
  %110 = vmatprep.subr.bf16.mxu0 0
  %111 = vmatpush1.bf16.msra.mxu0 %v87
  %112 = vmatprep.subr.bf16.mxu0 0
  %113 = vmatpush1.bf16.msra.mxu0 %v86
  %114 = vmatprep.subr.bf16.mxu0 0
  %115 = vmatpush1.bf16.msra.mxu0 %v85
  %116 = vmatprep.subr.bf16.mxu0 0
  %117 = vmatpush2.bf16.msra.mxu0 0
  %118 = vmatprep.subr.bf16.mxu0 0
  %119 = vmatpush2.bf16.msra.mxu0 0
  %120 = vmatprep.subr.bf16.mxu0 0
  %121 = vmatpush2.bf16.msra.mxu0 0
  %122 = vmatprep.subr.bf16.mxu0 0
  %123 = vmatpush2.bf16.msra.mxu0 0
  %124 = vmatprep.subr.bf16.mxu0 0
  %125 = vmatpush2.bf16.msra.mxu0 0
  %126 = vmatprep.subr.bf16.mxu0 0
  %127 = vmatpush2.bf16.msra.mxu0 0
  %128 = vmatprep.subr.bf16.mxu0 0
  %129 = vmatpush2.bf16.msra.mxu0 0
  %130 = vmatprep.subr.bf16.mxu0 0
  %131 = vmatpush2.bf16.msra.mxu0 0
  %132 = vmatprep.mubr.bf16.mxu0 0
  %133 = vmatmul.mubr.bf16.gmra.mxu0 %v95
  %v134 = vpop.f32.mrf.mxu0
  %v135 = vadd.f32 %v58, %v134
  %v136 = vpop.f32.mrf.mxu0
  %v137 = vpop.f32.mrf.mxu0
  %v138 = vadd.f32 %v58, %v137
  %v139 = vpop.f32.mrf.mxu0
  %140 = vmatprep.mubr.bf16.mxu0 0
  %141 = vmatmul.mubr.bf16.gmra.mxu0 %v98
  %v142 = vpop.f32.mrf.mxu0
  %v143 = vadd.f32 %v58, %v142
  %v144 = vpop.f32.mrf.mxu0
  %v145 = vpop.f32.mrf.mxu0
  %v146 = vadd.f32 %v58, %v145
  %v147 = vpop.f32.mrf.mxu0
  %148 = vdwg.mxu0
  %v149 = vmax.f32 %v135, 0.0
  %v150 = vmax.f32 %v138, 0.0
  %v151 = vmax.f32 %v143, 0.0
  %v152 = vmax.f32 %v146, 0.0
  %v153 = vpack.c.bf16 %v150, %v149
  %v154 = vpack.c.bf16 %v152, %v151
  %v155 = vld [vmem:[%s5] sm:$0xf]
  %v156 = vld [vmem:[%s5 + $0x4] sm:$0xf]
  %v157 = vld [vmem:[%s5 + $0x8] sm:$0xf]
  %v158 = vld [vmem:[%s5 + $0xc] sm:$0xf]
  %v159 = vld [vmem:[%s1] sm:$0xf]
  %v160 = vld [vmem:[%s1 + $0x4] sm:$0xf]
  %v161 = vld [vmem:[%s1 + $0x8] sm:$0xf]
  %v162 = vld [vmem:[%s1 + $0xc] sm:$0xf]
  %v167 = vunpack.c.l.b16 %v159
  %v168 = vunpack.c.l.b16 %v160
  %v169 = vunpack.c.l.b16 %v161
  %v170 = vunpack.c.l.b16 %v162
  %v171 = vpack.c.b16 %v168, %v167
  %v172 = vpack.c.b16 %v170, %v169
  %vm175 = vcmask 261120
  %v177 = vsel %vm175, %v171, 0
  %v180 = vsel %vm175, %v172, 0
  %182 = vmatprep.subr.bf16.mxu0 0
  %183 = vmatpush1.bf16.msra.mxu0 0
  %184 = vmatprep.subr.bf16.mxu0 0
  %185 = vmatpush1.bf16.msra.mxu0 0
  %186 = vmatprep.subr.bf16.mxu0 0
  %187 = vmatpush1.bf16.msra.mxu0 0
  %188 = vmatprep.subr.bf16.mxu0 0
  %189 = vmatpush1.bf16.msra.mxu0 0
  %190 = vmatprep.subr.bf16.mxu0 0
  %191 = vmatpush1.bf16.msra.mxu0 0
  %192 = vmatprep.subr.bf16.mxu0 0
  %193 = vmatpush1.bf16.msra.mxu0 0
  %194 = vmatprep.subr.bf16.mxu0 0
  %195 = vmatpush1.bf16.msra.mxu0 %v68
  %196 = vmatprep.subr.bf16.mxu0 0
  %197 = vmatpush1.bf16.msra.mxu0 %v67
  %198 = vmatprep.subr.bf16.mxu0 0
  %199 = vmatpush2.bf16.msra.mxu0 0
  %200 = vmatprep.subr.bf16.mxu0 0
  %201 = vmatpush2.bf16.msra.mxu0 0
  %202 = vmatprep.subr.bf16.mxu0 0
  %203 = vmatpush2.bf16.msra.mxu0 0
  %204 = vmatprep.subr.bf16.mxu0 0
  %205 = vmatpush2.bf16.msra.mxu0 0
  %206 = vmatprep.subr.bf16.mxu0 0
  %207 = vmatpush2.bf16.msra.mxu0 0
  %208 = vmatprep.subr.bf16.mxu0 0
  %209 = vmatpush2.bf16.msra.mxu0 0
  %210 = vmatprep.subr.bf16.mxu0 0
  %211 = vmatpush2.bf16.msra.mxu0 0
  %212 = vmatprep.subr.bf16.mxu0 0
  %213 = vmatpush2.bf16.msra.mxu0 0
  %214 = vmatprep.mubr.bf16.mxu0 0
  %215 = vmatmul.mubr.bf16.gmra.mxu0 %v177
  %v216 = vpop.f32.mrf.mxu0
  %v217 = vadd.f32 0.0, %v216
  %v218 = vpop.f32.mrf.mxu0
  %v219 = vpop.f32.mrf.mxu0
  %v220 = vadd.f32 0.0, %v219
  %v221 = vpop.f32.mrf.mxu0
  %222 = vmatprep.mubr.bf16.mxu0 0
  %223 = vmatmul.mubr.bf16.gmra.mxu0 %v180
  %v224 = vpop.f32.mrf.mxu0
  %v225 = vadd.f32 0.0, %v224
  %v226 = vpop.f32.mrf.mxu0
  %v227 = vpop.f32.mrf.mxu0
  %v228 = vadd.f32 0.0, %v227
  %v229 = vpop.f32.mrf.mxu0
  %230 = vdwg.mxu0
  %v231 = vpack.c.bf16 %v220, %v217
  %v232 = vpack.c.bf16 %v228, %v225
  %v233 = vld [vmem:[%s3] sm:$0xf]
  %v234 = vld [vmem:[%s3 + $0x4] sm:$0xf]
  %v235 = vld [vmem:[%s3 + $0x8] sm:$0xf]
  %v236 = vld [vmem:[%s3 + $0xc] sm:$0xf]
  %v237 = vld [vmem:[%s3 + $0x10] sm:$0xf]
  %v238 = vld [vmem:[%s3 + $0x14] sm:$0xf]
  %v239 = vld [vmem:[%s3 + $0x18] sm:$0xf]
  %v240 = vld [vmem:[%s3 + $0x1c] sm:$0xf]
  %s241 = scalar_lea.vmem %s1, 16
  %v242 = vld [vmem:[%s241] sm:$0xf]
  %v243 = vld [vmem:[%s241 + $0x4] sm:$0xf]
  %v244 = vld [vmem:[%s241 + $0x8] sm:$0xf]
  %v245 = vld [vmem:[%s241 + $0xc] sm:$0xf]
  %v250 = vunpack.c.l.b16 %v242
  %v251 = vunpack.c.l.b16 %v243
  %v252 = vunpack.c.l.b16 %v244
  %v253 = vunpack.c.l.b16 %v245
  %v254 = vpack.c.b16 %v251, %v250
  %v255 = vpack.c.b16 %v253, %v252
  %v257 = vsel %vm175, %v254, 0
  %v260 = vsel %vm175, %v255, 0
  %262 = vmatprep.subr.bf16.mxu0 0
  %263 = vmatpush1.bf16.msra.mxu0 0
  %264 = vmatprep.subr.bf16.mxu0 0
  %265 = vmatpush1.bf16.msra.mxu0 0
  %266 = vmatprep.subr.bf16.mxu0 0
  %267 = vmatpush1.bf16.msra.mxu0 0
  %268 = vmatprep.subr.bf16.mxu0 0
  %269 = vmatpush1.bf16.msra.mxu0 0
  %270 = vmatprep.subr.bf16.mxu0 0
  %271 = vmatpush1.bf16.msra.mxu0 0
  %272 = vmatprep.subr.bf16.mxu0 0
  %273 = vmatpush1.bf16.msra.mxu0 0
  %274 = vmatprep.subr.bf16.mxu0 0
  %275 = vmatpush1.bf16.msra.mxu0 %v68
  %276 = vmatprep.subr.bf16.mxu0 0
  %277 = vmatpush1.bf16.msra.mxu0 %v67
  %278 = vmatprep.subr.bf16.mxu0 0
  %279 = vmatpush2.bf16.msra.mxu0 0
  %280 = vmatprep.subr.bf16.mxu0 0
  %281 = vmatpush2.bf16.msra.mxu0 0
  %282 = vmatprep.subr.bf16.mxu0 0
  %283 = vmatpush2.bf16.msra.mxu0 0
  %284 = vmatprep.subr.bf16.mxu0 0
  %285 = vmatpush2.bf16.msra.mxu0 0
  %286 = vmatprep.subr.bf16.mxu0 0
  %287 = vmatpush2.bf16.msra.mxu0 0
  %288 = vmatprep.subr.bf16.mxu0 0
  %289 = vmatpush2.bf16.msra.mxu0 0
  %290 = vmatprep.subr.bf16.mxu0 0
  %291 = vmatpush2.bf16.msra.mxu0 0
  %292 = vmatprep.subr.bf16.mxu0 0
  %293 = vmatpush2.bf16.msra.mxu0 0
  %294 = vmatprep.mubr.bf16.mxu0 0
  %295 = vmatmul.mubr.bf16.gmra.mxu0 %v257
  %v296 = vpop.f32.mrf.mxu0
  %v297 = vadd.f32 0.0, %v296
  %v298 = vpop.f32.mrf.mxu0
  %v299 = vpop.f32.mrf.mxu0
  %v300 = vadd.f32 0.0, %v299
  %v301 = vpop.f32.mrf.mxu0
  %302 = vmatprep.mubr.bf16.mxu0 0
  %303 = vmatmul.mubr.bf16.gmra.mxu0 %v260
  %v304 = vpop.f32.mrf.mxu0
  %v305 = vadd.f32 0.0, %v304
  %v306 = vpop.f32.mrf.mxu0
  %v307 = vpop.f32.mrf.mxu0
  %v308 = vadd.f32 0.0, %v307
  %v309 = vpop.f32.mrf.mxu0
  %310 = vdwg.mxu0
  %v311 = vpack.c.bf16 %v300, %v297
  %v312 = vpack.c.bf16 %v308, %v305
  %s313 = scalar_lea.vmem %s3, 32
  %v314 = vld [vmem:[%s313] sm:$0xf]
  %v315 = vld [vmem:[%s313 + $0x4] sm:$0xf]
  %v316 = vld [vmem:[%s313 + $0x8] sm:$0xf]
  %v317 = vld [vmem:[%s313 + $0xc] sm:$0xf]
  %v318 = vld [vmem:[%s313 + $0x10] sm:$0xf]
  %v319 = vld [vmem:[%s313 + $0x14] sm:$0xf]
  %v320 = vld [vmem:[%s313 + $0x18] sm:$0xf]
  %v321 = vld [vmem:[%s313 + $0x1c] sm:$0xf]
  %v330 = vunpack.c.l.b16 %v314
  %v331 = vunpack.c.l.b16 %v315
  %v332 = vunpack.c.l.b16 %v316
  %v333 = vunpack.c.l.b16 %v317
  %v334 = vunpack.c.l.b16 %v318
  %v335 = vunpack.c.l.b16 %v319
  %v336 = vunpack.c.l.b16 %v320
  %v337 = vunpack.c.l.b16 %v321
  %v338 = vpack.c.b16 %v331, %v330
  %v339 = vpack.c.b16 %v333, %v332
  %v340 = vpack.c.b16 %v335, %v334
  %v341 = vpack.c.b16 %v337, %v336
  %v347 = vsel %vm93, %v311, 0
  %v350 = vsel %vm93, %v312, 0
  %352 = vmatprep.subr.bf16.mxu0 0
  %353 = vmatpush1.bf16.msra.mxu0 0
  %354 = vmatprep.subr.bf16.mxu0 0
  %355 = vmatpush1.bf16.msra.mxu0 0
  %356 = vmatprep.subr.bf16.mxu0 0
  %357 = vmatpush1.bf16.msra.mxu0 0
  %358 = vmatprep.subr.bf16.mxu0 0
  %359 = vmatpush1.bf16.msra.mxu0 0
  %360 = vmatprep.subr.bf16.mxu0 0
  %361 = vmatpush1.bf16.msra.mxu0 %v341
  %362 = vmatprep.subr.bf16.mxu0 0
  %363 = vmatpush1.bf16.msra.mxu0 %v340
  %364 = vmatprep.subr.bf16.mxu0 0
  %365 = vmatpush1.bf16.msra.mxu0 %v339
  %366 = vmatprep.subr.bf16.mxu0 0
  %367 = vmatpush1.bf16.msra.mxu0 %v338
  %368 = vmatprep.subr.bf16.mxu0 0
  %369 = vmatpush2.bf16.msra.mxu0 0
  %370 = vmatprep.subr.bf16.mxu0 0
  %371 = vmatpush2.bf16.msra.mxu0 0
  %372 = vmatprep.subr.bf16.mxu0 0
  %373 = vmatpush2.bf16.msra.mxu0 0
  %374 = vmatprep.subr.bf16.mxu0 0
  %375 = vmatpush2.bf16.msra.mxu0 0
  %376 = vmatprep.subr.bf16.mxu0 0
  %377 = vmatpush2.bf16.msra.mxu0 0
  %378 = vmatprep.subr.bf16.mxu0 0
  %379 = vmatpush2.bf16.msra.mxu0 0
  %380 = vmatprep.subr.bf16.mxu0 0
  %381 = vmatpush2.bf16.msra.mxu0 0
  %382 = vmatprep.subr.bf16.mxu0 0
  %383 = vmatpush2.bf16.msra.mxu0 0
  %384 = vmatprep.mubr.bf16.mxu0 0
  %385 = vmatmul.mubr.bf16.gmra.mxu0 %v347
  %v386 = vpop.f32.mrf.mxu0
  %v387 = vadd.f32 0.0, %v386
  %v388 = vpop.f32.mrf.mxu0
  %v389 = vpop.f32.mrf.mxu0
  %v390 = vadd.f32 0.0, %v389
  %v391 = vpop.f32.mrf.mxu0
  %392 = vmatprep.mubr.bf16.mxu0 0
  %393 = vmatmul.mubr.bf16.gmra.mxu0 %v350
  %v394 = vpop.f32.mrf.mxu0
  %v395 = vadd.f32 0.0, %v394
  %v396 = vpop.f32.mrf.mxu0
  %v397 = vpop.f32.mrf.mxu0
  %v398 = vadd.f32 0.0, %v397
  %v399 = vpop.f32.mrf.mxu0
  %400 = vdwg.mxu0
  %v409 = vunpack.c.l.b16 %v233
  %v410 = vunpack.c.l.b16 %v234
  %v411 = vunpack.c.l.b16 %v235
  %v412 = vunpack.c.l.b16 %v236
  %v413 = vunpack.c.l.b16 %v237
  %v414 = vunpack.c.l.b16 %v238
  %v415 = vunpack.c.l.b16 %v239
  %v416 = vunpack.c.l.b16 %v240
  %v417 = vpack.c.b16 %v410, %v409
  %v418 = vpack.c.b16 %v412, %v411
  %v419 = vpack.c.b16 %v414, %v413
  %v420 = vpack.c.b16 %v416, %v415
  %v426 = vsel %vm93, %v231, 0
  %v429 = vsel %vm93, %v232, 0
  %431 = vmatprep.subr.bf16.mxu0 0
  %432 = vmatpush1.bf16.msra.mxu0 0
  %433 = vmatprep.subr.bf16.mxu0 0
  %434 = vmatpush1.bf16.msra.mxu0 0
  %435 = vmatprep.subr.bf16.mxu0 0
  %436 = vmatpush1.bf16.msra.mxu0 0
  %437 = vmatprep.subr.bf16.mxu0 0
  %438 = vmatpush1.bf16.msra.mxu0 0
  %439 = vmatprep.subr.bf16.mxu0 0
  %440 = vmatpush1.bf16.msra.mxu0 %v420
  %441 = vmatprep.subr.bf16.mxu0 0
  %442 = vmatpush1.bf16.msra.mxu0 %v419
  %443 = vmatprep.subr.bf16.mxu0 0
  %444 = vmatpush1.bf16.msra.mxu0 %v418
  %445 = vmatprep.subr.bf16.mxu0 0
  %446 = vmatpush1.bf16.msra.mxu0 %v417
  %447 = vmatprep.subr.bf16.mxu0 0
  %448 = vmatpush2.bf16.msra.mxu0 0
  %449 = vmatprep.subr.bf16.mxu0 0
  %450 = vmatpush2.bf16.msra.mxu0 0
  %451 = vmatprep.subr.bf16.mxu0 0
  %452 = vmatpush2.bf16.msra.mxu0 0
  %453 = vmatprep.subr.bf16.mxu0 0
  %454 = vmatpush2.bf16.msra.mxu0 0
  %455 = vmatprep.subr.bf16.mxu0 0
  %456 = vmatpush2.bf16.msra.mxu0 0
  %457 = vmatprep.subr.bf16.mxu0 0
  %458 = vmatpush2.bf16.msra.mxu0 0
  %459 = vmatprep.subr.bf16.mxu0 0
  %460 = vmatpush2.bf16.msra.mxu0 0
  %461 = vmatprep.subr.bf16.mxu0 0
  %462 = vmatpush2.bf16.msra.mxu0 0
  %463 = vmatprep.mubr.bf16.mxu0 0
  %464 = vmatmul.mubr.bf16.gmra.mxu0 %v426
  %v465 = vpop.f32.mrf.mxu0
  %v466 = vadd.f32 %v387, %v465
  %v467 = vpop.f32.mrf.mxu0
  %v468 = vpop.f32.mrf.mxu0
  %v469 = vadd.f32 %v390, %v468
  %v470 = vpop.f32.mrf.mxu0
  %471 = vmatprep.mubr.bf16.mxu0 0
  %472 = vmatmul.mubr.bf16.gmra.mxu0 %v429
  %v473 = vpop.f32.mrf.mxu0
  %v474 = vadd.f32 %v395, %v473
  %v475 = vpop.f32.mrf.mxu0
  %v476 = vpop.f32.mrf.mxu0
  %v477 = vadd.f32 %v398, %v476
  %v478 = vpop.f32.mrf.mxu0
  %479 = vdwg.mxu0
  %s480 = scalar_lea.vmem %s1, 32
  %v481 = vld [vmem:[%s480] sm:$0xf]
  %v482 = vld [vmem:[%s480 + $0x4] sm:$0xf]
  %v483 = vld [vmem:[%s480 + $0x8] sm:$0xf]
  %v484 = vld [vmem:[%s480 + $0xc] sm:$0xf]
  %v489 = vunpack.c.l.b16 %v481
  %v490 = vunpack.c.l.b16 %v482
  %v491 = vunpack.c.l.b16 %v483
  %v492 = vunpack.c.l.b16 %v484
  %v493 = vpack.c.b16 %v490, %v489
  %v494 = vpack.c.b16 %v492, %v491
  %v496 = vsel %vm175, %v493, 0
  %v499 = vsel %vm175, %v494, 0
  %501 = vmatprep.subr.bf16.mxu0 0
  %502 = vmatpush1.bf16.msra.mxu0 0
  %503 = vmatprep.subr.bf16.mxu0 0
  %504 = vmatpush1.bf16.msra.mxu0 0
  %505 = vmatprep.subr.bf16.mxu0 0
  %506 = vmatpush1.bf16.msra.mxu0 0
  %507 = vmatprep.subr.bf16.mxu0 0
  %508 = vmatpush1.bf16.msra.mxu0 0
  %509 = vmatprep.subr.bf16.mxu0 0
  %510 = vmatpush1.bf16.msra.mxu0 0
  %511 = vmatprep.subr.bf16.mxu0 0
  %512 = vmatpush1.bf16.msra.mxu0 0
  %513 = vmatprep.subr.bf16.mxu0 0
  %514 = vmatpush1.bf16.msra.mxu0 %v68
  %515 = vmatprep.subr.bf16.mxu0 0
  %516 = vmatpush1.bf16.msra.mxu0 %v67
  %517 = vmatprep.subr.bf16.mxu0 0
  %518 = vmatpush2.bf16.msra.mxu0 0
  %519 = vmatprep.subr.bf16.mxu0 0
  %520 = vmatpush2.bf16.msra.mxu0 0
  %521 = vmatprep.subr.bf16.mxu0 0
  %522 = vmatpush2.bf16.msra.mxu0 0
  %523 = vmatprep.subr.bf16.mxu0 0
  %524 = vmatpush2.bf16.msra.mxu0 0
  %525 = vmatprep.subr.bf16.mxu0 0
  %526 = vmatpush2.bf16.msra.mxu0 0
  %527 = vmatprep.subr.bf16.mxu0 0
  %528 = vmatpush2.bf16.msra.mxu0 0
  %529 = vmatprep.subr.bf16.mxu0 0
  %530 = vmatpush2.bf16.msra.mxu0 0
  %531 = vmatprep.subr.bf16.mxu0 0
  %532 = vmatpush2.bf16.msra.mxu0 0
  %533 = vmatprep.mubr.bf16.mxu0 0
  %534 = vmatmul.mubr.bf16.gmra.mxu0 %v496
  %v535 = vpop.f32.mrf.mxu0
  %v536 = vadd.f32 0.0, %v535
  %v537 = vpop.f32.mrf.mxu0
  %v538 = vpop.f32.mrf.mxu0
  %v539 = vadd.f32 0.0, %v538
  %v540 = vpop.f32.mrf.mxu0
  %541 = vmatprep.mubr.bf16.mxu0 0
  %542 = vmatmul.mubr.bf16.gmra.mxu0 %v499
  %v543 = vpop.f32.mrf.mxu0
  %v544 = vadd.f32 0.0, %v543
  %v545 = vpop.f32.mrf.mxu0
  %v546 = vpop.f32.mrf.mxu0
  %v547 = vadd.f32 0.0, %v546
  %v548 = vpop.f32.mrf.mxu0
  %549 = vdwg.mxu0
  %v550 = vpack.c.bf16 %v539, %v536
  %v551 = vpack.c.bf16 %v547, %v544
  %s552 = scalar_lea.vmem %s3, 64
  %v553 = vld [vmem:[%s552] sm:$0xf]
  %v554 = vld [vmem:[%s552 + $0x4] sm:$0xf]
  %v555 = vld [vmem:[%s552 + $0x8] sm:$0xf]
  %v556 = vld [vmem:[%s552 + $0xc] sm:$0xf]
  %v557 = vld [vmem:[%s552 + $0x10] sm:$0xf]
  %v558 = vld [vmem:[%s552 + $0x14] sm:$0xf]
  %v559 = vld [vmem:[%s552 + $0x18] sm:$0xf]
  %v560 = vld [vmem:[%s552 + $0x1c] sm:$0xf]
  %v569 = vunpack.c.l.b16 %v553
  %v570 = vunpack.c.l.b16 %v554
  %v571 = vunpack.c.l.b16 %v555
  %v572 = vunpack.c.l.b16 %v556
  %v573 = vunpack.c.l.b16 %v557
  %v574 = vunpack.c.l.b16 %v558
  %v575 = vunpack.c.l.b16 %v559
  %v576 = vunpack.c.l.b16 %v560
  %v577 = vpack.c.b16 %v570, %v569
  %v578 = vpack.c.b16 %v572, %v571
  %v579 = vpack.c.b16 %v574, %v573
  %v580 = vpack.c.b16 %v576, %v575
  %v586 = vsel %vm93, %v550, 0
  %v589 = vsel %vm93, %v551, 0
  %591 = vmatprep.subr.bf16.mxu0 0
  %592 = vmatpush1.bf16.msra.mxu0 0
  %593 = vmatprep.subr.bf16.mxu0 0
  %594 = vmatpush1.bf16.msra.mxu0 0
  %595 = vmatprep.subr.bf16.mxu0 0
  %596 = vmatpush1.bf16.msra.mxu0 0
  %597 = vmatprep.subr.bf16.mxu0 0
  %598 = vmatpush1.bf16.msra.mxu0 0
  %599 = vmatprep.subr.bf16.mxu0 0
  %600 = vmatpush1.bf16.msra.mxu0 %v580
  %601 = vmatprep.subr.bf16.mxu0 0
  %602 = vmatpush1.bf16.msra.mxu0 %v579
  %603 = vmatprep.subr.bf16.mxu0 0
  %604 = vmatpush1.bf16.msra.mxu0 %v578
  %605 = vmatprep.subr.bf16.mxu0 0
  %606 = vmatpush1.bf16.msra.mxu0 %v577
  %607 = vmatprep.subr.bf16.mxu0 0
  %608 = vmatpush2.bf16.msra.mxu0 0
  %609 = vmatprep.subr.bf16.mxu0 0
  %610 = vmatpush2.bf16.msra.mxu0 0
  %611 = vmatprep.subr.bf16.mxu0 0
  %612 = vmatpush2.bf16.msra.mxu0 0
  %613 = vmatprep.subr.bf16.mxu0 0
  %614 = vmatpush2.bf16.msra.mxu0 0
  %615 = vmatprep.subr.bf16.mxu0 0
  %616 = vmatpush2.bf16.msra.mxu0 0
  %617 = vmatprep.subr.bf16.mxu0 0
  %618 = vmatpush2.bf16.msra.mxu0 0
  %619 = vmatprep.subr.bf16.mxu0 0
  %620 = vmatpush2.bf16.msra.mxu0 0
  %621 = vmatprep.subr.bf16.mxu0 0
  %622 = vmatpush2.bf16.msra.mxu0 0
  %623 = vmatprep.mubr.bf16.mxu0 0
  %624 = vmatmul.mubr.bf16.gmra.mxu0 %v586
  %v625 = vpop.f32.mrf.mxu0
  %v626 = vadd.f32 0.0, %v625
  %v627 = vpop.f32.mrf.mxu0
  %v628 = vpop.f32.mrf.mxu0
  %v629 = vadd.f32 0.0, %v628
  %v630 = vpop.f32.mrf.mxu0
  %631 = vmatprep.mubr.bf16.mxu0 0
  %632 = vmatmul.mubr.bf16.gmra.mxu0 %v589
  %v633 = vpop.f32.mrf.mxu0
  %v634 = vadd.f32 0.0, %v633
  %v635 = vpop.f32.mrf.mxu0
  %v636 = vpop.f32.mrf.mxu0
  %v637 = vadd.f32 0.0, %v636
  %v638 = vpop.f32.mrf.mxu0
  %639 = vdwg.mxu0
  %v640 = vadd.f32 %v466, %v626
  %v641 = vadd.f32 %v469, %v629
  %v642 = vadd.f32 %v474, %v634
  %v643 = vadd.f32 %v477, %v637
  %s644 = scalar_lea.vmem %s1, 48
  %v645 = vld [vmem:[%s644] sm:$0xf]
  %v646 = vld [vmem:[%s644 + $0x4] sm:$0xf]
  %v647 = vld [vmem:[%s644 + $0x8] sm:$0xf]
  %v648 = vld [vmem:[%s644 + $0xc] sm:$0xf]
  %v653 = vunpack.c.l.b16 %v645
  %v654 = vunpack.c.l.b16 %v646
  %v655 = vunpack.c.l.b16 %v647
  %v656 = vunpack.c.l.b16 %v648
  %v657 = vpack.c.b16 %v654, %v653
  %v658 = vpack.c.b16 %v656, %v655
  %v660 = vsel %vm175, %v657, 0
  %v663 = vsel %vm175, %v658, 0
  %665 = vmatprep.subr.bf16.mxu0 0
  %666 = vmatpush1.bf16.msra.mxu0 0
  %667 = vmatprep.subr.bf16.mxu0 0
  %668 = vmatpush1.bf16.msra.mxu0 0
  %669 = vmatprep.subr.bf16.mxu0 0
  %670 = vmatpush1.bf16.msra.mxu0 0
  %671 = vmatprep.subr.bf16.mxu0 0
  %672 = vmatpush1.bf16.msra.mxu0 0
  %673 = vmatprep.subr.bf16.mxu0 0
  %674 = vmatpush1.bf16.msra.mxu0 0
  %675 = vmatprep.subr.bf16.mxu0 0
  %676 = vmatpush1.bf16.msra.mxu0 0
  %677 = vmatprep.subr.bf16.mxu0 0
  %678 = vmatpush1.bf16.msra.mxu0 %v68
  %679 = vmatprep.subr.bf16.mxu0 0
  %680 = vmatpush1.bf16.msra.mxu0 %v67
  %681 = vmatprep.subr.bf16.mxu0 0
  %682 = vmatpush2.bf16.msra.mxu0 0
  %683 = vmatprep.subr.bf16.mxu0 0
  %684 = vmatpush2.bf16.msra.mxu0 0
  %685 = vmatprep.subr.bf16.mxu0 0
  %686 = vmatpush2.bf16.msra.mxu0 0
  %687 = vmatprep.subr.bf16.mxu0 0
  %688 = vmatpush2.bf16.msra.mxu0 0
  %689 = vmatprep.subr.bf16.mxu0 0
  %690 = vmatpush2.bf16.msra.mxu0 0
  %691 = vmatprep.subr.bf16.mxu0 0
  %692 = vmatpush2.bf16.msra.mxu0 0
  %693 = vmatprep.subr.bf16.mxu0 0
  %694 = vmatpush2.bf16.msra.mxu0 0
  %695 = vmatprep.subr.bf16.mxu0 0
  %696 = vmatpush2.bf16.msra.mxu0 0
  %697 = vmatprep.mubr.bf16.mxu0 0
  %698 = vmatmul.mubr.bf16.gmra.mxu0 %v660
  %v699 = vpop.f32.mrf.mxu0
  %v700 = vadd.f32 0.0, %v699
  %v701 = vpop.f32.mrf.mxu0
  %v702 = vpop.f32.mrf.mxu0
  %v703 = vadd.f32 0.0, %v702
  %v704 = vpop.f32.mrf.mxu0
  %705 = vmatprep.mubr.bf16.mxu0 0
  %706 = vmatmul.mubr.bf16.gmra.mxu0 %v663
  %v707 = vpop.f32.mrf.mxu0
  %v708 = vadd.f32 0.0, %v707
  %v709 = vpop.f32.mrf.mxu0
  %v710 = vpop.f32.mrf.mxu0
  %v711 = vadd.f32 0.0, %v710
  %v712 = vpop.f32.mrf.mxu0
  %713 = vdwg.mxu0
  %v714 = vpack.c.bf16 %v703, %v700
  %v715 = vpack.c.bf16 %v711, %v708
  %s716 = scalar_lea.vmem %s3, 96
  %v717 = vld [vmem:[%s716] sm:$0xf]
  %v718 = vld [vmem:[%s716 + $0x4] sm:$0xf]
  %v719 = vld [vmem:[%s716 + $0x8] sm:$0xf]
  %v720 = vld [vmem:[%s716 + $0xc] sm:$0xf]
  %v721 = vld [vmem:[%s716 + $0x10] sm:$0xf]
  %v722 = vld [vmem:[%s716 + $0x14] sm:$0xf]
  %v723 = vld [vmem:[%s716 + $0x18] sm:$0xf]
  %v724 = vld [vmem:[%s716 + $0x1c] sm:$0xf]
  %v733 = vunpack.c.l.b16 %v717
  %v734 = vunpack.c.l.b16 %v718
  %v735 = vunpack.c.l.b16 %v719
  %v736 = vunpack.c.l.b16 %v720
  %v737 = vunpack.c.l.b16 %v721
  %v738 = vunpack.c.l.b16 %v722
  %v739 = vunpack.c.l.b16 %v723
  %v740 = vunpack.c.l.b16 %v724
  %v741 = vpack.c.b16 %v734, %v733
  %v742 = vpack.c.b16 %v736, %v735
  %v743 = vpack.c.b16 %v738, %v737
  %v744 = vpack.c.b16 %v740, %v739
  %v750 = vsel %vm93, %v714, 0
  %v753 = vsel %vm93, %v715, 0
  %755 = vmatprep.subr.bf16.mxu0 0
  %756 = vmatpush1.bf16.msra.mxu0 0
  %757 = vmatprep.subr.bf16.mxu0 0
  %758 = vmatpush1.bf16.msra.mxu0 0
  %759 = vmatprep.subr.bf16.mxu0 0
  %760 = vmatpush1.bf16.msra.mxu0 0
  %761 = vmatprep.subr.bf16.mxu0 0
  %762 = vmatpush1.bf16.msra.mxu0 0
  %763 = vmatprep.subr.bf16.mxu0 0
  %764 = vmatpush1.bf16.msra.mxu0 %v744
  %765 = vmatprep.subr.bf16.mxu0 0
  %766 = vmatpush1.bf16.msra.mxu0 %v743
  %767 = vmatprep.subr.bf16.mxu0 0
  %768 = vmatpush1.bf16.msra.mxu0 %v742
  %769 = vmatprep.subr.bf16.mxu0 0
  %770 = vmatpush1.bf16.msra.mxu0 %v741
  %771 = vmatprep.subr.bf16.mxu0 0
  %772 = vmatpush2.bf16.msra.mxu0 0
  %773 = vmatprep.subr.bf16.mxu0 0
  %774 = vmatpush2.bf16.msra.mxu0 0
  %775 = vmatprep.subr.bf16.mxu0 0
  %776 = vmatpush2.bf16.msra.mxu0 0
  %777 = vmatprep.subr.bf16.mxu0 0
  %778 = vmatpush2.bf16.msra.mxu0 0
  %779 = vmatprep.subr.bf16.mxu0 0
  %780 = vmatpush2.bf16.msra.mxu0 0
  %781 = vmatprep.subr.bf16.mxu0 0
  %782 = vmatpush2.bf16.msra.mxu0 0
  %783 = vmatprep.subr.bf16.mxu0 0
  %784 = vmatpush2.bf16.msra.mxu0 0
  %785 = vmatprep.subr.bf16.mxu0 0
  %786 = vmatpush2.bf16.msra.mxu0 0
  %787 = vmatprep.mubr.bf16.mxu0 0
  %788 = vmatmul.mubr.bf16.gmra.mxu0 %v750
  %v789 = vpop.f32.mrf.mxu0
  %v790 = vadd.f32 0.0, %v789
  %v791 = vpop.f32.mrf.mxu0
  %v792 = vpop.f32.mrf.mxu0
  %v793 = vadd.f32 0.0, %v792
  %v794 = vpop.f32.mrf.mxu0
  %795 = vmatprep.mubr.bf16.mxu0 0
  %796 = vmatmul.mubr.bf16.gmra.mxu0 %v753
  %v797 = vpop.f32.mrf.mxu0
  %v798 = vadd.f32 0.0, %v797
  %v799 = vpop.f32.mrf.mxu0
  %v800 = vpop.f32.mrf.mxu0
  %v801 = vadd.f32 0.0, %v800
  %v802 = vpop.f32.mrf.mxu0
  %803 = vdwg.mxu0
  %v804 = vadd.f32 %v640, %v790
  %v805 = vadd.f32 %v641, %v793
  %v806 = vadd.f32 %v642, %v798
  %v807 = vadd.f32 %v643, %v801
  %s808 = scalar_lea.vmem %s1, 64
  %v809 = vld [vmem:[%s808] sm:$0xf]
  %v810 = vld [vmem:[%s808 + $0x4] sm:$0xf]
  %v811 = vld [vmem:[%s808 + $0x8] sm:$0xf]
  %v812 = vld [vmem:[%s808 + $0xc] sm:$0xf]
  %v817 = vunpack.c.l.b16 %v809
  %v818 = vunpack.c.l.b16 %v810
  %v819 = vunpack.c.l.b16 %v811
  %v820 = vunpack.c.l.b16 %v812
  %v821 = vpack.c.b16 %v818, %v817
  %v822 = vpack.c.b16 %v820, %v819
  %v824 = vsel %vm175, %v821, 0
  %v827 = vsel %vm175, %v822, 0
  %829 = vmatprep.subr.bf16.mxu0 0
  %830 = vmatpush1.bf16.msra.mxu0 0
  %831 = vmatprep.subr.bf16.mxu0 0
  %832 = vmatpush1.bf16.msra.mxu0 0
  %833 = vmatprep.subr.bf16.mxu0 0
  %834 = vmatpush1.bf16.msra.mxu0 0
  %835 = vmatprep.subr.bf16.mxu0 0
  %836 = vmatpush1.bf16.msra.mxu0 0
  %837 = vmatprep.subr.bf16.mxu0 0
  %838 = vmatpush1.bf16.msra.mxu0 0
  %839 = vmatprep.subr.bf16.mxu0 0
  %840 = vmatpush1.bf16.msra.mxu0 0
  %841 = vmatprep.subr.bf16.mxu0 0
  %842 = vmatpush1.bf16.msra.mxu0 %v68
  %843 = vmatprep.subr.bf16.mxu0 0
  %844 = vmatpush1.bf16.msra.mxu0 %v67
  %845 = vmatprep.subr.bf16.mxu0 0
  %846 = vmatpush2.bf16.msra.mxu0 0
  %847 = vmatprep.subr.bf16.mxu0 0
  %848 = vmatpush2.bf16.msra.mxu0 0
  %849 = vmatprep.subr.bf16.mxu0 0
  %850 = vmatpush2.bf16.msra.mxu0 0
  %851 = vmatprep.subr.bf16.mxu0 0
  %852 = vmatpush2.bf16.msra.mxu0 0
  %853 = vmatprep.subr.bf16.mxu0 0
  %854 = vmatpush2.bf16.msra.mxu0 0
  %855 = vmatprep.subr.bf16.mxu0 0
  %856 = vmatpush2.bf16.msra.mxu0 0
  %857 = vmatprep.subr.bf16.mxu0 0
  %858 = vmatpush2.bf16.msra.mxu0 0
  %859 = vmatprep.subr.bf16.mxu0 0
  %860 = vmatpush2.bf16.msra.mxu0 0
  %861 = vmatprep.mubr.bf16.mxu0 0
  %862 = vmatmul.mubr.bf16.gmra.mxu0 %v824
  %v863 = vpop.f32.mrf.mxu0
  %v864 = vadd.f32 0.0, %v863
  %v865 = vpop.f32.mrf.mxu0
  %v866 = vpop.f32.mrf.mxu0
  %v867 = vadd.f32 0.0, %v866
  %v868 = vpop.f32.mrf.mxu0
  %869 = vmatprep.mubr.bf16.mxu0 0
  %870 = vmatmul.mubr.bf16.gmra.mxu0 %v827
  %v871 = vpop.f32.mrf.mxu0
  %v872 = vadd.f32 0.0, %v871
  %v873 = vpop.f32.mrf.mxu0
  %v874 = vpop.f32.mrf.mxu0
  %v875 = vadd.f32 0.0, %v874
  %v876 = vpop.f32.mrf.mxu0
  %877 = vdwg.mxu0
  %v878 = vpack.c.bf16 %v867, %v864
  %v879 = vpack.c.bf16 %v875, %v872
  %s880 = scalar_lea.vmem %s3, 128
  %v881 = vld [vmem:[%s880] sm:$0xf]
  %v882 = vld [vmem:[%s880 + $0x4] sm:$0xf]
  %v883 = vld [vmem:[%s880 + $0x8] sm:$0xf]
  %v884 = vld [vmem:[%s880 + $0xc] sm:$0xf]
  %v885 = vld [vmem:[%s880 + $0x10] sm:$0xf]
  %v886 = vld [vmem:[%s880 + $0x14] sm:$0xf]
  %v887 = vld [vmem:[%s880 + $0x18] sm:$0xf]
  %v888 = vld [vmem:[%s880 + $0x1c] sm:$0xf]
  %v897 = vunpack.c.l.b16 %v881
  %v898 = vunpack.c.l.b16 %v882
  %v899 = vunpack.c.l.b16 %v883
  %v900 = vunpack.c.l.b16 %v884
  %v901 = vunpack.c.l.b16 %v885
  %v902 = vunpack.c.l.b16 %v886
  %v903 = vunpack.c.l.b16 %v887
  %v904 = vunpack.c.l.b16 %v888
  %v905 = vpack.c.b16 %v898, %v897
  %v906 = vpack.c.b16 %v900, %v899
  %v907 = vpack.c.b16 %v902, %v901
  %v908 = vpack.c.b16 %v904, %v903
  %v914 = vsel %vm93, %v878, 0
  %v917 = vsel %vm93, %v879, 0
  %919 = vmatprep.subr.bf16.mxu0 0
  %920 = vmatpush1.bf16.msra.mxu0 0
  %921 = vmatprep.subr.bf16.mxu0 0
  %922 = vmatpush1.bf16.msra.mxu0 0
  %923 = vmatprep.subr.bf16.mxu0 0
  %924 = vmatpush1.bf16.msra.mxu0 0
  %925 = vmatprep.subr.bf16.mxu0 0
  %926 = vmatpush1.bf16.msra.mxu0 0
  %927 = vmatprep.subr.bf16.mxu0 0
  %928 = vmatpush1.bf16.msra.mxu0 %v908
  %929 = vmatprep.subr.bf16.mxu0 0
  %930 = vmatpush1.bf16.msra.mxu0 %v907
  %931 = vmatprep.subr.bf16.mxu0 0
  %932 = vmatpush1.bf16.msra.mxu0 %v906
  %933 = vmatprep.subr.bf16.mxu0 0
  %934 = vmatpush1.bf16.msra.mxu0 %v905
  %935 = vmatprep.subr.bf16.mxu0 0
  %936 = vmatpush2.bf16.msra.mxu0 0
  %937 = vmatprep.subr.bf16.mxu0 0
  %938 = vmatpush2.bf16.msra.mxu0 0
  %939 = vmatprep.subr.bf16.mxu0 0
  %940 = vmatpush2.bf16.msra.mxu0 0
  %941 = vmatprep.subr.bf16.mxu0 0
  %942 = vmatpush2.bf16.msra.mxu0 0
  %943 = vmatprep.subr.bf16.mxu0 0
  %944 = vmatpush2.bf16.msra.mxu0 0
  %945 = vmatprep.subr.bf16.mxu0 0
  %946 = vmatpush2.bf16.msra.mxu0 0
  %947 = vmatprep.subr.bf16.mxu0 0
  %948 = vmatpush2.bf16.msra.mxu0 0
  %949 = vmatprep.subr.bf16.mxu0 0
  %950 = vmatpush2.bf16.msra.mxu0 0
  %951 = vmatprep.mubr.bf16.mxu0 0
  %952 = vmatmul.mubr.bf16.gmra.mxu0 %v914
  %v953 = vpop.f32.mrf.mxu0
  %v954 = vadd.f32 0.0, %v953
  %v955 = vpop.f32.mrf.mxu0
  %v956 = vpop.f32.mrf.mxu0
  %v957 = vadd.f32 0.0, %v956
  %v958 = vpop.f32.mrf.mxu0
  %959 = vmatprep.mubr.bf16.mxu0 0
  %960 = vmatmul.mubr.bf16.gmra.mxu0 %v917
  %v961 = vpop.f32.mrf.mxu0
  %v962 = vadd.f32 0.0, %v961
  %v963 = vpop.f32.mrf.mxu0
  %v964 = vpop.f32.mrf.mxu0
  %v965 = vadd.f32 0.0, %v964
  %v966 = vpop.f32.mrf.mxu0
  %967 = vdwg.mxu0
  %v968 = vadd.f32 %v804, %v954
  %v969 = vadd.f32 %v805, %v957
  %v970 = vadd.f32 %v806, %v962
  %v971 = vadd.f32 %v807, %v965
  %s972 = scalar_lea.vmem %s1, 80
  %v973 = vld [vmem:[%s972] sm:$0xf]
  %v974 = vld [vmem:[%s972 + $0x4] sm:$0xf]
  %v975 = vld [vmem:[%s972 + $0x8] sm:$0xf]
  %v976 = vld [vmem:[%s972 + $0xc] sm:$0xf]
  %v981 = vunpack.c.l.b16 %v973
  %v982 = vunpack.c.l.b16 %v974
  %v983 = vunpack.c.l.b16 %v975
  %v984 = vunpack.c.l.b16 %v976
  %v985 = vpack.c.b16 %v982, %v981
  %v986 = vpack.c.b16 %v984, %v983
  %v988 = vsel %vm175, %v985, 0
  %v991 = vsel %vm175, %v986, 0
  %993 = vmatprep.subr.bf16.mxu0 0
  %994 = vmatpush1.bf16.msra.mxu0 0
  %995 = vmatprep.subr.bf16.mxu0 0
  %996 = vmatpush1.bf16.msra.mxu0 0
  %997 = vmatprep.subr.bf16.mxu0 0
  %998 = vmatpush1.bf16.msra.mxu0 0
  %999 = vmatprep.subr.bf16.mxu0 0
  %1000 = vmatpush1.bf16.msra.mxu0 0
  %1001 = vmatprep.subr.bf16.mxu0 0
  %1002 = vmatpush1.bf16.msra.mxu0 0
  %1003 = vmatprep.subr.bf16.mxu0 0
  %1004 = vmatpush1.bf16.msra.mxu0 0
  %1005 = vmatprep.subr.bf16.mxu0 0
  %1006 = vmatpush1.bf16.msra.mxu0 %v68
  %1007 = vmatprep.subr.bf16.mxu0 0
  %1008 = vmatpush1.bf16.msra.mxu0 %v67
  %1009 = vmatprep.subr.bf16.mxu0 0
  %1010 = vmatpush2.bf16.msra.mxu0 0
  %1011 = vmatprep.subr.bf16.mxu0 0
  %1012 = vmatpush2.bf16.msra.mxu0 0
  %1013 = vmatprep.subr.bf16.mxu0 0
  %1014 = vmatpush2.bf16.msra.mxu0 0
  %1015 = vmatprep.subr.bf16.mxu0 0
  %1016 = vmatpush2.bf16.msra.mxu0 0
  %1017 = vmatprep.subr.bf16.mxu0 0
  %1018 = vmatpush2.bf16.msra.mxu0 0
  %1019 = vmatprep.subr.bf16.mxu0 0
  %1020 = vmatpush2.bf16.msra.mxu0 0
  %1021 = vmatprep.subr.bf16.mxu0 0
  %1022 = vmatpush2.bf16.msra.mxu0 0
  %1023 = vmatprep.subr.bf16.mxu0 0
  %1024 = vmatpush2.bf16.msra.mxu0 0
  %1025 = vmatprep.mubr.bf16.mxu0 0
  %1026 = vmatmul.mubr.bf16.gmra.mxu0 %v988
  %v1027 = vpop.f32.mrf.mxu0
  %v1028 = vadd.f32 0.0, %v1027
  %v1029 = vpop.f32.mrf.mxu0
  %v1030 = vpop.f32.mrf.mxu0
  %v1031 = vadd.f32 0.0, %v1030
  %v1032 = vpop.f32.mrf.mxu0
  %1033 = vmatprep.mubr.bf16.mxu0 0
  %1034 = vmatmul.mubr.bf16.gmra.mxu0 %v991
  %v1035 = vpop.f32.mrf.mxu0
  %v1036 = vadd.f32 0.0, %v1035
  %v1037 = vpop.f32.mrf.mxu0
  %v1038 = vpop.f32.mrf.mxu0
  %v1039 = vadd.f32 0.0, %v1038
  %v1040 = vpop.f32.mrf.mxu0
  %1041 = vdwg.mxu0
  %v1042 = vpack.c.bf16 %v1031, %v1028
  %v1043 = vpack.c.bf16 %v1039, %v1036
  %s1044 = scalar_lea.vmem %s3, 160
  %v1045 = vld [vmem:[%s1044] sm:$0xf]
  %v1046 = vld [vmem:[%s1044 + $0x4] sm:$0xf]
  %v1047 = vld [vmem:[%s1044 + $0x8] sm:$0xf]
  %v1048 = vld [vmem:[%s1044 + $0xc] sm:$0xf]
  %v1049 = vld [vmem:[%s1044 + $0x10] sm:$0xf]
  %v1050 = vld [vmem:[%s1044 + $0x14] sm:$0xf]
  %v1051 = vld [vmem:[%s1044 + $0x18] sm:$0xf]
  %v1052 = vld [vmem:[%s1044 + $0x1c] sm:$0xf]
  %v1061 = vunpack.c.l.b16 %v1045
  %v1062 = vunpack.c.l.b16 %v1046
  %v1063 = vunpack.c.l.b16 %v1047
  %v1064 = vunpack.c.l.b16 %v1048
  %v1065 = vunpack.c.l.b16 %v1049
  %v1066 = vunpack.c.l.b16 %v1050
  %v1067 = vunpack.c.l.b16 %v1051
  %v1068 = vunpack.c.l.b16 %v1052
  %v1069 = vpack.c.b16 %v1062, %v1061
  %v1070 = vpack.c.b16 %v1064, %v1063
  %v1071 = vpack.c.b16 %v1066, %v1065
  %v1072 = vpack.c.b16 %v1068, %v1067
  %v1078 = vsel %vm93, %v1042, 0
  %v1081 = vsel %vm93, %v1043, 0
  %1083 = vmatprep.subr.bf16.mxu0 0
  %1084 = vmatpush1.bf16.msra.mxu0 0
  %1085 = vmatprep.subr.bf16.mxu0 0
  %1086 = vmatpush1.bf16.msra.mxu0 0
  %1087 = vmatprep.subr.bf16.mxu0 0
  %1088 = vmatpush1.bf16.msra.mxu0 0
  %1089 = vmatprep.subr.bf16.mxu0 0
  %1090 = vmatpush1.bf16.msra.mxu0 0
  %1091 = vmatprep.subr.bf16.mxu0 0
  %1092 = vmatpush1.bf16.msra.mxu0 %v1072
  %1093 = vmatprep.subr.bf16.mxu0 0
  %1094 = vmatpush1.bf16.msra.mxu0 %v1071
  %1095 = vmatprep.subr.bf16.mxu0 0
  %1096 = vmatpush1.bf16.msra.mxu0 %v1070
  %1097 = vmatprep.subr.bf16.mxu0 0
  %1098 = vmatpush1.bf16.msra.mxu0 %v1069
  %1099 = vmatprep.subr.bf16.mxu0 0
  %1100 = vmatpush2.bf16.msra.mxu0 0
  %1101 = vmatprep.subr.bf16.mxu0 0
  %1102 = vmatpush2.bf16.msra.mxu0 0
  %1103 = vmatprep.subr.bf16.mxu0 0
  %1104 = vmatpush2.bf16.msra.mxu0 0
  %1105 = vmatprep.subr.bf16.mxu0 0
  %1106 = vmatpush2.bf16.msra.mxu0 0
  %1107 = vmatprep.subr.bf16.mxu0 0
  %1108 = vmatpush2.bf16.msra.mxu0 0
  %1109 = vmatprep.subr.bf16.mxu0 0
  %1110 = vmatpush2.bf16.msra.mxu0 0
  %1111 = vmatprep.subr.bf16.mxu0 0
  %1112 = vmatpush2.bf16.msra.mxu0 0
  %1113 = vmatprep.subr.bf16.mxu0 0
  %1114 = vmatpush2.bf16.msra.mxu0 0
  %1115 = vmatprep.mubr.bf16.mxu0 0
  %1116 = vmatmul.mubr.bf16.gmra.mxu0 %v1078
  %v1117 = vpop.f32.mrf.mxu0
  %v1118 = vadd.f32 0.0, %v1117
  %v1119 = vpop.f32.mrf.mxu0
  %v1120 = vpop.f32.mrf.mxu0
  %v1121 = vadd.f32 0.0, %v1120
  %v1122 = vpop.f32.mrf.mxu0
  %1123 = vmatprep.mubr.bf16.mxu0 0
  %1124 = vmatmul.mubr.bf16.gmra.mxu0 %v1081
  %v1125 = vpop.f32.mrf.mxu0
  %v1126 = vadd.f32 0.0, %v1125
  %v1127 = vpop.f32.mrf.mxu0
  %v1128 = vpop.f32.mrf.mxu0
  %v1129 = vadd.f32 0.0, %v1128
  %v1130 = vpop.f32.mrf.mxu0
  %1131 = vdwg.mxu0
  %v1132 = vadd.f32 %v968, %v1118
  %v1133 = vadd.f32 %v969, %v1121
  %v1134 = vadd.f32 %v970, %v1126
  %v1135 = vadd.f32 %v971, %v1129
  %s1136 = scalar_lea.vmem %s1, 96
  %v1137 = vld [vmem:[%s1136] sm:$0xf]
  %v1138 = vld [vmem:[%s1136 + $0x4] sm:$0xf]
  %v1139 = vld [vmem:[%s1136 + $0x8] sm:$0xf]
  %v1140 = vld [vmem:[%s1136 + $0xc] sm:$0xf]
  %v1145 = vunpack.c.l.b16 %v1137
  %v1146 = vunpack.c.l.b16 %v1138
  %v1147 = vunpack.c.l.b16 %v1139
  %v1148 = vunpack.c.l.b16 %v1140
  %v1149 = vpack.c.b16 %v1146, %v1145
  %v1150 = vpack.c.b16 %v1148, %v1147
  %v1152 = vsel %vm175, %v1149, 0
  %v1155 = vsel %vm175, %v1150, 0
  %1157 = vmatprep.subr.bf16.mxu0 0
  %1158 = vmatpush1.bf16.msra.mxu0 0
  %1159 = vmatprep.subr.bf16.mxu0 0
  %1160 = vmatpush1.bf16.msra.mxu0 0
  %1161 = vmatprep.subr.bf16.mxu0 0
  %1162 = vmatpush1.bf16.msra.mxu0 0
  %1163 = vmatprep.subr.bf16.mxu0 0
  %1164 = vmatpush1.bf16.msra.mxu0 0
  %1165 = vmatprep.subr.bf16.mxu0 0
  %1166 = vmatpush1.bf16.msra.mxu0 0
  %1167 = vmatprep.subr.bf16.mxu0 0
  %1168 = vmatpush1.bf16.msra.mxu0 0
  %1169 = vmatprep.subr.bf16.mxu0 0
  %1170 = vmatpush1.bf16.msra.mxu0 %v68
  %1171 = vmatprep.subr.bf16.mxu0 0
  %1172 = vmatpush1.bf16.msra.mxu0 %v67
  %1173 = vmatprep.subr.bf16.mxu0 0
  %1174 = vmatpush2.bf16.msra.mxu0 0
  %1175 = vmatprep.subr.bf16.mxu0 0
  %1176 = vmatpush2.bf16.msra.mxu0 0
  %1177 = vmatprep.subr.bf16.mxu0 0
  %1178 = vmatpush2.bf16.msra.mxu0 0
  %1179 = vmatprep.subr.bf16.mxu0 0
  %1180 = vmatpush2.bf16.msra.mxu0 0
  %1181 = vmatprep.subr.bf16.mxu0 0
  %1182 = vmatpush2.bf16.msra.mxu0 0
  %1183 = vmatprep.subr.bf16.mxu0 0
  %1184 = vmatpush2.bf16.msra.mxu0 0
  %1185 = vmatprep.subr.bf16.mxu0 0
  %1186 = vmatpush2.bf16.msra.mxu0 0
  %1187 = vmatprep.subr.bf16.mxu0 0
  %1188 = vmatpush2.bf16.msra.mxu0 0
  %1189 = vmatprep.mubr.bf16.mxu0 0
  %1190 = vmatmul.mubr.bf16.gmra.mxu0 %v1152
  %v1191 = vpop.f32.mrf.mxu0
  %v1192 = vadd.f32 0.0, %v1191
  %v1193 = vpop.f32.mrf.mxu0
  %v1194 = vpop.f32.mrf.mxu0
  %v1195 = vadd.f32 0.0, %v1194
  %v1196 = vpop.f32.mrf.mxu0
  %1197 = vmatprep.mubr.bf16.mxu0 0
  %1198 = vmatmul.mubr.bf16.gmra.mxu0 %v1155
  %v1199 = vpop.f32.mrf.mxu0
  %v1200 = vadd.f32 0.0, %v1199
  %v1201 = vpop.f32.mrf.mxu0
  %v1202 = vpop.f32.mrf.mxu0
  %v1203 = vadd.f32 0.0, %v1202
  %v1204 = vpop.f32.mrf.mxu0
  %1205 = vdwg.mxu0
  %v1206 = vpack.c.bf16 %v1195, %v1192
  %v1207 = vpack.c.bf16 %v1203, %v1200
  %s1208 = scalar_lea.vmem %s3, 192
  %v1209 = vld [vmem:[%s1208] sm:$0xf]
  %v1210 = vld [vmem:[%s1208 + $0x4] sm:$0xf]
  %v1211 = vld [vmem:[%s1208 + $0x8] sm:$0xf]
  %v1212 = vld [vmem:[%s1208 + $0xc] sm:$0xf]
  %v1213 = vld [vmem:[%s1208 + $0x10] sm:$0xf]
  %v1214 = vld [vmem:[%s1208 + $0x14] sm:$0xf]
  %v1215 = vld [vmem:[%s1208 + $0x18] sm:$0xf]
  %v1216 = vld [vmem:[%s1208 + $0x1c] sm:$0xf]
  %v1225 = vunpack.c.l.b16 %v1209
  %v1226 = vunpack.c.l.b16 %v1210
  %v1227 = vunpack.c.l.b16 %v1211
  %v1228 = vunpack.c.l.b16 %v1212
  %v1229 = vunpack.c.l.b16 %v1213
  %v1230 = vunpack.c.l.b16 %v1214
  %v1231 = vunpack.c.l.b16 %v1215
  %v1232 = vunpack.c.l.b16 %v1216
  %v1233 = vpack.c.b16 %v1226, %v1225
  %v1234 = vpack.c.b16 %v1228, %v1227
  %v1235 = vpack.c.b16 %v1230, %v1229
  %v1236 = vpack.c.b16 %v1232, %v1231
  %v1242 = vsel %vm93, %v1206, 0
  %v1245 = vsel %vm93, %v1207, 0
  %1247 = vmatprep.subr.bf16.mxu0 0
  %1248 = vmatpush1.bf16.msra.mxu0 0
  %1249 = vmatprep.subr.bf16.mxu0 0
  %1250 = vmatpush1.bf16.msra.mxu0 0
  %1251 = vmatprep.subr.bf16.mxu0 0
  %1252 = vmatpush1.bf16.msra.mxu0 0
  %1253 = vmatprep.subr.bf16.mxu0 0
  %1254 = vmatpush1.bf16.msra.mxu0 0
  %1255 = vmatprep.subr.bf16.mxu0 0
  %1256 = vmatpush1.bf16.msra.mxu0 %v1236
  %1257 = vmatprep.subr.bf16.mxu0 0
  %1258 = vmatpush1.bf16.msra.mxu0 %v1235
  %1259 = vmatprep.subr.bf16.mxu0 0
  %1260 = vmatpush1.bf16.msra.mxu0 %v1234
  %1261 = vmatprep.subr.bf16.mxu0 0
  %1262 = vmatpush1.bf16.msra.mxu0 %v1233
  %1263 = vmatprep.subr.bf16.mxu0 0
  %1264 = vmatpush2.bf16.msra.mxu0 0
  %1265 = vmatprep.subr.bf16.mxu0 0
  %1266 = vmatpush2.bf16.msra.mxu0 0
  %1267 = vmatprep.subr.bf16.mxu0 0
  %1268 = vmatpush2.bf16.msra.mxu0 0
  %1269 = vmatprep.subr.bf16.mxu0 0
  %1270 = vmatpush2.bf16.msra.mxu0 0
  %1271 = vmatprep.subr.bf16.mxu0 0
  %1272 = vmatpush2.bf16.msra.mxu0 0
  %1273 = vmatprep.subr.bf16.mxu0 0
  %1274 = vmatpush2.bf16.msra.mxu0 0
  %1275 = vmatprep.subr.bf16.mxu0 0
  %1276 = vmatpush2.bf16.msra.mxu0 0
  %1277 = vmatprep.subr.bf16.mxu0 0
  %1278 = vmatpush2.bf16.msra.mxu0 0
  %1279 = vmatprep.mubr.bf16.mxu0 0
  %1280 = vmatmul.mubr.bf16.gmra.mxu0 %v1242
  %v1281 = vpop.f32.mrf.mxu0
  %v1282 = vadd.f32 0.0, %v1281
  %v1283 = vpop.f32.mrf.mxu0
  %v1284 = vpop.f32.mrf.mxu0
  %v1285 = vadd.f32 0.0, %v1284
  %v1286 = vpop.f32.mrf.mxu0
  %1287 = vmatprep.mubr.bf16.mxu0 0
  %1288 = vmatmul.mubr.bf16.gmra.mxu0 %v1245
  %v1289 = vpop.f32.mrf.mxu0
  %v1290 = vadd.f32 0.0, %v1289
  %v1291 = vpop.f32.mrf.mxu0
  %v1292 = vpop.f32.mrf.mxu0
  %v1293 = vadd.f32 0.0, %v1292
  %v1294 = vpop.f32.mrf.mxu0
  %1295 = vdwg.mxu0
  %v1296 = vadd.f32 %v1132, %v1282
  %v1297 = vadd.f32 %v1133, %v1285
  %v1298 = vadd.f32 %v1134, %v1290
  %v1299 = vadd.f32 %v1135, %v1293
  %s1300 = scalar_lea.vmem %s1, 112
  %v1301 = vld [vmem:[%s1300] sm:$0xf]
  %v1302 = vld [vmem:[%s1300 + $0x4] sm:$0xf]
  %v1303 = vld [vmem:[%s1300 + $0x8] sm:$0xf]
  %v1304 = vld [vmem:[%s1300 + $0xc] sm:$0xf]
  %v1309 = vunpack.c.l.b16 %v1301
  %v1310 = vunpack.c.l.b16 %v1302
  %v1311 = vunpack.c.l.b16 %v1303
  %v1312 = vunpack.c.l.b16 %v1304
  %v1313 = vpack.c.b16 %v1310, %v1309
  %v1314 = vpack.c.b16 %v1312, %v1311
  %v1316 = vsel %vm175, %v1313, 0
  %v1319 = vsel %vm175, %v1314, 0
  %1321 = vmatprep.subr.bf16.mxu0 0
  %1322 = vmatpush1.bf16.msra.mxu0 0
  %1323 = vmatprep.subr.bf16.mxu0 0
  %1324 = vmatpush1.bf16.msra.mxu0 0
  %1325 = vmatprep.subr.bf16.mxu0 0
  %1326 = vmatpush1.bf16.msra.mxu0 0
  %1327 = vmatprep.subr.bf16.mxu0 0
  %1328 = vmatpush1.bf16.msra.mxu0 0
  %1329 = vmatprep.subr.bf16.mxu0 0
  %1330 = vmatpush1.bf16.msra.mxu0 0
  %1331 = vmatprep.subr.bf16.mxu0 0
  %1332 = vmatpush1.bf16.msra.mxu0 0
  %1333 = vmatprep.subr.bf16.mxu0 0
  %1334 = vmatpush1.bf16.msra.mxu0 %v68
  %1335 = vmatprep.subr.bf16.mxu0 0
  %1336 = vmatpush1.bf16.msra.mxu0 %v67
  %1337 = vmatprep.subr.bf16.mxu0 0
  %1338 = vmatpush2.bf16.msra.mxu0 0
  %1339 = vmatprep.subr.bf16.mxu0 0
  %1340 = vmatpush2.bf16.msra.mxu0 0
  %1341 = vmatprep.subr.bf16.mxu0 0
  %1342 = vmatpush2.bf16.msra.mxu0 0
  %1343 = vmatprep.subr.bf16.mxu0 0
  %1344 = vmatpush2.bf16.msra.mxu0 0
  %1345 = vmatprep.subr.bf16.mxu0 0
  %1346 = vmatpush2.bf16.msra.mxu0 0
  %1347 = vmatprep.subr.bf16.mxu0 0
  %1348 = vmatpush2.bf16.msra.mxu0 0
  %1349 = vmatprep.subr.bf16.mxu0 0
  %1350 = vmatpush2.bf16.msra.mxu0 0
  %1351 = vmatprep.subr.bf16.mxu0 0
  %1352 = vmatpush2.bf16.msra.mxu0 0
  %1353 = vmatprep.mubr.bf16.mxu0 0
  %1354 = vmatmul.mubr.bf16.gmra.mxu0 %v1316
  %v1355 = vpop.f32.mrf.mxu0
  %v1356 = vadd.f32 0.0, %v1355
  %v1357 = vpop.f32.mrf.mxu0
  %v1358 = vpop.f32.mrf.mxu0
  %v1359 = vadd.f32 0.0, %v1358
  %v1360 = vpop.f32.mrf.mxu0
  %1361 = vmatprep.mubr.bf16.mxu0 0
  %1362 = vmatmul.mubr.bf16.gmra.mxu0 %v1319
  %v1363 = vpop.f32.mrf.mxu0
  %v1364 = vadd.f32 0.0, %v1363
  %v1365 = vpop.f32.mrf.mxu0
  %v1366 = vpop.f32.mrf.mxu0
  %v1367 = vadd.f32 0.0, %v1366
  %v1368 = vpop.f32.mrf.mxu0
  %1369 = vdwg.mxu0
  %v1370 = vpack.c.bf16 %v1359, %v1356
  %v1371 = vpack.c.bf16 %v1367, %v1364
  %s1372 = scalar_lea.vmem %s3, 224
  %v1373 = vld [vmem:[%s1372] sm:$0xf]
  %v1374 = vld [vmem:[%s1372 + $0x4] sm:$0xf]
  %v1375 = vld [vmem:[%s1372 + $0x8] sm:$0xf]
  %v1376 = vld [vmem:[%s1372 + $0xc] sm:$0xf]
  %v1377 = vld [vmem:[%s1372 + $0x10] sm:$0xf]
  %v1378 = vld [vmem:[%s1372 + $0x14] sm:$0xf]
  %v1379 = vld [vmem:[%s1372 + $0x18] sm:$0xf]
  %v1380 = vld [vmem:[%s1372 + $0x1c] sm:$0xf]
  %v1389 = vunpack.c.l.b16 %v1373
  %v1390 = vunpack.c.l.b16 %v1374
  %v1391 = vunpack.c.l.b16 %v1375
  %v1392 = vunpack.c.l.b16 %v1376
  %v1393 = vunpack.c.l.b16 %v1377
  %v1394 = vunpack.c.l.b16 %v1378
  %v1395 = vunpack.c.l.b16 %v1379
  %v1396 = vunpack.c.l.b16 %v1380
  %v1397 = vpack.c.b16 %v1390, %v1389
  %v1398 = vpack.c.b16 %v1392, %v1391
  %v1399 = vpack.c.b16 %v1394, %v1393
  %v1400 = vpack.c.b16 %v1396, %v1395
  %v1406 = vsel %vm93, %v1370, 0
  %v1409 = vsel %vm93, %v1371, 0
  %1411 = vmatprep.subr.bf16.mxu0 0
  %1412 = vmatpush1.bf16.msra.mxu0 0
  %1413 = vmatprep.subr.bf16.mxu0 0
  %1414 = vmatpush1.bf16.msra.mxu0 0
  %1415 = vmatprep.subr.bf16.mxu0 0
  %1416 = vmatpush1.bf16.msra.mxu0 0
  %1417 = vmatprep.subr.bf16.mxu0 0
  %1418 = vmatpush1.bf16.msra.mxu0 0
  %1419 = vmatprep.subr.bf16.mxu0 0
  %1420 = vmatpush1.bf16.msra.mxu0 %v1400
  %1421 = vmatprep.subr.bf16.mxu0 0
  %1422 = vmatpush1.bf16.msra.mxu0 %v1399
  %1423 = vmatprep.subr.bf16.mxu0 0
  %1424 = vmatpush1.bf16.msra.mxu0 %v1398
  %1425 = vmatprep.subr.bf16.mxu0 0
  %1426 = vmatpush1.bf16.msra.mxu0 %v1397
  %1427 = vmatprep.subr.bf16.mxu0 0
  %1428 = vmatpush2.bf16.msra.mxu0 0
  %1429 = vmatprep.subr.bf16.mxu0 0
  %1430 = vmatpush2.bf16.msra.mxu0 0
  %1431 = vmatprep.subr.bf16.mxu0 0
  %1432 = vmatpush2.bf16.msra.mxu0 0
  %1433 = vmatprep.subr.bf16.mxu0 0
  %1434 = vmatpush2.bf16.msra.mxu0 0
  %1435 = vmatprep.subr.bf16.mxu0 0
  %1436 = vmatpush2.bf16.msra.mxu0 0
  %1437 = vmatprep.subr.bf16.mxu0 0
  %1438 = vmatpush2.bf16.msra.mxu0 0
  %1439 = vmatprep.subr.bf16.mxu0 0
  %1440 = vmatpush2.bf16.msra.mxu0 0
  %1441 = vmatprep.subr.bf16.mxu0 0
  %1442 = vmatpush2.bf16.msra.mxu0 0
  %1443 = vmatprep.mubr.bf16.mxu0 0
  %1444 = vmatmul.mubr.bf16.gmra.mxu0 %v1406
  %v1445 = vpop.f32.mrf.mxu0
  %v1446 = vadd.f32 0.0, %v1445
  %v1447 = vpop.f32.mrf.mxu0
  %v1448 = vpop.f32.mrf.mxu0
  %v1449 = vadd.f32 0.0, %v1448
  %v1450 = vpop.f32.mrf.mxu0
  %1451 = vmatprep.mubr.bf16.mxu0 0
  %1452 = vmatmul.mubr.bf16.gmra.mxu0 %v1409
  %v1453 = vpop.f32.mrf.mxu0
  %v1454 = vadd.f32 0.0, %v1453
  %v1455 = vpop.f32.mrf.mxu0
  %v1456 = vpop.f32.mrf.mxu0
  %v1457 = vadd.f32 0.0, %v1456
  %v1458 = vpop.f32.mrf.mxu0
  %1459 = vdwg.mxu0
  %v1460 = vadd.f32 %v1296, %v1446
  %v1461 = vadd.f32 %v1297, %v1449
  %v1462 = vadd.f32 %v1298, %v1454
  %v1463 = vadd.f32 %v1299, %v1457
  %s1464 = scalar_lea.vmem %s1, 128
  %v1465 = vld [vmem:[%s1464] sm:$0xf]
  %v1466 = vld [vmem:[%s1464 + $0x4] sm:$0xf]
  %v1467 = vld [vmem:[%s1464 + $0x8] sm:$0xf]
  %v1468 = vld [vmem:[%s1464 + $0xc] sm:$0xf]
  %v1473 = vunpack.c.l.b16 %v1465
  %v1474 = vunpack.c.l.b16 %v1466
  %v1475 = vunpack.c.l.b16 %v1467
  %v1476 = vunpack.c.l.b16 %v1468
  %v1477 = vpack.c.b16 %v1474, %v1473
  %v1478 = vpack.c.b16 %v1476, %v1475
  %v1480 = vsel %vm175, %v1477, 0
  %v1483 = vsel %vm175, %v1478, 0
  %1485 = vmatprep.subr.bf16.mxu0 0
  %1486 = vmatpush1.bf16.msra.mxu0 0
  %1487 = vmatprep.subr.bf16.mxu0 0
  %1488 = vmatpush1.bf16.msra.mxu0 0
  %1489 = vmatprep.subr.bf16.mxu0 0
  %1490 = vmatpush1.bf16.msra.mxu0 0
  %1491 = vmatprep.subr.bf16.mxu0 0
  %1492 = vmatpush1.bf16.msra.mxu0 0
  %1493 = vmatprep.subr.bf16.mxu0 0
  %1494 = vmatpush1.bf16.msra.mxu0 0
  %1495 = vmatprep.subr.bf16.mxu0 0
  %1496 = vmatpush1.bf16.msra.mxu0 0
  %1497 = vmatprep.subr.bf16.mxu0 0
  %1498 = vmatpush1.bf16.msra.mxu0 %v68
  %1499 = vmatprep.subr.bf16.mxu0 0
  %1500 = vmatpush1.bf16.msra.mxu0 %v67
  %1501 = vmatprep.subr.bf16.mxu0 0
  %1502 = vmatpush2.bf16.msra.mxu0 0
  %1503 = vmatprep.subr.bf16.mxu0 0
  %1504 = vmatpush2.bf16.msra.mxu0 0
  %1505 = vmatprep.subr.bf16.mxu0 0
  %1506 = vmatpush2.bf16.msra.mxu0 0
  %1507 = vmatprep.subr.bf16.mxu0 0
  %1508 = vmatpush2.bf16.msra.mxu0 0
  %1509 = vmatprep.subr.bf16.mxu0 0
  %1510 = vmatpush2.bf16.msra.mxu0 0
  %1511 = vmatprep.subr.bf16.mxu0 0
  %1512 = vmatpush2.bf16.msra.mxu0 0
  %1513 = vmatprep.subr.bf16.mxu0 0
  %1514 = vmatpush2.bf16.msra.mxu0 0
  %1515 = vmatprep.subr.bf16.mxu0 0
  %1516 = vmatpush2.bf16.msra.mxu0 0
  %1517 = vmatprep.mubr.bf16.mxu0 0
  %1518 = vmatmul.mubr.bf16.gmra.mxu0 %v1480
  %v1519 = vpop.f32.mrf.mxu0
  %v1520 = vadd.f32 0.0, %v1519
  %v1521 = vpop.f32.mrf.mxu0
  %v1522 = vpop.f32.mrf.mxu0
  %v1523 = vadd.f32 0.0, %v1522
  %v1524 = vpop.f32.mrf.mxu0
  %1525 = vmatprep.mubr.bf16.mxu0 0
  %1526 = vmatmul.mubr.bf16.gmra.mxu0 %v1483
  %v1527 = vpop.f32.mrf.mxu0
  %v1528 = vadd.f32 0.0, %v1527
  %v1529 = vpop.f32.mrf.mxu0
  %v1530 = vpop.f32.mrf.mxu0
  %v1531 = vadd.f32 0.0, %v1530
  %v1532 = vpop.f32.mrf.mxu0
  %1533 = vdwg.mxu0
  %v1534 = vpack.c.bf16 %v1523, %v1520
  %v1535 = vpack.c.bf16 %v1531, %v1528
  %s1536 = scalar_lea.vmem %s3, 256
  %v1537 = vld [vmem:[%s1536] sm:$0xf]
  %v1538 = vld [vmem:[%s1536 + $0x4] sm:$0xf]
  %v1539 = vld [vmem:[%s1536 + $0x8] sm:$0xf]
  %v1540 = vld [vmem:[%s1536 + $0xc] sm:$0xf]
  %v1541 = vld [vmem:[%s1536 + $0x10] sm:$0xf]
  %v1542 = vld [vmem:[%s1536 + $0x14] sm:$0xf]
  %v1543 = vld [vmem:[%s1536 + $0x18] sm:$0xf]
  %v1544 = vld [vmem:[%s1536 + $0x1c] sm:$0xf]
  %v1553 = vunpack.c.l.b16 %v1537
  %v1554 = vunpack.c.l.b16 %v1538
  %v1555 = vunpack.c.l.b16 %v1539
  %v1556 = vunpack.c.l.b16 %v1540
  %v1557 = vunpack.c.l.b16 %v1541
  %v1558 = vunpack.c.l.b16 %v1542
  %v1559 = vunpack.c.l.b16 %v1543
  %v1560 = vunpack.c.l.b16 %v1544
  %v1561 = vpack.c.b16 %v1554, %v1553
  %v1562 = vpack.c.b16 %v1556, %v1555
  %v1563 = vpack.c.b16 %v1558, %v1557
  %v1564 = vpack.c.b16 %v1560, %v1559
  %v1570 = vsel %vm93, %v1534, 0
  %v1573 = vsel %vm93, %v1535, 0
  %1575 = vmatprep.subr.bf16.mxu0 0
  %1576 = vmatpush1.bf16.msra.mxu0 0
  %1577 = vmatprep.subr.bf16.mxu0 0
  %1578 = vmatpush1.bf16.msra.mxu0 0
  %1579 = vmatprep.subr.bf16.mxu0 0
  %1580 = vmatpush1.bf16.msra.mxu0 0
  %1581 = vmatprep.subr.bf16.mxu0 0
  %1582 = vmatpush1.bf16.msra.mxu0 0
  %1583 = vmatprep.subr.bf16.mxu0 0
  %1584 = vmatpush1.bf16.msra.mxu0 %v1564
  %1585 = vmatprep.subr.bf16.mxu0 0
  %1586 = vmatpush1.bf16.msra.mxu0 %v1563
  %1587 = vmatprep.subr.bf16.mxu0 0
  %1588 = vmatpush1.bf16.msra.mxu0 %v1562
  %1589 = vmatprep.subr.bf16.mxu0 0
  %1590 = vmatpush1.bf16.msra.mxu0 %v1561
  %1591 = vmatprep.subr.bf16.mxu0 0
  %1592 = vmatpush2.bf16.msra.mxu0 0
  %1593 = vmatprep.subr.bf16.mxu0 0
  %1594 = vmatpush2.bf16.msra.mxu0 0
  %1595 = vmatprep.subr.bf16.mxu0 0
  %1596 = vmatpush2.bf16.msra.mxu0 0
  %1597 = vmatprep.subr.bf16.mxu0 0
  %1598 = vmatpush2.bf16.msra.mxu0 0
  %1599 = vmatprep.subr.bf16.mxu0 0
  %1600 = vmatpush2.bf16.msra.mxu0 0
  %1601 = vmatprep.subr.bf16.mxu0 0
  %1602 = vmatpush2.bf16.msra.mxu0 0
  %1603 = vmatprep.subr.bf16.mxu0 0
  %1604 = vmatpush2.bf16.msra.mxu0 0
  %1605 = vmatprep.subr.bf16.mxu0 0
  %1606 = vmatpush2.bf16.msra.mxu0 0
  %1607 = vmatprep.mubr.bf16.mxu0 0
  %1608 = vmatmul.mubr.bf16.gmra.mxu0 %v1570
  %v1609 = vpop.f32.mrf.mxu0
  %v1610 = vadd.f32 0.0, %v1609
  %v1611 = vpop.f32.mrf.mxu0
  %v1612 = vpop.f32.mrf.mxu0
  %v1613 = vadd.f32 0.0, %v1612
  %v1614 = vpop.f32.mrf.mxu0
  %1615 = vmatprep.mubr.bf16.mxu0 0
  %1616 = vmatmul.mubr.bf16.gmra.mxu0 %v1573
  %v1617 = vpop.f32.mrf.mxu0
  %v1618 = vadd.f32 0.0, %v1617
  %v1619 = vpop.f32.mrf.mxu0
  %v1620 = vpop.f32.mrf.mxu0
  %v1621 = vadd.f32 0.0, %v1620
  %v1622 = vpop.f32.mrf.mxu0
  %1623 = vdwg.mxu0
  %v1624 = vadd.f32 %v1460, %v1610
  %v1625 = vadd.f32 %v1461, %v1613
  %v1626 = vadd.f32 %v1462, %v1618
  %v1627 = vadd.f32 %v1463, %v1621
  %v1628 = vld [vmem:[%s8 + $0x1] sm:$0x1]
  %v1629 = vlaneseq
  %v1630 = vshrl.u32 %v1629, 7
  %v1631 = vsub.s32 0, %v1630
  %v1632 = vrot.slane %v1628, %v1631
  %v1633 = vadd.f32 %v1624, %v1632
  %v1634 = vadd.f32 %v1625, %v1632
  %v1635 = vadd.f32 %v1626, %v1632
  %v1636 = vadd.f32 %v1627, %v1632
  %v1637 = vmax.f32 %v1633, 0.0
  %v1638 = vmax.f32 %v1634, 0.0
  %v1639 = vmax.f32 %v1635, 0.0
  %v1640 = vmax.f32 %v1636, 0.0
  %v1641 = vpack.c.bf16 %v1638, %v1637
  %v1642 = vpack.c.bf16 %v1640, %v1639
  %v1643 = vld [vmem:[%s5 + $0x10] sm:$0xf]
  %v1644 = vld [vmem:[%s5 + $0x14] sm:$0xf]
  %v1645 = vld [vmem:[%s5 + $0x18] sm:$0xf]
  %v1646 = vld [vmem:[%s5 + $0x1c] sm:$0xf]
  %v1651 = vunpack.c.l.b16 %v1643
  %v1652 = vunpack.c.l.b16 %v1644
  %v1653 = vunpack.c.l.b16 %v1645
  %v1654 = vunpack.c.l.b16 %v1646
  %v1655 = vpack.c.b16 %v1652, %v1651
  %v1656 = vpack.c.b16 %v1654, %v1653
  %v1660 = vsel %vm175, %v1641, 0
  %v1663 = vsel %vm175, %v1642, 0
  %1665 = vmatprep.subr.bf16.mxu0 0
  %1666 = vmatpush1.bf16.msra.mxu0 0
  %1667 = vmatprep.subr.bf16.mxu0 0
  %1668 = vmatpush1.bf16.msra.mxu0 0
  %1669 = vmatprep.subr.bf16.mxu0 0
  %1670 = vmatpush1.bf16.msra.mxu0 0
  %1671 = vmatprep.subr.bf16.mxu0 0
  %1672 = vmatpush1.bf16.msra.mxu0 0
  %1673 = vmatprep.subr.bf16.mxu0 0
  %1674 = vmatpush1.bf16.msra.mxu0 0
  %1675 = vmatprep.subr.bf16.mxu0 0
  %1676 = vmatpush1.bf16.msra.mxu0 0
  %1677 = vmatprep.subr.bf16.mxu0 0
  %1678 = vmatpush1.bf16.msra.mxu0 %v1656
  %1679 = vmatprep.subr.bf16.mxu0 0
  %1680 = vmatpush1.bf16.msra.mxu0 %v1655
  %1681 = vmatprep.subr.bf16.mxu0 0
  %1682 = vmatpush2.bf16.msra.mxu0 0
  %1683 = vmatprep.subr.bf16.mxu0 0
  %1684 = vmatpush2.bf16.msra.mxu0 0
  %1685 = vmatprep.subr.bf16.mxu0 0
  %1686 = vmatpush2.bf16.msra.mxu0 0
  %1687 = vmatprep.subr.bf16.mxu0 0
  %1688 = vmatpush2.bf16.msra.mxu0 0
  %1689 = vmatprep.subr.bf16.mxu0 0
  %1690 = vmatpush2.bf16.msra.mxu0 0
  %1691 = vmatprep.subr.bf16.mxu0 0
  %1692 = vmatpush2.bf16.msra.mxu0 0
  %1693 = vmatprep.subr.bf16.mxu0 0
  %1694 = vmatpush2.bf16.msra.mxu0 0
  %1695 = vmatprep.subr.bf16.mxu0 0
  %1696 = vmatpush2.bf16.msra.mxu0 0
  %1697 = vmatprep.mubr.bf16.mxu0 0
  %1698 = vmatmul.mubr.bf16.gmra.mxu0 %v1660
  %v1699 = vpop.f32.mrf.mxu0
  %v1700 = vadd.f32 0.0, %v1699
  %v1701 = vpop.f32.mrf.mxu0
  %v1702 = vpop.f32.mrf.mxu0
  %v1703 = vadd.f32 0.0, %v1702
  %v1704 = vpop.f32.mrf.mxu0
  %1705 = vmatprep.mubr.bf16.mxu0 0
  %1706 = vmatmul.mubr.bf16.gmra.mxu0 %v1663
  %v1707 = vpop.f32.mrf.mxu0
  %v1708 = vadd.f32 0.0, %v1707
  %v1709 = vpop.f32.mrf.mxu0
  %v1710 = vpop.f32.mrf.mxu0
  %v1711 = vadd.f32 0.0, %v1710
  %v1712 = vpop.f32.mrf.mxu0
  %1713 = vdwg.mxu0
  %v1718 = vunpack.c.l.b16 %v155
  %v1719 = vunpack.c.l.b16 %v156
  %v1720 = vunpack.c.l.b16 %v157
  %v1721 = vunpack.c.l.b16 %v158
  %v1722 = vpack.c.b16 %v1719, %v1718
  %v1723 = vpack.c.b16 %v1721, %v1720
  %v1727 = vsel %vm175, %v153, 0
  %v1730 = vsel %vm175, %v154, 0
  %1732 = vmatprep.subr.bf16.mxu0 0
  %1733 = vmatpush1.bf16.msra.mxu0 0
  %1734 = vmatprep.subr.bf16.mxu0 0
  %1735 = vmatpush1.bf16.msra.mxu0 0
  %1736 = vmatprep.subr.bf16.mxu0 0
  %1737 = vmatpush1.bf16.msra.mxu0 0
  %1738 = vmatprep.subr.bf16.mxu0 0
  %1739 = vmatpush1.bf16.msra.mxu0 0
  %1740 = vmatprep.subr.bf16.mxu0 0
  %1741 = vmatpush1.bf16.msra.mxu0 0
  %1742 = vmatprep.subr.bf16.mxu0 0
  %1743 = vmatpush1.bf16.msra.mxu0 0
  %1744 = vmatprep.subr.bf16.mxu0 0
  %1745 = vmatpush1.bf16.msra.mxu0 %v1723
  %1746 = vmatprep.subr.bf16.mxu0 0
  %1747 = vmatpush1.bf16.msra.mxu0 %v1722
  %1748 = vmatprep.subr.bf16.mxu0 0
  %1749 = vmatpush2.bf16.msra.mxu0 0
  %1750 = vmatprep.subr.bf16.mxu0 0
  %1751 = vmatpush2.bf16.msra.mxu0 0
  %1752 = vmatprep.subr.bf16.mxu0 0
  %1753 = vmatpush2.bf16.msra.mxu0 0
  %1754 = vmatprep.subr.bf16.mxu0 0
  %1755 = vmatpush2.bf16.msra.mxu0 0
  %1756 = vmatprep.subr.bf16.mxu0 0
  %1757 = vmatpush2.bf16.msra.mxu0 0
  %1758 = vmatprep.subr.bf16.mxu0 0
  %1759 = vmatpush2.bf16.msra.mxu0 0
  %1760 = vmatprep.subr.bf16.mxu0 0
  %1761 = vmatpush2.bf16.msra.mxu0 0
  %1762 = vmatprep.subr.bf16.mxu0 0
  %1763 = vmatpush2.bf16.msra.mxu0 0
  %1764 = vmatprep.mubr.bf16.mxu0 0
  %1765 = vmatmul.mubr.bf16.gmra.mxu0 %v1727
  %v1766 = vpop.f32.mrf.mxu0
  %v1767 = vadd.f32 %v1700, %v1766
  %v1768 = vpop.f32.mrf.mxu0
  %v1769 = vpop.f32.mrf.mxu0
  %v1770 = vadd.f32 %v1703, %v1769
  %v1771 = vpop.f32.mrf.mxu0
  %1772 = vmatprep.mubr.bf16.mxu0 0
  %1773 = vmatmul.mubr.bf16.gmra.mxu0 %v1730
  %v1774 = vpop.f32.mrf.mxu0
  %v1775 = vadd.f32 %v1708, %v1774
  %v1776 = vpop.f32.mrf.mxu0
  %v1777 = vpop.f32.mrf.mxu0
  %v1778 = vadd.f32 %v1711, %v1777
  %v1779 = vpop.f32.mrf.mxu0
  %1780 = vdwg.mxu0
  %s1781 = scalar_lea.vmem %s1, 144
  %v1782 = vld [vmem:[%s1781] sm:$0xf]
  %v1783 = vld [vmem:[%s1781 + $0x4] sm:$0xf]
  %v1784 = vld [vmem:[%s1781 + $0x8] sm:$0xf]
  %v1785 = vld [vmem:[%s1781 + $0xc] sm:$0xf]
  %v1790 = vunpack.c.l.b16 %v1782
  %v1791 = vunpack.c.l.b16 %v1783
  %v1792 = vunpack.c.l.b16 %v1784
  %v1793 = vunpack.c.l.b16 %v1785
  %v1794 = vpack.c.b16 %v1791, %v1790
  %v1795 = vpack.c.b16 %v1793, %v1792
  %v1797 = vsel %vm175, %v1794, 0
  %v1800 = vsel %vm175, %v1795, 0
  %1802 = vmatprep.subr.bf16.mxu0 0
  %1803 = vmatpush1.bf16.msra.mxu0 0
  %1804 = vmatprep.subr.bf16.mxu0 0
  %1805 = vmatpush1.bf16.msra.mxu0 0
  %1806 = vmatprep.subr.bf16.mxu0 0
  %1807 = vmatpush1.bf16.msra.mxu0 0
  %1808 = vmatprep.subr.bf16.mxu0 0
  %1809 = vmatpush1.bf16.msra.mxu0 0
  %1810 = vmatprep.subr.bf16.mxu0 0
  %1811 = vmatpush1.bf16.msra.mxu0 0
  %1812 = vmatprep.subr.bf16.mxu0 0
  %1813 = vmatpush1.bf16.msra.mxu0 0
  %1814 = vmatprep.subr.bf16.mxu0 0
  %1815 = vmatpush1.bf16.msra.mxu0 %v68
  %1816 = vmatprep.subr.bf16.mxu0 0
  %1817 = vmatpush1.bf16.msra.mxu0 %v67
  %1818 = vmatprep.subr.bf16.mxu0 0
  %1819 = vmatpush2.bf16.msra.mxu0 0
  %1820 = vmatprep.subr.bf16.mxu0 0
  %1821 = vmatpush2.bf16.msra.mxu0 0
  %1822 = vmatprep.subr.bf16.mxu0 0
  %1823 = vmatpush2.bf16.msra.mxu0 0
  %1824 = vmatprep.subr.bf16.mxu0 0
  %1825 = vmatpush2.bf16.msra.mxu0 0
  %1826 = vmatprep.subr.bf16.mxu0 0
  %1827 = vmatpush2.bf16.msra.mxu0 0
  %1828 = vmatprep.subr.bf16.mxu0 0
  %1829 = vmatpush2.bf16.msra.mxu0 0
  %1830 = vmatprep.subr.bf16.mxu0 0
  %1831 = vmatpush2.bf16.msra.mxu0 0
  %1832 = vmatprep.subr.bf16.mxu0 0
  %1833 = vmatpush2.bf16.msra.mxu0 0
  %1834 = vmatprep.mubr.bf16.mxu0 0
  %1835 = vmatmul.mubr.bf16.gmra.mxu0 %v1797
  %v1836 = vpop.f32.mrf.mxu0
  %v1837 = vadd.f32 0.0, %v1836
  %v1838 = vpop.f32.mrf.mxu0
  %v1839 = vpop.f32.mrf.mxu0
  %v1840 = vadd.f32 0.0, %v1839
  %v1841 = vpop.f32.mrf.mxu0
  %1842 = vmatprep.mubr.bf16.mxu0 0
  %1843 = vmatmul.mubr.bf16.gmra.mxu0 %v1800
  %v1844 = vpop.f32.mrf.mxu0
  %v1845 = vadd.f32 0.0, %v1844
  %v1846 = vpop.f32.mrf.mxu0
  %v1847 = vpop.f32.mrf.mxu0
  %v1848 = vadd.f32 0.0, %v1847
  %v1849 = vpop.f32.mrf.mxu0
  %1850 = vdwg.mxu0
  %v1851 = vpack.c.bf16 %v1840, %v1837
  %v1852 = vpack.c.bf16 %v1848, %v1845
  %s1853 = scalar_lea.vmem %s3, 288
  %v1854 = vld [vmem:[%s1853] sm:$0xf]
  %v1855 = vld [vmem:[%s1853 + $0x4] sm:$0xf]
  %v1856 = vld [vmem:[%s1853 + $0x8] sm:$0xf]
  %v1857 = vld [vmem:[%s1853 + $0xc] sm:$0xf]
  %v1858 = vld [vmem:[%s1853 + $0x10] sm:$0xf]
  %v1859 = vld [vmem:[%s1853 + $0x14] sm:$0xf]
  %v1860 = vld [vmem:[%s1853 + $0x18] sm:$0xf]
  %v1861 = vld [vmem:[%s1853 + $0x1c] sm:$0xf]
  %s1862 = scalar_lea.vmem %s1, 160
  %v1863 = vld [vmem:[%s1862] sm:$0xf]
  %v1864 = vld [vmem:[%s1862 + $0x4] sm:$0xf]
  %v1865 = vld [vmem:[%s1862 + $0x8] sm:$0xf]
  %v1866 = vld [vmem:[%s1862 + $0xc] sm:$0xf]
  %v1871 = vunpack.c.l.b16 %v1863
  %v1872 = vunpack.c.l.b16 %v1864
  %v1873 = vunpack.c.l.b16 %v1865
  %v1874 = vunpack.c.l.b16 %v1866
  %v1875 = vpack.c.b16 %v1872, %v1871
  %v1876 = vpack.c.b16 %v1874, %v1873
  %v1878 = vsel %vm175, %v1875, 0
  %v1881 = vsel %vm175, %v1876, 0
  %1883 = vmatprep.subr.bf16.mxu0 0
  %1884 = vmatpush1.bf16.msra.mxu0 0
  %1885 = vmatprep.subr.bf16.mxu0 0
  %1886 = vmatpush1.bf16.msra.mxu0 0
  %1887 = vmatprep.subr.bf16.mxu0 0
  %1888 = vmatpush1.bf16.msra.mxu0 0
  %1889 = vmatprep.subr.bf16.mxu0 0
  %1890 = vmatpush1.bf16.msra.mxu0 0
  %1891 = vmatprep.subr.bf16.mxu0 0
  %1892 = vmatpush1.bf16.msra.mxu0 0
  %1893 = vmatprep.subr.bf16.mxu0 0
  %1894 = vmatpush1.bf16.msra.mxu0 0
  %1895 = vmatprep.subr.bf16.mxu0 0
  %1896 = vmatpush1.bf16.msra.mxu0 %v68
  %1897 = vmatprep.subr.bf16.mxu0 0
  %1898 = vmatpush1.bf16.msra.mxu0 %v67
  %1899 = vmatprep.subr.bf16.mxu0 0
  %1900 = vmatpush2.bf16.msra.mxu0 0
  %1901 = vmatprep.subr.bf16.mxu0 0
  %1902 = vmatpush2.bf16.msra.mxu0 0
  %1903 = vmatprep.subr.bf16.mxu0 0
  %1904 = vmatpush2.bf16.msra.mxu0 0
  %1905 = vmatprep.subr.bf16.mxu0 0
  %1906 = vmatpush2.bf16.msra.mxu0 0
  %1907 = vmatprep.subr.bf16.mxu0 0
  %1908 = vmatpush2.bf16.msra.mxu0 0
  %1909 = vmatprep.subr.bf16.mxu0 0
  %1910 = vmatpush2.bf16.msra.mxu0 0
  %1911 = vmatprep.subr.bf16.mxu0 0
  %1912 = vmatpush2.bf16.msra.mxu0 0
  %1913 = vmatprep.subr.bf16.mxu0 0
  %1914 = vmatpush2.bf16.msra.mxu0 0
  %1915 = vmatprep.mubr.bf16.mxu0 0
  %1916 = vmatmul.mubr.bf16.gmra.mxu0 %v1878
  %v1917 = vpop.f32.mrf.mxu0
  %v1918 = vadd.f32 0.0, %v1917
  %v1919 = vpop.f32.mrf.mxu0
  %v1920 = vpop.f32.mrf.mxu0
  %v1921 = vadd.f32 0.0, %v1920
  %v1922 = vpop.f32.mrf.mxu0
  %1923 = vmatprep.mubr.bf16.mxu0 0
  %1924 = vmatmul.mubr.bf16.gmra.mxu0 %v1881
  %v1925 = vpop.f32.mrf.mxu0
  %v1926 = vadd.f32 0.0, %v1925
  %v1927 = vpop.f32.mrf.mxu0
  %v1928 = vpop.f32.mrf.mxu0
  %v1929 = vadd.f32 0.0, %v1928
  %v1930 = vpop.f32.mrf.mxu0
  %1931 = vdwg.mxu0
  %v1932 = vpack.c.bf16 %v1921, %v1918
  %v1933 = vpack.c.bf16 %v1929, %v1926
  %s1934 = scalar_lea.vmem %s3, 320
  %v1935 = vld [vmem:[%s1934] sm:$0xf]
  %v1936 = vld [vmem:[%s1934 + $0x4] sm:$0xf]
  %v1937 = vld [vmem:[%s1934 + $0x8] sm:$0xf]
  %v1938 = vld [vmem:[%s1934 + $0xc] sm:$0xf]
  %v1939 = vld [vmem:[%s1934 + $0x10] sm:$0xf]
  %v1940 = vld [vmem:[%s1934 + $0x14] sm:$0xf]
  %v1941 = vld [vmem:[%s1934 + $0x18] sm:$0xf]
  %v1942 = vld [vmem:[%s1934 + $0x1c] sm:$0xf]
  %v1951 = vunpack.c.l.b16 %v1935
  %v1952 = vunpack.c.l.b16 %v1936
  %v1953 = vunpack.c.l.b16 %v1937
  %v1954 = vunpack.c.l.b16 %v1938
  %v1955 = vunpack.c.l.b16 %v1939
  %v1956 = vunpack.c.l.b16 %v1940
  %v1957 = vunpack.c.l.b16 %v1941
  %v1958 = vunpack.c.l.b16 %v1942
  %v1959 = vpack.c.b16 %v1952, %v1951
  %v1960 = vpack.c.b16 %v1954, %v1953
  %v1961 = vpack.c.b16 %v1956, %v1955
  %v1962 = vpack.c.b16 %v1958, %v1957
  %v1968 = vsel %vm93, %v1932, 0
  %v1971 = vsel %vm93, %v1933, 0
  %1973 = vmatprep.subr.bf16.mxu0 0
  %1974 = vmatpush1.bf16.msra.mxu0 0
  %1975 = vmatprep.subr.bf16.mxu0 0
  %1976 = vmatpush1.bf16.msra.mxu0 0
  %1977 = vmatprep.subr.bf16.mxu0 0
  %1978 = vmatpush1.bf16.msra.mxu0 0
  %1979 = vmatprep.subr.bf16.mxu0 0
  %1980 = vmatpush1.bf16.msra.mxu0 0
  %1981 = vmatprep.subr.bf16.mxu0 0
  %1982 = vmatpush1.bf16.msra.mxu0 %v1962
  %1983 = vmatprep.subr.bf16.mxu0 0
  %1984 = vmatpush1.bf16.msra.mxu0 %v1961
  %1985 = vmatprep.subr.bf16.mxu0 0
  %1986 = vmatpush1.bf16.msra.mxu0 %v1960
  %1987 = vmatprep.subr.bf16.mxu0 0
  %1988 = vmatpush1.bf16.msra.mxu0 %v1959
  %1989 = vmatprep.subr.bf16.mxu0 0
  %1990 = vmatpush2.bf16.msra.mxu0 0
  %1991 = vmatprep.subr.bf16.mxu0 0
  %1992 = vmatpush2.bf16.msra.mxu0 0
  %1993 = vmatprep.subr.bf16.mxu0 0
  %1994 = vmatpush2.bf16.msra.mxu0 0
  %1995 = vmatprep.subr.bf16.mxu0 0
  %1996 = vmatpush2.bf16.msra.mxu0 0
  %1997 = vmatprep.subr.bf16.mxu0 0
  %1998 = vmatpush2.bf16.msra.mxu0 0
  %1999 = vmatprep.subr.bf16.mxu0 0
  %2000 = vmatpush2.bf16.msra.mxu0 0
  %2001 = vmatprep.subr.bf16.mxu0 0
  %2002 = vmatpush2.bf16.msra.mxu0 0
  %2003 = vmatprep.subr.bf16.mxu0 0
  %2004 = vmatpush2.bf16.msra.mxu0 0
  %2005 = vmatprep.mubr.bf16.mxu0 0
  %2006 = vmatmul.mubr.bf16.gmra.mxu0 %v1968
  %v2007 = vpop.f32.mrf.mxu0
  %v2008 = vadd.f32 0.0, %v2007
  %v2009 = vpop.f32.mrf.mxu0
  %v2010 = vpop.f32.mrf.mxu0
  %v2011 = vadd.f32 0.0, %v2010
  %v2012 = vpop.f32.mrf.mxu0
  %2013 = vmatprep.mubr.bf16.mxu0 0
  %2014 = vmatmul.mubr.bf16.gmra.mxu0 %v1971
  %v2015 = vpop.f32.mrf.mxu0
  %v2016 = vadd.f32 0.0, %v2015
  %v2017 = vpop.f32.mrf.mxu0
  %v2018 = vpop.f32.mrf.mxu0
  %v2019 = vadd.f32 0.0, %v2018
  %v2020 = vpop.f32.mrf.mxu0
  %2021 = vdwg.mxu0
  %v2030 = vunpack.c.l.b16 %v1854
  %v2031 = vunpack.c.l.b16 %v1855
  %v2032 = vunpack.c.l.b16 %v1856
  %v2033 = vunpack.c.l.b16 %v1857
  %v2034 = vunpack.c.l.b16 %v1858
  %v2035 = vunpack.c.l.b16 %v1859
  %v2036 = vunpack.c.l.b16 %v1860
  %v2037 = vunpack.c.l.b16 %v1861
  %v2038 = vpack.c.b16 %v2031, %v2030
  %v2039 = vpack.c.b16 %v2033, %v2032
  %v2040 = vpack.c.b16 %v2035, %v2034
  %v2041 = vpack.c.b16 %v2037, %v2036
  %v2047 = vsel %vm93, %v1851, 0
  %v2050 = vsel %vm93, %v1852, 0
  %2052 = vmatprep.subr.bf16.mxu0 0
  %2053 = vmatpush1.bf16.msra.mxu0 0
  %2054 = vmatprep.subr.bf16.mxu0 0
  %2055 = vmatpush1.bf16.msra.mxu0 0
  %2056 = vmatprep.subr.bf16.mxu0 0
  %2057 = vmatpush1.bf16.msra.mxu0 0
  %2058 = vmatprep.subr.bf16.mxu0 0
  %2059 = vmatpush1.bf16.msra.mxu0 0
  %2060 = vmatprep.subr.bf16.mxu0 0
  %2061 = vmatpush1.bf16.msra.mxu0 %v2041
  %2062 = vmatprep.subr.bf16.mxu0 0
  %2063 = vmatpush1.bf16.msra.mxu0 %v2040
  %2064 = vmatprep.subr.bf16.mxu0 0
  %2065 = vmatpush1.bf16.msra.mxu0 %v2039
  %2066 = vmatprep.subr.bf16.mxu0 0
  %2067 = vmatpush1.bf16.msra.mxu0 %v2038
  %2068 = vmatprep.subr.bf16.mxu0 0
  %2069 = vmatpush2.bf16.msra.mxu0 0
  %2070 = vmatprep.subr.bf16.mxu0 0
  %2071 = vmatpush2.bf16.msra.mxu0 0
  %2072 = vmatprep.subr.bf16.mxu0 0
  %2073 = vmatpush2.bf16.msra.mxu0 0
  %2074 = vmatprep.subr.bf16.mxu0 0
  %2075 = vmatpush2.bf16.msra.mxu0 0
  %2076 = vmatprep.subr.bf16.mxu0 0
  %2077 = vmatpush2.bf16.msra.mxu0 0
  %2078 = vmatprep.subr.bf16.mxu0 0
  %2079 = vmatpush2.bf16.msra.mxu0 0
  %2080 = vmatprep.subr.bf16.mxu0 0
  %2081 = vmatpush2.bf16.msra.mxu0 0
  %2082 = vmatprep.subr.bf16.mxu0 0
  %2083 = vmatpush2.bf16.msra.mxu0 0
  %2084 = vmatprep.mubr.bf16.mxu0 0
  %2085 = vmatmul.mubr.bf16.gmra.mxu0 %v2047
  %v2086 = vpop.f32.mrf.mxu0
  %v2087 = vadd.f32 %v2008, %v2086
  %v2088 = vpop.f32.mrf.mxu0
  %v2089 = vpop.f32.mrf.mxu0
  %v2090 = vadd.f32 %v2011, %v2089
  %v2091 = vpop.f32.mrf.mxu0
  %2092 = vmatprep.mubr.bf16.mxu0 0
  %2093 = vmatmul.mubr.bf16.gmra.mxu0 %v2050
  %v2094 = vpop.f32.mrf.mxu0
  %v2095 = vadd.f32 %v2016, %v2094
  %v2096 = vpop.f32.mrf.mxu0
  %v2097 = vpop.f32.mrf.mxu0
  %v2098 = vadd.f32 %v2019, %v2097
  %v2099 = vpop.f32.mrf.mxu0
  %2100 = vdwg.mxu0
  %s2101 = scalar_lea.vmem %s1, 176
  %v2102 = vld [vmem:[%s2101] sm:$0xf]
  %v2103 = vld [vmem:[%s2101 + $0x4] sm:$0xf]
  %v2104 = vld [vmem:[%s2101 + $0x8] sm:$0xf]
  %v2105 = vld [vmem:[%s2101 + $0xc] sm:$0xf]
  %v2110 = vunpack.c.l.b16 %v2102
  %v2111 = vunpack.c.l.b16 %v2103
  %v2112 = vunpack.c.l.b16 %v2104
  %v2113 = vunpack.c.l.b16 %v2105
  %v2114 = vpack.c.b16 %v2111, %v2110
  %v2115 = vpack.c.b16 %v2113, %v2112
  %v2117 = vsel %vm175, %v2114, 0
  %v2120 = vsel %vm175, %v2115, 0
  %2122 = vmatprep.subr.bf16.mxu0 0
  %2123 = vmatpush1.bf16.msra.mxu0 0
  %2124 = vmatprep.subr.bf16.mxu0 0
  %2125 = vmatpush1.bf16.msra.mxu0 0
  %2126 = vmatprep.subr.bf16.mxu0 0
  %2127 = vmatpush1.bf16.msra.mxu0 0
  %2128 = vmatprep.subr.bf16.mxu0 0
  %2129 = vmatpush1.bf16.msra.mxu0 0
  %2130 = vmatprep.subr.bf16.mxu0 0
  %2131 = vmatpush1.bf16.msra.mxu0 0
  %2132 = vmatprep.subr.bf16.mxu0 0
  %2133 = vmatpush1.bf16.msra.mxu0 0
  %2134 = vmatprep.subr.bf16.mxu0 0
  %2135 = vmatpush1.bf16.msra.mxu0 %v68
  %2136 = vmatprep.subr.bf16.mxu0 0
  %2137 = vmatpush1.bf16.msra.mxu0 %v67
  %2138 = vmatprep.subr.bf16.mxu0 0
  %2139 = vmatpush2.bf16.msra.mxu0 0
  %2140 = vmatprep.subr.bf16.mxu0 0
  %2141 = vmatpush2.bf16.msra.mxu0 0
  %2142 = vmatprep.subr.bf16.mxu0 0
  %2143 = vmatpush2.bf16.msra.mxu0 0
  %2144 = vmatprep.subr.bf16.mxu0 0
  %2145 = vmatpush2.bf16.msra.mxu0 0
  %2146 = vmatprep.subr.bf16.mxu0 0
  %2147 = vmatpush2.bf16.msra.mxu0 0
  %2148 = vmatprep.subr.bf16.mxu0 0
  %2149 = vmatpush2.bf16.msra.mxu0 0
  %2150 = vmatprep.subr.bf16.mxu0 0
  %2151 = vmatpush2.bf16.msra.mxu0 0
  %2152 = vmatprep.subr.bf16.mxu0 0
  %2153 = vmatpush2.bf16.msra.mxu0 0
  %2154 = vmatprep.mubr.bf16.mxu0 0
  %2155 = vmatmul.mubr.bf16.gmra.mxu0 %v2117
  %v2156 = vpop.f32.mrf.mxu0
  %v2157 = vadd.f32 0.0, %v2156
  %v2158 = vpop.f32.mrf.mxu0
  %v2159 = vpop.f32.mrf.mxu0
  %v2160 = vadd.f32 0.0, %v2159
  %v2161 = vpop.f32.mrf.mxu0
  %2162 = vmatprep.mubr.bf16.mxu0 0
  %2163 = vmatmul.mubr.bf16.gmra.mxu0 %v2120
  %v2164 = vpop.f32.mrf.mxu0
  %v2165 = vadd.f32 0.0, %v2164
  %v2166 = vpop.f32.mrf.mxu0
  %v2167 = vpop.f32.mrf.mxu0
  %v2168 = vadd.f32 0.0, %v2167
  %v2169 = vpop.f32.mrf.mxu0
  %2170 = vdwg.mxu0
  %v2171 = vpack.c.bf16 %v2160, %v2157
  %v2172 = vpack.c.bf16 %v2168, %v2165
  %s2173 = scalar_lea.vmem %s3, 352
  %v2174 = vld [vmem:[%s2173] sm:$0xf]
  %v2175 = vld [vmem:[%s2173 + $0x4] sm:$0xf]
  %v2176 = vld [vmem:[%s2173 + $0x8] sm:$0xf]
  %v2177 = vld [vmem:[%s2173 + $0xc] sm:$0xf]
  %v2178 = vld [vmem:[%s2173 + $0x10] sm:$0xf]
  %v2179 = vld [vmem:[%s2173 + $0x14] sm:$0xf]
  %v2180 = vld [vmem:[%s2173 + $0x18] sm:$0xf]
  %v2181 = vld [vmem:[%s2173 + $0x1c] sm:$0xf]
  %v2190 = vunpack.c.l.b16 %v2174
  %v2191 = vunpack.c.l.b16 %v2175
  %v2192 = vunpack.c.l.b16 %v2176
  %v2193 = vunpack.c.l.b16 %v2177
  %v2194 = vunpack.c.l.b16 %v2178
  %v2195 = vunpack.c.l.b16 %v2179
  %v2196 = vunpack.c.l.b16 %v2180
  %v2197 = vunpack.c.l.b16 %v2181
  %v2198 = vpack.c.b16 %v2191, %v2190
  %v2199 = vpack.c.b16 %v2193, %v2192
  %v2200 = vpack.c.b16 %v2195, %v2194
  %v2201 = vpack.c.b16 %v2197, %v2196
  %v2207 = vsel %vm93, %v2171, 0
  %v2210 = vsel %vm93, %v2172, 0
  %2212 = vmatprep.subr.bf16.mxu0 0
  %2213 = vmatpush1.bf16.msra.mxu0 0
  %2214 = vmatprep.subr.bf16.mxu0 0
  %2215 = vmatpush1.bf16.msra.mxu0 0
  %2216 = vmatprep.subr.bf16.mxu0 0
  %2217 = vmatpush1.bf16.msra.mxu0 0
  %2218 = vmatprep.subr.bf16.mxu0 0
  %2219 = vmatpush1.bf16.msra.mxu0 0
  %2220 = vmatprep.subr.bf16.mxu0 0
  %2221 = vmatpush1.bf16.msra.mxu0 %v2201
  %2222 = vmatprep.subr.bf16.mxu0 0
  %2223 = vmatpush1.bf16.msra.mxu0 %v2200
  %2224 = vmatprep.subr.bf16.mxu0 0
  %2225 = vmatpush1.bf16.msra.mxu0 %v2199
  %2226 = vmatprep.subr.bf16.mxu0 0
  %2227 = vmatpush1.bf16.msra.mxu0 %v2198
  %2228 = vmatprep.subr.bf16.mxu0 0
  %2229 = vmatpush2.bf16.msra.mxu0 0
  %2230 = vmatprep.subr.bf16.mxu0 0
  %2231 = vmatpush2.bf16.msra.mxu0 0
  %2232 = vmatprep.subr.bf16.mxu0 0
  %2233 = vmatpush2.bf16.msra.mxu0 0
  %2234 = vmatprep.subr.bf16.mxu0 0
  %2235 = vmatpush2.bf16.msra.mxu0 0
  %2236 = vmatprep.subr.bf16.mxu0 0
  %2237 = vmatpush2.bf16.msra.mxu0 0
  %2238 = vmatprep.subr.bf16.mxu0 0
  %2239 = vmatpush2.bf16.msra.mxu0 0
  %2240 = vmatprep.subr.bf16.mxu0 0
  %2241 = vmatpush2.bf16.msra.mxu0 0
  %2242 = vmatprep.subr.bf16.mxu0 0
  %2243 = vmatpush2.bf16.msra.mxu0 0
  %2244 = vmatprep.mubr.bf16.mxu0 0
  %2245 = vmatmul.mubr.bf16.gmra.mxu0 %v2207
  %v2246 = vpop.f32.mrf.mxu0
  %v2247 = vadd.f32 0.0, %v2246
  %v2248 = vpop.f32.mrf.mxu0
  %v2249 = vpop.f32.mrf.mxu0
  %v2250 = vadd.f32 0.0, %v2249
  %v2251 = vpop.f32.mrf.mxu0
  %2252 = vmatprep.mubr.bf16.mxu0 0
  %2253 = vmatmul.mubr.bf16.gmra.mxu0 %v2210
  %v2254 = vpop.f32.mrf.mxu0
  %v2255 = vadd.f32 0.0, %v2254
  %v2256 = vpop.f32.mrf.mxu0
  %v2257 = vpop.f32.mrf.mxu0
  %v2258 = vadd.f32 0.0, %v2257
  %v2259 = vpop.f32.mrf.mxu0
  %2260 = vdwg.mxu0
  %v2261 = vadd.f32 %v2087, %v2247
  %v2262 = vadd.f32 %v2090, %v2250
  %v2263 = vadd.f32 %v2095, %v2255
  %v2264 = vadd.f32 %v2098, %v2258
  %s2265 = scalar_lea.vmem %s1, 192
  %v2266 = vld [vmem:[%s2265] sm:$0xf]
  %v2267 = vld [vmem:[%s2265 + $0x4] sm:$0xf]
  %v2268 = vld [vmem:[%s2265 + $0x8] sm:$0xf]
  %v2269 = vld [vmem:[%s2265 + $0xc] sm:$0xf]
  %v2274 = vunpack.c.l.b16 %v2266
  %v2275 = vunpack.c.l.b16 %v2267
  %v2276 = vunpack.c.l.b16 %v2268
  %v2277 = vunpack.c.l.b16 %v2269
  %v2278 = vpack.c.b16 %v2275, %v2274
  %v2279 = vpack.c.b16 %v2277, %v2276
  %v2281 = vsel %vm175, %v2278, 0
  %v2284 = vsel %vm175, %v2279, 0
  %2286 = vmatprep.subr.bf16.mxu0 0
  %2287 = vmatpush1.bf16.msra.mxu0 0
  %2288 = vmatprep.subr.bf16.mxu0 0
  %2289 = vmatpush1.bf16.msra.mxu0 0
  %2290 = vmatprep.subr.bf16.mxu0 0
  %2291 = vmatpush1.bf16.msra.mxu0 0
  %2292 = vmatprep.subr.bf16.mxu0 0
  %2293 = vmatpush1.bf16.msra.mxu0 0
  %2294 = vmatprep.subr.bf16.mxu0 0
  %2295 = vmatpush1.bf16.msra.mxu0 0
  %2296 = vmatprep.subr.bf16.mxu0 0
  %2297 = vmatpush1.bf16.msra.mxu0 0
  %2298 = vmatprep.subr.bf16.mxu0 0
  %2299 = vmatpush1.bf16.msra.mxu0 %v68
  %2300 = vmatprep.subr.bf16.mxu0 0
  %2301 = vmatpush1.bf16.msra.mxu0 %v67
  %2302 = vmatprep.subr.bf16.mxu0 0
  %2303 = vmatpush2.bf16.msra.mxu0 0
  %2304 = vmatprep.subr.bf16.mxu0 0
  %2305 = vmatpush2.bf16.msra.mxu0 0
  %2306 = vmatprep.subr.bf16.mxu0 0
  %2307 = vmatpush2.bf16.msra.mxu0 0
  %2308 = vmatprep.subr.bf16.mxu0 0
  %2309 = vmatpush2.bf16.msra.mxu0 0
  %2310 = vmatprep.subr.bf16.mxu0 0
  %2311 = vmatpush2.bf16.msra.mxu0 0
  %2312 = vmatprep.subr.bf16.mxu0 0
  %2313 = vmatpush2.bf16.msra.mxu0 0
  %2314 = vmatprep.subr.bf16.mxu0 0
  %2315 = vmatpush2.bf16.msra.mxu0 0
  %2316 = vmatprep.subr.bf16.mxu0 0
  %2317 = vmatpush2.bf16.msra.mxu0 0
  %2318 = vmatprep.mubr.bf16.mxu0 0
  %2319 = vmatmul.mubr.bf16.gmra.mxu0 %v2281
  %v2320 = vpop.f32.mrf.mxu0
  %v2321 = vadd.f32 0.0, %v2320
  %v2322 = vpop.f32.mrf.mxu0
  %v2323 = vpop.f32.mrf.mxu0
  %v2324 = vadd.f32 0.0, %v2323
  %v2325 = vpop.f32.mrf.mxu0
  %2326 = vmatprep.mubr.bf16.mxu0 0
  %2327 = vmatmul.mubr.bf16.gmra.mxu0 %v2284
  %v2328 = vpop.f32.mrf.mxu0
  %v2329 = vadd.f32 0.0, %v2328
  %v2330 = vpop.f32.mrf.mxu0
  %v2331 = vpop.f32.mrf.mxu0
  %v2332 = vadd.f32 0.0, %v2331
  %v2333 = vpop.f32.mrf.mxu0
  %2334 = vdwg.mxu0
  %v2335 = vpack.c.bf16 %v2324, %v2321
  %v2336 = vpack.c.bf16 %v2332, %v2329
  %s2337 = scalar_lea.vmem %s3, 384
  %v2338 = vld [vmem:[%s2337] sm:$0xf]
  %v2339 = vld [vmem:[%s2337 + $0x4] sm:$0xf]
  %v2340 = vld [vmem:[%s2337 + $0x8] sm:$0xf]
  %v2341 = vld [vmem:[%s2337 + $0xc] sm:$0xf]
  %v2342 = vld [vmem:[%s2337 + $0x10] sm:$0xf]
  %v2343 = vld [vmem:[%s2337 + $0x14] sm:$0xf]
  %v2344 = vld [vmem:[%s2337 + $0x18] sm:$0xf]
  %v2345 = vld [vmem:[%s2337 + $0x1c] sm:$0xf]
  %v2354 = vunpack.c.l.b16 %v2338
  %v2355 = vunpack.c.l.b16 %v2339
  %v2356 = vunpack.c.l.b16 %v2340
  %v2357 = vunpack.c.l.b16 %v2341
  %v2358 = vunpack.c.l.b16 %v2342
  %v2359 = vunpack.c.l.b16 %v2343
  %v2360 = vunpack.c.l.b16 %v2344
  %v2361 = vunpack.c.l.b16 %v2345
  %v2362 = vpack.c.b16 %v2355, %v2354
  %v2363 = vpack.c.b16 %v2357, %v2356
  %v2364 = vpack.c.b16 %v2359, %v2358
  %v2365 = vpack.c.b16 %v2361, %v2360
  %v2371 = vsel %vm93, %v2335, 0
  %v2374 = vsel %vm93, %v2336, 0
  %2376 = vmatprep.subr.bf16.mxu0 0
  %2377 = vmatpush1.bf16.msra.mxu0 0
  %2378 = vmatprep.subr.bf16.mxu0 0
  %2379 = vmatpush1.bf16.msra.mxu0 0
  %2380 = vmatprep.subr.bf16.mxu0 0
  %2381 = vmatpush1.bf16.msra.mxu0 0
  %2382 = vmatprep.subr.bf16.mxu0 0
  %2383 = vmatpush1.bf16.msra.mxu0 0
  %2384 = vmatprep.subr.bf16.mxu0 0
  %2385 = vmatpush1.bf16.msra.mxu0 %v2365
  %2386 = vmatprep.subr.bf16.mxu0 0
  %2387 = vmatpush1.bf16.msra.mxu0 %v2364
  %2388 = vmatprep.subr.bf16.mxu0 0
  %2389 = vmatpush1.bf16.msra.mxu0 %v2363
  %2390 = vmatprep.subr.bf16.mxu0 0
  %2391 = vmatpush1.bf16.msra.mxu0 %v2362
  %2392 = vmatprep.subr.bf16.mxu0 0
  %2393 = vmatpush2.bf16.msra.mxu0 0
  %2394 = vmatprep.subr.bf16.mxu0 0
  %2395 = vmatpush2.bf16.msra.mxu0 0
  %2396 = vmatprep.subr.bf16.mxu0 0
  %2397 = vmatpush2.bf16.msra.mxu0 0
  %2398 = vmatprep.subr.bf16.mxu0 0
  %2399 = vmatpush2.bf16.msra.mxu0 0
  %2400 = vmatprep.subr.bf16.mxu0 0
  %2401 = vmatpush2.bf16.msra.mxu0 0
  %2402 = vmatprep.subr.bf16.mxu0 0
  %2403 = vmatpush2.bf16.msra.mxu0 0
  %2404 = vmatprep.subr.bf16.mxu0 0
  %2405 = vmatpush2.bf16.msra.mxu0 0
  %2406 = vmatprep.subr.bf16.mxu0 0
  %2407 = vmatpush2.bf16.msra.mxu0 0
  %2408 = vmatprep.mubr.bf16.mxu0 0
  %2409 = vmatmul.mubr.bf16.gmra.mxu0 %v2371
  %v2410 = vpop.f32.mrf.mxu0
  %v2411 = vadd.f32 0.0, %v2410
  %v2412 = vpop.f32.mrf.mxu0
  %v2413 = vpop.f32.mrf.mxu0
  %v2414 = vadd.f32 0.0, %v2413
  %v2415 = vpop.f32.mrf.mxu0
  %2416 = vmatprep.mubr.bf16.mxu0 0
  %2417 = vmatmul.mubr.bf16.gmra.mxu0 %v2374
  %v2418 = vpop.f32.mrf.mxu0
  %v2419 = vadd.f32 0.0, %v2418
  %v2420 = vpop.f32.mrf.mxu0
  %v2421 = vpop.f32.mrf.mxu0
  %v2422 = vadd.f32 0.0, %v2421
  %v2423 = vpop.f32.mrf.mxu0
  %2424 = vdwg.mxu0
  %v2425 = vadd.f32 %v2261, %v2411
  %v2426 = vadd.f32 %v2262, %v2414
  %v2427 = vadd.f32 %v2263, %v2419
  %v2428 = vadd.f32 %v2264, %v2422
  %s2429 = scalar_lea.vmem %s1, 208
  %v2430 = vld [vmem:[%s2429] sm:$0xf]
  %v2431 = vld [vmem:[%s2429 + $0x4] sm:$0xf]
  %v2432 = vld [vmem:[%s2429 + $0x8] sm:$0xf]
  %v2433 = vld [vmem:[%s2429 + $0xc] sm:$0xf]
  %v2438 = vunpack.c.l.b16 %v2430
  %v2439 = vunpack.c.l.b16 %v2431
  %v2440 = vunpack.c.l.b16 %v2432
  %v2441 = vunpack.c.l.b16 %v2433
  %v2442 = vpack.c.b16 %v2439, %v2438
  %v2443 = vpack.c.b16 %v2441, %v2440
  %v2445 = vsel %vm175, %v2442, 0
  %v2448 = vsel %vm175, %v2443, 0
  %2450 = vmatprep.subr.bf16.mxu0 0
  %2451 = vmatpush1.bf16.msra.mxu0 0
  %2452 = vmatprep.subr.bf16.mxu0 0
  %2453 = vmatpush1.bf16.msra.mxu0 0
  %2454 = vmatprep.subr.bf16.mxu0 0
  %2455 = vmatpush1.bf16.msra.mxu0 0
  %2456 = vmatprep.subr.bf16.mxu0 0
  %2457 = vmatpush1.bf16.msra.mxu0 0
  %2458 = vmatprep.subr.bf16.mxu0 0
  %2459 = vmatpush1.bf16.msra.mxu0 0
  %2460 = vmatprep.subr.bf16.mxu0 0
  %2461 = vmatpush1.bf16.msra.mxu0 0
  %2462 = vmatprep.subr.bf16.mxu0 0
  %2463 = vmatpush1.bf16.msra.mxu0 %v68
  %2464 = vmatprep.subr.bf16.mxu0 0
  %2465 = vmatpush1.bf16.msra.mxu0 %v67
  %2466 = vmatprep.subr.bf16.mxu0 0
  %2467 = vmatpush2.bf16.msra.mxu0 0
  %2468 = vmatprep.subr.bf16.mxu0 0
  %2469 = vmatpush2.bf16.msra.mxu0 0
  %2470 = vmatprep.subr.bf16.mxu0 0
  %2471 = vmatpush2.bf16.msra.mxu0 0
  %2472 = vmatprep.subr.bf16.mxu0 0
  %2473 = vmatpush2.bf16.msra.mxu0 0
  %2474 = vmatprep.subr.bf16.mxu0 0
  %2475 = vmatpush2.bf16.msra.mxu0 0
  %2476 = vmatprep.subr.bf16.mxu0 0
  %2477 = vmatpush2.bf16.msra.mxu0 0
  %2478 = vmatprep.subr.bf16.mxu0 0
  %2479 = vmatpush2.bf16.msra.mxu0 0
  %2480 = vmatprep.subr.bf16.mxu0 0
  %2481 = vmatpush2.bf16.msra.mxu0 0
  %2482 = vmatprep.mubr.bf16.mxu0 0
  %2483 = vmatmul.mubr.bf16.gmra.mxu0 %v2445
  %v2484 = vpop.f32.mrf.mxu0
  %v2485 = vadd.f32 0.0, %v2484
  %v2486 = vpop.f32.mrf.mxu0
  %v2487 = vpop.f32.mrf.mxu0
  %v2488 = vadd.f32 0.0, %v2487
  %v2489 = vpop.f32.mrf.mxu0
  %2490 = vmatprep.mubr.bf16.mxu0 0
  %2491 = vmatmul.mubr.bf16.gmra.mxu0 %v2448
  %v2492 = vpop.f32.mrf.mxu0
  %v2493 = vadd.f32 0.0, %v2492
  %v2494 = vpop.f32.mrf.mxu0
  %v2495 = vpop.f32.mrf.mxu0
  %v2496 = vadd.f32 0.0, %v2495
  %v2497 = vpop.f32.mrf.mxu0
  %2498 = vdwg.mxu0
  %v2499 = vpack.c.bf16 %v2488, %v2485
  %v2500 = vpack.c.bf16 %v2496, %v2493
  %s2501 = scalar_lea.vmem %s3, 416
  %v2502 = vld [vmem:[%s2501] sm:$0xf]
  %v2503 = vld [vmem:[%s2501 + $0x4] sm:$0xf]
  %v2504 = vld [vmem:[%s2501 + $0x8] sm:$0xf]
  %v2505 = vld [vmem:[%s2501 + $0xc] sm:$0xf]
  %v2506 = vld [vmem:[%s2501 + $0x10] sm:$0xf]
  %v2507 = vld [vmem:[%s2501 + $0x14] sm:$0xf]
  %v2508 = vld [vmem:[%s2501 + $0x18] sm:$0xf]
  %v2509 = vld [vmem:[%s2501 + $0x1c] sm:$0xf]
  %v2518 = vunpack.c.l.b16 %v2502
  %v2519 = vunpack.c.l.b16 %v2503
  %v2520 = vunpack.c.l.b16 %v2504
  %v2521 = vunpack.c.l.b16 %v2505
  %v2522 = vunpack.c.l.b16 %v2506
  %v2523 = vunpack.c.l.b16 %v2507
  %v2524 = vunpack.c.l.b16 %v2508
  %v2525 = vunpack.c.l.b16 %v2509
  %v2526 = vpack.c.b16 %v2519, %v2518
  %v2527 = vpack.c.b16 %v2521, %v2520
  %v2528 = vpack.c.b16 %v2523, %v2522
  %v2529 = vpack.c.b16 %v2525, %v2524
  %v2535 = vsel %vm93, %v2499, 0
  %v2538 = vsel %vm93, %v2500, 0
  %2540 = vmatprep.subr.bf16.mxu0 0
  %2541 = vmatpush1.bf16.msra.mxu0 0
  %2542 = vmatprep.subr.bf16.mxu0 0
  %2543 = vmatpush1.bf16.msra.mxu0 0
  %2544 = vmatprep.subr.bf16.mxu0 0
  %2545 = vmatpush1.bf16.msra.mxu0 0
  %2546 = vmatprep.subr.bf16.mxu0 0
  %2547 = vmatpush1.bf16.msra.mxu0 0
  %2548 = vmatprep.subr.bf16.mxu0 0
  %2549 = vmatpush1.bf16.msra.mxu0 %v2529
  %2550 = vmatprep.subr.bf16.mxu0 0
  %2551 = vmatpush1.bf16.msra.mxu0 %v2528
  %2552 = vmatprep.subr.bf16.mxu0 0
  %2553 = vmatpush1.bf16.msra.mxu0 %v2527
  %2554 = vmatprep.subr.bf16.mxu0 0
  %2555 = vmatpush1.bf16.msra.mxu0 %v2526
  %2556 = vmatprep.subr.bf16.mxu0 0
  %2557 = vmatpush2.bf16.msra.mxu0 0
  %2558 = vmatprep.subr.bf16.mxu0 0
  %2559 = vmatpush2.bf16.msra.mxu0 0
  %2560 = vmatprep.subr.bf16.mxu0 0
  %2561 = vmatpush2.bf16.msra.mxu0 0
  %2562 = vmatprep.subr.bf16.mxu0 0
  %2563 = vmatpush2.bf16.msra.mxu0 0
  %2564 = vmatprep.subr.bf16.mxu0 0
  %2565 = vmatpush2.bf16.msra.mxu0 0
  %2566 = vmatprep.subr.bf16.mxu0 0
  %2567 = vmatpush2.bf16.msra.mxu0 0
  %2568 = vmatprep.subr.bf16.mxu0 0
  %2569 = vmatpush2.bf16.msra.mxu0 0
  %2570 = vmatprep.subr.bf16.mxu0 0
  %2571 = vmatpush2.bf16.msra.mxu0 0
  %2572 = vmatprep.mubr.bf16.mxu0 0
  %2573 = vmatmul.mubr.bf16.gmra.mxu0 %v2535
  %v2574 = vpop.f32.mrf.mxu0
  %v2575 = vadd.f32 0.0, %v2574
  %v2576 = vpop.f32.mrf.mxu0
  %v2577 = vpop.f32.mrf.mxu0
  %v2578 = vadd.f32 0.0, %v2577
  %v2579 = vpop.f32.mrf.mxu0
  %2580 = vmatprep.mubr.bf16.mxu0 0
  %2581 = vmatmul.mubr.bf16.gmra.mxu0 %v2538
  %v2582 = vpop.f32.mrf.mxu0
  %v2583 = vadd.f32 0.0, %v2582
  %v2584 = vpop.f32.mrf.mxu0
  %v2585 = vpop.f32.mrf.mxu0
  %v2586 = vadd.f32 0.0, %v2585
  %v2587 = vpop.f32.mrf.mxu0
  %2588 = vdwg.mxu0
  %v2589 = vadd.f32 %v2425, %v2575
  %v2590 = vadd.f32 %v2426, %v2578
  %v2591 = vadd.f32 %v2427, %v2583
  %v2592 = vadd.f32 %v2428, %v2586
  %s2593 = scalar_lea.vmem %s1, 224
  %v2594 = vld [vmem:[%s2593] sm:$0xf]
  %v2595 = vld [vmem:[%s2593 + $0x4] sm:$0xf]
  %v2596 = vld [vmem:[%s2593 + $0x8] sm:$0xf]
  %v2597 = vld [vmem:[%s2593 + $0xc] sm:$0xf]
  %v2602 = vunpack.c.l.b16 %v2594
  %v2603 = vunpack.c.l.b16 %v2595
  %v2604 = vunpack.c.l.b16 %v2596
  %v2605 = vunpack.c.l.b16 %v2597
  %v2606 = vpack.c.b16 %v2603, %v2602
  %v2607 = vpack.c.b16 %v2605, %v2604
  %v2609 = vsel %vm175, %v2606, 0
  %v2612 = vsel %vm175, %v2607, 0
  %2614 = vmatprep.subr.bf16.mxu0 0
  %2615 = vmatpush1.bf16.msra.mxu0 0
  %2616 = vmatprep.subr.bf16.mxu0 0
  %2617 = vmatpush1.bf16.msra.mxu0 0
  %2618 = vmatprep.subr.bf16.mxu0 0
  %2619 = vmatpush1.bf16.msra.mxu0 0
  %2620 = vmatprep.subr.bf16.mxu0 0
  %2621 = vmatpush1.bf16.msra.mxu0 0
  %2622 = vmatprep.subr.bf16.mxu0 0
  %2623 = vmatpush1.bf16.msra.mxu0 0
  %2624 = vmatprep.subr.bf16.mxu0 0
  %2625 = vmatpush1.bf16.msra.mxu0 0
  %2626 = vmatprep.subr.bf16.mxu0 0
  %2627 = vmatpush1.bf16.msra.mxu0 %v68
  %2628 = vmatprep.subr.bf16.mxu0 0
  %2629 = vmatpush1.bf16.msra.mxu0 %v67
  %2630 = vmatprep.subr.bf16.mxu0 0
  %2631 = vmatpush2.bf16.msra.mxu0 0
  %2632 = vmatprep.subr.bf16.mxu0 0
  %2633 = vmatpush2.bf16.msra.mxu0 0
  %2634 = vmatprep.subr.bf16.mxu0 0
  %2635 = vmatpush2.bf16.msra.mxu0 0
  %2636 = vmatprep.subr.bf16.mxu0 0
  %2637 = vmatpush2.bf16.msra.mxu0 0
  %2638 = vmatprep.subr.bf16.mxu0 0
  %2639 = vmatpush2.bf16.msra.mxu0 0
  %2640 = vmatprep.subr.bf16.mxu0 0
  %2641 = vmatpush2.bf16.msra.mxu0 0
  %2642 = vmatprep.subr.bf16.mxu0 0
  %2643 = vmatpush2.bf16.msra.mxu0 0
  %2644 = vmatprep.subr.bf16.mxu0 0
  %2645 = vmatpush2.bf16.msra.mxu0 0
  %2646 = vmatprep.mubr.bf16.mxu0 0
  %2647 = vmatmul.mubr.bf16.gmra.mxu0 %v2609
  %v2648 = vpop.f32.mrf.mxu0
  %v2649 = vadd.f32 0.0, %v2648
  %v2650 = vpop.f32.mrf.mxu0
  %v2651 = vpop.f32.mrf.mxu0
  %v2652 = vadd.f32 0.0, %v2651
  %v2653 = vpop.f32.mrf.mxu0
  %2654 = vmatprep.mubr.bf16.mxu0 0
  %2655 = vmatmul.mubr.bf16.gmra.mxu0 %v2612
  %v2656 = vpop.f32.mrf.mxu0
  %v2657 = vadd.f32 0.0, %v2656
  %v2658 = vpop.f32.mrf.mxu0
  %v2659 = vpop.f32.mrf.mxu0
  %v2660 = vadd.f32 0.0, %v2659
  %v2661 = vpop.f32.mrf.mxu0
  %2662 = vdwg.mxu0
  %v2663 = vpack.c.bf16 %v2652, %v2649
  %v2664 = vpack.c.bf16 %v2660, %v2657
  %s2665 = scalar_lea.vmem %s3, 448
  %v2666 = vld [vmem:[%s2665] sm:$0xf]
  %v2667 = vld [vmem:[%s2665 + $0x4] sm:$0xf]
  %v2668 = vld [vmem:[%s2665 + $0x8] sm:$0xf]
  %v2669 = vld [vmem:[%s2665 + $0xc] sm:$0xf]
  %v2670 = vld [vmem:[%s2665 + $0x10] sm:$0xf]
  %v2671 = vld [vmem:[%s2665 + $0x14] sm:$0xf]
  %v2672 = vld [vmem:[%s2665 + $0x18] sm:$0xf]
  %v2673 = vld [vmem:[%s2665 + $0x1c] sm:$0xf]
  %v2682 = vunpack.c.l.b16 %v2666
  %v2683 = vunpack.c.l.b16 %v2667
  %v2684 = vunpack.c.l.b16 %v2668
  %v2685 = vunpack.c.l.b16 %v2669
  %v2686 = vunpack.c.l.b16 %v2670
  %v2687 = vunpack.c.l.b16 %v2671
  %v2688 = vunpack.c.l.b16 %v2672
  %v2689 = vunpack.c.l.b16 %v2673
  %v2690 = vpack.c.b16 %v2683, %v2682
  %v2691 = vpack.c.b16 %v2685, %v2684
  %v2692 = vpack.c.b16 %v2687, %v2686
  %v2693 = vpack.c.b16 %v2689, %v2688
  %v2699 = vsel %vm93, %v2663, 0
  %v2702 = vsel %vm93, %v2664, 0
  %2704 = vmatprep.subr.bf16.mxu0 0
  %2705 = vmatpush1.bf16.msra.mxu0 0
  %2706 = vmatprep.subr.bf16.mxu0 0
  %2707 = vmatpush1.bf16.msra.mxu0 0
  %2708 = vmatprep.subr.bf16.mxu0 0
  %2709 = vmatpush1.bf16.msra.mxu0 0
  %2710 = vmatprep.subr.bf16.mxu0 0
  %2711 = vmatpush1.bf16.msra.mxu0 0
  %2712 = vmatprep.subr.bf16.mxu0 0
  %2713 = vmatpush1.bf16.msra.mxu0 %v2693
  %2714 = vmatprep.subr.bf16.mxu0 0
  %2715 = vmatpush1.bf16.msra.mxu0 %v2692
  %2716 = vmatprep.subr.bf16.mxu0 0
  %2717 = vmatpush1.bf16.msra.mxu0 %v2691
  %2718 = vmatprep.subr.bf16.mxu0 0
  %2719 = vmatpush1.bf16.msra.mxu0 %v2690
  %2720 = vmatprep.subr.bf16.mxu0 0
  %2721 = vmatpush2.bf16.msra.mxu0 0
  %2722 = vmatprep.subr.bf16.mxu0 0
  %2723 = vmatpush2.bf16.msra.mxu0 0
  %2724 = vmatprep.subr.bf16.mxu0 0
  %2725 = vmatpush2.bf16.msra.mxu0 0
  %2726 = vmatprep.subr.bf16.mxu0 0
  %2727 = vmatpush2.bf16.msra.mxu0 0
  %2728 = vmatprep.subr.bf16.mxu0 0
  %2729 = vmatpush2.bf16.msra.mxu0 0
  %2730 = vmatprep.subr.bf16.mxu0 0
  %2731 = vmatpush2.bf16.msra.mxu0 0
  %2732 = vmatprep.subr.bf16.mxu0 0
  %2733 = vmatpush2.bf16.msra.mxu0 0
  %2734 = vmatprep.subr.bf16.mxu0 0
  %2735 = vmatpush2.bf16.msra.mxu0 0
  %2736 = vmatprep.mubr.bf16.mxu0 0
  %2737 = vmatmul.mubr.bf16.gmra.mxu0 %v2699
  %v2738 = vpop.f32.mrf.mxu0
  %v2739 = vadd.f32 0.0, %v2738
  %v2740 = vpop.f32.mrf.mxu0
  %v2741 = vpop.f32.mrf.mxu0
  %v2742 = vadd.f32 0.0, %v2741
  %v2743 = vpop.f32.mrf.mxu0
  %2744 = vmatprep.mubr.bf16.mxu0 0
  %2745 = vmatmul.mubr.bf16.gmra.mxu0 %v2702
  %v2746 = vpop.f32.mrf.mxu0
  %v2747 = vadd.f32 0.0, %v2746
  %v2748 = vpop.f32.mrf.mxu0
  %v2749 = vpop.f32.mrf.mxu0
  %v2750 = vadd.f32 0.0, %v2749
  %v2751 = vpop.f32.mrf.mxu0
  %2752 = vdwg.mxu0
  %v2753 = vadd.f32 %v2589, %v2739
  %v2754 = vadd.f32 %v2590, %v2742
  %v2755 = vadd.f32 %v2591, %v2747
  %v2756 = vadd.f32 %v2592, %v2750
  %s2757 = scalar_lea.vmem %s1, 240
  %v2758 = vld [vmem:[%s2757] sm:$0xf]
  %v2759 = vld [vmem:[%s2757 + $0x4] sm:$0xf]
  %v2760 = vld [vmem:[%s2757 + $0x8] sm:$0xf]
  %v2761 = vld [vmem:[%s2757 + $0xc] sm:$0xf]
  %v2766 = vunpack.c.l.b16 %v2758
  %v2767 = vunpack.c.l.b16 %v2759
  %v2768 = vunpack.c.l.b16 %v2760
  %v2769 = vunpack.c.l.b16 %v2761
  %v2770 = vpack.c.b16 %v2767, %v2766
  %v2771 = vpack.c.b16 %v2769, %v2768
  %v2773 = vsel %vm175, %v2770, 0
  %v2776 = vsel %vm175, %v2771, 0
  %2778 = vmatprep.subr.bf16.mxu0 0
  %2779 = vmatpush1.bf16.msra.mxu0 0
  %2780 = vmatprep.subr.bf16.mxu0 0
  %2781 = vmatpush1.bf16.msra.mxu0 0
  %2782 = vmatprep.subr.bf16.mxu0 0
  %2783 = vmatpush1.bf16.msra.mxu0 0
  %2784 = vmatprep.subr.bf16.mxu0 0
  %2785 = vmatpush1.bf16.msra.mxu0 0
  %2786 = vmatprep.subr.bf16.mxu0 0
  %2787 = vmatpush1.bf16.msra.mxu0 0
  %2788 = vmatprep.subr.bf16.mxu0 0
  %2789 = vmatpush1.bf16.msra.mxu0 0
  %2790 = vmatprep.subr.bf16.mxu0 0
  %2791 = vmatpush1.bf16.msra.mxu0 %v68
  %2792 = vmatprep.subr.bf16.mxu0 0
  %2793 = vmatpush1.bf16.msra.mxu0 %v67
  %2794 = vmatprep.subr.bf16.mxu0 0
  %2795 = vmatpush2.bf16.msra.mxu0 0
  %2796 = vmatprep.subr.bf16.mxu0 0
  %2797 = vmatpush2.bf16.msra.mxu0 0
  %2798 = vmatprep.subr.bf16.mxu0 0
  %2799 = vmatpush2.bf16.msra.mxu0 0
  %2800 = vmatprep.subr.bf16.mxu0 0
  %2801 = vmatpush2.bf16.msra.mxu0 0
  %2802 = vmatprep.subr.bf16.mxu0 0
  %2803 = vmatpush2.bf16.msra.mxu0 0
  %2804 = vmatprep.subr.bf16.mxu0 0
  %2805 = vmatpush2.bf16.msra.mxu0 0
  %2806 = vmatprep.subr.bf16.mxu0 0
  %2807 = vmatpush2.bf16.msra.mxu0 0
  %2808 = vmatprep.subr.bf16.mxu0 0
  %2809 = vmatpush2.bf16.msra.mxu0 0
  %2810 = vmatprep.mubr.bf16.mxu0 0
  %2811 = vmatmul.mubr.bf16.gmra.mxu0 %v2773
  %v2812 = vpop.f32.mrf.mxu0
  %v2813 = vadd.f32 0.0, %v2812
  %v2814 = vpop.f32.mrf.mxu0
  %v2815 = vpop.f32.mrf.mxu0
  %v2816 = vadd.f32 0.0, %v2815
  %v2817 = vpop.f32.mrf.mxu0
  %2818 = vmatprep.mubr.bf16.mxu0 0
  %2819 = vmatmul.mubr.bf16.gmra.mxu0 %v2776
  %v2820 = vpop.f32.mrf.mxu0
  %v2821 = vadd.f32 0.0, %v2820
  %v2822 = vpop.f32.mrf.mxu0
  %v2823 = vpop.f32.mrf.mxu0
  %v2824 = vadd.f32 0.0, %v2823
  %v2825 = vpop.f32.mrf.mxu0
  %2826 = vdwg.mxu0
  %v2827 = vpack.c.bf16 %v2816, %v2813
  %v2828 = vpack.c.bf16 %v2824, %v2821
  %s2829 = scalar_lea.vmem %s3, 480
  %v2830 = vld [vmem:[%s2829] sm:$0xf]
  %v2831 = vld [vmem:[%s2829 + $0x4] sm:$0xf]
  %v2832 = vld [vmem:[%s2829 + $0x8] sm:$0xf]
  %v2833 = vld [vmem:[%s2829 + $0xc] sm:$0xf]
  %v2834 = vld [vmem:[%s2829 + $0x10] sm:$0xf]
  %v2835 = vld [vmem:[%s2829 + $0x14] sm:$0xf]
  %v2836 = vld [vmem:[%s2829 + $0x18] sm:$0xf]
  %v2837 = vld [vmem:[%s2829 + $0x1c] sm:$0xf]
  %v2846 = vunpack.c.l.b16 %v2830
  %v2847 = vunpack.c.l.b16 %v2831
  %v2848 = vunpack.c.l.b16 %v2832
  %v2849 = vunpack.c.l.b16 %v2833
  %v2850 = vunpack.c.l.b16 %v2834
  %v2851 = vunpack.c.l.b16 %v2835
  %v2852 = vunpack.c.l.b16 %v2836
  %v2853 = vunpack.c.l.b16 %v2837
  %v2854 = vpack.c.b16 %v2847, %v2846
  %v2855 = vpack.c.b16 %v2849, %v2848
  %v2856 = vpack.c.b16 %v2851, %v2850
  %v2857 = vpack.c.b16 %v2853, %v2852
  %v2863 = vsel %vm93, %v2827, 0
  %v2866 = vsel %vm93, %v2828, 0
  %2868 = vmatprep.subr.bf16.mxu0 0
  %2869 = vmatpush1.bf16.msra.mxu0 0
  %2870 = vmatprep.subr.bf16.mxu0 0
  %2871 = vmatpush1.bf16.msra.mxu0 0
  %2872 = vmatprep.subr.bf16.mxu0 0
  %2873 = vmatpush1.bf16.msra.mxu0 0
  %2874 = vmatprep.subr.bf16.mxu0 0
  %2875 = vmatpush1.bf16.msra.mxu0 0
  %2876 = vmatprep.subr.bf16.mxu0 0
  %2877 = vmatpush1.bf16.msra.mxu0 %v2857
  %2878 = vmatprep.subr.bf16.mxu0 0
  %2879 = vmatpush1.bf16.msra.mxu0 %v2856
  %2880 = vmatprep.subr.bf16.mxu0 0
  %2881 = vmatpush1.bf16.msra.mxu0 %v2855
  %2882 = vmatprep.subr.bf16.mxu0 0
  %2883 = vmatpush1.bf16.msra.mxu0 %v2854
  %2884 = vmatprep.subr.bf16.mxu0 0
  %2885 = vmatpush2.bf16.msra.mxu0 0
  %2886 = vmatprep.subr.bf16.mxu0 0
  %2887 = vmatpush2.bf16.msra.mxu0 0
  %2888 = vmatprep.subr.bf16.mxu0 0
  %2889 = vmatpush2.bf16.msra.mxu0 0
  %2890 = vmatprep.subr.bf16.mxu0 0
  %2891 = vmatpush2.bf16.msra.mxu0 0
  %2892 = vmatprep.subr.bf16.mxu0 0
  %2893 = vmatpush2.bf16.msra.mxu0 0
  %2894 = vmatprep.subr.bf16.mxu0 0
  %2895 = vmatpush2.bf16.msra.mxu0 0
  %2896 = vmatprep.subr.bf16.mxu0 0
  %2897 = vmatpush2.bf16.msra.mxu0 0
  %2898 = vmatprep.subr.bf16.mxu0 0
  %2899 = vmatpush2.bf16.msra.mxu0 0
  %2900 = vmatprep.mubr.bf16.mxu0 0
  %2901 = vmatmul.mubr.bf16.gmra.mxu0 %v2863
  %v2902 = vpop.f32.mrf.mxu0
  %v2903 = vadd.f32 0.0, %v2902
  %v2904 = vpop.f32.mrf.mxu0
  %v2905 = vpop.f32.mrf.mxu0
  %v2906 = vadd.f32 0.0, %v2905
  %v2907 = vpop.f32.mrf.mxu0
  %2908 = vmatprep.mubr.bf16.mxu0 0
  %2909 = vmatmul.mubr.bf16.gmra.mxu0 %v2866
  %v2910 = vpop.f32.mrf.mxu0
  %v2911 = vadd.f32 0.0, %v2910
  %v2912 = vpop.f32.mrf.mxu0
  %v2913 = vpop.f32.mrf.mxu0
  %v2914 = vadd.f32 0.0, %v2913
  %v2915 = vpop.f32.mrf.mxu0
  %2916 = vdwg.mxu0
  %v2917 = vadd.f32 %v2753, %v2903
  %v2918 = vadd.f32 %v2754, %v2906
  %v2919 = vadd.f32 %v2755, %v2911
  %v2920 = vadd.f32 %v2756, %v2914
  %s2921 = scalar_lea.vmem %s1, 256
  %v2922 = vld [vmem:[%s2921] sm:$0xf]
  %v2923 = vld [vmem:[%s2921 + $0x4] sm:$0xf]
  %v2924 = vld [vmem:[%s2921 + $0x8] sm:$0xf]
  %v2925 = vld [vmem:[%s2921 + $0xc] sm:$0xf]
  %v2930 = vunpack.c.l.b16 %v2922
  %v2931 = vunpack.c.l.b16 %v2923
  %v2932 = vunpack.c.l.b16 %v2924
  %v2933 = vunpack.c.l.b16 %v2925
  %v2934 = vpack.c.b16 %v2931, %v2930
  %v2935 = vpack.c.b16 %v2933, %v2932
  %v2937 = vsel %vm175, %v2934, 0
  %v2940 = vsel %vm175, %v2935, 0
  %2942 = vmatprep.subr.bf16.mxu0 0
  %2943 = vmatpush1.bf16.msra.mxu0 0
  %2944 = vmatprep.subr.bf16.mxu0 0
  %2945 = vmatpush1.bf16.msra.mxu0 0
  %2946 = vmatprep.subr.bf16.mxu0 0
  %2947 = vmatpush1.bf16.msra.mxu0 0
  %2948 = vmatprep.subr.bf16.mxu0 0
  %2949 = vmatpush1.bf16.msra.mxu0 0
  %2950 = vmatprep.subr.bf16.mxu0 0
  %2951 = vmatpush1.bf16.msra.mxu0 0
  %2952 = vmatprep.subr.bf16.mxu0 0
  %2953 = vmatpush1.bf16.msra.mxu0 0
  %2954 = vmatprep.subr.bf16.mxu0 0
  %2955 = vmatpush1.bf16.msra.mxu0 %v68
  %2956 = vmatprep.subr.bf16.mxu0 0
  %2957 = vmatpush1.bf16.msra.mxu0 %v67
  %2958 = vmatprep.subr.bf16.mxu0 0
  %2959 = vmatpush2.bf16.msra.mxu0 0
  %2960 = vmatprep.subr.bf16.mxu0 0
  %2961 = vmatpush2.bf16.msra.mxu0 0
  %2962 = vmatprep.subr.bf16.mxu0 0
  %2963 = vmatpush2.bf16.msra.mxu0 0
  %2964 = vmatprep.subr.bf16.mxu0 0
  %2965 = vmatpush2.bf16.msra.mxu0 0
  %2966 = vmatprep.subr.bf16.mxu0 0
  %2967 = vmatpush2.bf16.msra.mxu0 0
  %2968 = vmatprep.subr.bf16.mxu0 0
  %2969 = vmatpush2.bf16.msra.mxu0 0
  %2970 = vmatprep.subr.bf16.mxu0 0
  %2971 = vmatpush2.bf16.msra.mxu0 0
  %2972 = vmatprep.subr.bf16.mxu0 0
  %2973 = vmatpush2.bf16.msra.mxu0 0
  %2974 = vmatprep.mubr.bf16.mxu0 0
  %2975 = vmatmul.mubr.bf16.gmra.mxu0 %v2937
  %v2976 = vpop.f32.mrf.mxu0
  %v2977 = vadd.f32 0.0, %v2976
  %v2978 = vpop.f32.mrf.mxu0
  %v2979 = vpop.f32.mrf.mxu0
  %v2980 = vadd.f32 0.0, %v2979
  %v2981 = vpop.f32.mrf.mxu0
  %2982 = vmatprep.mubr.bf16.mxu0 0
  %2983 = vmatmul.mubr.bf16.gmra.mxu0 %v2940
  %v2984 = vpop.f32.mrf.mxu0
  %v2985 = vadd.f32 0.0, %v2984
  %v2986 = vpop.f32.mrf.mxu0
  %v2987 = vpop.f32.mrf.mxu0
  %v2988 = vadd.f32 0.0, %v2987
  %v2989 = vpop.f32.mrf.mxu0
  %2990 = vdwg.mxu0
  %v2991 = vpack.c.bf16 %v2980, %v2977
  %v2992 = vpack.c.bf16 %v2988, %v2985
  %s2993 = scalar_lea.vmem %s3, 512
  %v2994 = vld [vmem:[%s2993] sm:$0xf]
  %v2995 = vld [vmem:[%s2993 + $0x4] sm:$0xf]
  %v2996 = vld [vmem:[%s2993 + $0x8] sm:$0xf]
  %v2997 = vld [vmem:[%s2993 + $0xc] sm:$0xf]
  %v2998 = vld [vmem:[%s2993 + $0x10] sm:$0xf]
  %v2999 = vld [vmem:[%s2993 + $0x14] sm:$0xf]
  %v3000 = vld [vmem:[%s2993 + $0x18] sm:$0xf]
  %v3001 = vld [vmem:[%s2993 + $0x1c] sm:$0xf]
  %v3010 = vunpack.c.l.b16 %v2994
  %v3011 = vunpack.c.l.b16 %v2995
  %v3012 = vunpack.c.l.b16 %v2996
  %v3013 = vunpack.c.l.b16 %v2997
  %v3014 = vunpack.c.l.b16 %v2998
  %v3015 = vunpack.c.l.b16 %v2999
  %v3016 = vunpack.c.l.b16 %v3000
  %v3017 = vunpack.c.l.b16 %v3001
  %v3018 = vpack.c.b16 %v3011, %v3010
  %v3019 = vpack.c.b16 %v3013, %v3012
  %v3020 = vpack.c.b16 %v3015, %v3014
  %v3021 = vpack.c.b16 %v3017, %v3016
  %v3027 = vsel %vm93, %v2991, 0
  %v3030 = vsel %vm93, %v2992, 0
  %3032 = vmatprep.subr.bf16.mxu0 0
  %3033 = vmatpush1.bf16.msra.mxu0 0
  %3034 = vmatprep.subr.bf16.mxu0 0
  %3035 = vmatpush1.bf16.msra.mxu0 0
  %3036 = vmatprep.subr.bf16.mxu0 0
  %3037 = vmatpush1.bf16.msra.mxu0 0
  %3038 = vmatprep.subr.bf16.mxu0 0
  %3039 = vmatpush1.bf16.msra.mxu0 0
  %3040 = vmatprep.subr.bf16.mxu0 0
  %3041 = vmatpush1.bf16.msra.mxu0 %v3021
  %3042 = vmatprep.subr.bf16.mxu0 0
  %3043 = vmatpush1.bf16.msra.mxu0 %v3020
  %3044 = vmatprep.subr.bf16.mxu0 0
  %3045 = vmatpush1.bf16.msra.mxu0 %v3019
  %3046 = vmatprep.subr.bf16.mxu0 0
  %3047 = vmatpush1.bf16.msra.mxu0 %v3018
  %3048 = vmatprep.subr.bf16.mxu0 0
  %3049 = vmatpush2.bf16.msra.mxu0 0
  %3050 = vmatprep.subr.bf16.mxu0 0
  %3051 = vmatpush2.bf16.msra.mxu0 0
  %3052 = vmatprep.subr.bf16.mxu0 0
  %3053 = vmatpush2.bf16.msra.mxu0 0
  %3054 = vmatprep.subr.bf16.mxu0 0
  %3055 = vmatpush2.bf16.msra.mxu0 0
  %3056 = vmatprep.subr.bf16.mxu0 0
  %3057 = vmatpush2.bf16.msra.mxu0 0
  %3058 = vmatprep.subr.bf16.mxu0 0
  %3059 = vmatpush2.bf16.msra.mxu0 0
  %3060 = vmatprep.subr.bf16.mxu0 0
  %3061 = vmatpush2.bf16.msra.mxu0 0
  %3062 = vmatprep.subr.bf16.mxu0 0
  %3063 = vmatpush2.bf16.msra.mxu0 0
  %3064 = vmatprep.mubr.bf16.mxu0 0
  %3065 = vmatmul.mubr.bf16.gmra.mxu0 %v3027
  %v3066 = vpop.f32.mrf.mxu0
  %v3067 = vadd.f32 0.0, %v3066
  %v3068 = vpop.f32.mrf.mxu0
  %v3069 = vpop.f32.mrf.mxu0
  %v3070 = vadd.f32 0.0, %v3069
  %v3071 = vpop.f32.mrf.mxu0
  %3072 = vmatprep.mubr.bf16.mxu0 0
  %3073 = vmatmul.mubr.bf16.gmra.mxu0 %v3030
  %v3074 = vpop.f32.mrf.mxu0
  %v3075 = vadd.f32 0.0, %v3074
  %v3076 = vpop.f32.mrf.mxu0
  %v3077 = vpop.f32.mrf.mxu0
  %v3078 = vadd.f32 0.0, %v3077
  %v3079 = vpop.f32.mrf.mxu0
  %3080 = vdwg.mxu0
  %v3081 = vadd.f32 %v2917, %v3067
  %v3082 = vadd.f32 %v2918, %v3070
  %v3083 = vadd.f32 %v2919, %v3075
  %v3084 = vadd.f32 %v2920, %v3078
  %s3085 = scalar_lea.vmem %s1, 272
  %v3086 = vld [vmem:[%s3085] sm:$0xf]
  %v3087 = vld [vmem:[%s3085 + $0x4] sm:$0xf]
  %v3088 = vld [vmem:[%s3085 + $0x8] sm:$0xf]
  %v3089 = vld [vmem:[%s3085 + $0xc] sm:$0xf]
  %v3094 = vunpack.c.l.b16 %v3086
  %v3095 = vunpack.c.l.b16 %v3087
  %v3096 = vunpack.c.l.b16 %v3088
  %v3097 = vunpack.c.l.b16 %v3089
  %v3098 = vpack.c.b16 %v3095, %v3094
  %v3099 = vpack.c.b16 %v3097, %v3096
  %v3101 = vsel %vm175, %v3098, 0
  %v3104 = vsel %vm175, %v3099, 0
  %3106 = vmatprep.subr.bf16.mxu0 0
  %3107 = vmatpush1.bf16.msra.mxu0 0
  %3108 = vmatprep.subr.bf16.mxu0 0
  %3109 = vmatpush1.bf16.msra.mxu0 0
  %3110 = vmatprep.subr.bf16.mxu0 0
  %3111 = vmatpush1.bf16.msra.mxu0 0
  %3112 = vmatprep.subr.bf16.mxu0 0
  %3113 = vmatpush1.bf16.msra.mxu0 0
  %3114 = vmatprep.subr.bf16.mxu0 0
  %3115 = vmatpush1.bf16.msra.mxu0 0
  %3116 = vmatprep.subr.bf16.mxu0 0
  %3117 = vmatpush1.bf16.msra.mxu0 0
  %3118 = vmatprep.subr.bf16.mxu0 0
  %3119 = vmatpush1.bf16.msra.mxu0 %v68
  %3120 = vmatprep.subr.bf16.mxu0 0
  %3121 = vmatpush1.bf16.msra.mxu0 %v67
  %3122 = vmatprep.subr.bf16.mxu0 0
  %3123 = vmatpush2.bf16.msra.mxu0 0
  %3124 = vmatprep.subr.bf16.mxu0 0
  %3125 = vmatpush2.bf16.msra.mxu0 0
  %3126 = vmatprep.subr.bf16.mxu0 0
  %3127 = vmatpush2.bf16.msra.mxu0 0
  %3128 = vmatprep.subr.bf16.mxu0 0
  %3129 = vmatpush2.bf16.msra.mxu0 0
  %3130 = vmatprep.subr.bf16.mxu0 0
  %3131 = vmatpush2.bf16.msra.mxu0 0
  %3132 = vmatprep.subr.bf16.mxu0 0
  %3133 = vmatpush2.bf16.msra.mxu0 0
  %3134 = vmatprep.subr.bf16.mxu0 0
  %3135 = vmatpush2.bf16.msra.mxu0 0
  %3136 = vmatprep.subr.bf16.mxu0 0
  %3137 = vmatpush2.bf16.msra.mxu0 0
  %3138 = vmatprep.mubr.bf16.mxu0 0
  %3139 = vmatmul.mubr.bf16.gmra.mxu0 %v3101
  %v3140 = vpop.f32.mrf.mxu0
  %v3141 = vadd.f32 0.0, %v3140
  %v3142 = vpop.f32.mrf.mxu0
  %v3143 = vpop.f32.mrf.mxu0
  %v3144 = vadd.f32 0.0, %v3143
  %v3145 = vpop.f32.mrf.mxu0
  %3146 = vmatprep.mubr.bf16.mxu0 0
  %3147 = vmatmul.mubr.bf16.gmra.mxu0 %v3104
  %v3148 = vpop.f32.mrf.mxu0
  %v3149 = vadd.f32 0.0, %v3148
  %v3150 = vpop.f32.mrf.mxu0
  %v3151 = vpop.f32.mrf.mxu0
  %v3152 = vadd.f32 0.0, %v3151
  %v3153 = vpop.f32.mrf.mxu0
  %3154 = vdwg.mxu0
  %v3155 = vpack.c.bf16 %v3144, %v3141
  %v3156 = vpack.c.bf16 %v3152, %v3149
  %s3157 = scalar_lea.vmem %s3, 544
  %v3158 = vld [vmem:[%s3157] sm:$0xf]
  %v3159 = vld [vmem:[%s3157 + $0x4] sm:$0xf]
  %v3160 = vld [vmem:[%s3157 + $0x8] sm:$0xf]
  %v3161 = vld [vmem:[%s3157 + $0xc] sm:$0xf]
  %v3162 = vld [vmem:[%s3157 + $0x10] sm:$0xf]
  %v3163 = vld [vmem:[%s3157 + $0x14] sm:$0xf]
  %v3164 = vld [vmem:[%s3157 + $0x18] sm:$0xf]
  %v3165 = vld [vmem:[%s3157 + $0x1c] sm:$0xf]
  %v3174 = vunpack.c.l.b16 %v3158
  %v3175 = vunpack.c.l.b16 %v3159
  %v3176 = vunpack.c.l.b16 %v3160
  %v3177 = vunpack.c.l.b16 %v3161
  %v3178 = vunpack.c.l.b16 %v3162
  %v3179 = vunpack.c.l.b16 %v3163
  %v3180 = vunpack.c.l.b16 %v3164
  %v3181 = vunpack.c.l.b16 %v3165
  %v3182 = vpack.c.b16 %v3175, %v3174
  %v3183 = vpack.c.b16 %v3177, %v3176
  %v3184 = vpack.c.b16 %v3179, %v3178
  %v3185 = vpack.c.b16 %v3181, %v3180
  %v3191 = vsel %vm93, %v3155, 0
  %v3194 = vsel %vm93, %v3156, 0
  %3196 = vmatprep.subr.bf16.mxu0 0
  %3197 = vmatpush1.bf16.msra.mxu0 0
  %3198 = vmatprep.subr.bf16.mxu0 0
  %3199 = vmatpush1.bf16.msra.mxu0 0
  %3200 = vmatprep.subr.bf16.mxu0 0
  %3201 = vmatpush1.bf16.msra.mxu0 0
  %3202 = vmatprep.subr.bf16.mxu0 0
  %3203 = vmatpush1.bf16.msra.mxu0 0
  %3204 = vmatprep.subr.bf16.mxu0 0
  %3205 = vmatpush1.bf16.msra.mxu0 %v3185
  %3206 = vmatprep.subr.bf16.mxu0 0
  %3207 = vmatpush1.bf16.msra.mxu0 %v3184
  %3208 = vmatprep.subr.bf16.mxu0 0
  %3209 = vmatpush1.bf16.msra.mxu0 %v3183
  %3210 = vmatprep.subr.bf16.mxu0 0
  %3211 = vmatpush1.bf16.msra.mxu0 %v3182
  %3212 = vmatprep.subr.bf16.mxu0 0
  %3213 = vmatpush2.bf16.msra.mxu0 0
  %3214 = vmatprep.subr.bf16.mxu0 0
  %3215 = vmatpush2.bf16.msra.mxu0 0
  %3216 = vmatprep.subr.bf16.mxu0 0
  %3217 = vmatpush2.bf16.msra.mxu0 0
  %3218 = vmatprep.subr.bf16.mxu0 0
  %3219 = vmatpush2.bf16.msra.mxu0 0
  %3220 = vmatprep.subr.bf16.mxu0 0
  %3221 = vmatpush2.bf16.msra.mxu0 0
  %3222 = vmatprep.subr.bf16.mxu0 0
  %3223 = vmatpush2.bf16.msra.mxu0 0
  %3224 = vmatprep.subr.bf16.mxu0 0
  %3225 = vmatpush2.bf16.msra.mxu0 0
  %3226 = vmatprep.subr.bf16.mxu0 0
  %3227 = vmatpush2.bf16.msra.mxu0 0
  %3228 = vmatprep.mubr.bf16.mxu0 0
  %3229 = vmatmul.mubr.bf16.gmra.mxu0 %v3191
  %v3230 = vpop.f32.mrf.mxu0
  %v3231 = vadd.f32 0.0, %v3230
  %v3232 = vpop.f32.mrf.mxu0
  %v3233 = vpop.f32.mrf.mxu0
  %v3234 = vadd.f32 0.0, %v3233
  %v3235 = vpop.f32.mrf.mxu0
  %3236 = vmatprep.mubr.bf16.mxu0 0
  %3237 = vmatmul.mubr.bf16.gmra.mxu0 %v3194
  %v3238 = vpop.f32.mrf.mxu0
  %v3239 = vadd.f32 0.0, %v3238
  %v3240 = vpop.f32.mrf.mxu0
  %v3241 = vpop.f32.mrf.mxu0
  %v3242 = vadd.f32 0.0, %v3241
  %v3243 = vpop.f32.mrf.mxu0
  %3244 = vdwg.mxu0
  %v3245 = vadd.f32 %v3081, %v3231
  %v3246 = vadd.f32 %v3082, %v3234
  %v3247 = vadd.f32 %v3083, %v3239
  %v3248 = vadd.f32 %v3084, %v3242
  %v3249 = vld [vmem:[%s8 + $0x2] sm:$0x1]
  %v3250 = vlaneseq
  %v3251 = vshrl.u32 %v3250, 7
  %v3252 = vsub.s32 0, %v3251
  %v3253 = vrot.slane %v3249, %v3252
  %v3254 = vadd.f32 %v3245, %v3253
  %v3255 = vadd.f32 %v3246, %v3253
  %v3256 = vadd.f32 %v3247, %v3253
  %v3257 = vadd.f32 %v3248, %v3253
  %v3258 = vmax.f32 %v3254, 0.0
  %v3259 = vmax.f32 %v3255, 0.0
  %v3260 = vmax.f32 %v3256, 0.0
  %v3261 = vmax.f32 %v3257, 0.0
  %v3262 = vpack.c.bf16 %v3259, %v3258
  %v3263 = vpack.c.bf16 %v3261, %v3260
  %v3264 = vld [vmem:[%s5 + $0x20] sm:$0xf]
  %v3265 = vld [vmem:[%s5 + $0x24] sm:$0xf]
  %v3266 = vld [vmem:[%s5 + $0x28] sm:$0xf]
  %v3267 = vld [vmem:[%s5 + $0x2c] sm:$0xf]
  %v3272 = vunpack.c.l.b16 %v3264
  %v3273 = vunpack.c.l.b16 %v3265
  %v3274 = vunpack.c.l.b16 %v3266
  %v3275 = vunpack.c.l.b16 %v3267
  %v3276 = vpack.c.b16 %v3273, %v3272
  %v3277 = vpack.c.b16 %v3275, %v3274
  %v3281 = vsel %vm175, %v3262, 0
  %v3284 = vsel %vm175, %v3263, 0
  %3286 = vmatprep.subr.bf16.mxu0 0
  %3287 = vmatpush1.bf16.msra.mxu0 0
  %3288 = vmatprep.subr.bf16.mxu0 0
  %3289 = vmatpush1.bf16.msra.mxu0 0
  %3290 = vmatprep.subr.bf16.mxu0 0
  %3291 = vmatpush1.bf16.msra.mxu0 0
  %3292 = vmatprep.subr.bf16.mxu0 0
  %3293 = vmatpush1.bf16.msra.mxu0 0
  %3294 = vmatprep.subr.bf16.mxu0 0
  %3295 = vmatpush1.bf16.msra.mxu0 0
  %3296 = vmatprep.subr.bf16.mxu0 0
  %3297 = vmatpush1.bf16.msra.mxu0 0
  %3298 = vmatprep.subr.bf16.mxu0 0
  %3299 = vmatpush1.bf16.msra.mxu0 %v3277
  %3300 = vmatprep.subr.bf16.mxu0 0
  %3301 = vmatpush1.bf16.msra.mxu0 %v3276
  %3302 = vmatprep.subr.bf16.mxu0 0
  %3303 = vmatpush2.bf16.msra.mxu0 0
  %3304 = vmatprep.subr.bf16.mxu0 0
  %3305 = vmatpush2.bf16.msra.mxu0 0
  %3306 = vmatprep.subr.bf16.mxu0 0
  %3307 = vmatpush2.bf16.msra.mxu0 0
  %3308 = vmatprep.subr.bf16.mxu0 0
  %3309 = vmatpush2.bf16.msra.mxu0 0
  %3310 = vmatprep.subr.bf16.mxu0 0
  %3311 = vmatpush2.bf16.msra.mxu0 0
  %3312 = vmatprep.subr.bf16.mxu0 0
  %3313 = vmatpush2.bf16.msra.mxu0 0
  %3314 = vmatprep.subr.bf16.mxu0 0
  %3315 = vmatpush2.bf16.msra.mxu0 0
  %3316 = vmatprep.subr.bf16.mxu0 0
  %3317 = vmatpush2.bf16.msra.mxu0 0
  %3318 = vmatprep.mubr.bf16.mxu0 0
  %3319 = vmatmul.mubr.bf16.gmra.mxu0 %v3281
  %v3320 = vpop.f32.mrf.mxu0
  %v3321 = vadd.f32 0.0, %v3320
  %v3322 = vpop.f32.mrf.mxu0
  %v3323 = vpop.f32.mrf.mxu0
  %v3324 = vadd.f32 0.0, %v3323
  %v3325 = vpop.f32.mrf.mxu0
  %3326 = vmatprep.mubr.bf16.mxu0 0
  %3327 = vmatmul.mubr.bf16.gmra.mxu0 %v3284
  %v3328 = vpop.f32.mrf.mxu0
  %v3329 = vadd.f32 0.0, %v3328
  %v3330 = vpop.f32.mrf.mxu0
  %v3331 = vpop.f32.mrf.mxu0
  %v3332 = vadd.f32 0.0, %v3331
  %v3333 = vpop.f32.mrf.mxu0
  %3334 = vdwg.mxu0
  %v3335 = vadd.f32 %v1767, %v3321
  %v3336 = vadd.f32 %v1770, %v3324
  %v3337 = vadd.f32 %v1775, %v3329
  %v3338 = vadd.f32 %v1778, %v3332
  %s3339 = scalar_lea.vmem %s1, 288
  %v3340 = vld [vmem:[%s3339] sm:$0xf]
  %v3341 = vld [vmem:[%s3339 + $0x4] sm:$0xf]
  %v3342 = vld [vmem:[%s3339 + $0x8] sm:$0xf]
  %v3343 = vld [vmem:[%s3339 + $0xc] sm:$0xf]
  %v3348 = vunpack.c.l.b16 %v3340
  %v3349 = vunpack.c.l.b16 %v3341
  %v3350 = vunpack.c.l.b16 %v3342
  %v3351 = vunpack.c.l.b16 %v3343
  %v3352 = vpack.c.b16 %v3349, %v3348
  %v3353 = vpack.c.b16 %v3351, %v3350
  %v3355 = vsel %vm175, %v3352, 0
  %v3358 = vsel %vm175, %v3353, 0
  %3360 = vmatprep.subr.bf16.mxu0 0
  %3361 = vmatpush1.bf16.msra.mxu0 0
  %3362 = vmatprep.subr.bf16.mxu0 0
  %3363 = vmatpush1.bf16.msra.mxu0 0
  %3364 = vmatprep.subr.bf16.mxu0 0
  %3365 = vmatpush1.bf16.msra.mxu0 0
  %3366 = vmatprep.subr.bf16.mxu0 0
  %3367 = vmatpush1.bf16.msra.mxu0 0
  %3368 = vmatprep.subr.bf16.mxu0 0
  %3369 = vmatpush1.bf16.msra.mxu0 0
  %3370 = vmatprep.subr.bf16.mxu0 0
  %3371 = vmatpush1.bf16.msra.mxu0 0
  %3372 = vmatprep.subr.bf16.mxu0 0
  %3373 = vmatpush1.bf16.msra.mxu0 %v68
  %3374 = vmatprep.subr.bf16.mxu0 0
  %3375 = vmatpush1.bf16.msra.mxu0 %v67
  %3376 = vmatprep.subr.bf16.mxu0 0
  %3377 = vmatpush2.bf16.msra.mxu0 0
  %3378 = vmatprep.subr.bf16.mxu0 0
  %3379 = vmatpush2.bf16.msra.mxu0 0
  %3380 = vmatprep.subr.bf16.mxu0 0
  %3381 = vmatpush2.bf16.msra.mxu0 0
  %3382 = vmatprep.subr.bf16.mxu0 0
  %3383 = vmatpush2.bf16.msra.mxu0 0
  %3384 = vmatprep.subr.bf16.mxu0 0
  %3385 = vmatpush2.bf16.msra.mxu0 0
  %3386 = vmatprep.subr.bf16.mxu0 0
  %3387 = vmatpush2.bf16.msra.mxu0 0
  %3388 = vmatprep.subr.bf16.mxu0 0
  %3389 = vmatpush2.bf16.msra.mxu0 0
  %3390 = vmatprep.subr.bf16.mxu0 0
  %3391 = vmatpush2.bf16.msra.mxu0 0
  %3392 = vmatprep.mubr.bf16.mxu0 0
  %3393 = vmatmul.mubr.bf16.gmra.mxu0 %v3355
  %v3394 = vpop.f32.mrf.mxu0
  %v3395 = vadd.f32 0.0, %v3394
  %v3396 = vpop.f32.mrf.mxu0
  %v3397 = vpop.f32.mrf.mxu0
  %v3398 = vadd.f32 0.0, %v3397
  %v3399 = vpop.f32.mrf.mxu0
  %3400 = vmatprep.mubr.bf16.mxu0 0
  %3401 = vmatmul.mubr.bf16.gmra.mxu0 %v3358
  %v3402 = vpop.f32.mrf.mxu0
  %v3403 = vadd.f32 0.0, %v3402
  %v3404 = vpop.f32.mrf.mxu0
  %v3405 = vpop.f32.mrf.mxu0
  %v3406 = vadd.f32 0.0, %v3405
  %v3407 = vpop.f32.mrf.mxu0
  %3408 = vdwg.mxu0
  %v3409 = vpack.c.bf16 %v3398, %v3395
  %v3410 = vpack.c.bf16 %v3406, %v3403
  %s3411 = scalar_lea.vmem %s3, 576
  %v3412 = vld [vmem:[%s3411] sm:$0xf]
  %v3413 = vld [vmem:[%s3411 + $0x4] sm:$0xf]
  %v3414 = vld [vmem:[%s3411 + $0x8] sm:$0xf]
  %v3415 = vld [vmem:[%s3411 + $0xc] sm:$0xf]
  %v3416 = vld [vmem:[%s3411 + $0x10] sm:$0xf]
  %v3417 = vld [vmem:[%s3411 + $0x14] sm:$0xf]
  %v3418 = vld [vmem:[%s3411 + $0x18] sm:$0xf]
  %v3419 = vld [vmem:[%s3411 + $0x1c] sm:$0xf]
  %s3420 = scalar_lea.vmem %s1, 304
  %v3421 = vld [vmem:[%s3420] sm:$0xf]
  %v3422 = vld [vmem:[%s3420 + $0x4] sm:$0xf]
  %v3423 = vld [vmem:[%s3420 + $0x8] sm:$0xf]
  %v3424 = vld [vmem:[%s3420 + $0xc] sm:$0xf]
  %v3429 = vunpack.c.l.b16 %v3421
  %v3430 = vunpack.c.l.b16 %v3422
  %v3431 = vunpack.c.l.b16 %v3423
  %v3432 = vunpack.c.l.b16 %v3424
  %v3433 = vpack.c.b16 %v3430, %v3429
  %v3434 = vpack.c.b16 %v3432, %v3431
  %v3436 = vsel %vm175, %v3433, 0
  %v3439 = vsel %vm175, %v3434, 0
  %3441 = vmatprep.subr.bf16.mxu0 0
  %3442 = vmatpush1.bf16.msra.mxu0 0
  %3443 = vmatprep.subr.bf16.mxu0 0
  %3444 = vmatpush1.bf16.msra.mxu0 0
  %3445 = vmatprep.subr.bf16.mxu0 0
  %3446 = vmatpush1.bf16.msra.mxu0 0
  %3447 = vmatprep.subr.bf16.mxu0 0
  %3448 = vmatpush1.bf16.msra.mxu0 0
  %3449 = vmatprep.subr.bf16.mxu0 0
  %3450 = vmatpush1.bf16.msra.mxu0 0
  %3451 = vmatprep.subr.bf16.mxu0 0
  %3452 = vmatpush1.bf16.msra.mxu0 0
  %3453 = vmatprep.subr.bf16.mxu0 0
  %3454 = vmatpush1.bf16.msra.mxu0 %v68
  %3455 = vmatprep.subr.bf16.mxu0 0
  %3456 = vmatpush1.bf16.msra.mxu0 %v67
  %3457 = vmatprep.subr.bf16.mxu0 0
  %3458 = vmatpush2.bf16.msra.mxu0 0
  %3459 = vmatprep.subr.bf16.mxu0 0
  %3460 = vmatpush2.bf16.msra.mxu0 0
  %3461 = vmatprep.subr.bf16.mxu0 0
  %3462 = vmatpush2.bf16.msra.mxu0 0
  %3463 = vmatprep.subr.bf16.mxu0 0
  %3464 = vmatpush2.bf16.msra.mxu0 0
  %3465 = vmatprep.subr.bf16.mxu0 0
  %3466 = vmatpush2.bf16.msra.mxu0 0
  %3467 = vmatprep.subr.bf16.mxu0 0
  %3468 = vmatpush2.bf16.msra.mxu0 0
  %3469 = vmatprep.subr.bf16.mxu0 0
  %3470 = vmatpush2.bf16.msra.mxu0 0
  %3471 = vmatprep.subr.bf16.mxu0 0
  %3472 = vmatpush2.bf16.msra.mxu0 0
  %3473 = vmatprep.mubr.bf16.mxu0 0
  %3474 = vmatmul.mubr.bf16.gmra.mxu0 %v3436
  %v3475 = vpop.f32.mrf.mxu0
  %v3476 = vadd.f32 0.0, %v3475
  %v3477 = vpop.f32.mrf.mxu0
  %v3478 = vpop.f32.mrf.mxu0
  %v3479 = vadd.f32 0.0, %v3478
  %v3480 = vpop.f32.mrf.mxu0
  %3481 = vmatprep.mubr.bf16.mxu0 0
  %3482 = vmatmul.mubr.bf16.gmra.mxu0 %v3439
  %v3483 = vpop.f32.mrf.mxu0
  %v3484 = vadd.f32 0.0, %v3483
  %v3485 = vpop.f32.mrf.mxu0
  %v3486 = vpop.f32.mrf.mxu0
  %v3487 = vadd.f32 0.0, %v3486
  %v3488 = vpop.f32.mrf.mxu0
  %3489 = vdwg.mxu0
  %v3490 = vpack.c.bf16 %v3479, %v3476
  %v3491 = vpack.c.bf16 %v3487, %v3484
  %s3492 = scalar_lea.vmem %s3, 608
  %v3493 = vld [vmem:[%s3492] sm:$0xf]
  %v3494 = vld [vmem:[%s3492 + $0x4] sm:$0xf]
  %v3495 = vld [vmem:[%s3492 + $0x8] sm:$0xf]
  %v3496 = vld [vmem:[%s3492 + $0xc] sm:$0xf]
  %v3497 = vld [vmem:[%s3492 + $0x10] sm:$0xf]
  %v3498 = vld [vmem:[%s3492 + $0x14] sm:$0xf]
  %v3499 = vld [vmem:[%s3492 + $0x18] sm:$0xf]
  %v3500 = vld [vmem:[%s3492 + $0x1c] sm:$0xf]
  %v3509 = vunpack.c.l.b16 %v3493
  %v3510 = vunpack.c.l.b16 %v3494
  %v3511 = vunpack.c.l.b16 %v3495
  %v3512 = vunpack.c.l.b16 %v3496
  %v3513 = vunpack.c.l.b16 %v3497
  %v3514 = vunpack.c.l.b16 %v3498
  %v3515 = vunpack.c.l.b16 %v3499
  %v3516 = vunpack.c.l.b16 %v3500
  %v3517 = vpack.c.b16 %v3510, %v3509
  %v3518 = vpack.c.b16 %v3512, %v3511
  %v3519 = vpack.c.b16 %v3514, %v3513
  %v3520 = vpack.c.b16 %v3516, %v3515
  %v3526 = vsel %vm93, %v3490, 0
  %v3529 = vsel %vm93, %v3491, 0
  %3531 = vmatprep.subr.bf16.mxu0 0
  %3532 = vmatpush1.bf16.msra.mxu0 0
  %3533 = vmatprep.subr.bf16.mxu0 0
  %3534 = vmatpush1.bf16.msra.mxu0 0
  %3535 = vmatprep.subr.bf16.mxu0 0
  %3536 = vmatpush1.bf16.msra.mxu0 0
  %3537 = vmatprep.subr.bf16.mxu0 0
  %3538 = vmatpush1.bf16.msra.mxu0 0
  %3539 = vmatprep.subr.bf16.mxu0 0
  %3540 = vmatpush1.bf16.msra.mxu0 %v3520
  %3541 = vmatprep.subr.bf16.mxu0 0
  %3542 = vmatpush1.bf16.msra.mxu0 %v3519
  %3543 = vmatprep.subr.bf16.mxu0 0
  %3544 = vmatpush1.bf16.msra.mxu0 %v3518
  %3545 = vmatprep.subr.bf16.mxu0 0
  %3546 = vmatpush1.bf16.msra.mxu0 %v3517
  %3547 = vmatprep.subr.bf16.mxu0 0
  %3548 = vmatpush2.bf16.msra.mxu0 0
  %3549 = vmatprep.subr.bf16.mxu0 0
  %3550 = vmatpush2.bf16.msra.mxu0 0
  %3551 = vmatprep.subr.bf16.mxu0 0
  %3552 = vmatpush2.bf16.msra.mxu0 0
  %3553 = vmatprep.subr.bf16.mxu0 0
  %3554 = vmatpush2.bf16.msra.mxu0 0
  %3555 = vmatprep.subr.bf16.mxu0 0
  %3556 = vmatpush2.bf16.msra.mxu0 0
  %3557 = vmatprep.subr.bf16.mxu0 0
  %3558 = vmatpush2.bf16.msra.mxu0 0
  %3559 = vmatprep.subr.bf16.mxu0 0
  %3560 = vmatpush2.bf16.msra.mxu0 0
  %3561 = vmatprep.subr.bf16.mxu0 0
  %3562 = vmatpush2.bf16.msra.mxu0 0
  %3563 = vmatprep.mubr.bf16.mxu0 0
  %3564 = vmatmul.mubr.bf16.gmra.mxu0 %v3526
  %v3565 = vpop.f32.mrf.mxu0
  %v3566 = vadd.f32 0.0, %v3565
  %v3567 = vpop.f32.mrf.mxu0
  %v3568 = vpop.f32.mrf.mxu0
  %v3569 = vadd.f32 0.0, %v3568
  %v3570 = vpop.f32.mrf.mxu0
  %3571 = vmatprep.mubr.bf16.mxu0 0
  %3572 = vmatmul.mubr.bf16.gmra.mxu0 %v3529
  %v3573 = vpop.f32.mrf.mxu0
  %v3574 = vadd.f32 0.0, %v3573
  %v3575 = vpop.f32.mrf.mxu0
  %v3576 = vpop.f32.mrf.mxu0
  %v3577 = vadd.f32 0.0, %v3576
  %v3578 = vpop.f32.mrf.mxu0
  %3579 = vdwg.mxu0
  %v3588 = vunpack.c.l.b16 %v3412
  %v3589 = vunpack.c.l.b16 %v3413
  %v3590 = vunpack.c.l.b16 %v3414
  %v3591 = vunpack.c.l.b16 %v3415
  %v3592 = vunpack.c.l.b16 %v3416
  %v3593 = vunpack.c.l.b16 %v3417
  %v3594 = vunpack.c.l.b16 %v3418
  %v3595 = vunpack.c.l.b16 %v3419
  %v3596 = vpack.c.b16 %v3589, %v3588
  %v3597 = vpack.c.b16 %v3591, %v3590
  %v3598 = vpack.c.b16 %v3593, %v3592
  %v3599 = vpack.c.b16 %v3595, %v3594
  %v3605 = vsel %vm93, %v3409, 0
  %v3608 = vsel %vm93, %v3410, 0
  %3610 = vmatprep.subr.bf16.mxu0 0
  %3611 = vmatpush1.bf16.msra.mxu0 0
  %3612 = vmatprep.subr.bf16.mxu0 0
  %3613 = vmatpush1.bf16.msra.mxu0 0
  %3614 = vmatprep.subr.bf16.mxu0 0
  %3615 = vmatpush1.bf16.msra.mxu0 0
  %3616 = vmatprep.subr.bf16.mxu0 0
  %3617 = vmatpush1.bf16.msra.mxu0 0
  %3618 = vmatprep.subr.bf16.mxu0 0
  %3619 = vmatpush1.bf16.msra.mxu0 %v3599
  %3620 = vmatprep.subr.bf16.mxu0 0
  %3621 = vmatpush1.bf16.msra.mxu0 %v3598
  %3622 = vmatprep.subr.bf16.mxu0 0
  %3623 = vmatpush1.bf16.msra.mxu0 %v3597
  %3624 = vmatprep.subr.bf16.mxu0 0
  %3625 = vmatpush1.bf16.msra.mxu0 %v3596
  %3626 = vmatprep.subr.bf16.mxu0 0
  %3627 = vmatpush2.bf16.msra.mxu0 0
  %3628 = vmatprep.subr.bf16.mxu0 0
  %3629 = vmatpush2.bf16.msra.mxu0 0
  %3630 = vmatprep.subr.bf16.mxu0 0
  %3631 = vmatpush2.bf16.msra.mxu0 0
  %3632 = vmatprep.subr.bf16.mxu0 0
  %3633 = vmatpush2.bf16.msra.mxu0 0
  %3634 = vmatprep.subr.bf16.mxu0 0
  %3635 = vmatpush2.bf16.msra.mxu0 0
  %3636 = vmatprep.subr.bf16.mxu0 0
  %3637 = vmatpush2.bf16.msra.mxu0 0
  %3638 = vmatprep.subr.bf16.mxu0 0
  %3639 = vmatpush2.bf16.msra.mxu0 0
  %3640 = vmatprep.subr.bf16.mxu0 0
  %3641 = vmatpush2.bf16.msra.mxu0 0
  %3642 = vmatprep.mubr.bf16.mxu0 0
  %3643 = vmatmul.mubr.bf16.gmra.mxu0 %v3605
  %v3644 = vpop.f32.mrf.mxu0
  %v3645 = vadd.f32 %v3566, %v3644
  %v3646 = vpop.f32.mrf.mxu0
  %v3647 = vpop.f32.mrf.mxu0
  %v3648 = vadd.f32 %v3569, %v3647
  %v3649 = vpop.f32.mrf.mxu0
  %3650 = vmatprep.mubr.bf16.mxu0 0
  %3651 = vmatmul.mubr.bf16.gmra.mxu0 %v3608
  %v3652 = vpop.f32.mrf.mxu0
  %v3653 = vadd.f32 %v3574, %v3652
  %v3654 = vpop.f32.mrf.mxu0
  %v3655 = vpop.f32.mrf.mxu0
  %v3656 = vadd.f32 %v3577, %v3655
  %v3657 = vpop.f32.mrf.mxu0
  %3658 = vdwg.mxu0
  %s3659 = scalar_lea.vmem %s1, 320
  %v3660 = vld [vmem:[%s3659] sm:$0xf]
  %v3661 = vld [vmem:[%s3659 + $0x4] sm:$0xf]
  %v3662 = vld [vmem:[%s3659 + $0x8] sm:$0xf]
  %v3663 = vld [vmem:[%s3659 + $0xc] sm:$0xf]
  %v3668 = vunpack.c.l.b16 %v3660
  %v3669 = vunpack.c.l.b16 %v3661
  %v3670 = vunpack.c.l.b16 %v3662
  %v3671 = vunpack.c.l.b16 %v3663
  %v3672 = vpack.c.b16 %v3669, %v3668
  %v3673 = vpack.c.b16 %v3671, %v3670
  %v3675 = vsel %vm175, %v3672, 0
  %v3678 = vsel %vm175, %v3673, 0
  %3680 = vmatprep.subr.bf16.mxu0 0
  %3681 = vmatpush1.bf16.msra.mxu0 0
  %3682 = vmatprep.subr.bf16.mxu0 0
  %3683 = vmatpush1.bf16.msra.mxu0 0
  %3684 = vmatprep.subr.bf16.mxu0 0
  %3685 = vmatpush1.bf16.msra.mxu0 0
  %3686 = vmatprep.subr.bf16.mxu0 0
  %3687 = vmatpush1.bf16.msra.mxu0 0
  %3688 = vmatprep.subr.bf16.mxu0 0
  %3689 = vmatpush1.bf16.msra.mxu0 0
  %3690 = vmatprep.subr.bf16.mxu0 0
  %3691 = vmatpush1.bf16.msra.mxu0 0
  %3692 = vmatprep.subr.bf16.mxu0 0
  %3693 = vmatpush1.bf16.msra.mxu0 %v68
  %3694 = vmatprep.subr.bf16.mxu0 0
  %3695 = vmatpush1.bf16.msra.mxu0 %v67
  %3696 = vmatprep.subr.bf16.mxu0 0
  %3697 = vmatpush2.bf16.msra.mxu0 0
  %3698 = vmatprep.subr.bf16.mxu0 0
  %3699 = vmatpush2.bf16.msra.mxu0 0
  %3700 = vmatprep.subr.bf16.mxu0 0
  %3701 = vmatpush2.bf16.msra.mxu0 0
  %3702 = vmatprep.subr.bf16.mxu0 0
  %3703 = vmatpush2.bf16.msra.mxu0 0
  %3704 = vmatprep.subr.bf16.mxu0 0
  %3705 = vmatpush2.bf16.msra.mxu0 0
  %3706 = vmatprep.subr.bf16.mxu0 0
  %3707 = vmatpush2.bf16.msra.mxu0 0
  %3708 = vmatprep.subr.bf16.mxu0 0
  %3709 = vmatpush2.bf16.msra.mxu0 0
  %3710 = vmatprep.subr.bf16.mxu0 0
  %3711 = vmatpush2.bf16.msra.mxu0 0
  %3712 = vmatprep.mubr.bf16.mxu0 0
  %3713 = vmatmul.mubr.bf16.gmra.mxu0 %v3675
  %v3714 = vpop.f32.mrf.mxu0
  %v3715 = vadd.f32 0.0, %v3714
  %v3716 = vpop.f32.mrf.mxu0
  %v3717 = vpop.f32.mrf.mxu0
  %v3718 = vadd.f32 0.0, %v3717
  %v3719 = vpop.f32.mrf.mxu0
  %3720 = vmatprep.mubr.bf16.mxu0 0
  %3721 = vmatmul.mubr.bf16.gmra.mxu0 %v3678
  %v3722 = vpop.f32.mrf.mxu0
  %v3723 = vadd.f32 0.0, %v3722
  %v3724 = vpop.f32.mrf.mxu0
  %v3725 = vpop.f32.mrf.mxu0
  %v3726 = vadd.f32 0.0, %v3725
  %v3727 = vpop.f32.mrf.mxu0
  %3728 = vdwg.mxu0
  %v3729 = vpack.c.bf16 %v3718, %v3715
  %v3730 = vpack.c.bf16 %v3726, %v3723
  %s3731 = scalar_lea.vmem %s3, 640
  %v3732 = vld [vmem:[%s3731] sm:$0xf]
  %v3733 = vld [vmem:[%s3731 + $0x4] sm:$0xf]
  %v3734 = vld [vmem:[%s3731 + $0x8] sm:$0xf]
  %v3735 = vld [vmem:[%s3731 + $0xc] sm:$0xf]
  %v3736 = vld [vmem:[%s3731 + $0x10] sm:$0xf]
  %v3737 = vld [vmem:[%s3731 + $0x14] sm:$0xf]
  %v3738 = vld [vmem:[%s3731 + $0x18] sm:$0xf]
  %v3739 = vld [vmem:[%s3731 + $0x1c] sm:$0xf]
  %v3748 = vunpack.c.l.b16 %v3732
  %v3749 = vunpack.c.l.b16 %v3733
  %v3750 = vunpack.c.l.b16 %v3734
  %v3751 = vunpack.c.l.b16 %v3735
  %v3752 = vunpack.c.l.b16 %v3736
  %v3753 = vunpack.c.l.b16 %v3737
  %v3754 = vunpack.c.l.b16 %v3738
  %v3755 = vunpack.c.l.b16 %v3739
  %v3756 = vpack.c.b16 %v3749, %v3748
  %v3757 = vpack.c.b16 %v3751, %v3750
  %v3758 = vpack.c.b16 %v3753, %v3752
  %v3759 = vpack.c.b16 %v3755, %v3754
  %v3765 = vsel %vm93, %v3729, 0
  %v3768 = vsel %vm93, %v3730, 0
  %3770 = vmatprep.subr.bf16.mxu0 0
  %3771 = vmatpush1.bf16.msra.mxu0 0
  %3772 = vmatprep.subr.bf16.mxu0 0
  %3773 = vmatpush1.bf16.msra.mxu0 0
  %3774 = vmatprep.subr.bf16.mxu0 0
  %3775 = vmatpush1.bf16.msra.mxu0 0
  %3776 = vmatprep.subr.bf16.mxu0 0
  %3777 = vmatpush1.bf16.msra.mxu0 0
  %3778 = vmatprep.subr.bf16.mxu0 0
  %3779 = vmatpush1.bf16.msra.mxu0 %v3759
  %3780 = vmatprep.subr.bf16.mxu0 0
  %3781 = vmatpush1.bf16.msra.mxu0 %v3758
  %3782 = vmatprep.subr.bf16.mxu0 0
  %3783 = vmatpush1.bf16.msra.mxu0 %v3757
  %3784 = vmatprep.subr.bf16.mxu0 0
  %3785 = vmatpush1.bf16.msra.mxu0 %v3756
  %3786 = vmatprep.subr.bf16.mxu0 0
  %3787 = vmatpush2.bf16.msra.mxu0 0
  %3788 = vmatprep.subr.bf16.mxu0 0
  %3789 = vmatpush2.bf16.msra.mxu0 0
  %3790 = vmatprep.subr.bf16.mxu0 0
  %3791 = vmatpush2.bf16.msra.mxu0 0
  %3792 = vmatprep.subr.bf16.mxu0 0
  %3793 = vmatpush2.bf16.msra.mxu0 0
  %3794 = vmatprep.subr.bf16.mxu0 0
  %3795 = vmatpush2.bf16.msra.mxu0 0
  %3796 = vmatprep.subr.bf16.mxu0 0
  %3797 = vmatpush2.bf16.msra.mxu0 0
  %3798 = vmatprep.subr.bf16.mxu0 0
  %3799 = vmatpush2.bf16.msra.mxu0 0
  %3800 = vmatprep.subr.bf16.mxu0 0
  %3801 = vmatpush2.bf16.msra.mxu0 0
  %3802 = vmatprep.mubr.bf16.mxu0 0
  %3803 = vmatmul.mubr.bf16.gmra.mxu0 %v3765
  %v3804 = vpop.f32.mrf.mxu0
  %v3805 = vadd.f32 0.0, %v3804
  %v3806 = vpop.f32.mrf.mxu0
  %v3807 = vpop.f32.mrf.mxu0
  %v3808 = vadd.f32 0.0, %v3807
  %v3809 = vpop.f32.mrf.mxu0
  %3810 = vmatprep.mubr.bf16.mxu0 0
  %3811 = vmatmul.mubr.bf16.gmra.mxu0 %v3768
  %v3812 = vpop.f32.mrf.mxu0
  %v3813 = vadd.f32 0.0, %v3812
  %v3814 = vpop.f32.mrf.mxu0
  %v3815 = vpop.f32.mrf.mxu0
  %v3816 = vadd.f32 0.0, %v3815
  %v3817 = vpop.f32.mrf.mxu0
  %3818 = vdwg.mxu0
  %v3819 = vadd.f32 %v3645, %v3805
  %v3820 = vadd.f32 %v3648, %v3808
  %v3821 = vadd.f32 %v3653, %v3813
  %v3822 = vadd.f32 %v3656, %v3816
  %s3823 = scalar_lea.vmem %s1, 336
  %v3824 = vld [vmem:[%s3823] sm:$0xf]
  %v3825 = vld [vmem:[%s3823 + $0x4] sm:$0xf]
  %v3826 = vld [vmem:[%s3823 + $0x8] sm:$0xf]
  %v3827 = vld [vmem:[%s3823 + $0xc] sm:$0xf]
  %v3832 = vunpack.c.l.b16 %v3824
  %v3833 = vunpack.c.l.b16 %v3825
  %v3834 = vunpack.c.l.b16 %v3826
  %v3835 = vunpack.c.l.b16 %v3827
  %v3836 = vpack.c.b16 %v3833, %v3832
  %v3837 = vpack.c.b16 %v3835, %v3834
  %v3839 = vsel %vm175, %v3836, 0
  %v3842 = vsel %vm175, %v3837, 0
  %3844 = vmatprep.subr.bf16.mxu0 0
  %3845 = vmatpush1.bf16.msra.mxu0 0
  %3846 = vmatprep.subr.bf16.mxu0 0
  %3847 = vmatpush1.bf16.msra.mxu0 0
  %3848 = vmatprep.subr.bf16.mxu0 0
  %3849 = vmatpush1.bf16.msra.mxu0 0
  %3850 = vmatprep.subr.bf16.mxu0 0
  %3851 = vmatpush1.bf16.msra.mxu0 0
  %3852 = vmatprep.subr.bf16.mxu0 0
  %3853 = vmatpush1.bf16.msra.mxu0 0
  %3854 = vmatprep.subr.bf16.mxu0 0
  %3855 = vmatpush1.bf16.msra.mxu0 0
  %3856 = vmatprep.subr.bf16.mxu0 0
  %3857 = vmatpush1.bf16.msra.mxu0 %v68
  %3858 = vmatprep.subr.bf16.mxu0 0
  %3859 = vmatpush1.bf16.msra.mxu0 %v67
  %3860 = vmatprep.subr.bf16.mxu0 0
  %3861 = vmatpush2.bf16.msra.mxu0 0
  %3862 = vmatprep.subr.bf16.mxu0 0
  %3863 = vmatpush2.bf16.msra.mxu0 0
  %3864 = vmatprep.subr.bf16.mxu0 0
  %3865 = vmatpush2.bf16.msra.mxu0 0
  %3866 = vmatprep.subr.bf16.mxu0 0
  %3867 = vmatpush2.bf16.msra.mxu0 0
  %3868 = vmatprep.subr.bf16.mxu0 0
  %3869 = vmatpush2.bf16.msra.mxu0 0
  %3870 = vmatprep.subr.bf16.mxu0 0
  %3871 = vmatpush2.bf16.msra.mxu0 0
  %3872 = vmatprep.subr.bf16.mxu0 0
  %3873 = vmatpush2.bf16.msra.mxu0 0
  %3874 = vmatprep.subr.bf16.mxu0 0
  %3875 = vmatpush2.bf16.msra.mxu0 0
  %3876 = vmatprep.mubr.bf16.mxu0 0
  %3877 = vmatmul.mubr.bf16.gmra.mxu0 %v3839
  %v3878 = vpop.f32.mrf.mxu0
  %v3879 = vadd.f32 0.0, %v3878
  %v3880 = vpop.f32.mrf.mxu0
  %v3881 = vpop.f32.mrf.mxu0
  %v3882 = vadd.f32 0.0, %v3881
  %v3883 = vpop.f32.mrf.mxu0
  %3884 = vmatprep.mubr.bf16.mxu0 0
  %3885 = vmatmul.mubr.bf16.gmra.mxu0 %v3842
  %v3886 = vpop.f32.mrf.mxu0
  %v3887 = vadd.f32 0.0, %v3886
  %v3888 = vpop.f32.mrf.mxu0
  %v3889 = vpop.f32.mrf.mxu0
  %v3890 = vadd.f32 0.0, %v3889
  %v3891 = vpop.f32.mrf.mxu0
  %3892 = vdwg.mxu0
  %v3893 = vpack.c.bf16 %v3882, %v3879
  %v3894 = vpack.c.bf16 %v3890, %v3887
  %s3895 = scalar_lea.vmem %s3, 672
  %v3896 = vld [vmem:[%s3895] sm:$0xf]
  %v3897 = vld [vmem:[%s3895 + $0x4] sm:$0xf]
  %v3898 = vld [vmem:[%s3895 + $0x8] sm:$0xf]
  %v3899 = vld [vmem:[%s3895 + $0xc] sm:$0xf]
  %v3900 = vld [vmem:[%s3895 + $0x10] sm:$0xf]
  %v3901 = vld [vmem:[%s3895 + $0x14] sm:$0xf]
  %v3902 = vld [vmem:[%s3895 + $0x18] sm:$0xf]
  %v3903 = vld [vmem:[%s3895 + $0x1c] sm:$0xf]
  %v3912 = vunpack.c.l.b16 %v3896
  %v3913 = vunpack.c.l.b16 %v3897
  %v3914 = vunpack.c.l.b16 %v3898
  %v3915 = vunpack.c.l.b16 %v3899
  %v3916 = vunpack.c.l.b16 %v3900
  %v3917 = vunpack.c.l.b16 %v3901
  %v3918 = vunpack.c.l.b16 %v3902
  %v3919 = vunpack.c.l.b16 %v3903
  %v3920 = vpack.c.b16 %v3913, %v3912
  %v3921 = vpack.c.b16 %v3915, %v3914
  %v3922 = vpack.c.b16 %v3917, %v3916
  %v3923 = vpack.c.b16 %v3919, %v3918
  %v3929 = vsel %vm93, %v3893, 0
  %v3932 = vsel %vm93, %v3894, 0
  %3934 = vmatprep.subr.bf16.mxu0 0
  %3935 = vmatpush1.bf16.msra.mxu0 0
  %3936 = vmatprep.subr.bf16.mxu0 0
  %3937 = vmatpush1.bf16.msra.mxu0 0
  %3938 = vmatprep.subr.bf16.mxu0 0
  %3939 = vmatpush1.bf16.msra.mxu0 0
  %3940 = vmatprep.subr.bf16.mxu0 0
  %3941 = vmatpush1.bf16.msra.mxu0 0
  %3942 = vmatprep.subr.bf16.mxu0 0
  %3943 = vmatpush1.bf16.msra.mxu0 %v3923
  %3944 = vmatprep.subr.bf16.mxu0 0
  %3945 = vmatpush1.bf16.msra.mxu0 %v3922
  %3946 = vmatprep.subr.bf16.mxu0 0
  %3947 = vmatpush1.bf16.msra.mxu0 %v3921
  %3948 = vmatprep.subr.bf16.mxu0 0
  %3949 = vmatpush1.bf16.msra.mxu0 %v3920
  %3950 = vmatprep.subr.bf16.mxu0 0
  %3951 = vmatpush2.bf16.msra.mxu0 0
  %3952 = vmatprep.subr.bf16.mxu0 0
  %3953 = vmatpush2.bf16.msra.mxu0 0
  %3954 = vmatprep.subr.bf16.mxu0 0
  %3955 = vmatpush2.bf16.msra.mxu0 0
  %3956 = vmatprep.subr.bf16.mxu0 0
  %3957 = vmatpush2.bf16.msra.mxu0 0
  %3958 = vmatprep.subr.bf16.mxu0 0
  %3959 = vmatpush2.bf16.msra.mxu0 0
  %3960 = vmatprep.subr.bf16.mxu0 0
  %3961 = vmatpush2.bf16.msra.mxu0 0
  %3962 = vmatprep.subr.bf16.mxu0 0
  %3963 = vmatpush2.bf16.msra.mxu0 0
  %3964 = vmatprep.subr.bf16.mxu0 0
  %3965 = vmatpush2.bf16.msra.mxu0 0
  %3966 = vmatprep.mubr.bf16.mxu0 0
  %3967 = vmatmul.mubr.bf16.gmra.mxu0 %v3929
  %v3968 = vpop.f32.mrf.mxu0
  %v3969 = vadd.f32 0.0, %v3968
  %v3970 = vpop.f32.mrf.mxu0
  %v3971 = vpop.f32.mrf.mxu0
  %v3972 = vadd.f32 0.0, %v3971
  %v3973 = vpop.f32.mrf.mxu0
  %3974 = vmatprep.mubr.bf16.mxu0 0
  %3975 = vmatmul.mubr.bf16.gmra.mxu0 %v3932
  %v3976 = vpop.f32.mrf.mxu0
  %v3977 = vadd.f32 0.0, %v3976
  %v3978 = vpop.f32.mrf.mxu0
  %v3979 = vpop.f32.mrf.mxu0
  %v3980 = vadd.f32 0.0, %v3979
  %v3981 = vpop.f32.mrf.mxu0
  %3982 = vdwg.mxu0
  %v3983 = vadd.f32 %v3819, %v3969
  %v3984 = vadd.f32 %v3820, %v3972
  %v3985 = vadd.f32 %v3821, %v3977
  %v3986 = vadd.f32 %v3822, %v3980
  %s3987 = scalar_lea.vmem %s1, 352
  %v3988 = vld [vmem:[%s3987] sm:$0xf]
  %v3989 = vld [vmem:[%s3987 + $0x4] sm:$0xf]
  %v3990 = vld [vmem:[%s3987 + $0x8] sm:$0xf]
  %v3991 = vld [vmem:[%s3987 + $0xc] sm:$0xf]
  %v3996 = vunpack.c.l.b16 %v3988
  %v3997 = vunpack.c.l.b16 %v3989
  %v3998 = vunpack.c.l.b16 %v3990
  %v3999 = vunpack.c.l.b16 %v3991
  %v4000 = vpack.c.b16 %v3997, %v3996
  %v4001 = vpack.c.b16 %v3999, %v3998
  %v4003 = vsel %vm175, %v4000, 0
  %v4006 = vsel %vm175, %v4001, 0
  %4008 = vmatprep.subr.bf16.mxu0 0
  %4009 = vmatpush1.bf16.msra.mxu0 0
  %4010 = vmatprep.subr.bf16.mxu0 0
  %4011 = vmatpush1.bf16.msra.mxu0 0
  %4012 = vmatprep.subr.bf16.mxu0 0
  %4013 = vmatpush1.bf16.msra.mxu0 0
  %4014 = vmatprep.subr.bf16.mxu0 0
  %4015 = vmatpush1.bf16.msra.mxu0 0
  %4016 = vmatprep.subr.bf16.mxu0 0
  %4017 = vmatpush1.bf16.msra.mxu0 0
  %4018 = vmatprep.subr.bf16.mxu0 0
  %4019 = vmatpush1.bf16.msra.mxu0 0
  %4020 = vmatprep.subr.bf16.mxu0 0
  %4021 = vmatpush1.bf16.msra.mxu0 %v68
  %4022 = vmatprep.subr.bf16.mxu0 0
  %4023 = vmatpush1.bf16.msra.mxu0 %v67
  %4024 = vmatprep.subr.bf16.mxu0 0
  %4025 = vmatpush2.bf16.msra.mxu0 0
  %4026 = vmatprep.subr.bf16.mxu0 0
  %4027 = vmatpush2.bf16.msra.mxu0 0
  %4028 = vmatprep.subr.bf16.mxu0 0
  %4029 = vmatpush2.bf16.msra.mxu0 0
  %4030 = vmatprep.subr.bf16.mxu0 0
  %4031 = vmatpush2.bf16.msra.mxu0 0
  %4032 = vmatprep.subr.bf16.mxu0 0
  %4033 = vmatpush2.bf16.msra.mxu0 0
  %4034 = vmatprep.subr.bf16.mxu0 0
  %4035 = vmatpush2.bf16.msra.mxu0 0
  %4036 = vmatprep.subr.bf16.mxu0 0
  %4037 = vmatpush2.bf16.msra.mxu0 0
  %4038 = vmatprep.subr.bf16.mxu0 0
  %4039 = vmatpush2.bf16.msra.mxu0 0
  %4040 = vmatprep.mubr.bf16.mxu0 0
  %4041 = vmatmul.mubr.bf16.gmra.mxu0 %v4003
  %v4042 = vpop.f32.mrf.mxu0
  %v4043 = vadd.f32 0.0, %v4042
  %v4044 = vpop.f32.mrf.mxu0
  %v4045 = vpop.f32.mrf.mxu0
  %v4046 = vadd.f32 0.0, %v4045
  %v4047 = vpop.f32.mrf.mxu0
  %4048 = vmatprep.mubr.bf16.mxu0 0
  %4049 = vmatmul.mubr.bf16.gmra.mxu0 %v4006
  %v4050 = vpop.f32.mrf.mxu0
  %v4051 = vadd.f32 0.0, %v4050
  %v4052 = vpop.f32.mrf.mxu0
  %v4053 = vpop.f32.mrf.mxu0
  %v4054 = vadd.f32 0.0, %v4053
  %v4055 = vpop.f32.mrf.mxu0
  %4056 = vdwg.mxu0
  %v4057 = vpack.c.bf16 %v4046, %v4043
  %v4058 = vpack.c.bf16 %v4054, %v4051
  %s4059 = scalar_lea.vmem %s3, 704
  %v4060 = vld [vmem:[%s4059] sm:$0xf]
  %v4061 = vld [vmem:[%s4059 + $0x4] sm:$0xf]
  %v4062 = vld [vmem:[%s4059 + $0x8] sm:$0xf]
  %v4063 = vld [vmem:[%s4059 + $0xc] sm:$0xf]
  %v4064 = vld [vmem:[%s4059 + $0x10] sm:$0xf]
  %v4065 = vld [vmem:[%s4059 + $0x14] sm:$0xf]
  %v4066 = vld [vmem:[%s4059 + $0x18] sm:$0xf]
  %v4067 = vld [vmem:[%s4059 + $0x1c] sm:$0xf]
  %v4076 = vunpack.c.l.b16 %v4060
  %v4077 = vunpack.c.l.b16 %v4061
  %v4078 = vunpack.c.l.b16 %v4062
  %v4079 = vunpack.c.l.b16 %v4063
  %v4080 = vunpack.c.l.b16 %v4064
  %v4081 = vunpack.c.l.b16 %v4065
  %v4082 = vunpack.c.l.b16 %v4066
  %v4083 = vunpack.c.l.b16 %v4067
  %v4084 = vpack.c.b16 %v4077, %v4076
  %v4085 = vpack.c.b16 %v4079, %v4078
  %v4086 = vpack.c.b16 %v4081, %v4080
  %v4087 = vpack.c.b16 %v4083, %v4082
  %v4093 = vsel %vm93, %v4057, 0
  %v4096 = vsel %vm93, %v4058, 0
  %4098 = vmatprep.subr.bf16.mxu0 0
  %4099 = vmatpush1.bf16.msra.mxu0 0
  %4100 = vmatprep.subr.bf16.mxu0 0
  %4101 = vmatpush1.bf16.msra.mxu0 0
  %4102 = vmatprep.subr.bf16.mxu0 0
  %4103 = vmatpush1.bf16.msra.mxu0 0
  %4104 = vmatprep.subr.bf16.mxu0 0
  %4105 = vmatpush1.bf16.msra.mxu0 0
  %4106 = vmatprep.subr.bf16.mxu0 0
  %4107 = vmatpush1.bf16.msra.mxu0 %v4087
  %4108 = vmatprep.subr.bf16.mxu0 0
  %4109 = vmatpush1.bf16.msra.mxu0 %v4086
  %4110 = vmatprep.subr.bf16.mxu0 0
  %4111 = vmatpush1.bf16.msra.mxu0 %v4085
  %4112 = vmatprep.subr.bf16.mxu0 0
  %4113 = vmatpush1.bf16.msra.mxu0 %v4084
  %4114 = vmatprep.subr.bf16.mxu0 0
  %4115 = vmatpush2.bf16.msra.mxu0 0
  %4116 = vmatprep.subr.bf16.mxu0 0
  %4117 = vmatpush2.bf16.msra.mxu0 0
  %4118 = vmatprep.subr.bf16.mxu0 0
  %4119 = vmatpush2.bf16.msra.mxu0 0
  %4120 = vmatprep.subr.bf16.mxu0 0
  %4121 = vmatpush2.bf16.msra.mxu0 0
  %4122 = vmatprep.subr.bf16.mxu0 0
  %4123 = vmatpush2.bf16.msra.mxu0 0
  %4124 = vmatprep.subr.bf16.mxu0 0
  %4125 = vmatpush2.bf16.msra.mxu0 0
  %4126 = vmatprep.subr.bf16.mxu0 0
  %4127 = vmatpush2.bf16.msra.mxu0 0
  %4128 = vmatprep.subr.bf16.mxu0 0
  %4129 = vmatpush2.bf16.msra.mxu0 0
  %4130 = vmatprep.mubr.bf16.mxu0 0
  %4131 = vmatmul.mubr.bf16.gmra.mxu0 %v4093
  %v4132 = vpop.f32.mrf.mxu0
  %v4133 = vadd.f32 0.0, %v4132
  %v4134 = vpop.f32.mrf.mxu0
  %v4135 = vpop.f32.mrf.mxu0
  %v4136 = vadd.f32 0.0, %v4135
  %v4137 = vpop.f32.mrf.mxu0
  %4138 = vmatprep.mubr.bf16.mxu0 0
  %4139 = vmatmul.mubr.bf16.gmra.mxu0 %v4096
  %v4140 = vpop.f32.mrf.mxu0
  %v4141 = vadd.f32 0.0, %v4140
  %v4142 = vpop.f32.mrf.mxu0
  %v4143 = vpop.f32.mrf.mxu0
  %v4144 = vadd.f32 0.0, %v4143
  %v4145 = vpop.f32.mrf.mxu0
  %4146 = vdwg.mxu0
  %v4147 = vadd.f32 %v3983, %v4133
  %v4148 = vadd.f32 %v3984, %v4136
  %v4149 = vadd.f32 %v3985, %v4141
  %v4150 = vadd.f32 %v3986, %v4144
  %s4151 = scalar_lea.vmem %s1, 368
  %v4152 = vld [vmem:[%s4151] sm:$0xf]
  %v4153 = vld [vmem:[%s4151 + $0x4] sm:$0xf]
  %v4154 = vld [vmem:[%s4151 + $0x8] sm:$0xf]
  %v4155 = vld [vmem:[%s4151 + $0xc] sm:$0xf]
  %v4160 = vunpack.c.l.b16 %v4152
  %v4161 = vunpack.c.l.b16 %v4153
  %v4162 = vunpack.c.l.b16 %v4154
  %v4163 = vunpack.c.l.b16 %v4155
  %v4164 = vpack.c.b16 %v4161, %v4160
  %v4165 = vpack.c.b16 %v4163, %v4162
  %v4167 = vsel %vm175, %v4164, 0
  %v4170 = vsel %vm175, %v4165, 0
  %4172 = vmatprep.subr.bf16.mxu0 0
  %4173 = vmatpush1.bf16.msra.mxu0 0
  %4174 = vmatprep.subr.bf16.mxu0 0
  %4175 = vmatpush1.bf16.msra.mxu0 0
  %4176 = vmatprep.subr.bf16.mxu0 0
  %4177 = vmatpush1.bf16.msra.mxu0 0
  %4178 = vmatprep.subr.bf16.mxu0 0
  %4179 = vmatpush1.bf16.msra.mxu0 0
  %4180 = vmatprep.subr.bf16.mxu0 0
  %4181 = vmatpush1.bf16.msra.mxu0 0
  %4182 = vmatprep.subr.bf16.mxu0 0
  %4183 = vmatpush1.bf16.msra.mxu0 0
  %4184 = vmatprep.subr.bf16.mxu0 0
  %4185 = vmatpush1.bf16.msra.mxu0 %v68
  %4186 = vmatprep.subr.bf16.mxu0 0
  %4187 = vmatpush1.bf16.msra.mxu0 %v67
  %4188 = vmatprep.subr.bf16.mxu0 0
  %4189 = vmatpush2.bf16.msra.mxu0 0
  %4190 = vmatprep.subr.bf16.mxu0 0
  %4191 = vmatpush2.bf16.msra.mxu0 0
  %4192 = vmatprep.subr.bf16.mxu0 0
  %4193 = vmatpush2.bf16.msra.mxu0 0
  %4194 = vmatprep.subr.bf16.mxu0 0
  %4195 = vmatpush2.bf16.msra.mxu0 0
  %4196 = vmatprep.subr.bf16.mxu0 0
  %4197 = vmatpush2.bf16.msra.mxu0 0
  %4198 = vmatprep.subr.bf16.mxu0 0
  %4199 = vmatpush2.bf16.msra.mxu0 0
  %4200 = vmatprep.subr.bf16.mxu0 0
  %4201 = vmatpush2.bf16.msra.mxu0 0
  %4202 = vmatprep.subr.bf16.mxu0 0
  %4203 = vmatpush2.bf16.msra.mxu0 0
  %4204 = vmatprep.mubr.bf16.mxu0 0
  %4205 = vmatmul.mubr.bf16.gmra.mxu0 %v4167
  %v4206 = vpop.f32.mrf.mxu0
  %v4207 = vadd.f32 0.0, %v4206
  %v4208 = vpop.f32.mrf.mxu0
  %v4209 = vpop.f32.mrf.mxu0
  %v4210 = vadd.f32 0.0, %v4209
  %v4211 = vpop.f32.mrf.mxu0
  %4212 = vmatprep.mubr.bf16.mxu0 0
  %4213 = vmatmul.mubr.bf16.gmra.mxu0 %v4170
  %v4214 = vpop.f32.mrf.mxu0
  %v4215 = vadd.f32 0.0, %v4214
  %v4216 = vpop.f32.mrf.mxu0
  %v4217 = vpop.f32.mrf.mxu0
  %v4218 = vadd.f32 0.0, %v4217
  %v4219 = vpop.f32.mrf.mxu0
  %4220 = vdwg.mxu0
  %v4221 = vpack.c.bf16 %v4210, %v4207
  %v4222 = vpack.c.bf16 %v4218, %v4215
  %s4223 = scalar_lea.vmem %s3, 736
  %v4224 = vld [vmem:[%s4223] sm:$0xf]
  %v4225 = vld [vmem:[%s4223 + $0x4] sm:$0xf]
  %v4226 = vld [vmem:[%s4223 + $0x8] sm:$0xf]
  %v4227 = vld [vmem:[%s4223 + $0xc] sm:$0xf]
  %v4228 = vld [vmem:[%s4223 + $0x10] sm:$0xf]
  %v4229 = vld [vmem:[%s4223 + $0x14] sm:$0xf]
  %v4230 = vld [vmem:[%s4223 + $0x18] sm:$0xf]
  %v4231 = vld [vmem:[%s4223 + $0x1c] sm:$0xf]
  %v4240 = vunpack.c.l.b16 %v4224
  %v4241 = vunpack.c.l.b16 %v4225
  %v4242 = vunpack.c.l.b16 %v4226
  %v4243 = vunpack.c.l.b16 %v4227
  %v4244 = vunpack.c.l.b16 %v4228
  %v4245 = vunpack.c.l.b16 %v4229
  %v4246 = vunpack.c.l.b16 %v4230
  %v4247 = vunpack.c.l.b16 %v4231
  %v4248 = vpack.c.b16 %v4241, %v4240
  %v4249 = vpack.c.b16 %v4243, %v4242
  %v4250 = vpack.c.b16 %v4245, %v4244
  %v4251 = vpack.c.b16 %v4247, %v4246
  %v4257 = vsel %vm93, %v4221, 0
  %v4260 = vsel %vm93, %v4222, 0
  %4262 = vmatprep.subr.bf16.mxu0 0
  %4263 = vmatpush1.bf16.msra.mxu0 0
  %4264 = vmatprep.subr.bf16.mxu0 0
  %4265 = vmatpush1.bf16.msra.mxu0 0
  %4266 = vmatprep.subr.bf16.mxu0 0
  %4267 = vmatpush1.bf16.msra.mxu0 0
  %4268 = vmatprep.subr.bf16.mxu0 0
  %4269 = vmatpush1.bf16.msra.mxu0 0
  %4270 = vmatprep.subr.bf16.mxu0 0
  %4271 = vmatpush1.bf16.msra.mxu0 %v4251
  %4272 = vmatprep.subr.bf16.mxu0 0
  %4273 = vmatpush1.bf16.msra.mxu0 %v4250
  %4274 = vmatprep.subr.bf16.mxu0 0
  %4275 = vmatpush1.bf16.msra.mxu0 %v4249
  %4276 = vmatprep.subr.bf16.mxu0 0
  %4277 = vmatpush1.bf16.msra.mxu0 %v4248
  %4278 = vmatprep.subr.bf16.mxu0 0
  %4279 = vmatpush2.bf16.msra.mxu0 0
  %4280 = vmatprep.subr.bf16.mxu0 0
  %4281 = vmatpush2.bf16.msra.mxu0 0
  %4282 = vmatprep.subr.bf16.mxu0 0
  %4283 = vmatpush2.bf16.msra.mxu0 0
  %4284 = vmatprep.subr.bf16.mxu0 0
  %4285 = vmatpush2.bf16.msra.mxu0 0
  %4286 = vmatprep.subr.bf16.mxu0 0
  %4287 = vmatpush2.bf16.msra.mxu0 0
  %4288 = vmatprep.subr.bf16.mxu0 0
  %4289 = vmatpush2.bf16.msra.mxu0 0
  %4290 = vmatprep.subr.bf16.mxu0 0
  %4291 = vmatpush2.bf16.msra.mxu0 0
  %4292 = vmatprep.subr.bf16.mxu0 0
  %4293 = vmatpush2.bf16.msra.mxu0 0
  %4294 = vmatprep.mubr.bf16.mxu0 0
  %4295 = vmatmul.mubr.bf16.gmra.mxu0 %v4257
  %v4296 = vpop.f32.mrf.mxu0
  %v4297 = vadd.f32 0.0, %v4296
  %v4298 = vpop.f32.mrf.mxu0
  %v4299 = vpop.f32.mrf.mxu0
  %v4300 = vadd.f32 0.0, %v4299
  %v4301 = vpop.f32.mrf.mxu0
  %4302 = vmatprep.mubr.bf16.mxu0 0
  %4303 = vmatmul.mubr.bf16.gmra.mxu0 %v4260
  %v4304 = vpop.f32.mrf.mxu0
  %v4305 = vadd.f32 0.0, %v4304
  %v4306 = vpop.f32.mrf.mxu0
  %v4307 = vpop.f32.mrf.mxu0
  %v4308 = vadd.f32 0.0, %v4307
  %v4309 = vpop.f32.mrf.mxu0
  %4310 = vdwg.mxu0
  %v4311 = vadd.f32 %v4147, %v4297
  %v4312 = vadd.f32 %v4148, %v4300
  %v4313 = vadd.f32 %v4149, %v4305
  %v4314 = vadd.f32 %v4150, %v4308
  %s4315 = scalar_lea.vmem %s1, 384
  %v4316 = vld [vmem:[%s4315] sm:$0xf]
  %v4317 = vld [vmem:[%s4315 + $0x4] sm:$0xf]
  %v4318 = vld [vmem:[%s4315 + $0x8] sm:$0xf]
  %v4319 = vld [vmem:[%s4315 + $0xc] sm:$0xf]
  %v4324 = vunpack.c.l.b16 %v4316
  %v4325 = vunpack.c.l.b16 %v4317
  %v4326 = vunpack.c.l.b16 %v4318
  %v4327 = vunpack.c.l.b16 %v4319
  %v4328 = vpack.c.b16 %v4325, %v4324
  %v4329 = vpack.c.b16 %v4327, %v4326
  %v4331 = vsel %vm175, %v4328, 0
  %v4334 = vsel %vm175, %v4329, 0
  %4336 = vmatprep.subr.bf16.mxu0 0
  %4337 = vmatpush1.bf16.msra.mxu0 0
  %4338 = vmatprep.subr.bf16.mxu0 0
  %4339 = vmatpush1.bf16.msra.mxu0 0
  %4340 = vmatprep.subr.bf16.mxu0 0
  %4341 = vmatpush1.bf16.msra.mxu0 0
  %4342 = vmatprep.subr.bf16.mxu0 0
  %4343 = vmatpush1.bf16.msra.mxu0 0
  %4344 = vmatprep.subr.bf16.mxu0 0
  %4345 = vmatpush1.bf16.msra.mxu0 0
  %4346 = vmatprep.subr.bf16.mxu0 0
  %4347 = vmatpush1.bf16.msra.mxu0 0
  %4348 = vmatprep.subr.bf16.mxu0 0
  %4349 = vmatpush1.bf16.msra.mxu0 %v68
  %4350 = vmatprep.subr.bf16.mxu0 0
  %4351 = vmatpush1.bf16.msra.mxu0 %v67
  %4352 = vmatprep.subr.bf16.mxu0 0
  %4353 = vmatpush2.bf16.msra.mxu0 0
  %4354 = vmatprep.subr.bf16.mxu0 0
  %4355 = vmatpush2.bf16.msra.mxu0 0
  %4356 = vmatprep.subr.bf16.mxu0 0
  %4357 = vmatpush2.bf16.msra.mxu0 0
  %4358 = vmatprep.subr.bf16.mxu0 0
  %4359 = vmatpush2.bf16.msra.mxu0 0
  %4360 = vmatprep.subr.bf16.mxu0 0
  %4361 = vmatpush2.bf16.msra.mxu0 0
  %4362 = vmatprep.subr.bf16.mxu0 0
  %4363 = vmatpush2.bf16.msra.mxu0 0
  %4364 = vmatprep.subr.bf16.mxu0 0
  %4365 = vmatpush2.bf16.msra.mxu0 0
  %4366 = vmatprep.subr.bf16.mxu0 0
  %4367 = vmatpush2.bf16.msra.mxu0 0
  %4368 = vmatprep.mubr.bf16.mxu0 0
  %4369 = vmatmul.mubr.bf16.gmra.mxu0 %v4331
  %v4370 = vpop.f32.mrf.mxu0
  %v4371 = vadd.f32 0.0, %v4370
  %v4372 = vpop.f32.mrf.mxu0
  %v4373 = vpop.f32.mrf.mxu0
  %v4374 = vadd.f32 0.0, %v4373
  %v4375 = vpop.f32.mrf.mxu0
  %4376 = vmatprep.mubr.bf16.mxu0 0
  %4377 = vmatmul.mubr.bf16.gmra.mxu0 %v4334
  %v4378 = vpop.f32.mrf.mxu0
  %v4379 = vadd.f32 0.0, %v4378
  %v4380 = vpop.f32.mrf.mxu0
  %v4381 = vpop.f32.mrf.mxu0
  %v4382 = vadd.f32 0.0, %v4381
  %v4383 = vpop.f32.mrf.mxu0
  %4384 = vdwg.mxu0
  %v4385 = vpack.c.bf16 %v4374, %v4371
  %v4386 = vpack.c.bf16 %v4382, %v4379
  %s4387 = scalar_lea.vmem %s3, 768
  %v4388 = vld [vmem:[%s4387] sm:$0xf]
  %v4389 = vld [vmem:[%s4387 + $0x4] sm:$0xf]
  %v4390 = vld [vmem:[%s4387 + $0x8] sm:$0xf]
  %v4391 = vld [vmem:[%s4387 + $0xc] sm:$0xf]
  %v4392 = vld [vmem:[%s4387 + $0x10] sm:$0xf]
  %v4393 = vld [vmem:[%s4387 + $0x14] sm:$0xf]
  %v4394 = vld [vmem:[%s4387 + $0x18] sm:$0xf]
  %v4395 = vld [vmem:[%s4387 + $0x1c] sm:$0xf]
  %v4404 = vunpack.c.l.b16 %v4388
  %v4405 = vunpack.c.l.b16 %v4389
  %v4406 = vunpack.c.l.b16 %v4390
  %v4407 = vunpack.c.l.b16 %v4391
  %v4408 = vunpack.c.l.b16 %v4392
  %v4409 = vunpack.c.l.b16 %v4393
  %v4410 = vunpack.c.l.b16 %v4394
  %v4411 = vunpack.c.l.b16 %v4395
  %v4412 = vpack.c.b16 %v4405, %v4404
  %v4413 = vpack.c.b16 %v4407, %v4406
  %v4414 = vpack.c.b16 %v4409, %v4408
  %v4415 = vpack.c.b16 %v4411, %v4410
  %v4421 = vsel %vm93, %v4385, 0
  %v4424 = vsel %vm93, %v4386, 0
  %4426 = vmatprep.subr.bf16.mxu0 0
  %4427 = vmatpush1.bf16.msra.mxu0 0
  %4428 = vmatprep.subr.bf16.mxu0 0
  %4429 = vmatpush1.bf16.msra.mxu0 0
  %4430 = vmatprep.subr.bf16.mxu0 0
  %4431 = vmatpush1.bf16.msra.mxu0 0
  %4432 = vmatprep.subr.bf16.mxu0 0
  %4433 = vmatpush1.bf16.msra.mxu0 0
  %4434 = vmatprep.subr.bf16.mxu0 0
  %4435 = vmatpush1.bf16.msra.mxu0 %v4415
  %4436 = vmatprep.subr.bf16.mxu0 0
  %4437 = vmatpush1.bf16.msra.mxu0 %v4414
  %4438 = vmatprep.subr.bf16.mxu0 0
  %4439 = vmatpush1.bf16.msra.mxu0 %v4413
  %4440 = vmatprep.subr.bf16.mxu0 0
  %4441 = vmatpush1.bf16.msra.mxu0 %v4412
  %4442 = vmatprep.subr.bf16.mxu0 0
  %4443 = vmatpush2.bf16.msra.mxu0 0
  %4444 = vmatprep.subr.bf16.mxu0 0
  %4445 = vmatpush2.bf16.msra.mxu0 0
  %4446 = vmatprep.subr.bf16.mxu0 0
  %4447 = vmatpush2.bf16.msra.mxu0 0
  %4448 = vmatprep.subr.bf16.mxu0 0
  %4449 = vmatpush2.bf16.msra.mxu0 0
  %4450 = vmatprep.subr.bf16.mxu0 0
  %4451 = vmatpush2.bf16.msra.mxu0 0
  %4452 = vmatprep.subr.bf16.mxu0 0
  %4453 = vmatpush2.bf16.msra.mxu0 0
  %4454 = vmatprep.subr.bf16.mxu0 0
  %4455 = vmatpush2.bf16.msra.mxu0 0
  %4456 = vmatprep.subr.bf16.mxu0 0
  %4457 = vmatpush2.bf16.msra.mxu0 0
  %4458 = vmatprep.mubr.bf16.mxu0 0
  %4459 = vmatmul.mubr.bf16.gmra.mxu0 %v4421
  %v4460 = vpop.f32.mrf.mxu0
  %v4461 = vadd.f32 0.0, %v4460
  %v4462 = vpop.f32.mrf.mxu0
  %v4463 = vpop.f32.mrf.mxu0
  %v4464 = vadd.f32 0.0, %v4463
  %v4465 = vpop.f32.mrf.mxu0
  %4466 = vmatprep.mubr.bf16.mxu0 0
  %4467 = vmatmul.mubr.bf16.gmra.mxu0 %v4424
  %v4468 = vpop.f32.mrf.mxu0
  %v4469 = vadd.f32 0.0, %v4468
  %v4470 = vpop.f32.mrf.mxu0
  %v4471 = vpop.f32.mrf.mxu0
  %v4472 = vadd.f32 0.0, %v4471
  %v4473 = vpop.f32.mrf.mxu0
  %4474 = vdwg.mxu0
  %v4475 = vadd.f32 %v4311, %v4461
  %v4476 = vadd.f32 %v4312, %v4464
  %v4477 = vadd.f32 %v4313, %v4469
  %v4478 = vadd.f32 %v4314, %v4472
  %s4479 = scalar_lea.vmem %s1, 400
  %v4480 = vld [vmem:[%s4479] sm:$0xf]
  %v4481 = vld [vmem:[%s4479 + $0x4] sm:$0xf]
  %v4482 = vld [vmem:[%s4479 + $0x8] sm:$0xf]
  %v4483 = vld [vmem:[%s4479 + $0xc] sm:$0xf]
  %v4488 = vunpack.c.l.b16 %v4480
  %v4489 = vunpack.c.l.b16 %v4481
  %v4490 = vunpack.c.l.b16 %v4482
  %v4491 = vunpack.c.l.b16 %v4483
  %v4492 = vpack.c.b16 %v4489, %v4488
  %v4493 = vpack.c.b16 %v4491, %v4490
  %v4495 = vsel %vm175, %v4492, 0
  %v4498 = vsel %vm175, %v4493, 0
  %4500 = vmatprep.subr.bf16.mxu0 0
  %4501 = vmatpush1.bf16.msra.mxu0 0
  %4502 = vmatprep.subr.bf16.mxu0 0
  %4503 = vmatpush1.bf16.msra.mxu0 0
  %4504 = vmatprep.subr.bf16.mxu0 0
  %4505 = vmatpush1.bf16.msra.mxu0 0
  %4506 = vmatprep.subr.bf16.mxu0 0
  %4507 = vmatpush1.bf16.msra.mxu0 0
  %4508 = vmatprep.subr.bf16.mxu0 0
  %4509 = vmatpush1.bf16.msra.mxu0 0
  %4510 = vmatprep.subr.bf16.mxu0 0
  %4511 = vmatpush1.bf16.msra.mxu0 0
  %4512 = vmatprep.subr.bf16.mxu0 0
  %4513 = vmatpush1.bf16.msra.mxu0 %v68
  %4514 = vmatprep.subr.bf16.mxu0 0
  %4515 = vmatpush1.bf16.msra.mxu0 %v67
  %4516 = vmatprep.subr.bf16.mxu0 0
  %4517 = vmatpush2.bf16.msra.mxu0 0
  %4518 = vmatprep.subr.bf16.mxu0 0
  %4519 = vmatpush2.bf16.msra.mxu0 0
  %4520 = vmatprep.subr.bf16.mxu0 0
  %4521 = vmatpush2.bf16.msra.mxu0 0
  %4522 = vmatprep.subr.bf16.mxu0 0
  %4523 = vmatpush2.bf16.msra.mxu0 0
  %4524 = vmatprep.subr.bf16.mxu0 0
  %4525 = vmatpush2.bf16.msra.mxu0 0
  %4526 = vmatprep.subr.bf16.mxu0 0
  %4527 = vmatpush2.bf16.msra.mxu0 0
  %4528 = vmatprep.subr.bf16.mxu0 0
  %4529 = vmatpush2.bf16.msra.mxu0 0
  %4530 = vmatprep.subr.bf16.mxu0 0
  %4531 = vmatpush2.bf16.msra.mxu0 0
  %4532 = vmatprep.mubr.bf16.mxu0 0
  %4533 = vmatmul.mubr.bf16.gmra.mxu0 %v4495
  %v4534 = vpop.f32.mrf.mxu0
  %v4535 = vadd.f32 0.0, %v4534
  %v4536 = vpop.f32.mrf.mxu0
  %v4537 = vpop.f32.mrf.mxu0
  %v4538 = vadd.f32 0.0, %v4537
  %v4539 = vpop.f32.mrf.mxu0
  %4540 = vmatprep.mubr.bf16.mxu0 0
  %4541 = vmatmul.mubr.bf16.gmra.mxu0 %v4498
  %v4542 = vpop.f32.mrf.mxu0
  %v4543 = vadd.f32 0.0, %v4542
  %v4544 = vpop.f32.mrf.mxu0
  %v4545 = vpop.f32.mrf.mxu0
  %v4546 = vadd.f32 0.0, %v4545
  %v4547 = vpop.f32.mrf.mxu0
  %4548 = vdwg.mxu0
  %v4549 = vpack.c.bf16 %v4538, %v4535
  %v4550 = vpack.c.bf16 %v4546, %v4543
  %s4551 = scalar_lea.vmem %s3, 800
  %v4552 = vld [vmem:[%s4551] sm:$0xf]
  %v4553 = vld [vmem:[%s4551 + $0x4] sm:$0xf]
  %v4554 = vld [vmem:[%s4551 + $0x8] sm:$0xf]
  %v4555 = vld [vmem:[%s4551 + $0xc] sm:$0xf]
  %v4556 = vld [vmem:[%s4551 + $0x10] sm:$0xf]
  %v4557 = vld [vmem:[%s4551 + $0x14] sm:$0xf]
  %v4558 = vld [vmem:[%s4551 + $0x18] sm:$0xf]
  %v4559 = vld [vmem:[%s4551 + $0x1c] sm:$0xf]
  %v4568 = vunpack.c.l.b16 %v4552
  %v4569 = vunpack.c.l.b16 %v4553
  %v4570 = vunpack.c.l.b16 %v4554
  %v4571 = vunpack.c.l.b16 %v4555
  %v4572 = vunpack.c.l.b16 %v4556
  %v4573 = vunpack.c.l.b16 %v4557
  %v4574 = vunpack.c.l.b16 %v4558
  %v4575 = vunpack.c.l.b16 %v4559
  %v4576 = vpack.c.b16 %v4569, %v4568
  %v4577 = vpack.c.b16 %v4571, %v4570
  %v4578 = vpack.c.b16 %v4573, %v4572
  %v4579 = vpack.c.b16 %v4575, %v4574
  %v4585 = vsel %vm93, %v4549, 0
  %v4588 = vsel %vm93, %v4550, 0
  %4590 = vmatprep.subr.bf16.mxu0 0
  %4591 = vmatpush1.bf16.msra.mxu0 0
  %4592 = vmatprep.subr.bf16.mxu0 0
  %4593 = vmatpush1.bf16.msra.mxu0 0
  %4594 = vmatprep.subr.bf16.mxu0 0
  %4595 = vmatpush1.bf16.msra.mxu0 0
  %4596 = vmatprep.subr.bf16.mxu0 0
  %4597 = vmatpush1.bf16.msra.mxu0 0
  %4598 = vmatprep.subr.bf16.mxu0 0
  %4599 = vmatpush1.bf16.msra.mxu0 %v4579
  %4600 = vmatprep.subr.bf16.mxu0 0
  %4601 = vmatpush1.bf16.msra.mxu0 %v4578
  %4602 = vmatprep.subr.bf16.mxu0 0
  %4603 = vmatpush1.bf16.msra.mxu0 %v4577
  %4604 = vmatprep.subr.bf16.mxu0 0
  %4605 = vmatpush1.bf16.msra.mxu0 %v4576
  %4606 = vmatprep.subr.bf16.mxu0 0
  %4607 = vmatpush2.bf16.msra.mxu0 0
  %4608 = vmatprep.subr.bf16.mxu0 0
  %4609 = vmatpush2.bf16.msra.mxu0 0
  %4610 = vmatprep.subr.bf16.mxu0 0
  %4611 = vmatpush2.bf16.msra.mxu0 0
  %4612 = vmatprep.subr.bf16.mxu0 0
  %4613 = vmatpush2.bf16.msra.mxu0 0
  %4614 = vmatprep.subr.bf16.mxu0 0
  %4615 = vmatpush2.bf16.msra.mxu0 0
  %4616 = vmatprep.subr.bf16.mxu0 0
  %4617 = vmatpush2.bf16.msra.mxu0 0
  %4618 = vmatprep.subr.bf16.mxu0 0
  %4619 = vmatpush2.bf16.msra.mxu0 0
  %4620 = vmatprep.subr.bf16.mxu0 0
  %4621 = vmatpush2.bf16.msra.mxu0 0
  %4622 = vmatprep.mubr.bf16.mxu0 0
  %4623 = vmatmul.mubr.bf16.gmra.mxu0 %v4585
  %v4624 = vpop.f32.mrf.mxu0
  %v4625 = vadd.f32 0.0, %v4624
  %v4626 = vpop.f32.mrf.mxu0
  %v4627 = vpop.f32.mrf.mxu0
  %v4628 = vadd.f32 0.0, %v4627
  %v4629 = vpop.f32.mrf.mxu0
  %4630 = vmatprep.mubr.bf16.mxu0 0
  %4631 = vmatmul.mubr.bf16.gmra.mxu0 %v4588
  %v4632 = vpop.f32.mrf.mxu0
  %v4633 = vadd.f32 0.0, %v4632
  %v4634 = vpop.f32.mrf.mxu0
  %v4635 = vpop.f32.mrf.mxu0
  %v4636 = vadd.f32 0.0, %v4635
  %v4637 = vpop.f32.mrf.mxu0
  %4638 = vdwg.mxu0
  %v4639 = vadd.f32 %v4475, %v4625
  %v4640 = vadd.f32 %v4476, %v4628
  %v4641 = vadd.f32 %v4477, %v4633
  %v4642 = vadd.f32 %v4478, %v4636
  %s4643 = scalar_lea.vmem %s1, 416
  %v4644 = vld [vmem:[%s4643] sm:$0xf]
  %v4645 = vld [vmem:[%s4643 + $0x4] sm:$0xf]
  %v4646 = vld [vmem:[%s4643 + $0x8] sm:$0xf]
  %v4647 = vld [vmem:[%s4643 + $0xc] sm:$0xf]
  %v4652 = vunpack.c.l.b16 %v4644
  %v4653 = vunpack.c.l.b16 %v4645
  %v4654 = vunpack.c.l.b16 %v4646
  %v4655 = vunpack.c.l.b16 %v4647
  %v4656 = vpack.c.b16 %v4653, %v4652
  %v4657 = vpack.c.b16 %v4655, %v4654
  %v4659 = vsel %vm175, %v4656, 0
  %v4662 = vsel %vm175, %v4657, 0
  %4664 = vmatprep.subr.bf16.mxu0 0
  %4665 = vmatpush1.bf16.msra.mxu0 0
  %4666 = vmatprep.subr.bf16.mxu0 0
  %4667 = vmatpush1.bf16.msra.mxu0 0
  %4668 = vmatprep.subr.bf16.mxu0 0
  %4669 = vmatpush1.bf16.msra.mxu0 0
  %4670 = vmatprep.subr.bf16.mxu0 0
  %4671 = vmatpush1.bf16.msra.mxu0 0
  %4672 = vmatprep.subr.bf16.mxu0 0
  %4673 = vmatpush1.bf16.msra.mxu0 0
  %4674 = vmatprep.subr.bf16.mxu0 0
  %4675 = vmatpush1.bf16.msra.mxu0 0
  %4676 = vmatprep.subr.bf16.mxu0 0
  %4677 = vmatpush1.bf16.msra.mxu0 %v68
  %4678 = vmatprep.subr.bf16.mxu0 0
  %4679 = vmatpush1.bf16.msra.mxu0 %v67
  %4680 = vmatprep.subr.bf16.mxu0 0
  %4681 = vmatpush2.bf16.msra.mxu0 0
  %4682 = vmatprep.subr.bf16.mxu0 0
  %4683 = vmatpush2.bf16.msra.mxu0 0
  %4684 = vmatprep.subr.bf16.mxu0 0
  %4685 = vmatpush2.bf16.msra.mxu0 0
  %4686 = vmatprep.subr.bf16.mxu0 0
  %4687 = vmatpush2.bf16.msra.mxu0 0
  %4688 = vmatprep.subr.bf16.mxu0 0
  %4689 = vmatpush2.bf16.msra.mxu0 0
  %4690 = vmatprep.subr.bf16.mxu0 0
  %4691 = vmatpush2.bf16.msra.mxu0 0
  %4692 = vmatprep.subr.bf16.mxu0 0
  %4693 = vmatpush2.bf16.msra.mxu0 0
  %4694 = vmatprep.subr.bf16.mxu0 0
  %4695 = vmatpush2.bf16.msra.mxu0 0
  %4696 = vmatprep.mubr.bf16.mxu0 0
  %4697 = vmatmul.mubr.bf16.gmra.mxu0 %v4659
  %v4698 = vpop.f32.mrf.mxu0
  %v4699 = vadd.f32 0.0, %v4698
  %v4700 = vpop.f32.mrf.mxu0
  %v4701 = vpop.f32.mrf.mxu0
  %v4702 = vadd.f32 0.0, %v4701
  %v4703 = vpop.f32.mrf.mxu0
  %4704 = vmatprep.mubr.bf16.mxu0 0
  %4705 = vmatmul.mubr.bf16.gmra.mxu0 %v4662
  %v4706 = vpop.f32.mrf.mxu0
  %v4707 = vadd.f32 0.0, %v4706
  %v4708 = vpop.f32.mrf.mxu0
  %v4709 = vpop.f32.mrf.mxu0
  %v4710 = vadd.f32 0.0, %v4709
  %v4711 = vpop.f32.mrf.mxu0
  %4712 = vdwg.mxu0
  %v4713 = vpack.c.bf16 %v4702, %v4699
  %v4714 = vpack.c.bf16 %v4710, %v4707
  %s4715 = scalar_lea.vmem %s3, 832
  %v4716 = vld [vmem:[%s4715] sm:$0xf]
  %v4717 = vld [vmem:[%s4715 + $0x4] sm:$0xf]
  %v4718 = vld [vmem:[%s4715 + $0x8] sm:$0xf]
  %v4719 = vld [vmem:[%s4715 + $0xc] sm:$0xf]
  %v4720 = vld [vmem:[%s4715 + $0x10] sm:$0xf]
  %v4721 = vld [vmem:[%s4715 + $0x14] sm:$0xf]
  %v4722 = vld [vmem:[%s4715 + $0x18] sm:$0xf]
  %v4723 = vld [vmem:[%s4715 + $0x1c] sm:$0xf]
  %v4732 = vunpack.c.l.b16 %v4716
  %v4733 = vunpack.c.l.b16 %v4717
  %v4734 = vunpack.c.l.b16 %v4718
  %v4735 = vunpack.c.l.b16 %v4719
  %v4736 = vunpack.c.l.b16 %v4720
  %v4737 = vunpack.c.l.b16 %v4721
  %v4738 = vunpack.c.l.b16 %v4722
  %v4739 = vunpack.c.l.b16 %v4723
  %v4740 = vpack.c.b16 %v4733, %v4732
  %v4741 = vpack.c.b16 %v4735, %v4734
  %v4742 = vpack.c.b16 %v4737, %v4736
  %v4743 = vpack.c.b16 %v4739, %v4738
  %v4749 = vsel %vm93, %v4713, 0
  %v4752 = vsel %vm93, %v4714, 0
  %4754 = vmatprep.subr.bf16.mxu0 0
  %4755 = vmatpush1.bf16.msra.mxu0 0
  %4756 = vmatprep.subr.bf16.mxu0 0
  %4757 = vmatpush1.bf16.msra.mxu0 0
  %4758 = vmatprep.subr.bf16.mxu0 0
  %4759 = vmatpush1.bf16.msra.mxu0 0
  %4760 = vmatprep.subr.bf16.mxu0 0
  %4761 = vmatpush1.bf16.msra.mxu0 0
  %4762 = vmatprep.subr.bf16.mxu0 0
  %4763 = vmatpush1.bf16.msra.mxu0 %v4743
  %4764 = vmatprep.subr.bf16.mxu0 0
  %4765 = vmatpush1.bf16.msra.mxu0 %v4742
  %4766 = vmatprep.subr.bf16.mxu0 0
  %4767 = vmatpush1.bf16.msra.mxu0 %v4741
  %4768 = vmatprep.subr.bf16.mxu0 0
  %4769 = vmatpush1.bf16.msra.mxu0 %v4740
  %4770 = vmatprep.subr.bf16.mxu0 0
  %4771 = vmatpush2.bf16.msra.mxu0 0
  %4772 = vmatprep.subr.bf16.mxu0 0
  %4773 = vmatpush2.bf16.msra.mxu0 0
  %4774 = vmatprep.subr.bf16.mxu0 0
  %4775 = vmatpush2.bf16.msra.mxu0 0
  %4776 = vmatprep.subr.bf16.mxu0 0
  %4777 = vmatpush2.bf16.msra.mxu0 0
  %4778 = vmatprep.subr.bf16.mxu0 0
  %4779 = vmatpush2.bf16.msra.mxu0 0
  %4780 = vmatprep.subr.bf16.mxu0 0
  %4781 = vmatpush2.bf16.msra.mxu0 0
  %4782 = vmatprep.subr.bf16.mxu0 0
  %4783 = vmatpush2.bf16.msra.mxu0 0
  %4784 = vmatprep.subr.bf16.mxu0 0
  %4785 = vmatpush2.bf16.msra.mxu0 0
  %4786 = vmatprep.mubr.bf16.mxu0 0
  %4787 = vmatmul.mubr.bf16.gmra.mxu0 %v4749
  %v4788 = vpop.f32.mrf.mxu0
  %v4789 = vadd.f32 0.0, %v4788
  %v4790 = vpop.f32.mrf.mxu0
  %v4791 = vpop.f32.mrf.mxu0
  %v4792 = vadd.f32 0.0, %v4791
  %v4793 = vpop.f32.mrf.mxu0
  %4794 = vmatprep.mubr.bf16.mxu0 0
  %4795 = vmatmul.mubr.bf16.gmra.mxu0 %v4752
  %v4796 = vpop.f32.mrf.mxu0
  %v4797 = vadd.f32 0.0, %v4796
  %v4798 = vpop.f32.mrf.mxu0
  %v4799 = vpop.f32.mrf.mxu0
  %v4800 = vadd.f32 0.0, %v4799
  %v4801 = vpop.f32.mrf.mxu0
  %4802 = vdwg.mxu0
  %v4803 = vadd.f32 %v4639, %v4789
  %v4804 = vadd.f32 %v4640, %v4792
  %v4805 = vadd.f32 %v4641, %v4797
  %v4806 = vadd.f32 %v4642, %v4800
  %v4807 = vld [vmem:[%s8 + $0x3] sm:$0x1]
  %v4808 = vlaneseq
  %v4809 = vshrl.u32 %v4808, 7
  %v4810 = vsub.s32 0, %v4809
  %v4811 = vrot.slane %v4807, %v4810
  %v4812 = vadd.f32 %v4803, %v4811
  %v4813 = vadd.f32 %v4804, %v4811
  %v4814 = vadd.f32 %v4805, %v4811
  %v4815 = vadd.f32 %v4806, %v4811
  %v4816 = vmax.f32 %v4812, 0.0
  %v4817 = vmax.f32 %v4813, 0.0
  %v4818 = vmax.f32 %v4814, 0.0
  %v4819 = vmax.f32 %v4815, 0.0
  %v4820 = vpack.c.bf16 %v4817, %v4816
  %v4821 = vpack.c.bf16 %v4819, %v4818
  %v4822 = vld [vmem:[%s5 + $0x30] sm:$0xf]
  %v4823 = vld [vmem:[%s5 + $0x34] sm:$0xf]
  %v4824 = vld [vmem:[%s5 + $0x38] sm:$0xf]
  %v4825 = vld [vmem:[%s5 + $0x3c] sm:$0xf]
  %v4830 = vunpack.c.l.b16 %v4822
  %v4831 = vunpack.c.l.b16 %v4823
  %v4832 = vunpack.c.l.b16 %v4824
  %v4833 = vunpack.c.l.b16 %v4825
  %v4834 = vpack.c.b16 %v4831, %v4830
  %v4835 = vpack.c.b16 %v4833, %v4832
  %v4839 = vsel %vm175, %v4820, 0
  %v4842 = vsel %vm175, %v4821, 0
  %4844 = vmatprep.subr.bf16.mxu0 0
  %4845 = vmatpush1.bf16.msra.mxu0 0
  %4846 = vmatprep.subr.bf16.mxu0 0
  %4847 = vmatpush1.bf16.msra.mxu0 0
  %4848 = vmatprep.subr.bf16.mxu0 0
  %4849 = vmatpush1.bf16.msra.mxu0 0
  %4850 = vmatprep.subr.bf16.mxu0 0
  %4851 = vmatpush1.bf16.msra.mxu0 0
  %4852 = vmatprep.subr.bf16.mxu0 0
  %4853 = vmatpush1.bf16.msra.mxu0 0
  %4854 = vmatprep.subr.bf16.mxu0 0
  %4855 = vmatpush1.bf16.msra.mxu0 0
  %4856 = vmatprep.subr.bf16.mxu0 0
  %4857 = vmatpush1.bf16.msra.mxu0 %v4835
  %4858 = vmatprep.subr.bf16.mxu0 0
  %4859 = vmatpush1.bf16.msra.mxu0 %v4834
  %4860 = vmatprep.subr.bf16.mxu0 0
  %4861 = vmatpush2.bf16.msra.mxu0 0
  %4862 = vmatprep.subr.bf16.mxu0 0
  %4863 = vmatpush2.bf16.msra.mxu0 0
  %4864 = vmatprep.subr.bf16.mxu0 0
  %4865 = vmatpush2.bf16.msra.mxu0 0
  %4866 = vmatprep.subr.bf16.mxu0 0
  %4867 = vmatpush2.bf16.msra.mxu0 0
  %4868 = vmatprep.subr.bf16.mxu0 0
  %4869 = vmatpush2.bf16.msra.mxu0 0
  %4870 = vmatprep.subr.bf16.mxu0 0
  %4871 = vmatpush2.bf16.msra.mxu0 0
  %4872 = vmatprep.subr.bf16.mxu0 0
  %4873 = vmatpush2.bf16.msra.mxu0 0
  %4874 = vmatprep.subr.bf16.mxu0 0
  %4875 = vmatpush2.bf16.msra.mxu0 0
  %4876 = vmatprep.mubr.bf16.mxu0 0
  %4877 = vmatmul.mubr.bf16.gmra.mxu0 %v4839
  %v4878 = vpop.f32.mrf.mxu0
  %v4879 = vadd.f32 0.0, %v4878
  %v4880 = vpop.f32.mrf.mxu0
  %v4881 = vpop.f32.mrf.mxu0
  %v4882 = vadd.f32 0.0, %v4881
  %v4883 = vpop.f32.mrf.mxu0
  %4884 = vmatprep.mubr.bf16.mxu0 0
  %4885 = vmatmul.mubr.bf16.gmra.mxu0 %v4842
  %v4886 = vpop.f32.mrf.mxu0
  %v4887 = vadd.f32 0.0, %v4886
  %v4888 = vpop.f32.mrf.mxu0
  %v4889 = vpop.f32.mrf.mxu0
  %v4890 = vadd.f32 0.0, %v4889
  %v4891 = vpop.f32.mrf.mxu0
  %4892 = vdwg.mxu0
  %v4893 = vadd.f32 %v3335, %v4879
  %v4894 = vadd.f32 %v3336, %v4882
  %v4895 = vadd.f32 %v3337, %v4887
  %v4896 = vadd.f32 %v3338, %v4890
  %v4897 = vunpack.c.l.bf16 %v42
  %v4898 = vunpack.c.l.bf16 %v43
  %v4899 = vsel %vm93, %v4897, 0.0
  %v4900 = vsel %vm93, %v4898, 0.0
  %v4901 = vadd.f32 %v4899, %v4900
  %v4902 = vrot.slane %v4901, 4
  %v4903 = vadd.f32 %v4901, %v4902
  %v4904 = vrot.slane %v4903, 2
  %v4905 = vadd.f32 %v4903, %v4904
  %v4906 = vrot.slane %v4905, 1
  %v4907 = vadd.f32 %v4905, %v4906
  %v4908 = vrcp.pop 16.0
  %v4909 = vmul.f32 %v4907, %v4908
  %v4910 = vunpack.c.l.bf16 %v44
  %v4911 = vunpack.c.l.bf16 %v45
  %v4912 = vsel %vm93, %v4910, 0.0
  %v4913 = vsel %vm93, %v4911, 0.0
  %v4914 = vadd.f32 %v4912, %v4913
  %v4915 = vrot.slane %v4914, 4
  %v4916 = vadd.f32 %v4914, %v4915
  %v4917 = vrot.slane %v4916, 2
  %v4918 = vadd.f32 %v4916, %v4917
  %v4919 = vrot.slane %v4918, 1
  %v4920 = vadd.f32 %v4918, %v4919
  %v4921 = vmul.f32 %v4920, %v4908
  %vm4922 = vcmask 1040384
  %v4923 = vsel %vm4922, %v4909, %v4921
  %v4924 = vpack.c.bf16 %v4923, %v4923
  %v4925 = vld [vmem:[%s4] sm:$0xf]
  %v4926 = vld [vmem:[%s4 + $0x4] sm:$0xf]
  %v4927 = vld [vmem:[%s4 + $0x8] sm:$0xf]
  %v4928 = vld [vmem:[%s4 + $0xc] sm:$0xf]
  %v4929 = vld [vmem:[%s4 + $0x10] sm:$0xf]
  %v4930 = vld [vmem:[%s4 + $0x14] sm:$0xf]
  %v4931 = vld [vmem:[%s4 + $0x18] sm:$0xf]
  %v4932 = vld [vmem:[%s4 + $0x1c] sm:$0xf]
  %v4933 = vld [vmem:[%s8 + $0x4] sm:$0x1]
  %v4934 = vlaneseq
  %v4935 = vshrl.u32 %v4934, 7
  %v4936 = vsub.s32 0, %v4935
  %v4937 = vrot.slane %v4933, %v4936
  %v4946 = vunpack.c.l.b16 %v4925
  %v4947 = vunpack.c.l.b16 %v4926
  %v4948 = vunpack.c.l.b16 %v4927
  %v4949 = vunpack.c.l.b16 %v4928
  %v4950 = vunpack.c.l.b16 %v4929
  %v4951 = vunpack.c.l.b16 %v4930
  %v4952 = vunpack.c.l.b16 %v4931
  %v4953 = vunpack.c.l.b16 %v4932
  %v4954 = vpack.c.b16 %v4947, %v4946
  %v4955 = vpack.c.b16 %v4949, %v4948
  %v4956 = vpack.c.b16 %v4951, %v4950
  %v4957 = vpack.c.b16 %v4953, %v4952
  %v4963 = vsel %vm93, %v4924, 0
  %4965 = vmatprep.subr.bf16.mxu0 0
  %4966 = vmatpush1.bf16.msra.mxu0 0
  %4967 = vmatprep.subr.bf16.mxu0 0
  %4968 = vmatpush1.bf16.msra.mxu0 0
  %4969 = vmatprep.subr.bf16.mxu0 0
  %4970 = vmatpush1.bf16.msra.mxu0 0
  %4971 = vmatprep.subr.bf16.mxu0 0
  %4972 = vmatpush1.bf16.msra.mxu0 0
  %4973 = vmatprep.subr.bf16.mxu0 0
  %4974 = vmatpush1.bf16.msra.mxu0 %v4957
  %4975 = vmatprep.subr.bf16.mxu0 0
  %4976 = vmatpush1.bf16.msra.mxu0 %v4956
  %4977 = vmatprep.subr.bf16.mxu0 0
  %4978 = vmatpush1.bf16.msra.mxu0 %v4955
  %4979 = vmatprep.subr.bf16.mxu0 0
  %4980 = vmatpush1.bf16.msra.mxu0 %v4954
  %4981 = vmatprep.subr.bf16.mxu0 0
  %4982 = vmatpush2.bf16.msra.mxu0 0
  %4983 = vmatprep.subr.bf16.mxu0 0
  %4984 = vmatpush2.bf16.msra.mxu0 0
  %4985 = vmatprep.subr.bf16.mxu0 0
  %4986 = vmatpush2.bf16.msra.mxu0 0
  %4987 = vmatprep.subr.bf16.mxu0 0
  %4988 = vmatpush2.bf16.msra.mxu0 0
  %4989 = vmatprep.subr.bf16.mxu0 0
  %4990 = vmatpush2.bf16.msra.mxu0 0
  %4991 = vmatprep.subr.bf16.mxu0 0
  %4992 = vmatpush2.bf16.msra.mxu0 0
  %4993 = vmatprep.subr.bf16.mxu0 0
  %4994 = vmatpush2.bf16.msra.mxu0 0
  %4995 = vmatprep.subr.bf16.mxu0 0
  %4996 = vmatpush2.bf16.msra.mxu0 0
  %4997 = vmatprep.mubr.bf16.mxu0 0
  %4998 = vmatmul.mubr.bf16.gmra.mxu0 %v4963
  %v4999 = vpop.f32.mrf.mxu0
  %v5000 = vadd.f32 %v4937, %v4999
  %v5001 = vpop.f32.mrf.mxu0
  %v5002 = vpop.f32.mrf.mxu0
  %v5003 = vpop.f32.mrf.mxu0
  %5004 = vdwg.mxu0
  %v5005 = vmax.f32 %v5000, 0.0
  %v5006 = vpack.c.bf16 %v5005, %v5005
  %v5007 = vld [vmem:[%s5 + $0x40] sm:$0xf]
  %v5008 = vld [vmem:[%s5 + $0x44] sm:$0xf]
  %v5009 = vld [vmem:[%s5 + $0x48] sm:$0xf]
  %v5010 = vld [vmem:[%s5 + $0x4c] sm:$0xf]
  %v5015 = vunpack.c.l.b16 %v5007
  %v5016 = vunpack.c.l.b16 %v5008
  %v5017 = vunpack.c.l.b16 %v5009
  %v5018 = vunpack.c.l.b16 %v5010
  %v5019 = vpack.c.b16 %v5016, %v5015
  %v5020 = vpack.c.b16 %v5018, %v5017
  %v5024 = vsel %vm175, %v5006, 0
  %5026 = vmatprep.subr.bf16.mxu0 0
  %5027 = vmatpush1.bf16.msra.mxu0 0
  %5028 = vmatprep.subr.bf16.mxu0 0
  %5029 = vmatpush1.bf16.msra.mxu0 0
  %5030 = vmatprep.subr.bf16.mxu0 0
  %5031 = vmatpush1.bf16.msra.mxu0 0
  %5032 = vmatprep.subr.bf16.mxu0 0
  %5033 = vmatpush1.bf16.msra.mxu0 0
  %5034 = vmatprep.subr.bf16.mxu0 0
  %5035 = vmatpush1.bf16.msra.mxu0 0
  %5036 = vmatprep.subr.bf16.mxu0 0
  %5037 = vmatpush1.bf16.msra.mxu0 0
  %5038 = vmatprep.subr.bf16.mxu0 0
  %5039 = vmatpush1.bf16.msra.mxu0 %v5020
  %5040 = vmatprep.subr.bf16.mxu0 0
  %5041 = vmatpush1.bf16.msra.mxu0 %v5019
  %5042 = vmatprep.subr.bf16.mxu0 0
  %5043 = vmatpush2.bf16.msra.mxu0 0
  %5044 = vmatprep.subr.bf16.mxu0 0
  %5045 = vmatpush2.bf16.msra.mxu0 0
  %5046 = vmatprep.subr.bf16.mxu0 0
  %5047 = vmatpush2.bf16.msra.mxu0 0
  %5048 = vmatprep.subr.bf16.mxu0 0
  %5049 = vmatpush2.bf16.msra.mxu0 0
  %5050 = vmatprep.subr.bf16.mxu0 0
  %5051 = vmatpush2.bf16.msra.mxu0 0
  %5052 = vmatprep.subr.bf16.mxu0 0
  %5053 = vmatpush2.bf16.msra.mxu0 0
  %5054 = vmatprep.subr.bf16.mxu0 0
  %5055 = vmatpush2.bf16.msra.mxu0 0
  %5056 = vmatprep.subr.bf16.mxu0 0
  %5057 = vmatpush2.bf16.msra.mxu0 0
  %5058 = vmatprep.mubr.bf16.mxu0 0
  %5059 = vmatmul.mubr.bf16.gmra.mxu0 %v5024
  %v5060 = vpop.f32.mrf.mxu0
  %v5061 = vadd.f32 0.0, %v5060
  %v5062 = vpop.f32.mrf.mxu0
  %v5063 = vpop.f32.mrf.mxu0
  %v5064 = vpop.f32.mrf.mxu0
  %5065 = vdwg.mxu0
  %v5066 = vlaneseq
  %v5067 = vshrl.u32 %v5066, 7
  %v5068 = vsub.s32 0, %v5067
  %v5069 = vrot.slane %v5061, %v5068
  %v5070 = vlaneseq
  %v5071 = vshrl.u32 %v5070, 7
  %v5072 = vsub.s32 1, %v5071
  %v5073 = vrot.slane %v5061, %v5072
  %v5074 = vadd.f32 %v4893, %v5069
  %v5075 = vadd.f32 %v4894, %v5069
  %v5076 = vadd.f32 %v4895, %v5073
  %v5077 = vadd.f32 %v4896, %v5073
  %v5078 = vld [vmem:[%s8 + $0x5] sm:$0x1]
  %v5079 = vlaneseq
  %v5080 = vshrl.u32 %v5079, 7
  %v5081 = vsub.s32 0, %v5080
  %v5082 = vrot.slane %v5078, %v5081
  %v5083 = vadd.f32 %v5074, %v5082
  %v5084 = vadd.f32 %v5075, %v5082
  %v5085 = vadd.f32 %v5076, %v5082
  %v5086 = vadd.f32 %v5077, %v5082
  %v5087 = vmax.f32 %v5083, 0.0
  %v5088 = vmax.f32 %v5084, 0.0
  %v5089 = vmax.f32 %v5085, 0.0
  %v5090 = vmax.f32 %v5086, 0.0
  %v5091 = vpack.c.bf16 %v5088, %v5087
  %v5092 = vpack.c.bf16 %v5090, %v5089
  %5093 = vmatprep.subr.bf16.mxu0 0
  %5094 = vmatpush1.bf16.msra.mxu0 0
  %5095 = vmatprep.subr.bf16.mxu0 0
  %5096 = vmatpush1.bf16.msra.mxu0 0
  %5097 = vmatprep.subr.bf16.mxu0 0
  %5098 = vmatpush1.bf16.msra.mxu0 0
  %5099 = vmatprep.subr.bf16.mxu0 0
  %5100 = vmatpush1.bf16.msra.mxu0 0
  %5101 = vmatprep.subr.bf16.mxu0 0
  %5102 = vmatpush1.bf16.msra.mxu0 0
  %5103 = vmatprep.subr.bf16.mxu0 0
  %5104 = vmatpush1.bf16.msra.mxu0 0
  %5105 = vmatprep.subr.bf16.mxu0 0
  %5106 = vmatpush1.bf16.msra.mxu0 %v5092
  %5107 = vmatprep.subr.bf16.mxu0 0
  %5108 = vmatpush1.bf16.msra.mxu0 %v5091
  %5109 = vmatprep.subr.bf16.mxu0 0
  %5110 = vmatpush2.bf16.msra.mxu0 0
  %5111 = vmatprep.subr.bf16.mxu0 0
  %5112 = vmatpush2.bf16.msra.mxu0 0
  %5113 = vmatprep.subr.bf16.mxu0 0
  %5114 = vmatpush2.bf16.msra.mxu0 0
  %5115 = vmatprep.subr.bf16.mxu0 0
  %5116 = vmatpush2.bf16.msra.mxu0 0
  %5117 = vmatprep.subr.bf16.mxu0 0
  %5118 = vmatpush2.bf16.msra.mxu0 0
  %5119 = vmatprep.subr.bf16.mxu0 0
  %5120 = vmatpush2.bf16.msra.mxu0 0
  %5121 = vmatprep.subr.bf16.mxu0 0
  %5122 = vmatpush2.bf16.msra.mxu0 0
  %5123 = vmatprep.subr.bf16.mxu0 0
  %5124 = vmatpush2.bf16.msra.mxu0 0
  %5125 = vmatprep.mubr.bf16.mxu0 0
  %5126 = vmatmul.mubr.bf16.gmra.mxu0 %v177
  %v5127 = vpop.f32.mrf.mxu0
  %v5128 = vadd.f32 0.0, %v5127
  %v5129 = vpop.f32.mrf.mxu0
  %v5130 = vpop.f32.mrf.mxu0
  %v5131 = vadd.f32 0.0, %v5130
  %v5132 = vpop.f32.mrf.mxu0
  %5133 = vmatprep.mubr.bf16.mxu0 0
  %5134 = vmatmul.mubr.bf16.gmra.mxu0 %v180
  %v5135 = vpop.f32.mrf.mxu0
  %v5136 = vadd.f32 0.0, %v5135
  %v5137 = vpop.f32.mrf.mxu0
  %v5138 = vpop.f32.mrf.mxu0
  %v5139 = vadd.f32 0.0, %v5138
  %v5140 = vpop.f32.mrf.mxu0
  %5141 = vdwg.mxu0
  %v5142 = vpack.c.bf16 %v5131, %v5128
  %v5143 = vpack.c.bf16 %v5139, %v5136
  %v5144 = vld [vmem:[%s6] sm:$0xf]
  %v5145 = vld [vmem:[%s6 + $0x4] sm:$0xf]
  %v5146 = vld [vmem:[%s6 + $0x8] sm:$0xf]
  %v5147 = vld [vmem:[%s6 + $0xc] sm:$0xf]
  %5148 = vmatprep.subr.bf16.mxu0 0
  %5149 = vmatpush1.bf16.msra.mxu0 0
  %5150 = vmatprep.subr.bf16.mxu0 0
  %5151 = vmatpush1.bf16.msra.mxu0 0
  %5152 = vmatprep.subr.bf16.mxu0 0
  %5153 = vmatpush1.bf16.msra.mxu0 0
  %5154 = vmatprep.subr.bf16.mxu0 0
  %5155 = vmatpush1.bf16.msra.mxu0 0
  %5156 = vmatprep.subr.bf16.mxu0 0
  %5157 = vmatpush1.bf16.msra.mxu0 0
  %5158 = vmatprep.subr.bf16.mxu0 0
  %5159 = vmatpush1.bf16.msra.mxu0 0
  %5160 = vmatprep.subr.bf16.mxu0 0
  %5161 = vmatpush1.bf16.msra.mxu0 %v5092
  %5162 = vmatprep.subr.bf16.mxu0 0
  %5163 = vmatpush1.bf16.msra.mxu0 %v5091
  %5164 = vmatprep.subr.bf16.mxu0 0
  %5165 = vmatpush2.bf16.msra.mxu0 0
  %5166 = vmatprep.subr.bf16.mxu0 0
  %5167 = vmatpush2.bf16.msra.mxu0 0
  %5168 = vmatprep.subr.bf16.mxu0 0
  %5169 = vmatpush2.bf16.msra.mxu0 0
  %5170 = vmatprep.subr.bf16.mxu0 0
  %5171 = vmatpush2.bf16.msra.mxu0 0
  %5172 = vmatprep.subr.bf16.mxu0 0
  %5173 = vmatpush2.bf16.msra.mxu0 0
  %5174 = vmatprep.subr.bf16.mxu0 0
  %5175 = vmatpush2.bf16.msra.mxu0 0
  %5176 = vmatprep.subr.bf16.mxu0 0
  %5177 = vmatpush2.bf16.msra.mxu0 0
  %5178 = vmatprep.subr.bf16.mxu0 0
  %5179 = vmatpush2.bf16.msra.mxu0 0
  %5180 = vmatprep.mubr.bf16.mxu0 0
  %5181 = vmatmul.mubr.bf16.gmra.mxu0 %v257
  %v5182 = vpop.f32.mrf.mxu0
  %v5183 = vadd.f32 0.0, %v5182
  %v5184 = vpop.f32.mrf.mxu0
  %v5185 = vpop.f32.mrf.mxu0
  %v5186 = vadd.f32 0.0, %v5185
  %v5187 = vpop.f32.mrf.mxu0
  %5188 = vmatprep.mubr.bf16.mxu0 0
  %5189 = vmatmul.mubr.bf16.gmra.mxu0 %v260
  %v5190 = vpop.f32.mrf.mxu0
  %v5191 = vadd.f32 0.0, %v5190
  %v5192 = vpop.f32.mrf.mxu0
  %v5193 = vpop.f32.mrf.mxu0
  %v5194 = vadd.f32 0.0, %v5193
  %v5195 = vpop.f32.mrf.mxu0
  %5196 = vdwg.mxu0
  %v5197 = vpack.c.bf16 %v5186, %v5183
  %v5198 = vpack.c.bf16 %v5194, %v5191
  %s5199 = scalar_lea.vmem %s6, 16
  %v5200 = vld [vmem:[%s5199] sm:$0xf]
  %v5201 = vld [vmem:[%s5199 + $0x4] sm:$0xf]
  %v5202 = vld [vmem:[%s5199 + $0x8] sm:$0xf]
  %v5203 = vld [vmem:[%s5199 + $0xc] sm:$0xf]
  %v5208 = vunpack.c.l.b16 %v5200
  %v5209 = vunpack.c.l.b16 %v5201
  %v5210 = vunpack.c.l.b16 %v5202
  %v5211 = vunpack.c.l.b16 %v5203
  %v5212 = vpack.c.b16 %v5209, %v5208
  %v5213 = vpack.c.b16 %v5211, %v5210
  %v5217 = vsel %vm175, %v5197, 0
  %v5220 = vsel %vm175, %v5198, 0
  %5222 = vmatprep.subr.bf16.mxu0 0
  %5223 = vmatpush1.bf16.msra.mxu0 0
  %5224 = vmatprep.subr.bf16.mxu0 0
  %5225 = vmatpush1.bf16.msra.mxu0 0
  %5226 = vmatprep.subr.bf16.mxu0 0
  %5227 = vmatpush1.bf16.msra.mxu0 0
  %5228 = vmatprep.subr.bf16.mxu0 0
  %5229 = vmatpush1.bf16.msra.mxu0 0
  %5230 = vmatprep.subr.bf16.mxu0 0
  %5231 = vmatpush1.bf16.msra.mxu0 0
  %5232 = vmatprep.subr.bf16.mxu0 0
  %5233 = vmatpush1.bf16.msra.mxu0 0
  %5234 = vmatprep.subr.bf16.mxu0 0
  %5235 = vmatpush1.bf16.msra.mxu0 %v5213
  %5236 = vmatprep.subr.bf16.mxu0 0
  %5237 = vmatpush1.bf16.msra.mxu0 %v5212
  %5238 = vmatprep.subr.bf16.mxu0 0
  %5239 = vmatpush2.bf16.msra.mxu0 0
  %5240 = vmatprep.subr.bf16.mxu0 0
  %5241 = vmatpush2.bf16.msra.mxu0 0
  %5242 = vmatprep.subr.bf16.mxu0 0
  %5243 = vmatpush2.bf16.msra.mxu0 0
  %5244 = vmatprep.subr.bf16.mxu0 0
  %5245 = vmatpush2.bf16.msra.mxu0 0
  %5246 = vmatprep.subr.bf16.mxu0 0
  %5247 = vmatpush2.bf16.msra.mxu0 0
  %5248 = vmatprep.subr.bf16.mxu0 0
  %5249 = vmatpush2.bf16.msra.mxu0 0
  %5250 = vmatprep.subr.bf16.mxu0 0
  %5251 = vmatpush2.bf16.msra.mxu0 0
  %5252 = vmatprep.subr.bf16.mxu0 0
  %5253 = vmatpush2.bf16.msra.mxu0 0
  %5254 = vmatprep.mubr.bf16.mxu0 0
  %5255 = vmatmul.mubr.bf16.gmra.mxu0 %v5217
  %v5256 = vpop.f32.mrf.mxu0
  %v5257 = vadd.f32 0.0, %v5256
  %v5258 = vpop.f32.mrf.mxu0
  %v5259 = vpop.f32.mrf.mxu0
  %v5260 = vadd.f32 0.0, %v5259
  %v5261 = vpop.f32.mrf.mxu0
  %5262 = vmatprep.mubr.bf16.mxu0 0
  %5263 = vmatmul.mubr.bf16.gmra.mxu0 %v5220
  %v5264 = vpop.f32.mrf.mxu0
  %v5265 = vadd.f32 0.0, %v5264
  %v5266 = vpop.f32.mrf.mxu0
  %v5267 = vpop.f32.mrf.mxu0
  %v5268 = vadd.f32 0.0, %v5267
  %v5269 = vpop.f32.mrf.mxu0
  %5270 = vdwg.mxu0
  %v5275 = vunpack.c.l.b16 %v5144
  %v5276 = vunpack.c.l.b16 %v5145
  %v5277 = vunpack.c.l.b16 %v5146
  %v5278 = vunpack.c.l.b16 %v5147
  %v5279 = vpack.c.b16 %v5276, %v5275
  %v5280 = vpack.c.b16 %v5278, %v5277
  %v5284 = vsel %vm175, %v5142, 0
  %v5287 = vsel %vm175, %v5143, 0
  %5289 = vmatprep.subr.bf16.mxu0 0
  %5290 = vmatpush1.bf16.msra.mxu0 0
  %5291 = vmatprep.subr.bf16.mxu0 0
  %5292 = vmatpush1.bf16.msra.mxu0 0
  %5293 = vmatprep.subr.bf16.mxu0 0
  %5294 = vmatpush1.bf16.msra.mxu0 0
  %5295 = vmatprep.subr.bf16.mxu0 0
  %5296 = vmatpush1.bf16.msra.mxu0 0
  %5297 = vmatprep.subr.bf16.mxu0 0
  %5298 = vmatpush1.bf16.msra.mxu0 0
  %5299 = vmatprep.subr.bf16.mxu0 0
  %5300 = vmatpush1.bf16.msra.mxu0 0
  %5301 = vmatprep.subr.bf16.mxu0 0
  %5302 = vmatpush1.bf16.msra.mxu0 %v5280
  %5303 = vmatprep.subr.bf16.mxu0 0
  %5304 = vmatpush1.bf16.msra.mxu0 %v5279
  %5305 = vmatprep.subr.bf16.mxu0 0
  %5306 = vmatpush2.bf16.msra.mxu0 0
  %5307 = vmatprep.subr.bf16.mxu0 0
  %5308 = vmatpush2.bf16.msra.mxu0 0
  %5309 = vmatprep.subr.bf16.mxu0 0
  %5310 = vmatpush2.bf16.msra.mxu0 0
  %5311 = vmatprep.subr.bf16.mxu0 0
  %5312 = vmatpush2.bf16.msra.mxu0 0
  %5313 = vmatprep.subr.bf16.mxu0 0
  %5314 = vmatpush2.bf16.msra.mxu0 0
  %5315 = vmatprep.subr.bf16.mxu0 0
  %5316 = vmatpush2.bf16.msra.mxu0 0
  %5317 = vmatprep.subr.bf16.mxu0 0
  %5318 = vmatpush2.bf16.msra.mxu0 0
  %5319 = vmatprep.subr.bf16.mxu0 0
  %5320 = vmatpush2.bf16.msra.mxu0 0
  %5321 = vmatprep.mubr.bf16.mxu0 0
  %5322 = vmatmul.mubr.bf16.gmra.mxu0 %v5284
  %v5323 = vpop.f32.mrf.mxu0
  %v5324 = vadd.f32 %v5257, %v5323
  %v5325 = vpop.f32.mrf.mxu0
  %v5326 = vpop.f32.mrf.mxu0
  %v5327 = vadd.f32 %v5260, %v5326
  %v5328 = vpop.f32.mrf.mxu0
  %5329 = vmatprep.mubr.bf16.mxu0 0
  %5330 = vmatmul.mubr.bf16.gmra.mxu0 %v5287
  %v5331 = vpop.f32.mrf.mxu0
  %v5332 = vadd.f32 %v5265, %v5331
  %v5333 = vpop.f32.mrf.mxu0
  %v5334 = vpop.f32.mrf.mxu0
  %v5335 = vadd.f32 %v5268, %v5334
  %v5336 = vpop.f32.mrf.mxu0
  %5337 = vdwg.mxu0
  %5338 = vmatprep.subr.bf16.mxu0 0
  %5339 = vmatpush1.bf16.msra.mxu0 0
  %5340 = vmatprep.subr.bf16.mxu0 0
  %5341 = vmatpush1.bf16.msra.mxu0 0
  %5342 = vmatprep.subr.bf16.mxu0 0
  %5343 = vmatpush1.bf16.msra.mxu0 0
  %5344 = vmatprep.subr.bf16.mxu0 0
  %5345 = vmatpush1.bf16.msra.mxu0 0
  %5346 = vmatprep.subr.bf16.mxu0 0
  %5347 = vmatpush1.bf16.msra.mxu0 0
  %5348 = vmatprep.subr.bf16.mxu0 0
  %5349 = vmatpush1.bf16.msra.mxu0 0
  %5350 = vmatprep.subr.bf16.mxu0 0
  %5351 = vmatpush1.bf16.msra.mxu0 %v5092
  %5352 = vmatprep.subr.bf16.mxu0 0
  %5353 = vmatpush1.bf16.msra.mxu0 %v5091
  %5354 = vmatprep.subr.bf16.mxu0 0
  %5355 = vmatpush2.bf16.msra.mxu0 0
  %5356 = vmatprep.subr.bf16.mxu0 0
  %5357 = vmatpush2.bf16.msra.mxu0 0
  %5358 = vmatprep.subr.bf16.mxu0 0
  %5359 = vmatpush2.bf16.msra.mxu0 0
  %5360 = vmatprep.subr.bf16.mxu0 0
  %5361 = vmatpush2.bf16.msra.mxu0 0
  %5362 = vmatprep.subr.bf16.mxu0 0
  %5363 = vmatpush2.bf16.msra.mxu0 0
  %5364 = vmatprep.subr.bf16.mxu0 0
  %5365 = vmatpush2.bf16.msra.mxu0 0
  %5366 = vmatprep.subr.bf16.mxu0 0
  %5367 = vmatpush2.bf16.msra.mxu0 0
  %5368 = vmatprep.subr.bf16.mxu0 0
  %5369 = vmatpush2.bf16.msra.mxu0 0
  %5370 = vmatprep.mubr.bf16.mxu0 0
  %5371 = vmatmul.mubr.bf16.gmra.mxu0 %v496
  %v5372 = vpop.f32.mrf.mxu0
  %v5373 = vadd.f32 0.0, %v5372
  %v5374 = vpop.f32.mrf.mxu0
  %v5375 = vpop.f32.mrf.mxu0
  %v5376 = vadd.f32 0.0, %v5375
  %v5377 = vpop.f32.mrf.mxu0
  %5378 = vmatprep.mubr.bf16.mxu0 0
  %5379 = vmatmul.mubr.bf16.gmra.mxu0 %v499
  %v5380 = vpop.f32.mrf.mxu0
  %v5381 = vadd.f32 0.0, %v5380
  %v5382 = vpop.f32.mrf.mxu0
  %v5383 = vpop.f32.mrf.mxu0
  %v5384 = vadd.f32 0.0, %v5383
  %v5385 = vpop.f32.mrf.mxu0
  %5386 = vdwg.mxu0
  %v5387 = vpack.c.bf16 %v5376, %v5373
  %v5388 = vpack.c.bf16 %v5384, %v5381
  %s5389 = scalar_lea.vmem %s6, 32
  %v5390 = vld [vmem:[%s5389] sm:$0xf]
  %v5391 = vld [vmem:[%s5389 + $0x4] sm:$0xf]
  %v5392 = vld [vmem:[%s5389 + $0x8] sm:$0xf]
  %v5393 = vld [vmem:[%s5389 + $0xc] sm:$0xf]
  %v5398 = vunpack.c.l.b16 %v5390
  %v5399 = vunpack.c.l.b16 %v5391
  %v5400 = vunpack.c.l.b16 %v5392
  %v5401 = vunpack.c.l.b16 %v5393
  %v5402 = vpack.c.b16 %v5399, %v5398
  %v5403 = vpack.c.b16 %v5401, %v5400
  %v5407 = vsel %vm175, %v5387, 0
  %v5410 = vsel %vm175, %v5388, 0
  %5412 = vmatprep.subr.bf16.mxu0 0
  %5413 = vmatpush1.bf16.msra.mxu0 0
  %5414 = vmatprep.subr.bf16.mxu0 0
  %5415 = vmatpush1.bf16.msra.mxu0 0
  %5416 = vmatprep.subr.bf16.mxu0 0
  %5417 = vmatpush1.bf16.msra.mxu0 0
  %5418 = vmatprep.subr.bf16.mxu0 0
  %5419 = vmatpush1.bf16.msra.mxu0 0
  %5420 = vmatprep.subr.bf16.mxu0 0
  %5421 = vmatpush1.bf16.msra.mxu0 0
  %5422 = vmatprep.subr.bf16.mxu0 0
  %5423 = vmatpush1.bf16.msra.mxu0 0
  %5424 = vmatprep.subr.bf16.mxu0 0
  %5425 = vmatpush1.bf16.msra.mxu0 %v5403
  %5426 = vmatprep.subr.bf16.mxu0 0
  %5427 = vmatpush1.bf16.msra.mxu0 %v5402
  %5428 = vmatprep.subr.bf16.mxu0 0
  %5429 = vmatpush2.bf16.msra.mxu0 0
  %5430 = vmatprep.subr.bf16.mxu0 0
  %5431 = vmatpush2.bf16.msra.mxu0 0
  %5432 = vmatprep.subr.bf16.mxu0 0
  %5433 = vmatpush2.bf16.msra.mxu0 0
  %5434 = vmatprep.subr.bf16.mxu0 0
  %5435 = vmatpush2.bf16.msra.mxu0 0
  %5436 = vmatprep.subr.bf16.mxu0 0
  %5437 = vmatpush2.bf16.msra.mxu0 0
  %5438 = vmatprep.subr.bf16.mxu0 0
  %5439 = vmatpush2.bf16.msra.mxu0 0
  %5440 = vmatprep.subr.bf16.mxu0 0
  %5441 = vmatpush2.bf16.msra.mxu0 0
  %5442 = vmatprep.subr.bf16.mxu0 0
  %5443 = vmatpush2.bf16.msra.mxu0 0
  %5444 = vmatprep.mubr.bf16.mxu0 0
  %5445 = vmatmul.mubr.bf16.gmra.mxu0 %v5407
  %v5446 = vpop.f32.mrf.mxu0
  %v5447 = vadd.f32 0.0, %v5446
  %v5448 = vpop.f32.mrf.mxu0
  %v5449 = vpop.f32.mrf.mxu0
  %v5450 = vadd.f32 0.0, %v5449
  %v5451 = vpop.f32.mrf.mxu0
  %5452 = vmatprep.mubr.bf16.mxu0 0
  %5453 = vmatmul.mubr.bf16.gmra.mxu0 %v5410
  %v5454 = vpop.f32.mrf.mxu0
  %v5455 = vadd.f32 0.0, %v5454
  %v5456 = vpop.f32.mrf.mxu0
  %v5457 = vpop.f32.mrf.mxu0
  %v5458 = vadd.f32 0.0, %v5457
  %v5459 = vpop.f32.mrf.mxu0
  %5460 = vdwg.mxu0
  %v5461 = vadd.f32 %v5324, %v5447
  %v5462 = vadd.f32 %v5327, %v5450
  %v5463 = vadd.f32 %v5332, %v5455
  %v5464 = vadd.f32 %v5335, %v5458
  %5465 = vmatprep.subr.bf16.mxu0 0
  %5466 = vmatpush1.bf16.msra.mxu0 0
  %5467 = vmatprep.subr.bf16.mxu0 0
  %5468 = vmatpush1.bf16.msra.mxu0 0
  %5469 = vmatprep.subr.bf16.mxu0 0
  %5470 = vmatpush1.bf16.msra.mxu0 0
  %5471 = vmatprep.subr.bf16.mxu0 0
  %5472 = vmatpush1.bf16.msra.mxu0 0
  %5473 = vmatprep.subr.bf16.mxu0 0
  %5474 = vmatpush1.bf16.msra.mxu0 0
  %5475 = vmatprep.subr.bf16.mxu0 0
  %5476 = vmatpush1.bf16.msra.mxu0 0
  %5477 = vmatprep.subr.bf16.mxu0 0
  %5478 = vmatpush1.bf16.msra.mxu0 %v5092
  %5479 = vmatprep.subr.bf16.mxu0 0
  %5480 = vmatpush1.bf16.msra.mxu0 %v5091
  %5481 = vmatprep.subr.bf16.mxu0 0
  %5482 = vmatpush2.bf16.msra.mxu0 0
  %5483 = vmatprep.subr.bf16.mxu0 0
  %5484 = vmatpush2.bf16.msra.mxu0 0
  %5485 = vmatprep.subr.bf16.mxu0 0
  %5486 = vmatpush2.bf16.msra.mxu0 0
  %5487 = vmatprep.subr.bf16.mxu0 0
  %5488 = vmatpush2.bf16.msra.mxu0 0
  %5489 = vmatprep.subr.bf16.mxu0 0
  %5490 = vmatpush2.bf16.msra.mxu0 0
  %5491 = vmatprep.subr.bf16.mxu0 0
  %5492 = vmatpush2.bf16.msra.mxu0 0
  %5493 = vmatprep.subr.bf16.mxu0 0
  %5494 = vmatpush2.bf16.msra.mxu0 0
  %5495 = vmatprep.subr.bf16.mxu0 0
  %5496 = vmatpush2.bf16.msra.mxu0 0
  %5497 = vmatprep.mubr.bf16.mxu0 0
  %5498 = vmatmul.mubr.bf16.gmra.mxu0 %v660
  %v5499 = vpop.f32.mrf.mxu0
  %v5500 = vadd.f32 0.0, %v5499
  %v5501 = vpop.f32.mrf.mxu0
  %v5502 = vpop.f32.mrf.mxu0
  %v5503 = vadd.f32 0.0, %v5502
  %v5504 = vpop.f32.mrf.mxu0
  %5505 = vmatprep.mubr.bf16.mxu0 0
  %5506 = vmatmul.mubr.bf16.gmra.mxu0 %v663
  %v5507 = vpop.f32.mrf.mxu0
  %v5508 = vadd.f32 0.0, %v5507
  %v5509 = vpop.f32.mrf.mxu0
  %v5510 = vpop.f32.mrf.mxu0
  %v5511 = vadd.f32 0.0, %v5510
  %v5512 = vpop.f32.mrf.mxu0
  %5513 = vdwg.mxu0
  %v5514 = vpack.c.bf16 %v5503, %v5500
  %v5515 = vpack.c.bf16 %v5511, %v5508
  %s5516 = scalar_lea.vmem %s6, 48
  %v5517 = vld [vmem:[%s5516] sm:$0xf]
  %v5518 = vld [vmem:[%s5516 + $0x4] sm:$0xf]
  %v5519 = vld [vmem:[%s5516 + $0x8] sm:$0xf]
  %v5520 = vld [vmem:[%s5516 + $0xc] sm:$0xf]
  %v5525 = vunpack.c.l.b16 %v5517
  %v5526 = vunpack.c.l.b16 %v5518
  %v5527 = vunpack.c.l.b16 %v5519
  %v5528 = vunpack.c.l.b16 %v5520
  %v5529 = vpack.c.b16 %v5526, %v5525
  %v5530 = vpack.c.b16 %v5528, %v5527
  %v5534 = vsel %vm175, %v5514, 0
  %v5537 = vsel %vm175, %v5515, 0
  %5539 = vmatprep.subr.bf16.mxu0 0
  %5540 = vmatpush1.bf16.msra.mxu0 0
  %5541 = vmatprep.subr.bf16.mxu0 0
  %5542 = vmatpush1.bf16.msra.mxu0 0
  %5543 = vmatprep.subr.bf16.mxu0 0
  %5544 = vmatpush1.bf16.msra.mxu0 0
  %5545 = vmatprep.subr.bf16.mxu0 0
  %5546 = vmatpush1.bf16.msra.mxu0 0
  %5547 = vmatprep.subr.bf16.mxu0 0
  %5548 = vmatpush1.bf16.msra.mxu0 0
  %5549 = vmatprep.subr.bf16.mxu0 0
  %5550 = vmatpush1.bf16.msra.mxu0 0
  %5551 = vmatprep.subr.bf16.mxu0 0
  %5552 = vmatpush1.bf16.msra.mxu0 %v5530
  %5553 = vmatprep.subr.bf16.mxu0 0
  %5554 = vmatpush1.bf16.msra.mxu0 %v5529
  %5555 = vmatprep.subr.bf16.mxu0 0
  %5556 = vmatpush2.bf16.msra.mxu0 0
  %5557 = vmatprep.subr.bf16.mxu0 0
  %5558 = vmatpush2.bf16.msra.mxu0 0
  %5559 = vmatprep.subr.bf16.mxu0 0
  %5560 = vmatpush2.bf16.msra.mxu0 0
  %5561 = vmatprep.subr.bf16.mxu0 0
  %5562 = vmatpush2.bf16.msra.mxu0 0
  %5563 = vmatprep.subr.bf16.mxu0 0
  %5564 = vmatpush2.bf16.msra.mxu0 0
  %5565 = vmatprep.subr.bf16.mxu0 0
  %5566 = vmatpush2.bf16.msra.mxu0 0
  %5567 = vmatprep.subr.bf16.mxu0 0
  %5568 = vmatpush2.bf16.msra.mxu0 0
  %5569 = vmatprep.subr.bf16.mxu0 0
  %5570 = vmatpush2.bf16.msra.mxu0 0
  %5571 = vmatprep.mubr.bf16.mxu0 0
  %5572 = vmatmul.mubr.bf16.gmra.mxu0 %v5534
  %v5573 = vpop.f32.mrf.mxu0
  %v5574 = vadd.f32 0.0, %v5573
  %v5575 = vpop.f32.mrf.mxu0
  %v5576 = vpop.f32.mrf.mxu0
  %v5577 = vadd.f32 0.0, %v5576
  %v5578 = vpop.f32.mrf.mxu0
  %5579 = vmatprep.mubr.bf16.mxu0 0
  %5580 = vmatmul.mubr.bf16.gmra.mxu0 %v5537
  %v5581 = vpop.f32.mrf.mxu0
  %v5582 = vadd.f32 0.0, %v5581
  %v5583 = vpop.f32.mrf.mxu0
  %v5584 = vpop.f32.mrf.mxu0
  %v5585 = vadd.f32 0.0, %v5584
  %v5586 = vpop.f32.mrf.mxu0
  %5587 = vdwg.mxu0
  %v5588 = vadd.f32 %v5461, %v5574
  %v5589 = vadd.f32 %v5462, %v5577
  %v5590 = vadd.f32 %v5463, %v5582
  %v5591 = vadd.f32 %v5464, %v5585
  %5592 = vmatprep.subr.bf16.mxu0 0
  %5593 = vmatpush1.bf16.msra.mxu0 0
  %5594 = vmatprep.subr.bf16.mxu0 0
  %5595 = vmatpush1.bf16.msra.mxu0 0
  %5596 = vmatprep.subr.bf16.mxu0 0
  %5597 = vmatpush1.bf16.msra.mxu0 0
  %5598 = vmatprep.subr.bf16.mxu0 0
  %5599 = vmatpush1.bf16.msra.mxu0 0
  %5600 = vmatprep.subr.bf16.mxu0 0
  %5601 = vmatpush1.bf16.msra.mxu0 0
  %5602 = vmatprep.subr.bf16.mxu0 0
  %5603 = vmatpush1.bf16.msra.mxu0 0
  %5604 = vmatprep.subr.bf16.mxu0 0
  %5605 = vmatpush1.bf16.msra.mxu0 %v5092
  %5606 = vmatprep.subr.bf16.mxu0 0
  %5607 = vmatpush1.bf16.msra.mxu0 %v5091
  %5608 = vmatprep.subr.bf16.mxu0 0
  %5609 = vmatpush2.bf16.msra.mxu0 0
  %5610 = vmatprep.subr.bf16.mxu0 0
  %5611 = vmatpush2.bf16.msra.mxu0 0
  %5612 = vmatprep.subr.bf16.mxu0 0
  %5613 = vmatpush2.bf16.msra.mxu0 0
  %5614 = vmatprep.subr.bf16.mxu0 0
  %5615 = vmatpush2.bf16.msra.mxu0 0
  %5616 = vmatprep.subr.bf16.mxu0 0
  %5617 = vmatpush2.bf16.msra.mxu0 0
  %5618 = vmatprep.subr.bf16.mxu0 0
  %5619 = vmatpush2.bf16.msra.mxu0 0
  %5620 = vmatprep.subr.bf16.mxu0 0
  %5621 = vmatpush2.bf16.msra.mxu0 0
  %5622 = vmatprep.subr.bf16.mxu0 0
  %5623 = vmatpush2.bf16.msra.mxu0 0
  %5624 = vmatprep.mubr.bf16.mxu0 0
  %5625 = vmatmul.mubr.bf16.gmra.mxu0 %v824
  %v5626 = vpop.f32.mrf.mxu0
  %v5627 = vadd.f32 0.0, %v5626
  %v5628 = vpop.f32.mrf.mxu0
  %v5629 = vpop.f32.mrf.mxu0
  %v5630 = vadd.f32 0.0, %v5629
  %v5631 = vpop.f32.mrf.mxu0
  %5632 = vmatprep.mubr.bf16.mxu0 0
  %5633 = vmatmul.mubr.bf16.gmra.mxu0 %v827
  %v5634 = vpop.f32.mrf.mxu0
  %v5635 = vadd.f32 0.0, %v5634
  %v5636 = vpop.f32.mrf.mxu0
  %v5637 = vpop.f32.mrf.mxu0
  %v5638 = vadd.f32 0.0, %v5637
  %v5639 = vpop.f32.mrf.mxu0
  %5640 = vdwg.mxu0
  %v5641 = vpack.c.bf16 %v5630, %v5627
  %v5642 = vpack.c.bf16 %v5638, %v5635
  %s5643 = scalar_lea.vmem %s6, 64
  %v5644 = vld [vmem:[%s5643] sm:$0xf]
  %v5645 = vld [vmem:[%s5643 + $0x4] sm:$0xf]
  %v5646 = vld [vmem:[%s5643 + $0x8] sm:$0xf]
  %v5647 = vld [vmem:[%s5643 + $0xc] sm:$0xf]
  %v5652 = vunpack.c.l.b16 %v5644
  %v5653 = vunpack.c.l.b16 %v5645
  %v5654 = vunpack.c.l.b16 %v5646
  %v5655 = vunpack.c.l.b16 %v5647
  %v5656 = vpack.c.b16 %v5653, %v5652
  %v5657 = vpack.c.b16 %v5655, %v5654
  %v5661 = vsel %vm175, %v5641, 0
  %v5664 = vsel %vm175, %v5642, 0
  %5666 = vmatprep.subr.bf16.mxu0 0
  %5667 = vmatpush1.bf16.msra.mxu0 0
  %5668 = vmatprep.subr.bf16.mxu0 0
  %5669 = vmatpush1.bf16.msra.mxu0 0
  %5670 = vmatprep.subr.bf16.mxu0 0
  %5671 = vmatpush1.bf16.msra.mxu0 0
  %5672 = vmatprep.subr.bf16.mxu0 0
  %5673 = vmatpush1.bf16.msra.mxu0 0
  %5674 = vmatprep.subr.bf16.mxu0 0
  %5675 = vmatpush1.bf16.msra.mxu0 0
  %5676 = vmatprep.subr.bf16.mxu0 0
  %5677 = vmatpush1.bf16.msra.mxu0 0
  %5678 = vmatprep.subr.bf16.mxu0 0
  %5679 = vmatpush1.bf16.msra.mxu0 %v5657
  %5680 = vmatprep.subr.bf16.mxu0 0
  %5681 = vmatpush1.bf16.msra.mxu0 %v5656
  %5682 = vmatprep.subr.bf16.mxu0 0
  %5683 = vmatpush2.bf16.msra.mxu0 0
  %5684 = vmatprep.subr.bf16.mxu0 0
  %5685 = vmatpush2.bf16.msra.mxu0 0
  %5686 = vmatprep.subr.bf16.mxu0 0
  %5687 = vmatpush2.bf16.msra.mxu0 0
  %5688 = vmatprep.subr.bf16.mxu0 0
  %5689 = vmatpush2.bf16.msra.mxu0 0
  %5690 = vmatprep.subr.bf16.mxu0 0
  %5691 = vmatpush2.bf16.msra.mxu0 0
  %5692 = vmatprep.subr.bf16.mxu0 0
  %5693 = vmatpush2.bf16.msra.mxu0 0
  %5694 = vmatprep.subr.bf16.mxu0 0
  %5695 = vmatpush2.bf16.msra.mxu0 0
  %5696 = vmatprep.subr.bf16.mxu0 0
  %5697 = vmatpush2.bf16.msra.mxu0 0
  %5698 = vmatprep.mubr.bf16.mxu0 0
  %5699 = vmatmul.mubr.bf16.gmra.mxu0 %v5661
  %v5700 = vpop.f32.mrf.mxu0
  %v5701 = vadd.f32 0.0, %v5700
  %v5702 = vpop.f32.mrf.mxu0
  %v5703 = vpop.f32.mrf.mxu0
  %v5704 = vadd.f32 0.0, %v5703
  %v5705 = vpop.f32.mrf.mxu0
  %5706 = vmatprep.mubr.bf16.mxu0 0
  %5707 = vmatmul.mubr.bf16.gmra.mxu0 %v5664
  %v5708 = vpop.f32.mrf.mxu0
  %v5709 = vadd.f32 0.0, %v5708
  %v5710 = vpop.f32.mrf.mxu0
  %v5711 = vpop.f32.mrf.mxu0
  %v5712 = vadd.f32 0.0, %v5711
  %v5713 = vpop.f32.mrf.mxu0
  %5714 = vdwg.mxu0
  %v5715 = vadd.f32 %v5588, %v5701
  %v5716 = vadd.f32 %v5589, %v5704
  %v5717 = vadd.f32 %v5590, %v5709
  %v5718 = vadd.f32 %v5591, %v5712
  %5719 = vmatprep.subr.bf16.mxu0 0
  %5720 = vmatpush1.bf16.msra.mxu0 0
  %5721 = vmatprep.subr.bf16.mxu0 0
  %5722 = vmatpush1.bf16.msra.mxu0 0
  %5723 = vmatprep.subr.bf16.mxu0 0
  %5724 = vmatpush1.bf16.msra.mxu0 0
  %5725 = vmatprep.subr.bf16.mxu0 0
  %5726 = vmatpush1.bf16.msra.mxu0 0
  %5727 = vmatprep.subr.bf16.mxu0 0
  %5728 = vmatpush1.bf16.msra.mxu0 0
  %5729 = vmatprep.subr.bf16.mxu0 0
  %5730 = vmatpush1.bf16.msra.mxu0 0
  %5731 = vmatprep.subr.bf16.mxu0 0
  %5732 = vmatpush1.bf16.msra.mxu0 %v5092
  %5733 = vmatprep.subr.bf16.mxu0 0
  %5734 = vmatpush1.bf16.msra.mxu0 %v5091
  %5735 = vmatprep.subr.bf16.mxu0 0
  %5736 = vmatpush2.bf16.msra.mxu0 0
  %5737 = vmatprep.subr.bf16.mxu0 0
  %5738 = vmatpush2.bf16.msra.mxu0 0
  %5739 = vmatprep.subr.bf16.mxu0 0
  %5740 = vmatpush2.bf16.msra.mxu0 0
  %5741 = vmatprep.subr.bf16.mxu0 0
  %5742 = vmatpush2.bf16.msra.mxu0 0
  %5743 = vmatprep.subr.bf16.mxu0 0
  %5744 = vmatpush2.bf16.msra.mxu0 0
  %5745 = vmatprep.subr.bf16.mxu0 0
  %5746 = vmatpush2.bf16.msra.mxu0 0
  %5747 = vmatprep.subr.bf16.mxu0 0
  %5748 = vmatpush2.bf16.msra.mxu0 0
  %5749 = vmatprep.subr.bf16.mxu0 0
  %5750 = vmatpush2.bf16.msra.mxu0 0
  %5751 = vmatprep.mubr.bf16.mxu0 0
  %5752 = vmatmul.mubr.bf16.gmra.mxu0 %v988
  %v5753 = vpop.f32.mrf.mxu0
  %v5754 = vadd.f32 0.0, %v5753
  %v5755 = vpop.f32.mrf.mxu0
  %v5756 = vpop.f32.mrf.mxu0
  %v5757 = vadd.f32 0.0, %v5756
  %v5758 = vpop.f32.mrf.mxu0
  %5759 = vmatprep.mubr.bf16.mxu0 0
  %5760 = vmatmul.mubr.bf16.gmra.mxu0 %v991
  %v5761 = vpop.f32.mrf.mxu0
  %v5762 = vadd.f32 0.0, %v5761
  %v5763 = vpop.f32.mrf.mxu0
  %v5764 = vpop.f32.mrf.mxu0
  %v5765 = vadd.f32 0.0, %v5764
  %v5766 = vpop.f32.mrf.mxu0
  %5767 = vdwg.mxu0
  %v5768 = vpack.c.bf16 %v5757, %v5754
  %v5769 = vpack.c.bf16 %v5765, %v5762
  %s5770 = scalar_lea.vmem %s6, 80
  %v5771 = vld [vmem:[%s5770] sm:$0xf]
  %v5772 = vld [vmem:[%s5770 + $0x4] sm:$0xf]
  %v5773 = vld [vmem:[%s5770 + $0x8] sm:$0xf]
  %v5774 = vld [vmem:[%s5770 + $0xc] sm:$0xf]
  %v5779 = vunpack.c.l.b16 %v5771
  %v5780 = vunpack.c.l.b16 %v5772
  %v5781 = vunpack.c.l.b16 %v5773
  %v5782 = vunpack.c.l.b16 %v5774
  %v5783 = vpack.c.b16 %v5780, %v5779
  %v5784 = vpack.c.b16 %v5782, %v5781
  %v5788 = vsel %vm175, %v5768, 0
  %v5791 = vsel %vm175, %v5769, 0
  %5793 = vmatprep.subr.bf16.mxu0 0
  %5794 = vmatpush1.bf16.msra.mxu0 0
  %5795 = vmatprep.subr.bf16.mxu0 0
  %5796 = vmatpush1.bf16.msra.mxu0 0
  %5797 = vmatprep.subr.bf16.mxu0 0
  %5798 = vmatpush1.bf16.msra.mxu0 0
  %5799 = vmatprep.subr.bf16.mxu0 0
  %5800 = vmatpush1.bf16.msra.mxu0 0
  %5801 = vmatprep.subr.bf16.mxu0 0
  %5802 = vmatpush1.bf16.msra.mxu0 0
  %5803 = vmatprep.subr.bf16.mxu0 0
  %5804 = vmatpush1.bf16.msra.mxu0 0
  %5805 = vmatprep.subr.bf16.mxu0 0
  %5806 = vmatpush1.bf16.msra.mxu0 %v5784
  %5807 = vmatprep.subr.bf16.mxu0 0
  %5808 = vmatpush1.bf16.msra.mxu0 %v5783
  %5809 = vmatprep.subr.bf16.mxu0 0
  %5810 = vmatpush2.bf16.msra.mxu0 0
  %5811 = vmatprep.subr.bf16.mxu0 0
  %5812 = vmatpush2.bf16.msra.mxu0 0
  %5813 = vmatprep.subr.bf16.mxu0 0
  %5814 = vmatpush2.bf16.msra.mxu0 0
  %5815 = vmatprep.subr.bf16.mxu0 0
  %5816 = vmatpush2.bf16.msra.mxu0 0
  %5817 = vmatprep.subr.bf16.mxu0 0
  %5818 = vmatpush2.bf16.msra.mxu0 0
  %5819 = vmatprep.subr.bf16.mxu0 0
  %5820 = vmatpush2.bf16.msra.mxu0 0
  %5821 = vmatprep.subr.bf16.mxu0 0
  %5822 = vmatpush2.bf16.msra.mxu0 0
  %5823 = vmatprep.subr.bf16.mxu0 0
  %5824 = vmatpush2.bf16.msra.mxu0 0
  %5825 = vmatprep.mubr.bf16.mxu0 0
  %5826 = vmatmul.mubr.bf16.gmra.mxu0 %v5788
  %v5827 = vpop.f32.mrf.mxu0
  %v5828 = vadd.f32 0.0, %v5827
  %v5829 = vpop.f32.mrf.mxu0
  %v5830 = vpop.f32.mrf.mxu0
  %v5831 = vadd.f32 0.0, %v5830
  %v5832 = vpop.f32.mrf.mxu0
  %5833 = vmatprep.mubr.bf16.mxu0 0
  %5834 = vmatmul.mubr.bf16.gmra.mxu0 %v5791
  %v5835 = vpop.f32.mrf.mxu0
  %v5836 = vadd.f32 0.0, %v5835
  %v5837 = vpop.f32.mrf.mxu0
  %v5838 = vpop.f32.mrf.mxu0
  %v5839 = vadd.f32 0.0, %v5838
  %v5840 = vpop.f32.mrf.mxu0
  %5841 = vdwg.mxu0
  %v5842 = vadd.f32 %v5715, %v5828
  %v5843 = vadd.f32 %v5716, %v5831
  %v5844 = vadd.f32 %v5717, %v5836
  %v5845 = vadd.f32 %v5718, %v5839
  %5846 = vmatprep.subr.bf16.mxu0 0
  %5847 = vmatpush1.bf16.msra.mxu0 0
  %5848 = vmatprep.subr.bf16.mxu0 0
  %5849 = vmatpush1.bf16.msra.mxu0 0
  %5850 = vmatprep.subr.bf16.mxu0 0
  %5851 = vmatpush1.bf16.msra.mxu0 0
  %5852 = vmatprep.subr.bf16.mxu0 0
  %5853 = vmatpush1.bf16.msra.mxu0 0
  %5854 = vmatprep.subr.bf16.mxu0 0
  %5855 = vmatpush1.bf16.msra.mxu0 0
  %5856 = vmatprep.subr.bf16.mxu0 0
  %5857 = vmatpush1.bf16.msra.mxu0 0
  %5858 = vmatprep.subr.bf16.mxu0 0
  %5859 = vmatpush1.bf16.msra.mxu0 %v5092
  %5860 = vmatprep.subr.bf16.mxu0 0
  %5861 = vmatpush1.bf16.msra.mxu0 %v5091
  %5862 = vmatprep.subr.bf16.mxu0 0
  %5863 = vmatpush2.bf16.msra.mxu0 0
  %5864 = vmatprep.subr.bf16.mxu0 0
  %5865 = vmatpush2.bf16.msra.mxu0 0
  %5866 = vmatprep.subr.bf16.mxu0 0
  %5867 = vmatpush2.bf16.msra.mxu0 0
  %5868 = vmatprep.subr.bf16.mxu0 0
  %5869 = vmatpush2.bf16.msra.mxu0 0
  %5870 = vmatprep.subr.bf16.mxu0 0
  %5871 = vmatpush2.bf16.msra.mxu0 0
  %5872 = vmatprep.subr.bf16.mxu0 0
  %5873 = vmatpush2.bf16.msra.mxu0 0
  %5874 = vmatprep.subr.bf16.mxu0 0
  %5875 = vmatpush2.bf16.msra.mxu0 0
  %5876 = vmatprep.subr.bf16.mxu0 0
  %5877 = vmatpush2.bf16.msra.mxu0 0
  %5878 = vmatprep.mubr.bf16.mxu0 0
  %5879 = vmatmul.mubr.bf16.gmra.mxu0 %v1152
  %v5880 = vpop.f32.mrf.mxu0
  %v5881 = vadd.f32 0.0, %v5880
  %v5882 = vpop.f32.mrf.mxu0
  %v5883 = vpop.f32.mrf.mxu0
  %v5884 = vadd.f32 0.0, %v5883
  %v5885 = vpop.f32.mrf.mxu0
  %5886 = vmatprep.mubr.bf16.mxu0 0
  %5887 = vmatmul.mubr.bf16.gmra.mxu0 %v1155
  %v5888 = vpop.f32.mrf.mxu0
  %v5889 = vadd.f32 0.0, %v5888
  %v5890 = vpop.f32.mrf.mxu0
  %v5891 = vpop.f32.mrf.mxu0
  %v5892 = vadd.f32 0.0, %v5891
  %v5893 = vpop.f32.mrf.mxu0
  %5894 = vdwg.mxu0
  %v5895 = vpack.c.bf16 %v5884, %v5881
  %v5896 = vpack.c.bf16 %v5892, %v5889
  %s5897 = scalar_lea.vmem %s6, 96
  %v5898 = vld [vmem:[%s5897] sm:$0xf]
  %v5899 = vld [vmem:[%s5897 + $0x4] sm:$0xf]
  %v5900 = vld [vmem:[%s5897 + $0x8] sm:$0xf]
  %v5901 = vld [vmem:[%s5897 + $0xc] sm:$0xf]
  %v5906 = vunpack.c.l.b16 %v5898
  %v5907 = vunpack.c.l.b16 %v5899
  %v5908 = vunpack.c.l.b16 %v5900
  %v5909 = vunpack.c.l.b16 %v5901
  %v5910 = vpack.c.b16 %v5907, %v5906
  %v5911 = vpack.c.b16 %v5909, %v5908
  %v5915 = vsel %vm175, %v5895, 0
  %v5918 = vsel %vm175, %v5896, 0
  %5920 = vmatprep.subr.bf16.mxu0 0
  %5921 = vmatpush1.bf16.msra.mxu0 0
  %5922 = vmatprep.subr.bf16.mxu0 0
  %5923 = vmatpush1.bf16.msra.mxu0 0
  %5924 = vmatprep.subr.bf16.mxu0 0
  %5925 = vmatpush1.bf16.msra.mxu0 0
  %5926 = vmatprep.subr.bf16.mxu0 0
  %5927 = vmatpush1.bf16.msra.mxu0 0
  %5928 = vmatprep.subr.bf16.mxu0 0
  %5929 = vmatpush1.bf16.msra.mxu0 0
  %5930 = vmatprep.subr.bf16.mxu0 0
  %5931 = vmatpush1.bf16.msra.mxu0 0
  %5932 = vmatprep.subr.bf16.mxu0 0
  %5933 = vmatpush1.bf16.msra.mxu0 %v5911
  %5934 = vmatprep.subr.bf16.mxu0 0
  %5935 = vmatpush1.bf16.msra.mxu0 %v5910
  %5936 = vmatprep.subr.bf16.mxu0 0
  %5937 = vmatpush2.bf16.msra.mxu0 0
  %5938 = vmatprep.subr.bf16.mxu0 0
  %5939 = vmatpush2.bf16.msra.mxu0 0
  %5940 = vmatprep.subr.bf16.mxu0 0
  %5941 = vmatpush2.bf16.msra.mxu0 0
  %5942 = vmatprep.subr.bf16.mxu0 0
  %5943 = vmatpush2.bf16.msra.mxu0 0
  %5944 = vmatprep.subr.bf16.mxu0 0
  %5945 = vmatpush2.bf16.msra.mxu0 0
  %5946 = vmatprep.subr.bf16.mxu0 0
  %5947 = vmatpush2.bf16.msra.mxu0 0
  %5948 = vmatprep.subr.bf16.mxu0 0
  %5949 = vmatpush2.bf16.msra.mxu0 0
  %5950 = vmatprep.subr.bf16.mxu0 0
  %5951 = vmatpush2.bf16.msra.mxu0 0
  %5952 = vmatprep.mubr.bf16.mxu0 0
  %5953 = vmatmul.mubr.bf16.gmra.mxu0 %v5915
  %v5954 = vpop.f32.mrf.mxu0
  %v5955 = vadd.f32 0.0, %v5954
  %v5956 = vpop.f32.mrf.mxu0
  %v5957 = vpop.f32.mrf.mxu0
  %v5958 = vadd.f32 0.0, %v5957
  %v5959 = vpop.f32.mrf.mxu0
  %5960 = vmatprep.mubr.bf16.mxu0 0
  %5961 = vmatmul.mubr.bf16.gmra.mxu0 %v5918
  %v5962 = vpop.f32.mrf.mxu0
  %v5963 = vadd.f32 0.0, %v5962
  %v5964 = vpop.f32.mrf.mxu0
  %v5965 = vpop.f32.mrf.mxu0
  %v5966 = vadd.f32 0.0, %v5965
  %v5967 = vpop.f32.mrf.mxu0
  %5968 = vdwg.mxu0
  %v5969 = vadd.f32 %v5842, %v5955
  %v5970 = vadd.f32 %v5843, %v5958
  %v5971 = vadd.f32 %v5844, %v5963
  %v5972 = vadd.f32 %v5845, %v5966
  %5973 = vmatprep.subr.bf16.mxu0 0
  %5974 = vmatpush1.bf16.msra.mxu0 0
  %5975 = vmatprep.subr.bf16.mxu0 0
  %5976 = vmatpush1.bf16.msra.mxu0 0
  %5977 = vmatprep.subr.bf16.mxu0 0
  %5978 = vmatpush1.bf16.msra.mxu0 0
  %5979 = vmatprep.subr.bf16.mxu0 0
  %5980 = vmatpush1.bf16.msra.mxu0 0
  %5981 = vmatprep.subr.bf16.mxu0 0
  %5982 = vmatpush1.bf16.msra.mxu0 0
  %5983 = vmatprep.subr.bf16.mxu0 0
  %5984 = vmatpush1.bf16.msra.mxu0 0
  %5985 = vmatprep.subr.bf16.mxu0 0
  %5986 = vmatpush1.bf16.msra.mxu0 %v5092
  %5987 = vmatprep.subr.bf16.mxu0 0
  %5988 = vmatpush1.bf16.msra.mxu0 %v5091
  %5989 = vmatprep.subr.bf16.mxu0 0
  %5990 = vmatpush2.bf16.msra.mxu0 0
  %5991 = vmatprep.subr.bf16.mxu0 0
  %5992 = vmatpush2.bf16.msra.mxu0 0
  %5993 = vmatprep.subr.bf16.mxu0 0
  %5994 = vmatpush2.bf16.msra.mxu0 0
  %5995 = vmatprep.subr.bf16.mxu0 0
  %5996 = vmatpush2.bf16.msra.mxu0 0
  %5997 = vmatprep.subr.bf16.mxu0 0
  %5998 = vmatpush2.bf16.msra.mxu0 0
  %5999 = vmatprep.subr.bf16.mxu0 0
  %6000 = vmatpush2.bf16.msra.mxu0 0
  %6001 = vmatprep.subr.bf16.mxu0 0
  %6002 = vmatpush2.bf16.msra.mxu0 0
  %6003 = vmatprep.subr.bf16.mxu0 0
  %6004 = vmatpush2.bf16.msra.mxu0 0
  %6005 = vmatprep.mubr.bf16.mxu0 0
  %6006 = vmatmul.mubr.bf16.gmra.mxu0 %v1316
  %v6007 = vpop.f32.mrf.mxu0
  %v6008 = vadd.f32 0.0, %v6007
  %v6009 = vpop.f32.mrf.mxu0
  %v6010 = vpop.f32.mrf.mxu0
  %v6011 = vadd.f32 0.0, %v6010
  %v6012 = vpop.f32.mrf.mxu0
  %6013 = vmatprep.mubr.bf16.mxu0 0
  %6014 = vmatmul.mubr.bf16.gmra.mxu0 %v1319
  %v6015 = vpop.f32.mrf.mxu0
  %v6016 = vadd.f32 0.0, %v6015
  %v6017 = vpop.f32.mrf.mxu0
  %v6018 = vpop.f32.mrf.mxu0
  %v6019 = vadd.f32 0.0, %v6018
  %v6020 = vpop.f32.mrf.mxu0
  %6021 = vdwg.mxu0
  %v6022 = vpack.c.bf16 %v6011, %v6008
  %v6023 = vpack.c.bf16 %v6019, %v6016
  %s6024 = scalar_lea.vmem %s6, 112
  %v6025 = vld [vmem:[%s6024] sm:$0xf]
  %v6026 = vld [vmem:[%s6024 + $0x4] sm:$0xf]
  %v6027 = vld [vmem:[%s6024 + $0x8] sm:$0xf]
  %v6028 = vld [vmem:[%s6024 + $0xc] sm:$0xf]
  %v6033 = vunpack.c.l.b16 %v6025
  %v6034 = vunpack.c.l.b16 %v6026
  %v6035 = vunpack.c.l.b16 %v6027
  %v6036 = vunpack.c.l.b16 %v6028
  %v6037 = vpack.c.b16 %v6034, %v6033
  %v6038 = vpack.c.b16 %v6036, %v6035
  %v6042 = vsel %vm175, %v6022, 0
  %v6045 = vsel %vm175, %v6023, 0
  %6047 = vmatprep.subr.bf16.mxu0 0
  %6048 = vmatpush1.bf16.msra.mxu0 0
  %6049 = vmatprep.subr.bf16.mxu0 0
  %6050 = vmatpush1.bf16.msra.mxu0 0
  %6051 = vmatprep.subr.bf16.mxu0 0
  %6052 = vmatpush1.bf16.msra.mxu0 0
  %6053 = vmatprep.subr.bf16.mxu0 0
  %6054 = vmatpush1.bf16.msra.mxu0 0
  %6055 = vmatprep.subr.bf16.mxu0 0
  %6056 = vmatpush1.bf16.msra.mxu0 0
  %6057 = vmatprep.subr.bf16.mxu0 0
  %6058 = vmatpush1.bf16.msra.mxu0 0
  %6059 = vmatprep.subr.bf16.mxu0 0
  %6060 = vmatpush1.bf16.msra.mxu0 %v6038
  %6061 = vmatprep.subr.bf16.mxu0 0
  %6062 = vmatpush1.bf16.msra.mxu0 %v6037
  %6063 = vmatprep.subr.bf16.mxu0 0
  %6064 = vmatpush2.bf16.msra.mxu0 0
  %6065 = vmatprep.subr.bf16.mxu0 0
  %6066 = vmatpush2.bf16.msra.mxu0 0
  %6067 = vmatprep.subr.bf16.mxu0 0
  %6068 = vmatpush2.bf16.msra.mxu0 0
  %6069 = vmatprep.subr.bf16.mxu0 0
  %6070 = vmatpush2.bf16.msra.mxu0 0
  %6071 = vmatprep.subr.bf16.mxu0 0
  %6072 = vmatpush2.bf16.msra.mxu0 0
  %6073 = vmatprep.subr.bf16.mxu0 0
  %6074 = vmatpush2.bf16.msra.mxu0 0
  %6075 = vmatprep.subr.bf16.mxu0 0
  %6076 = vmatpush2.bf16.msra.mxu0 0
  %6077 = vmatprep.subr.bf16.mxu0 0
  %6078 = vmatpush2.bf16.msra.mxu0 0
  %6079 = vmatprep.mubr.bf16.mxu0 0
  %6080 = vmatmul.mubr.bf16.gmra.mxu0 %v6042
  %v6081 = vpop.f32.mrf.mxu0
  %v6082 = vadd.f32 0.0, %v6081
  %v6083 = vpop.f32.mrf.mxu0
  %v6084 = vpop.f32.mrf.mxu0
  %v6085 = vadd.f32 0.0, %v6084
  %v6086 = vpop.f32.mrf.mxu0
  %6087 = vmatprep.mubr.bf16.mxu0 0
  %6088 = vmatmul.mubr.bf16.gmra.mxu0 %v6045
  %v6089 = vpop.f32.mrf.mxu0
  %v6090 = vadd.f32 0.0, %v6089
  %v6091 = vpop.f32.mrf.mxu0
  %v6092 = vpop.f32.mrf.mxu0
  %v6093 = vadd.f32 0.0, %v6092
  %v6094 = vpop.f32.mrf.mxu0
  %6095 = vdwg.mxu0
  %v6096 = vadd.f32 %v5969, %v6082
  %v6097 = vadd.f32 %v5970, %v6085
  %v6098 = vadd.f32 %v5971, %v6090
  %v6099 = vadd.f32 %v5972, %v6093
  %6100 = vmatprep.subr.bf16.mxu0 0
  %6101 = vmatpush1.bf16.msra.mxu0 0
  %6102 = vmatprep.subr.bf16.mxu0 0
  %6103 = vmatpush1.bf16.msra.mxu0 0
  %6104 = vmatprep.subr.bf16.mxu0 0
  %6105 = vmatpush1.bf16.msra.mxu0 0
  %6106 = vmatprep.subr.bf16.mxu0 0
  %6107 = vmatpush1.bf16.msra.mxu0 0
  %6108 = vmatprep.subr.bf16.mxu0 0
  %6109 = vmatpush1.bf16.msra.mxu0 0
  %6110 = vmatprep.subr.bf16.mxu0 0
  %6111 = vmatpush1.bf16.msra.mxu0 0
  %6112 = vmatprep.subr.bf16.mxu0 0
  %6113 = vmatpush1.bf16.msra.mxu0 %v5092
  %6114 = vmatprep.subr.bf16.mxu0 0
  %6115 = vmatpush1.bf16.msra.mxu0 %v5091
  %6116 = vmatprep.subr.bf16.mxu0 0
  %6117 = vmatpush2.bf16.msra.mxu0 0
  %6118 = vmatprep.subr.bf16.mxu0 0
  %6119 = vmatpush2.bf16.msra.mxu0 0
  %6120 = vmatprep.subr.bf16.mxu0 0
  %6121 = vmatpush2.bf16.msra.mxu0 0
  %6122 = vmatprep.subr.bf16.mxu0 0
  %6123 = vmatpush2.bf16.msra.mxu0 0
  %6124 = vmatprep.subr.bf16.mxu0 0
  %6125 = vmatpush2.bf16.msra.mxu0 0
  %6126 = vmatprep.subr.bf16.mxu0 0
  %6127 = vmatpush2.bf16.msra.mxu0 0
  %6128 = vmatprep.subr.bf16.mxu0 0
  %6129 = vmatpush2.bf16.msra.mxu0 0
  %6130 = vmatprep.subr.bf16.mxu0 0
  %6131 = vmatpush2.bf16.msra.mxu0 0
  %6132 = vmatprep.mubr.bf16.mxu0 0
  %6133 = vmatmul.mubr.bf16.gmra.mxu0 %v1480
  %v6134 = vpop.f32.mrf.mxu0
  %v6135 = vadd.f32 0.0, %v6134
  %v6136 = vpop.f32.mrf.mxu0
  %v6137 = vpop.f32.mrf.mxu0
  %v6138 = vadd.f32 0.0, %v6137
  %v6139 = vpop.f32.mrf.mxu0
  %6140 = vmatprep.mubr.bf16.mxu0 0
  %6141 = vmatmul.mubr.bf16.gmra.mxu0 %v1483
  %v6142 = vpop.f32.mrf.mxu0
  %v6143 = vadd.f32 0.0, %v6142
  %v6144 = vpop.f32.mrf.mxu0
  %v6145 = vpop.f32.mrf.mxu0
  %v6146 = vadd.f32 0.0, %v6145
  %v6147 = vpop.f32.mrf.mxu0
  %6148 = vdwg.mxu0
  %v6149 = vpack.c.bf16 %v6138, %v6135
  %v6150 = vpack.c.bf16 %v6146, %v6143
  %s6151 = scalar_lea.vmem %s6, 128
  %v6152 = vld [vmem:[%s6151] sm:$0xf]
  %v6153 = vld [vmem:[%s6151 + $0x4] sm:$0xf]
  %v6154 = vld [vmem:[%s6151 + $0x8] sm:$0xf]
  %v6155 = vld [vmem:[%s6151 + $0xc] sm:$0xf]
  %v6160 = vunpack.c.l.b16 %v6152
  %v6161 = vunpack.c.l.b16 %v6153
  %v6162 = vunpack.c.l.b16 %v6154
  %v6163 = vunpack.c.l.b16 %v6155
  %v6164 = vpack.c.b16 %v6161, %v6160
  %v6165 = vpack.c.b16 %v6163, %v6162
  %v6169 = vsel %vm175, %v6149, 0
  %v6172 = vsel %vm175, %v6150, 0
  %6174 = vmatprep.subr.bf16.mxu0 0
  %6175 = vmatpush1.bf16.msra.mxu0 0
  %6176 = vmatprep.subr.bf16.mxu0 0
  %6177 = vmatpush1.bf16.msra.mxu0 0
  %6178 = vmatprep.subr.bf16.mxu0 0
  %6179 = vmatpush1.bf16.msra.mxu0 0
  %6180 = vmatprep.subr.bf16.mxu0 0
  %6181 = vmatpush1.bf16.msra.mxu0 0
  %6182 = vmatprep.subr.bf16.mxu0 0
  %6183 = vmatpush1.bf16.msra.mxu0 0
  %6184 = vmatprep.subr.bf16.mxu0 0
  %6185 = vmatpush1.bf16.msra.mxu0 0
  %6186 = vmatprep.subr.bf16.mxu0 0
  %6187 = vmatpush1.bf16.msra.mxu0 %v6165
  %6188 = vmatprep.subr.bf16.mxu0 0
  %6189 = vmatpush1.bf16.msra.mxu0 %v6164
  %6190 = vmatprep.subr.bf16.mxu0 0
  %6191 = vmatpush2.bf16.msra.mxu0 0
  %6192 = vmatprep.subr.bf16.mxu0 0
  %6193 = vmatpush2.bf16.msra.mxu0 0
  %6194 = vmatprep.subr.bf16.mxu0 0
  %6195 = vmatpush2.bf16.msra.mxu0 0
  %6196 = vmatprep.subr.bf16.mxu0 0
  %6197 = vmatpush2.bf16.msra.mxu0 0
  %6198 = vmatprep.subr.bf16.mxu0 0
  %6199 = vmatpush2.bf16.msra.mxu0 0
  %6200 = vmatprep.subr.bf16.mxu0 0
  %6201 = vmatpush2.bf16.msra.mxu0 0
  %6202 = vmatprep.subr.bf16.mxu0 0
  %6203 = vmatpush2.bf16.msra.mxu0 0
  %6204 = vmatprep.subr.bf16.mxu0 0
  %6205 = vmatpush2.bf16.msra.mxu0 0
  %6206 = vmatprep.mubr.bf16.mxu0 0
  %6207 = vmatmul.mubr.bf16.gmra.mxu0 %v6169
  %v6208 = vpop.f32.mrf.mxu0
  %v6209 = vadd.f32 0.0, %v6208
  %v6210 = vpop.f32.mrf.mxu0
  %v6211 = vpop.f32.mrf.mxu0
  %v6212 = vadd.f32 0.0, %v6211
  %v6213 = vpop.f32.mrf.mxu0
  %6214 = vmatprep.mubr.bf16.mxu0 0
  %6215 = vmatmul.mubr.bf16.gmra.mxu0 %v6172
  %v6216 = vpop.f32.mrf.mxu0
  %v6217 = vadd.f32 0.0, %v6216
  %v6218 = vpop.f32.mrf.mxu0
  %v6219 = vpop.f32.mrf.mxu0
  %v6220 = vadd.f32 0.0, %v6219
  %v6221 = vpop.f32.mrf.mxu0
  %6222 = vdwg.mxu0
  %v6223 = vadd.f32 %v6096, %v6209
  %v6224 = vadd.f32 %v6097, %v6212
  %v6225 = vadd.f32 %v6098, %v6217
  %v6226 = vadd.f32 %v6099, %v6220
  %v6227 = vld [vmem:[%s9] sm:$0x1]
  %v6229 = vlaneseq
  %v6230 = vshrl.u32 %v6229, 7
  %v6231 = vsub.s32 0, %v6230
  %v6232 = vrot.slane %v6227, %v6231
  %v6234 = vadd.f32 %v6223, %v6232
  %v6235 = vadd.f32 %v6224, %v6232
  %v6236 = vadd.f32 %v6225, %v6232
  %v6237 = vadd.f32 %v6226, %v6232
  %v6238 = vmax.f32 %v6234, 0.0
  %v6239 = vmax.f32 %v6235, 0.0
  %v6240 = vmax.f32 %v6236, 0.0
  %v6241 = vmax.f32 %v6237, 0.0
  %v6242 = vpack.c.bf16 %v6239, %v6238
  %v6243 = vpack.c.bf16 %v6241, %v6240
  %v6244 = vld [vmem:[%s7] sm:$0xf]
  %v6245 = vld [vmem:[%s7 + $0x4] sm:$0xf]
  %v6246 = vld [vmem:[%s7 + $0x8] sm:$0xf]
  %v6247 = vld [vmem:[%s7 + $0xc] sm:$0xf]
  %v6248 = vld [vmem:[%s10] sm:$0x1]
  %v6250 = vlaneseq
  %v6251 = vshrl.u32 %v6250, 7
  %v6252 = vsub.s32 0, %v6251
  %v6253 = vrot.slane %v6248, %v6252
  %v6259 = vunpack.c.l.b16 %v6244
  %v6260 = vunpack.c.l.b16 %v6245
  %v6261 = vunpack.c.l.b16 %v6246
  %v6262 = vunpack.c.l.b16 %v6247
  %v6263 = vpack.c.b16 %v6260, %v6259
  %v6264 = vpack.c.b16 %v6262, %v6261
  %v6268 = vsel %vm175, %v6242, 0
  %v6271 = vsel %vm175, %v6243, 0
  %6273 = vmatprep.subr.bf16.mxu0 0
  %6274 = vmatpush1.bf16.msra.mxu0 0
  %6275 = vmatprep.subr.bf16.mxu0 0
  %6276 = vmatpush1.bf16.msra.mxu0 0
  %6277 = vmatprep.subr.bf16.mxu0 0
  %6278 = vmatpush1.bf16.msra.mxu0 0
  %6279 = vmatprep.subr.bf16.mxu0 0
  %6280 = vmatpush1.bf16.msra.mxu0 0
  %6281 = vmatprep.subr.bf16.mxu0 0
  %6282 = vmatpush1.bf16.msra.mxu0 0
  %6283 = vmatprep.subr.bf16.mxu0 0
  %6284 = vmatpush1.bf16.msra.mxu0 0
  %6285 = vmatprep.subr.bf16.mxu0 0
  %6286 = vmatpush1.bf16.msra.mxu0 %v6264
  %6287 = vmatprep.subr.bf16.mxu0 0
  %6288 = vmatpush1.bf16.msra.mxu0 %v6263
  %6289 = vmatprep.subr.bf16.mxu0 0
  %6290 = vmatpush2.bf16.msra.mxu0 0
  %6291 = vmatprep.subr.bf16.mxu0 0
  %6292 = vmatpush2.bf16.msra.mxu0 0
  %6293 = vmatprep.subr.bf16.mxu0 0
  %6294 = vmatpush2.bf16.msra.mxu0 0
  %6295 = vmatprep.subr.bf16.mxu0 0
  %6296 = vmatpush2.bf16.msra.mxu0 0
  %6297 = vmatprep.subr.bf16.mxu0 0
  %6298 = vmatpush2.bf16.msra.mxu0 0
  %6299 = vmatprep.subr.bf16.mxu0 0
  %6300 = vmatpush2.bf16.msra.mxu0 0
  %6301 = vmatprep.subr.bf16.mxu0 0
  %6302 = vmatpush2.bf16.msra.mxu0 0
  %6303 = vmatprep.subr.bf16.mxu0 0
  %6304 = vmatpush2.bf16.msra.mxu0 0
  %6305 = vmatprep.mubr.bf16.mxu0 0
  %6306 = vmatmul.mubr.bf16.gmra.mxu0 %v6268
  %v6307 = vpop.f32.mrf.mxu0
  %v6308 = vadd.f32 %v6253, %v6307
  %v6309 = vpop.f32.mrf.mxu0
  %v6310 = vpop.f32.mrf.mxu0
  %v6311 = vadd.f32 %v6253, %v6310
  %v6312 = vpop.f32.mrf.mxu0
  %6313 = vmatprep.mubr.bf16.mxu0 0
  %6314 = vmatmul.mubr.bf16.gmra.mxu0 %v6271
  %v6315 = vpop.f32.mrf.mxu0
  %v6316 = vadd.f32 %v6253, %v6315
  %v6317 = vpop.f32.mrf.mxu0
  %v6318 = vpop.f32.mrf.mxu0
  %v6319 = vadd.f32 %v6253, %v6318
  %v6320 = vpop.f32.mrf.mxu0
  %6321 = vdwg.mxu0
  %v6322 = vld [vmem:[%s11] sm:$0xff]
  %v6323 = vld [vmem:[%s11 + $0x8] sm:$0xff]
  %v6324 = vld [vmem:[%s11 + $0x10] sm:$0xff]
  %v6325 = vld [vmem:[%s11 + $0x18] sm:$0xff]
  %v6326 = vld [vmem:[%s11 + $0x20] sm:$0xff]
  %v6327 = vld [vmem:[%s11 + $0x28] sm:$0xff]
  %v6328 = vld [vmem:[%s11 + $0x30] sm:$0xff]
  %v6329 = vld [vmem:[%s11 + $0x38] sm:$0xff]
  %v6330 = vld [vmem:[%s11 + $0x40] sm:$0xff]
  %v6331 = vld [vmem:[%s11 + $0x48] sm:$0xff]
  %v6332 = vld [vmem:[%s11 + $0x50] sm:$0xff]
  %v6333 = vld [vmem:[%s11 + $0x58] sm:$0xff]
  %v6334 = vld [vmem:[%s11 + $0x60] sm:$0xff]
  %v6335 = vld [vmem:[%s11 + $0x68] sm:$0xff]
  %v6336 = vld [vmem:[%s11 + $0x70] sm:$0xff]
  %v6337 = vld [vmem:[%s11 + $0x78] sm:$0xff]
  %v6338 = vld [vmem:[%s11 + $0x80] sm:$0xff]
  %v6339 = vld [vmem:[%s11 + $0x88] sm:$0xff]
  %v6340 = vld [vmem:[%s11 + $0x90] sm:$0xff]
  %v6341 = vld [vmem:[%s11 + $0x98] sm:$0xff]
  %v6342 = vld [vmem:[%s11 + $0xa0] sm:$0xff]
  %v6343 = vld [vmem:[%s11 + $0xa8] sm:$0xff]
  %v6344 = vld [vmem:[%s11 + $0xb0] sm:$0xff]
  %v6345 = vld [vmem:[%s11 + $0xb8] sm:$0xff]
  %v6346 = vld [vmem:[%s11 + $0xc0] sm:$0xff]
  %v6347 = vld [vmem:[%s11 + $0xc8] sm:$0xff]
  %v6348 = vld [vmem:[%s11 + $0xd0] sm:$0xff]
  %v6349 = vld [vmem:[%s11 + $0xd8] sm:$0xff]
  %v6350 = vld [vmem:[%s11 + $0xe0] sm:$0xff]
  %v6351 = vld [vmem:[%s11 + $0xe8] sm:$0xff]
  %v6352 = vld [vmem:[%s11 + $0xf0] sm:$0xff]
  %v6353 = vld [vmem:[%s11 + $0xf8] sm:$0xff]
  %v6354 = vld [vmem:[%s11 + $0x100] sm:$0xff]
  %v6355 = vld [vmem:[%s11 + $0x108] sm:$0xff]
  %v6356 = vld [vmem:[%s11 + $0x110] sm:$0xff]
  %v6357 = vld [vmem:[%s11 + $0x118] sm:$0xff]
  %v6358 = vld [vmem:[%s11 + $0x120] sm:$0xff]
  %v6359 = vld [vmem:[%s11 + $0x128] sm:$0xff]
  %v6360 = vld [vmem:[%s11 + $0x130] sm:$0xff]
  %v6361 = vld [vmem:[%s11 + $0x138] sm:$0xff]
  %v6362 = vld [vmem:[%s11 + $0x140] sm:$0xff]
  %v6363 = vld [vmem:[%s11 + $0x148] sm:$0xff]
  %v6364 = vld [vmem:[%s11 + $0x150] sm:$0xff]
  %v6365 = vld [vmem:[%s11 + $0x158] sm:$0xff]
  %v6366 = vld [vmem:[%s11 + $0x160] sm:$0xff]
  %v6367 = vld [vmem:[%s11 + $0x168] sm:$0xff]
  %v6368 = vld [vmem:[%s11 + $0x170] sm:$0xff]
  %v6369 = vld [vmem:[%s11 + $0x178] sm:$0xff]
  %v6370 = vld [vmem:[%s11 + $0x180] sm:$0xff]
  %v6371 = vld [vmem:[%s11 + $0x188] sm:$0xff]
  %v6372 = vld [vmem:[%s11 + $0x190] sm:$0xff]
  %v6373 = vld [vmem:[%s11 + $0x198] sm:$0xff]
  %v6374 = vld [vmem:[%s11 + $0x1a0] sm:$0xff]
  %v6375 = vld [vmem:[%s11 + $0x1a8] sm:$0xff]
  %v6376 = vld [vmem:[%s11 + $0x1b0] sm:$0xff]
  %v6377 = vld [vmem:[%s11 + $0x1b8] sm:$0xff]
  %v6378 = vld [vmem:[%s11 + $0x1c0] sm:$0xff]
  %v6379 = vld [vmem:[%s11 + $0x1c8] sm:$0xff]
  %v6380 = vld [vmem:[%s11 + $0x1d0] sm:$0xff]
  %v6381 = vld [vmem:[%s11 + $0x1d8] sm:$0xff]
  %v6382 = vld [vmem:[%s11 + $0x1e0] sm:$0xff]
  %v6383 = vld [vmem:[%s11 + $0x1e8] sm:$0xff]
  %v6384 = vld [vmem:[%s11 + $0x1f0] sm:$0xff]
  %v6385 = vld [vmem:[%s11 + $0x1f8] sm:$0xff]
  %v6386 = vld [vmem:[%s11 + $0x200] sm:$0xff]
  %v6387 = vld [vmem:[%s11 + $0x208] sm:$0xff]
  %v6388 = vld [vmem:[%s11 + $0x210] sm:$0xff]
  %v6389 = vld [vmem:[%s11 + $0x218] sm:$0xff]
  %v6390 = vld [vmem:[%s11 + $0x220] sm:$0xff]
  %v6391 = vld [vmem:[%s11 + $0x228] sm:$0xff]
  %v6392 = vld [vmem:[%s11 + $0x230] sm:$0xff]
  %v6393 = vld [vmem:[%s11 + $0x238] sm:$0xff]
  %v6394 = vld [vmem:[%s11 + $0x240] sm:$0xff]
  %v6395 = vld [vmem:[%s11 + $0x248] sm:$0xff]
  %v6396 = vld [vmem:[%s11 + $0x250] sm:$0xff]
  %v6397 = vld [vmem:[%s11 + $0x258] sm:$0xff]
  %v6398 = vld [vmem:[%s11 + $0x260] sm:$0xff]
  %v6399 = vld [vmem:[%s11 + $0x268] sm:$0xff]
  %v6400 = vld [vmem:[%s11 + $0x270] sm:$0xff]
  %v6401 = vld [vmem:[%s11 + $0x278] sm:$0xff]
  %v6402 = vld [vmem:[%s11 + $0x280] sm:$0xff]
  %v6403 = vld [vmem:[%s11 + $0x288] sm:$0xff]
  %v6404 = vld [vmem:[%s11 + $0x290] sm:$0xff]
  %v6405 = vld [vmem:[%s11 + $0x298] sm:$0xff]
  %v6406 = vld [vmem:[%s11 + $0x2a0] sm:$0xff]
  %v6407 = vld [vmem:[%s11 + $0x2a8] sm:$0xff]
  %v6408 = vld [vmem:[%s11 + $0x2b0] sm:$0xff]
  %v6409 = vld [vmem:[%s11 + $0x2b8] sm:$0xff]
  %v6410 = vld [vmem:[%s11 + $0x2c0] sm:$0xff]
  %v6411 = vld [vmem:[%s11 + $0x2c8] sm:$0xff]
  %v6412 = vld [vmem:[%s11 + $0x2d0] sm:$0xff]
  %v6413 = vld [vmem:[%s11 + $0x2d8] sm:$0xff]
  %v6414 = vld [vmem:[%s11 + $0x2e0] sm:$0xff]
  %v6415 = vld [vmem:[%s11 + $0x2e8] sm:$0xff]
  %v6416 = vld [vmem:[%s11 + $0x2f0] sm:$0xff]
  %v6417 = vld [vmem:[%s11 + $0x2f8] sm:$0xff]
  %v6418 = vld [vmem:[%s11 + $0x300] sm:$0xff]
  %v6419 = vld [vmem:[%s11 + $0x308] sm:$0xff]
  %v6420 = vld [vmem:[%s11 + $0x310] sm:$0xff]
  %v6421 = vld [vmem:[%s11 + $0x318] sm:$0xff]
  %v6422 = vld [vmem:[%s11 + $0x320] sm:$0xff]
  %v6423 = vld [vmem:[%s11 + $0x328] sm:$0xff]
  %v6424 = vld [vmem:[%s11 + $0x330] sm:$0xff]
  %v6425 = vld [vmem:[%s11 + $0x338] sm:$0xff]
  %v6426 = vld [vmem:[%s11 + $0x340] sm:$0xff]
  %v6427 = vld [vmem:[%s11 + $0x348] sm:$0xff]
  %v6428 = vld [vmem:[%s11 + $0x350] sm:$0xff]
  %v6429 = vld [vmem:[%s11 + $0x358] sm:$0xff]
  %v6430 = vld [vmem:[%s11 + $0x360] sm:$0xff]
  %v6431 = vld [vmem:[%s11 + $0x368] sm:$0xff]
  %v6432 = vld [vmem:[%s11 + $0x370] sm:$0xff]
  %v6433 = vld [vmem:[%s11 + $0x378] sm:$0xff]
  %v6434 = vld [vmem:[%s11 + $0x380] sm:$0xff]
  %v6435 = vld [vmem:[%s11 + $0x388] sm:$0xff]
  %v6436 = vld [vmem:[%s11 + $0x390] sm:$0xff]
  %v6437 = vld [vmem:[%s11 + $0x398] sm:$0xff]
  %v6438 = vld [vmem:[%s11 + $0x3a0] sm:$0xff]
  %v6439 = vld [vmem:[%s11 + $0x3a8] sm:$0xff]
  %v6440 = vld [vmem:[%s11 + $0x3b0] sm:$0xff]
  %v6441 = vld [vmem:[%s11 + $0x3b8] sm:$0xff]
  %v6442 = vld [vmem:[%s11 + $0x3c0] sm:$0xff]
  %v6443 = vld [vmem:[%s11 + $0x3c8] sm:$0xff]
  %v6444 = vld [vmem:[%s11 + $0x3d0] sm:$0xff]
  %v6445 = vld [vmem:[%s11 + $0x3d8] sm:$0xff]
  %v6446 = vld [vmem:[%s11 + $0x3e0] sm:$0xff]
  %v6447 = vld [vmem:[%s11 + $0x3e8] sm:$0xff]
  %v6448 = vld [vmem:[%s11 + $0x3f0] sm:$0xff]
  %v6449 = vld [vmem:[%s11 + $0x3f8] sm:$0xff]
  %vm6450 = vcmask 130048
  %v6452 = vsel %vm6450, %v6322, 0
  %v6455 = vsel %vm6450, %v6323, 0
  %v6458 = vsel %vm6450, %v6324, 0
  %v6461 = vsel %vm6450, %v6325, 0
  %v6464 = vsel %vm6450, %v6326, 0
  %v6467 = vsel %vm6450, %v6327, 0
  %v6470 = vsel %vm6450, %v6328, 0
  %v6473 = vsel %vm6450, %v6329, 0
  %v6476 = vsel %vm6450, %v6330, 0
  %v6479 = vsel %vm6450, %v6331, 0
  %v6482 = vsel %vm6450, %v6332, 0
  %v6485 = vsel %vm6450, %v6333, 0
  %v6488 = vsel %vm6450, %v6334, 0
  %v6491 = vsel %vm6450, %v6335, 0
  %v6494 = vsel %vm6450, %v6336, 0
  %v6497 = vsel %vm6450, %v6337, 0
  %v6500 = vsel %vm6450, %v6338, 0
  %v6503 = vsel %vm6450, %v6339, 0
  %v6506 = vsel %vm6450, %v6340, 0
  %v6509 = vsel %vm6450, %v6341, 0
  %v6512 = vsel %vm6450, %v6342, 0
  %v6515 = vsel %vm6450, %v6343, 0
  %v6518 = vsel %vm6450, %v6344, 0
  %v6521 = vsel %vm6450, %v6345, 0
  %v6524 = vsel %vm6450, %v6346, 0
  %v6527 = vsel %vm6450, %v6347, 0
  %v6530 = vsel %vm6450, %v6348, 0
  %v6533 = vsel %vm6450, %v6349, 0
  %v6536 = vsel %vm6450, %v6350, 0
  %v6539 = vsel %vm6450, %v6351, 0
  %v6542 = vsel %vm6450, %v6352, 0
  %v6545 = vsel %vm6450, %v6353, 0
  %v6548 = vsel %vm6450, %v6354, 0
  %v6551 = vsel %vm6450, %v6355, 0
  %v6554 = vsel %vm6450, %v6356, 0
  %v6557 = vsel %vm6450, %v6357, 0
  %v6560 = vsel %vm6450, %v6358, 0
  %v6563 = vsel %vm6450, %v6359, 0
  %v6566 = vsel %vm6450, %v6360, 0
  %v6569 = vsel %vm6450, %v6361, 0
  %v6572 = vsel %vm6450, %v6362, 0
  %v6575 = vsel %vm6450, %v6363, 0
  %v6578 = vsel %vm6450, %v6364, 0
  %v6581 = vsel %vm6450, %v6365, 0
  %v6584 = vsel %vm6450, %v6366, 0
  %v6587 = vsel %vm6450, %v6367, 0
  %v6590 = vsel %vm6450, %v6368, 0
  %v6593 = vsel %vm6450, %v6369, 0
  %v6596 = vsel %vm6450, %v6370, 0
  %v6599 = vsel %vm6450, %v6371, 0
  %v6602 = vsel %vm6450, %v6372, 0
  %v6605 = vsel %vm6450, %v6373, 0
  %v6608 = vsel %vm6450, %v6374, 0
  %v6611 = vsel %vm6450, %v6375, 0
  %v6614 = vsel %vm6450, %v6376, 0
  %v6617 = vsel %vm6450, %v6377, 0
  %v6620 = vsel %vm6450, %v6378, 0
  %v6623 = vsel %vm6450, %v6379, 0
  %v6626 = vsel %vm6450, %v6380, 0
  %v6629 = vsel %vm6450, %v6381, 0
  %v6632 = vsel %vm6450, %v6382, 0
  %v6635 = vsel %vm6450, %v6383, 0
  %v6638 = vsel %vm6450, %v6384, 0
  %v6641 = vsel %vm6450, %v6385, 0
  %v6644 = vsel %vm6450, %v6386, 0
  %v6647 = vsel %vm6450, %v6387, 0
  %v6650 = vsel %vm6450, %v6388, 0
  %v6653 = vsel %vm6450, %v6389, 0
  %v6656 = vsel %vm6450, %v6390, 0
  %v6659 = vsel %vm6450, %v6391, 0
  %v6662 = vsel %vm6450, %v6392, 0
  %v6665 = vsel %vm6450, %v6393, 0
  %v6668 = vsel %vm6450, %v6394, 0
  %v6671 = vsel %vm6450, %v6395, 0
  %v6674 = vsel %vm6450, %v6396, 0
  %v6677 = vsel %vm6450, %v6397, 0
  %v6680 = vsel %vm6450, %v6398, 0
  %v6683 = vsel %vm6450, %v6399, 0
  %v6686 = vsel %vm6450, %v6400, 0
  %v6689 = vsel %vm6450, %v6401, 0
  %v6692 = vsel %vm6450, %v6402, 0
  %v6695 = vsel %vm6450, %v6403, 0
  %v6698 = vsel %vm6450, %v6404, 0
  %v6701 = vsel %vm6450, %v6405, 0
  %v6704 = vsel %vm6450, %v6406, 0
  %v6707 = vsel %vm6450, %v6407, 0
  %v6710 = vsel %vm6450, %v6408, 0
  %v6713 = vsel %vm6450, %v6409, 0
  %v6716 = vsel %vm6450, %v6410, 0
  %v6719 = vsel %vm6450, %v6411, 0
  %v6722 = vsel %vm6450, %v6412, 0
  %v6725 = vsel %vm6450, %v6413, 0
  %v6728 = vsel %vm6450, %v6414, 0
  %v6731 = vsel %vm6450, %v6415, 0
  %v6734 = vsel %vm6450, %v6416, 0
  %v6737 = vsel %vm6450, %v6417, 0
  %v6740 = vsel %vm6450, %v6418, 0
  %v6743 = vsel %vm6450, %v6419, 0
  %v6746 = vsel %vm6450, %v6420, 0
  %v6749 = vsel %vm6450, %v6421, 0
  %v6752 = vsel %vm6450, %v6422, 0
  %v6755 = vsel %vm6450, %v6423, 0
  %v6758 = vsel %vm6450, %v6424, 0
  %v6761 = vsel %vm6450, %v6425, 0
  %v6764 = vsel %vm6450, %v6426, 0
  %v6767 = vsel %vm6450, %v6427, 0
  %v6770 = vsel %vm6450, %v6428, 0
  %v6773 = vsel %vm6450, %v6429, 0
  %v6776 = vsel %vm6450, %v6430, 0
  %v6779 = vsel %vm6450, %v6431, 0
  %v6782 = vsel %vm6450, %v6432, 0
  %v6785 = vsel %vm6450, %v6433, 0
  %v6788 = vsel %vm6450, %v6434, 0
  %v6791 = vsel %vm6450, %v6435, 0
  %v6794 = vsel %vm6450, %v6436, 0
  %v6797 = vsel %vm6450, %v6437, 0
  %v6800 = vsel %vm6450, %v6438, 0
  %v6803 = vsel %vm6450, %v6439, 0
  %v6806 = vsel %vm6450, %v6440, 0
  %v6809 = vsel %vm6450, %v6441, 0
  %v6812 = vsel %vm6450, %v6442, 0
  %v6815 = vsel %vm6450, %v6443, 0
  %v6818 = vsel %vm6450, %v6444, 0
  %v6821 = vsel %vm6450, %v6445, 0
  %v6824 = vsel %vm6450, %v6446, 0
  %v6827 = vsel %vm6450, %v6447, 0
  %v6830 = vsel %vm6450, %v6448, 0
  %v6833 = vsel %vm6450, %v6449, 0
  %6835 = vmatprep.subr.mxu0 0.0
  %6836 = vmatpush1.msra.mxu0 0.0
  %6837 = vmatprep.subr.mxu0 0.0
  %6838 = vmatpush1.msra.mxu0 0.0
  %6839 = vmatprep.subr.mxu0 0.0
  %6840 = vmatpush1.msra.mxu0 0.0
  %6841 = vmatprep.subr.mxu0 0.0
  %6842 = vmatpush1.msra.mxu0 0.0
  %6843 = vmatprep.subr.mxu0 0.0
  %6844 = vmatpush1.msra.mxu0 0.0
  %6845 = vmatprep.subr.mxu0 0.0
  %6846 = vmatpush1.msra.mxu0 0.0
  %6847 = vmatprep.subr.mxu0 0.0
  %6848 = vmatpush1.msra.mxu0 0.0
  %6849 = vmatprep.subr.mxu0 0.0
  %6850 = vmatpush1.msra.mxu0 0.0
  %6851 = vmatprep.subr.mxu0 0.0
  %6852 = vmatpush1.msra.mxu0 0.0
  %6853 = vmatprep.subr.mxu0 0.0
  %6854 = vmatpush1.msra.mxu0 0.0
  %6855 = vmatprep.subr.mxu0 0.0
  %6856 = vmatpush1.msra.mxu0 0.0
  %6857 = vmatprep.subr.mxu0 0.0
  %6858 = vmatpush1.msra.mxu0 0.0
  %6859 = vmatprep.subr.mxu0 0.0
  %6860 = vmatpush1.msra.mxu0 0.0
  %6861 = vmatprep.subr.mxu0 0.0
  %6862 = vmatpush1.msra.mxu0 0.0
  %6863 = vmatprep.subr.mxu0 0.0
  %6864 = vmatpush1.msra.mxu0 %v6311
  %6865 = vmatprep.subr.mxu0 0.0
  %6866 = vmatpush1.msra.mxu0 %v6308
  %6867 = vmatprep.subr.mxu0 0.0
  %6868 = vmatpush2.msra.mxu0 0.0
  %6869 = vmatprep.subr.mxu0 0.0
  %6870 = vmatpush2.msra.mxu0 0.0
  %6871 = vmatprep.subr.mxu0 0.0
  %6872 = vmatpush2.msra.mxu0 0.0
  %6873 = vmatprep.subr.mxu0 0.0
  %6874 = vmatpush2.msra.mxu0 0.0
  %6875 = vmatprep.subr.mxu0 0.0
  %6876 = vmatpush2.msra.mxu0 0.0
  %6877 = vmatprep.subr.mxu0 0.0
  %6878 = vmatpush2.msra.mxu0 0.0
  %6879 = vmatprep.subr.mxu0 0.0
  %6880 = vmatpush2.msra.mxu0 0.0
  %6881 = vmatprep.subr.mxu0 0.0
  %6882 = vmatpush2.msra.mxu0 0.0
  %6883 = vmatprep.subr.mxu0 0.0
  %6884 = vmatpush2.msra.mxu0 0.0
  %6885 = vmatprep.subr.mxu0 0.0
  %6886 = vmatpush2.msra.mxu0 0.0
  %6887 = vmatprep.subr.mxu0 0.0
  %6888 = vmatpush2.msra.mxu0 0.0
  %6889 = vmatprep.subr.mxu0 0.0
  %6890 = vmatpush2.msra.mxu0 0.0
  %6891 = vmatprep.subr.mxu0 0.0
  %6892 = vmatpush2.msra.mxu0 0.0
  %6893 = vmatprep.subr.mxu0 0.0
  %6894 = vmatpush2.msra.mxu0 0.0
  %6895 = vmatprep.subr.mxu0 0.0
  %6896 = vmatpush2.msra.mxu0 0.0
  %6897 = vmatprep.subr.mxu0 0.0
  %6898 = vmatpush2.msra.mxu0 0.0
  %6899 = vmatprep.mubr.f32.mxu0 0.0
  %6900 = vmatmul.mubr.f32.gmra.mxu0 %v6452
  %v6901 = vpop.f32.mrf.mxu0
  %v6902 = vadd.f32 0.0, %v6901
  %v6903 = vpop.f32.mrf.mxu0
  %6904 = vmatprep.mubr.f32.mxu0 0.0
  %6905 = vmatmul.mubr.f32.gmra.mxu0 %v6455
  %v6906 = vpop.f32.mrf.mxu0
  %v6907 = vadd.f32 0.0, %v6906
  %v6908 = vpop.f32.mrf.mxu0
  %6909 = vmatprep.mubr.f32.mxu0 0.0
  %6910 = vmatmul.mubr.f32.gmra.mxu0 %v6458
  %v6911 = vpop.f32.mrf.mxu0
  %v6912 = vadd.f32 0.0, %v6911
  %v6913 = vpop.f32.mrf.mxu0
  %6914 = vmatprep.mubr.f32.mxu0 0.0
  %6915 = vmatmul.mubr.f32.gmra.mxu0 %v6461
  %v6916 = vpop.f32.mrf.mxu0
  %v6917 = vadd.f32 0.0, %v6916
  %v6918 = vpop.f32.mrf.mxu0
  %6919 = vmatprep.mubr.f32.mxu0 0.0
  %6920 = vmatmul.mubr.f32.gmra.mxu0 %v6464
  %v6921 = vpop.f32.mrf.mxu0
  %v6922 = vadd.f32 0.0, %v6921
  %v6923 = vpop.f32.mrf.mxu0
  %6924 = vmatprep.mubr.f32.mxu0 0.0
  %6925 = vmatmul.mubr.f32.gmra.mxu0 %v6467
  %v6926 = vpop.f32.mrf.mxu0
  %v6927 = vadd.f32 0.0, %v6926
  %v6928 = vpop.f32.mrf.mxu0
  %6929 = vmatprep.mubr.f32.mxu0 0.0
  %6930 = vmatmul.mubr.f32.gmra.mxu0 %v6470
  %v6931 = vpop.f32.mrf.mxu0
  %v6932 = vadd.f32 0.0, %v6931
  %v6933 = vpop.f32.mrf.mxu0
  %6934 = vmatprep.mubr.f32.mxu0 0.0
  %6935 = vmatmul.mubr.f32.gmra.mxu0 %v6473
  %v6936 = vpop.f32.mrf.mxu0
  %v6937 = vadd.f32 0.0, %v6936
  %v6938 = vpop.f32.mrf.mxu0
  %6939 = vmatprep.mubr.f32.mxu0 0.0
  %6940 = vmatmul.mubr.f32.gmra.mxu0 %v6476
  %v6941 = vpop.f32.mrf.mxu0
  %v6942 = vadd.f32 0.0, %v6941
  %v6943 = vpop.f32.mrf.mxu0
  %6944 = vmatprep.mubr.f32.mxu0 0.0
  %6945 = vmatmul.mubr.f32.gmra.mxu0 %v6479
  %v6946 = vpop.f32.mrf.mxu0
  %v6947 = vadd.f32 0.0, %v6946
  %v6948 = vpop.f32.mrf.mxu0
  %6949 = vmatprep.mubr.f32.mxu0 0.0
  %6950 = vmatmul.mubr.f32.gmra.mxu0 %v6482
  %v6951 = vpop.f32.mrf.mxu0
  %v6952 = vadd.f32 0.0, %v6951
  %v6953 = vpop.f32.mrf.mxu0
  %6954 = vmatprep.mubr.f32.mxu0 0.0
  %6955 = vmatmul.mubr.f32.gmra.mxu0 %v6485
  %v6956 = vpop.f32.mrf.mxu0
  %v6957 = vadd.f32 0.0, %v6956
  %v6958 = vpop.f32.mrf.mxu0
  %6959 = vmatprep.mubr.f32.mxu0 0.0
  %6960 = vmatmul.mubr.f32.gmra.mxu0 %v6488
  %v6961 = vpop.f32.mrf.mxu0
  %v6962 = vadd.f32 0.0, %v6961
  %v6963 = vpop.f32.mrf.mxu0
  %6964 = vmatprep.mubr.f32.mxu0 0.0
  %6965 = vmatmul.mubr.f32.gmra.mxu0 %v6491
  %v6966 = vpop.f32.mrf.mxu0
  %v6967 = vadd.f32 0.0, %v6966
  %v6968 = vpop.f32.mrf.mxu0
  %6969 = vmatprep.mubr.f32.mxu0 0.0
  %6970 = vmatmul.mubr.f32.gmra.mxu0 %v6494
  %v6971 = vpop.f32.mrf.mxu0
  %v6972 = vadd.f32 0.0, %v6971
  %v6973 = vpop.f32.mrf.mxu0
  %6974 = vmatprep.mubr.f32.mxu0 0.0
  %6975 = vmatmul.mubr.f32.gmra.mxu0 %v6497
  %v6976 = vpop.f32.mrf.mxu0
  %v6977 = vadd.f32 0.0, %v6976
  %v6978 = vpop.f32.mrf.mxu0
  %6979 = vmatprep.mubr.f32.mxu0 0.0
  %6980 = vmatmul.mubr.f32.gmra.mxu0 %v6500
  %v6981 = vpop.f32.mrf.mxu0
  %v6982 = vadd.f32 0.0, %v6981
  %v6983 = vpop.f32.mrf.mxu0
  %6984 = vmatprep.mubr.f32.mxu0 0.0
  %6985 = vmatmul.mubr.f32.gmra.mxu0 %v6503
  %v6986 = vpop.f32.mrf.mxu0
  %v6987 = vadd.f32 0.0, %v6986
  %v6988 = vpop.f32.mrf.mxu0
  %6989 = vmatprep.mubr.f32.mxu0 0.0
  %6990 = vmatmul.mubr.f32.gmra.mxu0 %v6506
  %v6991 = vpop.f32.mrf.mxu0
  %v6992 = vadd.f32 0.0, %v6991
  %v6993 = vpop.f32.mrf.mxu0
  %6994 = vmatprep.mubr.f32.mxu0 0.0
  %6995 = vmatmul.mubr.f32.gmra.mxu0 %v6509
  %v6996 = vpop.f32.mrf.mxu0
  %v6997 = vadd.f32 0.0, %v6996
  %v6998 = vpop.f32.mrf.mxu0
  %6999 = vmatprep.mubr.f32.mxu0 0.0
  %7000 = vmatmul.mubr.f32.gmra.mxu0 %v6512
  %v7001 = vpop.f32.mrf.mxu0
  %v7002 = vadd.f32 0.0, %v7001
  %v7003 = vpop.f32.mrf.mxu0
  %7004 = vmatprep.mubr.f32.mxu0 0.0
  %7005 = vmatmul.mubr.f32.gmra.mxu0 %v6515
  %v7006 = vpop.f32.mrf.mxu0
  %v7007 = vadd.f32 0.0, %v7006
  %v7008 = vpop.f32.mrf.mxu0
  %7009 = vmatprep.mubr.f32.mxu0 0.0
  %7010 = vmatmul.mubr.f32.gmra.mxu0 %v6518
  %v7011 = vpop.f32.mrf.mxu0
  %v7012 = vadd.f32 0.0, %v7011
  %v7013 = vpop.f32.mrf.mxu0
  %7014 = vmatprep.mubr.f32.mxu0 0.0
  %7015 = vmatmul.mubr.f32.gmra.mxu0 %v6521
  %v7016 = vpop.f32.mrf.mxu0
  %v7017 = vadd.f32 0.0, %v7016
  %v7018 = vpop.f32.mrf.mxu0
  %7019 = vmatprep.mubr.f32.mxu0 0.0
  %7020 = vmatmul.mubr.f32.gmra.mxu0 %v6524
  %v7021 = vpop.f32.mrf.mxu0
  %v7022 = vadd.f32 0.0, %v7021
  %v7023 = vpop.f32.mrf.mxu0
  %7024 = vmatprep.mubr.f32.mxu0 0.0
  %7025 = vmatmul.mubr.f32.gmra.mxu0 %v6527
  %v7026 = vpop.f32.mrf.mxu0
  %v7027 = vadd.f32 0.0, %v7026
  %v7028 = vpop.f32.mrf.mxu0
  %7029 = vmatprep.mubr.f32.mxu0 0.0
  %7030 = vmatmul.mubr.f32.gmra.mxu0 %v6530
  %v7031 = vpop.f32.mrf.mxu0
  %v7032 = vadd.f32 0.0, %v7031
  %v7033 = vpop.f32.mrf.mxu0
  %7034 = vmatprep.mubr.f32.mxu0 0.0
  %7035 = vmatmul.mubr.f32.gmra.mxu0 %v6533
  %v7036 = vpop.f32.mrf.mxu0
  %v7037 = vadd.f32 0.0, %v7036
  %v7038 = vpop.f32.mrf.mxu0
  %7039 = vmatprep.mubr.f32.mxu0 0.0
  %7040 = vmatmul.mubr.f32.gmra.mxu0 %v6536
  %v7041 = vpop.f32.mrf.mxu0
  %v7042 = vadd.f32 0.0, %v7041
  %v7043 = vpop.f32.mrf.mxu0
  %7044 = vmatprep.mubr.f32.mxu0 0.0
  %7045 = vmatmul.mubr.f32.gmra.mxu0 %v6539
  %v7046 = vpop.f32.mrf.mxu0
  %v7047 = vadd.f32 0.0, %v7046
  %v7048 = vpop.f32.mrf.mxu0
  %7049 = vmatprep.mubr.f32.mxu0 0.0
  %7050 = vmatmul.mubr.f32.gmra.mxu0 %v6542
  %v7051 = vpop.f32.mrf.mxu0
  %v7052 = vadd.f32 0.0, %v7051
  %v7053 = vpop.f32.mrf.mxu0
  %7054 = vmatprep.mubr.f32.mxu0 0.0
  %7055 = vmatmul.mubr.f32.gmra.mxu0 %v6545
  %v7056 = vpop.f32.mrf.mxu0
  %v7057 = vadd.f32 0.0, %v7056
  %v7058 = vpop.f32.mrf.mxu0
  %7059 = vmatprep.mubr.f32.mxu0 0.0
  %7060 = vmatmul.mubr.f32.gmra.mxu0 %v6548
  %v7061 = vpop.f32.mrf.mxu0
  %v7062 = vadd.f32 0.0, %v7061
  %v7063 = vpop.f32.mrf.mxu0
  %7064 = vmatprep.mubr.f32.mxu0 0.0
  %7065 = vmatmul.mubr.f32.gmra.mxu0 %v6551
  %v7066 = vpop.f32.mrf.mxu0
  %v7067 = vadd.f32 0.0, %v7066
  %v7068 = vpop.f32.mrf.mxu0
  %7069 = vmatprep.mubr.f32.mxu0 0.0
  %7070 = vmatmul.mubr.f32.gmra.mxu0 %v6554
  %v7071 = vpop.f32.mrf.mxu0
  %v7072 = vadd.f32 0.0, %v7071
  %v7073 = vpop.f32.mrf.mxu0
  %7074 = vmatprep.mubr.f32.mxu0 0.0
  %7075 = vmatmul.mubr.f32.gmra.mxu0 %v6557
  %v7076 = vpop.f32.mrf.mxu0
  %v7077 = vadd.f32 0.0, %v7076
  %v7078 = vpop.f32.mrf.mxu0
  %7079 = vmatprep.mubr.f32.mxu0 0.0
  %7080 = vmatmul.mubr.f32.gmra.mxu0 %v6560
  %v7081 = vpop.f32.mrf.mxu0
  %v7082 = vadd.f32 0.0, %v7081
  %v7083 = vpop.f32.mrf.mxu0
  %7084 = vmatprep.mubr.f32.mxu0 0.0
  %7085 = vmatmul.mubr.f32.gmra.mxu0 %v6563
  %v7086 = vpop.f32.mrf.mxu0
  %v7087 = vadd.f32 0.0, %v7086
  %v7088 = vpop.f32.mrf.mxu0
  %7089 = vmatprep.mubr.f32.mxu0 0.0
  %7090 = vmatmul.mubr.f32.gmra.mxu0 %v6566
  %v7091 = vpop.f32.mrf.mxu0
  %v7092 = vadd.f32 0.0, %v7091
  %v7093 = vpop.f32.mrf.mxu0
  %7094 = vmatprep.mubr.f32.mxu0 0.0
  %7095 = vmatmul.mubr.f32.gmra.mxu0 %v6569
  %v7096 = vpop.f32.mrf.mxu0
  %v7097 = vadd.f32 0.0, %v7096
  %v7098 = vpop.f32.mrf.mxu0
  %7099 = vmatprep.mubr.f32.mxu0 0.0
  %7100 = vmatmul.mubr.f32.gmra.mxu0 %v6572
  %v7101 = vpop.f32.mrf.mxu0
  %v7102 = vadd.f32 0.0, %v7101
  %v7103 = vpop.f32.mrf.mxu0
  %7104 = vmatprep.mubr.f32.mxu0 0.0
  %7105 = vmatmul.mubr.f32.gmra.mxu0 %v6575
  %v7106 = vpop.f32.mrf.mxu0
  %v7107 = vadd.f32 0.0, %v7106
  %v7108 = vpop.f32.mrf.mxu0
  %7109 = vmatprep.mubr.f32.mxu0 0.0
  %7110 = vmatmul.mubr.f32.gmra.mxu0 %v6578
  %v7111 = vpop.f32.mrf.mxu0
  %v7112 = vadd.f32 0.0, %v7111
  %v7113 = vpop.f32.mrf.mxu0
  %7114 = vmatprep.mubr.f32.mxu0 0.0
  %7115 = vmatmul.mubr.f32.gmra.mxu0 %v6581
  %v7116 = vpop.f32.mrf.mxu0
  %v7117 = vadd.f32 0.0, %v7116
  %v7118 = vpop.f32.mrf.mxu0
  %7119 = vmatprep.mubr.f32.mxu0 0.0
  %7120 = vmatmul.mubr.f32.gmra.mxu0 %v6584
  %v7121 = vpop.f32.mrf.mxu0
  %v7122 = vadd.f32 0.0, %v7121
  %v7123 = vpop.f32.mrf.mxu0
  %7124 = vmatprep.mubr.f32.mxu0 0.0
  %7125 = vmatmul.mubr.f32.gmra.mxu0 %v6587
  %v7126 = vpop.f32.mrf.mxu0
  %v7127 = vadd.f32 0.0, %v7126
  %v7128 = vpop.f32.mrf.mxu0
  %7129 = vmatprep.mubr.f32.mxu0 0.0
  %7130 = vmatmul.mubr.f32.gmra.mxu0 %v6590
  %v7131 = vpop.f32.mrf.mxu0
  %v7132 = vadd.f32 0.0, %v7131
  %v7133 = vpop.f32.mrf.mxu0
  %7134 = vmatprep.mubr.f32.mxu0 0.0
  %7135 = vmatmul.mubr.f32.gmra.mxu0 %v6593
  %v7136 = vpop.f32.mrf.mxu0
  %v7137 = vadd.f32 0.0, %v7136
  %v7138 = vpop.f32.mrf.mxu0
  %7139 = vmatprep.mubr.f32.mxu0 0.0
  %7140 = vmatmul.mubr.f32.gmra.mxu0 %v6596
  %v7141 = vpop.f32.mrf.mxu0
  %v7142 = vadd.f32 0.0, %v7141
  %v7143 = vpop.f32.mrf.mxu0
  %7144 = vmatprep.mubr.f32.mxu0 0.0
  %7145 = vmatmul.mubr.f32.gmra.mxu0 %v6599
  %v7146 = vpop.f32.mrf.mxu0
  %v7147 = vadd.f32 0.0, %v7146
  %v7148 = vpop.f32.mrf.mxu0
  %7149 = vmatprep.mubr.f32.mxu0 0.0
  %7150 = vmatmul.mubr.f32.gmra.mxu0 %v6602
  %v7151 = vpop.f32.mrf.mxu0
  %v7152 = vadd.f32 0.0, %v7151
  %v7153 = vpop.f32.mrf.mxu0
  %7154 = vmatprep.mubr.f32.mxu0 0.0
  %7155 = vmatmul.mubr.f32.gmra.mxu0 %v6605
  %v7156 = vpop.f32.mrf.mxu0
  %v7157 = vadd.f32 0.0, %v7156
  %v7158 = vpop.f32.mrf.mxu0
  %7159 = vmatprep.mubr.f32.mxu0 0.0
  %7160 = vmatmul.mubr.f32.gmra.mxu0 %v6608
  %v7161 = vpop.f32.mrf.mxu0
  %v7162 = vadd.f32 0.0, %v7161
  %v7163 = vpop.f32.mrf.mxu0
  %7164 = vmatprep.mubr.f32.mxu0 0.0
  %7165 = vmatmul.mubr.f32.gmra.mxu0 %v6611
  %v7166 = vpop.f32.mrf.mxu0
  %v7167 = vadd.f32 0.0, %v7166
  %v7168 = vpop.f32.mrf.mxu0
  %7169 = vmatprep.mubr.f32.mxu0 0.0
  %7170 = vmatmul.mubr.f32.gmra.mxu0 %v6614
  %v7171 = vpop.f32.mrf.mxu0
  %v7172 = vadd.f32 0.0, %v7171
  %v7173 = vpop.f32.mrf.mxu0
  %7174 = vmatprep.mubr.f32.mxu0 0.0
  %7175 = vmatmul.mubr.f32.gmra.mxu0 %v6617
  %v7176 = vpop.f32.mrf.mxu0
  %v7177 = vadd.f32 0.0, %v7176
  %v7178 = vpop.f32.mrf.mxu0
  %7179 = vmatprep.mubr.f32.mxu0 0.0
  %7180 = vmatmul.mubr.f32.gmra.mxu0 %v6620
  %v7181 = vpop.f32.mrf.mxu0
  %v7182 = vadd.f32 0.0, %v7181
  %v7183 = vpop.f32.mrf.mxu0
  %7184 = vmatprep.mubr.f32.mxu0 0.0
  %7185 = vmatmul.mubr.f32.gmra.mxu0 %v6623
  %v7186 = vpop.f32.mrf.mxu0
  %v7187 = vadd.f32 0.0, %v7186
  %v7188 = vpop.f32.mrf.mxu0
  %7189 = vmatprep.mubr.f32.mxu0 0.0
  %7190 = vmatmul.mubr.f32.gmra.mxu0 %v6626
  %v7191 = vpop.f32.mrf.mxu0
  %v7192 = vadd.f32 0.0, %v7191
  %v7193 = vpop.f32.mrf.mxu0
  %7194 = vmatprep.mubr.f32.mxu0 0.0
  %7195 = vmatmul.mubr.f32.gmra.mxu0 %v6629
  %v7196 = vpop.f32.mrf.mxu0
  %v7197 = vadd.f32 0.0, %v7196
  %v7198 = vpop.f32.mrf.mxu0
  %7199 = vmatprep.mubr.f32.mxu0 0.0
  %7200 = vmatmul.mubr.f32.gmra.mxu0 %v6632
  %v7201 = vpop.f32.mrf.mxu0
  %v7202 = vadd.f32 0.0, %v7201
  %v7203 = vpop.f32.mrf.mxu0
  %7204 = vmatprep.mubr.f32.mxu0 0.0
  %7205 = vmatmul.mubr.f32.gmra.mxu0 %v6635
  %v7206 = vpop.f32.mrf.mxu0
  %v7207 = vadd.f32 0.0, %v7206
  %v7208 = vpop.f32.mrf.mxu0
  %7209 = vmatprep.mubr.f32.mxu0 0.0
  %7210 = vmatmul.mubr.f32.gmra.mxu0 %v6638
  %v7211 = vpop.f32.mrf.mxu0
  %v7212 = vadd.f32 0.0, %v7211
  %v7213 = vpop.f32.mrf.mxu0
  %7214 = vmatprep.mubr.f32.mxu0 0.0
  %7215 = vmatmul.mubr.f32.gmra.mxu0 %v6641
  %v7216 = vpop.f32.mrf.mxu0
  %v7217 = vadd.f32 0.0, %v7216
  %v7218 = vpop.f32.mrf.mxu0
  %7219 = vmatprep.mubr.f32.mxu0 0.0
  %7220 = vmatmul.mubr.f32.gmra.mxu0 %v6644
  %v7221 = vpop.f32.mrf.mxu0
  %v7222 = vadd.f32 0.0, %v7221
  %v7223 = vpop.f32.mrf.mxu0
  %7224 = vmatprep.mubr.f32.mxu0 0.0
  %7225 = vmatmul.mubr.f32.gmra.mxu0 %v6647
  %v7226 = vpop.f32.mrf.mxu0
  %v7227 = vadd.f32 0.0, %v7226
  %v7228 = vpop.f32.mrf.mxu0
  %7229 = vmatprep.mubr.f32.mxu0 0.0
  %7230 = vmatmul.mubr.f32.gmra.mxu0 %v6650
  %v7231 = vpop.f32.mrf.mxu0
  %v7232 = vadd.f32 0.0, %v7231
  %v7233 = vpop.f32.mrf.mxu0
  %7234 = vmatprep.mubr.f32.mxu0 0.0
  %7235 = vmatmul.mubr.f32.gmra.mxu0 %v6653
  %v7236 = vpop.f32.mrf.mxu0
  %v7237 = vadd.f32 0.0, %v7236
  %v7238 = vpop.f32.mrf.mxu0
  %7239 = vmatprep.mubr.f32.mxu0 0.0
  %7240 = vmatmul.mubr.f32.gmra.mxu0 %v6656
  %v7241 = vpop.f32.mrf.mxu0
  %v7242 = vadd.f32 0.0, %v7241
  %v7243 = vpop.f32.mrf.mxu0
  %7244 = vmatprep.mubr.f32.mxu0 0.0
  %7245 = vmatmul.mubr.f32.gmra.mxu0 %v6659
  %v7246 = vpop.f32.mrf.mxu0
  %v7247 = vadd.f32 0.0, %v7246
  %v7248 = vpop.f32.mrf.mxu0
  %7249 = vmatprep.mubr.f32.mxu0 0.0
  %7250 = vmatmul.mubr.f32.gmra.mxu0 %v6662
  %v7251 = vpop.f32.mrf.mxu0
  %v7252 = vadd.f32 0.0, %v7251
  %v7253 = vpop.f32.mrf.mxu0
  %7254 = vmatprep.mubr.f32.mxu0 0.0
  %7255 = vmatmul.mubr.f32.gmra.mxu0 %v6665
  %v7256 = vpop.f32.mrf.mxu0
  %v7257 = vadd.f32 0.0, %v7256
  %v7258 = vpop.f32.mrf.mxu0
  %7259 = vmatprep.mubr.f32.mxu0 0.0
  %7260 = vmatmul.mubr.f32.gmra.mxu0 %v6668
  %v7261 = vpop.f32.mrf.mxu0
  %v7262 = vadd.f32 0.0, %v7261
  %v7263 = vpop.f32.mrf.mxu0
  %7264 = vmatprep.mubr.f32.mxu0 0.0
  %7265 = vmatmul.mubr.f32.gmra.mxu0 %v6671
  %v7266 = vpop.f32.mrf.mxu0
  %v7267 = vadd.f32 0.0, %v7266
  %v7268 = vpop.f32.mrf.mxu0
  %7269 = vmatprep.mubr.f32.mxu0 0.0
  %7270 = vmatmul.mubr.f32.gmra.mxu0 %v6674
  %v7271 = vpop.f32.mrf.mxu0
  %v7272 = vadd.f32 0.0, %v7271
  %v7273 = vpop.f32.mrf.mxu0
  %7274 = vmatprep.mubr.f32.mxu0 0.0
  %7275 = vmatmul.mubr.f32.gmra.mxu0 %v6677
  %v7276 = vpop.f32.mrf.mxu0
  %v7277 = vadd.f32 0.0, %v7276
  %v7278 = vpop.f32.mrf.mxu0
  %7279 = vmatprep.mubr.f32.mxu0 0.0
  %7280 = vmatmul.mubr.f32.gmra.mxu0 %v6680
  %v7281 = vpop.f32.mrf.mxu0
  %v7282 = vadd.f32 0.0, %v7281
  %v7283 = vpop.f32.mrf.mxu0
  %7284 = vmatprep.mubr.f32.mxu0 0.0
  %7285 = vmatmul.mubr.f32.gmra.mxu0 %v6683
  %v7286 = vpop.f32.mrf.mxu0
  %v7287 = vadd.f32 0.0, %v7286
  %v7288 = vpop.f32.mrf.mxu0
  %7289 = vmatprep.mubr.f32.mxu0 0.0
  %7290 = vmatmul.mubr.f32.gmra.mxu0 %v6686
  %v7291 = vpop.f32.mrf.mxu0
  %v7292 = vadd.f32 0.0, %v7291
  %v7293 = vpop.f32.mrf.mxu0
  %7294 = vmatprep.mubr.f32.mxu0 0.0
  %7295 = vmatmul.mubr.f32.gmra.mxu0 %v6689
  %v7296 = vpop.f32.mrf.mxu0
  %v7297 = vadd.f32 0.0, %v7296
  %v7298 = vpop.f32.mrf.mxu0
  %7299 = vmatprep.mubr.f32.mxu0 0.0
  %7300 = vmatmul.mubr.f32.gmra.mxu0 %v6692
  %v7301 = vpop.f32.mrf.mxu0
  %v7302 = vadd.f32 0.0, %v7301
  %v7303 = vpop.f32.mrf.mxu0
  %7304 = vmatprep.mubr.f32.mxu0 0.0
  %7305 = vmatmul.mubr.f32.gmra.mxu0 %v6695
  %v7306 = vpop.f32.mrf.mxu0
  %v7307 = vadd.f32 0.0, %v7306
  %v7308 = vpop.f32.mrf.mxu0
  %7309 = vmatprep.mubr.f32.mxu0 0.0
  %7310 = vmatmul.mubr.f32.gmra.mxu0 %v6698
  %v7311 = vpop.f32.mrf.mxu0
  %v7312 = vadd.f32 0.0, %v7311
  %v7313 = vpop.f32.mrf.mxu0
  %7314 = vmatprep.mubr.f32.mxu0 0.0
  %7315 = vmatmul.mubr.f32.gmra.mxu0 %v6701
  %v7316 = vpop.f32.mrf.mxu0
  %v7317 = vadd.f32 0.0, %v7316
  %v7318 = vpop.f32.mrf.mxu0
  %7319 = vmatprep.mubr.f32.mxu0 0.0
  %7320 = vmatmul.mubr.f32.gmra.mxu0 %v6704
  %v7321 = vpop.f32.mrf.mxu0
  %v7322 = vadd.f32 0.0, %v7321
  %v7323 = vpop.f32.mrf.mxu0
  %7324 = vmatprep.mubr.f32.mxu0 0.0
  %7325 = vmatmul.mubr.f32.gmra.mxu0 %v6707
  %v7326 = vpop.f32.mrf.mxu0
  %v7327 = vadd.f32 0.0, %v7326
  %v7328 = vpop.f32.mrf.mxu0
  %7329 = vmatprep.mubr.f32.mxu0 0.0
  %7330 = vmatmul.mubr.f32.gmra.mxu0 %v6710
  %v7331 = vpop.f32.mrf.mxu0
  %v7332 = vadd.f32 0.0, %v7331
  %v7333 = vpop.f32.mrf.mxu0
  %7334 = vmatprep.mubr.f32.mxu0 0.0
  %7335 = vmatmul.mubr.f32.gmra.mxu0 %v6713
  %v7336 = vpop.f32.mrf.mxu0
  %v7337 = vadd.f32 0.0, %v7336
  %v7338 = vpop.f32.mrf.mxu0
  %7339 = vmatprep.mubr.f32.mxu0 0.0
  %7340 = vmatmul.mubr.f32.gmra.mxu0 %v6716
  %v7341 = vpop.f32.mrf.mxu0
  %v7342 = vadd.f32 0.0, %v7341
  %v7343 = vpop.f32.mrf.mxu0
  %7344 = vmatprep.mubr.f32.mxu0 0.0
  %7345 = vmatmul.mubr.f32.gmra.mxu0 %v6719
  %v7346 = vpop.f32.mrf.mxu0
  %v7347 = vadd.f32 0.0, %v7346
  %v7348 = vpop.f32.mrf.mxu0
  %7349 = vmatprep.mubr.f32.mxu0 0.0
  %7350 = vmatmul.mubr.f32.gmra.mxu0 %v6722
  %v7351 = vpop.f32.mrf.mxu0
  %v7352 = vadd.f32 0.0, %v7351
  %v7353 = vpop.f32.mrf.mxu0
  %7354 = vmatprep.mubr.f32.mxu0 0.0
  %7355 = vmatmul.mubr.f32.gmra.mxu0 %v6725
  %v7356 = vpop.f32.mrf.mxu0
  %v7357 = vadd.f32 0.0, %v7356
  %v7358 = vpop.f32.mrf.mxu0
  %7359 = vmatprep.mubr.f32.mxu0 0.0
  %7360 = vmatmul.mubr.f32.gmra.mxu0 %v6728
  %v7361 = vpop.f32.mrf.mxu0
  %v7362 = vadd.f32 0.0, %v7361
  %v7363 = vpop.f32.mrf.mxu0
  %7364 = vmatprep.mubr.f32.mxu0 0.0
  %7365 = vmatmul.mubr.f32.gmra.mxu0 %v6731
  %v7366 = vpop.f32.mrf.mxu0
  %v7367 = vadd.f32 0.0, %v7366
  %v7368 = vpop.f32.mrf.mxu0
  %7369 = vmatprep.mubr.f32.mxu0 0.0
  %7370 = vmatmul.mubr.f32.gmra.mxu0 %v6734
  %v7371 = vpop.f32.mrf.mxu0
  %v7372 = vadd.f32 0.0, %v7371
  %v7373 = vpop.f32.mrf.mxu0
  %7374 = vmatprep.mubr.f32.mxu0 0.0
  %7375 = vmatmul.mubr.f32.gmra.mxu0 %v6737
  %v7376 = vpop.f32.mrf.mxu0
  %v7377 = vadd.f32 0.0, %v7376
  %v7378 = vpop.f32.mrf.mxu0
  %7379 = vmatprep.mubr.f32.mxu0 0.0
  %7380 = vmatmul.mubr.f32.gmra.mxu0 %v6740
  %v7381 = vpop.f32.mrf.mxu0
  %v7382 = vadd.f32 0.0, %v7381
  %v7383 = vpop.f32.mrf.mxu0
  %7384 = vmatprep.mubr.f32.mxu0 0.0
  %7385 = vmatmul.mubr.f32.gmra.mxu0 %v6743
  %v7386 = vpop.f32.mrf.mxu0
  %v7387 = vadd.f32 0.0, %v7386
  %v7388 = vpop.f32.mrf.mxu0
  %7389 = vmatprep.mubr.f32.mxu0 0.0
  %7390 = vmatmul.mubr.f32.gmra.mxu0 %v6746
  %v7391 = vpop.f32.mrf.mxu0
  %v7392 = vadd.f32 0.0, %v7391
  %v7393 = vpop.f32.mrf.mxu0
  %7394 = vmatprep.mubr.f32.mxu0 0.0
  %7395 = vmatmul.mubr.f32.gmra.mxu0 %v6749
  %v7396 = vpop.f32.mrf.mxu0
  %v7397 = vadd.f32 0.0, %v7396
  %v7398 = vpop.f32.mrf.mxu0
  %7399 = vmatprep.mubr.f32.mxu0 0.0
  %7400 = vmatmul.mubr.f32.gmra.mxu0 %v6752
  %v7401 = vpop.f32.mrf.mxu0
  %v7402 = vadd.f32 0.0, %v7401
  %v7403 = vpop.f32.mrf.mxu0
  %7404 = vmatprep.mubr.f32.mxu0 0.0
  %7405 = vmatmul.mubr.f32.gmra.mxu0 %v6755
  %v7406 = vpop.f32.mrf.mxu0
  %v7407 = vadd.f32 0.0, %v7406
  %v7408 = vpop.f32.mrf.mxu0
  %7409 = vmatprep.mubr.f32.mxu0 0.0
  %7410 = vmatmul.mubr.f32.gmra.mxu0 %v6758
  %v7411 = vpop.f32.mrf.mxu0
  %v7412 = vadd.f32 0.0, %v7411
  %v7413 = vpop.f32.mrf.mxu0
  %7414 = vmatprep.mubr.f32.mxu0 0.0
  %7415 = vmatmul.mubr.f32.gmra.mxu0 %v6761
  %v7416 = vpop.f32.mrf.mxu0
  %v7417 = vadd.f32 0.0, %v7416
  %v7418 = vpop.f32.mrf.mxu0
  %7419 = vmatprep.mubr.f32.mxu0 0.0
  %7420 = vmatmul.mubr.f32.gmra.mxu0 %v6764
  %v7421 = vpop.f32.mrf.mxu0
  %v7422 = vadd.f32 0.0, %v7421
  %v7423 = vpop.f32.mrf.mxu0
  %7424 = vmatprep.mubr.f32.mxu0 0.0
  %7425 = vmatmul.mubr.f32.gmra.mxu0 %v6767
  %v7426 = vpop.f32.mrf.mxu0
  %v7427 = vadd.f32 0.0, %v7426
  %v7428 = vpop.f32.mrf.mxu0
  %7429 = vmatprep.mubr.f32.mxu0 0.0
  %7430 = vmatmul.mubr.f32.gmra.mxu0 %v6770
  %v7431 = vpop.f32.mrf.mxu0
  %v7432 = vadd.f32 0.0, %v7431
  %v7433 = vpop.f32.mrf.mxu0
  %7434 = vmatprep.mubr.f32.mxu0 0.0
  %7435 = vmatmul.mubr.f32.gmra.mxu0 %v6773
  %v7436 = vpop.f32.mrf.mxu0
  %v7437 = vadd.f32 0.0, %v7436
  %v7438 = vpop.f32.mrf.mxu0
  %7439 = vmatprep.mubr.f32.mxu0 0.0
  %7440 = vmatmul.mubr.f32.gmra.mxu0 %v6776
  %v7441 = vpop.f32.mrf.mxu0
  %v7442 = vadd.f32 0.0, %v7441
  %v7443 = vpop.f32.mrf.mxu0
  %7444 = vmatprep.mubr.f32.mxu0 0.0
  %7445 = vmatmul.mubr.f32.gmra.mxu0 %v6779
  %v7446 = vpop.f32.mrf.mxu0
  %v7447 = vadd.f32 0.0, %v7446
  %v7448 = vpop.f32.mrf.mxu0
  %7449 = vmatprep.mubr.f32.mxu0 0.0
  %7450 = vmatmul.mubr.f32.gmra.mxu0 %v6782
  %v7451 = vpop.f32.mrf.mxu0
  %v7452 = vadd.f32 0.0, %v7451
  %v7453 = vpop.f32.mrf.mxu0
  %7454 = vmatprep.mubr.f32.mxu0 0.0
  %7455 = vmatmul.mubr.f32.gmra.mxu0 %v6785
  %v7456 = vpop.f32.mrf.mxu0
  %v7457 = vadd.f32 0.0, %v7456
  %v7458 = vpop.f32.mrf.mxu0
  %7459 = vmatprep.mubr.f32.mxu0 0.0
  %7460 = vmatmul.mubr.f32.gmra.mxu0 %v6788
  %v7461 = vpop.f32.mrf.mxu0
  %v7462 = vadd.f32 0.0, %v7461
  %v7463 = vpop.f32.mrf.mxu0
  %7464 = vmatprep.mubr.f32.mxu0 0.0
  %7465 = vmatmul.mubr.f32.gmra.mxu0 %v6791
  %v7466 = vpop.f32.mrf.mxu0
  %v7467 = vadd.f32 0.0, %v7466
  %v7468 = vpop.f32.mrf.mxu0
  %7469 = vmatprep.mubr.f32.mxu0 0.0
  %7470 = vmatmul.mubr.f32.gmra.mxu0 %v6794
  %v7471 = vpop.f32.mrf.mxu0
  %v7472 = vadd.f32 0.0, %v7471
  %v7473 = vpop.f32.mrf.mxu0
  %7474 = vmatprep.mubr.f32.mxu0 0.0
  %7475 = vmatmul.mubr.f32.gmra.mxu0 %v6797
  %v7476 = vpop.f32.mrf.mxu0
  %v7477 = vadd.f32 0.0, %v7476
  %v7478 = vpop.f32.mrf.mxu0
  %7479 = vmatprep.mubr.f32.mxu0 0.0
  %7480 = vmatmul.mubr.f32.gmra.mxu0 %v6800
  %v7481 = vpop.f32.mrf.mxu0
  %v7482 = vadd.f32 0.0, %v7481
  %v7483 = vpop.f32.mrf.mxu0
  %7484 = vmatprep.mubr.f32.mxu0 0.0
  %7485 = vmatmul.mubr.f32.gmra.mxu0 %v6803
  %v7486 = vpop.f32.mrf.mxu0
  %v7487 = vadd.f32 0.0, %v7486
  %v7488 = vpop.f32.mrf.mxu0
  %7489 = vmatprep.mubr.f32.mxu0 0.0
  %7490 = vmatmul.mubr.f32.gmra.mxu0 %v6806
  %v7491 = vpop.f32.mrf.mxu0
  %v7492 = vadd.f32 0.0, %v7491
  %v7493 = vpop.f32.mrf.mxu0
  %7494 = vmatprep.mubr.f32.mxu0 0.0
  %7495 = vmatmul.mubr.f32.gmra.mxu0 %v6809
  %v7496 = vpop.f32.mrf.mxu0
  %v7497 = vadd.f32 0.0, %v7496
  %v7498 = vpop.f32.mrf.mxu0
  %7499 = vmatprep.mubr.f32.mxu0 0.0
  %7500 = vmatmul.mubr.f32.gmra.mxu0 %v6812
  %v7501 = vpop.f32.mrf.mxu0
  %v7502 = vadd.f32 0.0, %v7501
  %v7503 = vpop.f32.mrf.mxu0
  %7504 = vmatprep.mubr.f32.mxu0 0.0
  %7505 = vmatmul.mubr.f32.gmra.mxu0 %v6815
  %v7506 = vpop.f32.mrf.mxu0
  %v7507 = vadd.f32 0.0, %v7506
  %v7508 = vpop.f32.mrf.mxu0
  %7509 = vmatprep.mubr.f32.mxu0 0.0
  %7510 = vmatmul.mubr.f32.gmra.mxu0 %v6818
  %v7511 = vpop.f32.mrf.mxu0
  %v7512 = vadd.f32 0.0, %v7511
  %v7513 = vpop.f32.mrf.mxu0
  %7514 = vmatprep.mubr.f32.mxu0 0.0
  %7515 = vmatmul.mubr.f32.gmra.mxu0 %v6821
  %v7516 = vpop.f32.mrf.mxu0
  %v7517 = vadd.f32 0.0, %v7516
  %v7518 = vpop.f32.mrf.mxu0
  %7519 = vmatprep.mubr.f32.mxu0 0.0
  %7520 = vmatmul.mubr.f32.gmra.mxu0 %v6824
  %v7521 = vpop.f32.mrf.mxu0
  %v7522 = vadd.f32 0.0, %v7521
  %v7523 = vpop.f32.mrf.mxu0
  %7524 = vmatprep.mubr.f32.mxu0 0.0
  %7525 = vmatmul.mubr.f32.gmra.mxu0 %v6827
  %v7526 = vpop.f32.mrf.mxu0
  %v7527 = vadd.f32 0.0, %v7526
  %v7528 = vpop.f32.mrf.mxu0
  %7529 = vmatprep.mubr.f32.mxu0 0.0
  %7530 = vmatmul.mubr.f32.gmra.mxu0 %v6830
  %v7531 = vpop.f32.mrf.mxu0
  %v7532 = vadd.f32 0.0, %v7531
  %v7533 = vpop.f32.mrf.mxu0
  %7534 = vmatprep.mubr.f32.mxu0 0.0
  %7535 = vmatmul.mubr.f32.gmra.mxu0 %v6833
  %v7536 = vpop.f32.mrf.mxu0
  %v7537 = vadd.f32 0.0, %v7536
  %v7538 = vpop.f32.mrf.mxu0
  %7539 = vdwg.mxu0
  %vm7540 = vcmask 39936
  %7541 = vst.msk [vmem:[%s12] sm:$0xff] %vm7540, %v6902
  %7542 = vst.msk [vmem:[%s12 + $0x8] sm:$0xff] %vm7540, %v6907
  %7543 = vst.msk [vmem:[%s12 + $0x10] sm:$0xff] %vm7540, %v6912
  %7544 = vst.msk [vmem:[%s12 + $0x18] sm:$0xff] %vm7540, %v6917
  %7545 = vst.msk [vmem:[%s12 + $0x20] sm:$0xff] %vm7540, %v6922
  %7546 = vst.msk [vmem:[%s12 + $0x28] sm:$0xff] %vm7540, %v6927
  %7547 = vst.msk [vmem:[%s12 + $0x30] sm:$0xff] %vm7540, %v6932
  %7548 = vst.msk [vmem:[%s12 + $0x38] sm:$0xff] %vm7540, %v6937
  %7549 = vst.msk [vmem:[%s12 + $0x40] sm:$0xff] %vm7540, %v6942
  %7550 = vst.msk [vmem:[%s12 + $0x48] sm:$0xff] %vm7540, %v6947
  %7551 = vst.msk [vmem:[%s12 + $0x50] sm:$0xff] %vm7540, %v6952
  %7552 = vst.msk [vmem:[%s12 + $0x58] sm:$0xff] %vm7540, %v6957
  %7553 = vst.msk [vmem:[%s12 + $0x60] sm:$0xff] %vm7540, %v6962
  %7554 = vst.msk [vmem:[%s12 + $0x68] sm:$0xff] %vm7540, %v6967
  %7555 = vst.msk [vmem:[%s12 + $0x70] sm:$0xff] %vm7540, %v6972
  %7556 = vst.msk [vmem:[%s12 + $0x78] sm:$0xff] %vm7540, %v6977
  %7557 = vst.msk [vmem:[%s12 + $0x80] sm:$0xff] %vm7540, %v6982
  %7558 = vst.msk [vmem:[%s12 + $0x88] sm:$0xff] %vm7540, %v6987
  %7559 = vst.msk [vmem:[%s12 + $0x90] sm:$0xff] %vm7540, %v6992
  %7560 = vst.msk [vmem:[%s12 + $0x98] sm:$0xff] %vm7540, %v6997
  %7561 = vst.msk [vmem:[%s12 + $0xa0] sm:$0xff] %vm7540, %v7002
  %7562 = vst.msk [vmem:[%s12 + $0xa8] sm:$0xff] %vm7540, %v7007
  %7563 = vst.msk [vmem:[%s12 + $0xb0] sm:$0xff] %vm7540, %v7012
  %7564 = vst.msk [vmem:[%s12 + $0xb8] sm:$0xff] %vm7540, %v7017
  %7565 = vst.msk [vmem:[%s12 + $0xc0] sm:$0xff] %vm7540, %v7022
  %7566 = vst.msk [vmem:[%s12 + $0xc8] sm:$0xff] %vm7540, %v7027
  %7567 = vst.msk [vmem:[%s12 + $0xd0] sm:$0xff] %vm7540, %v7032
  %7568 = vst.msk [vmem:[%s12 + $0xd8] sm:$0xff] %vm7540, %v7037
  %7569 = vst.msk [vmem:[%s12 + $0xe0] sm:$0xff] %vm7540, %v7042
  %7570 = vst.msk [vmem:[%s12 + $0xe8] sm:$0xff] %vm7540, %v7047
  %7571 = vst.msk [vmem:[%s12 + $0xf0] sm:$0xff] %vm7540, %v7052
  %7572 = vst.msk [vmem:[%s12 + $0xf8] sm:$0xff] %vm7540, %v7057
  %7573 = vst.msk [vmem:[%s12 + $0x100] sm:$0xff] %vm7540, %v7062
  %7574 = vst.msk [vmem:[%s12 + $0x108] sm:$0xff] %vm7540, %v7067
  %7575 = vst.msk [vmem:[%s12 + $0x110] sm:$0xff] %vm7540, %v7072
  %7576 = vst.msk [vmem:[%s12 + $0x118] sm:$0xff] %vm7540, %v7077
  %7577 = vst.msk [vmem:[%s12 + $0x120] sm:$0xff] %vm7540, %v7082
  %7578 = vst.msk [vmem:[%s12 + $0x128] sm:$0xff] %vm7540, %v7087
  %7579 = vst.msk [vmem:[%s12 + $0x130] sm:$0xff] %vm7540, %v7092
  %7580 = vst.msk [vmem:[%s12 + $0x138] sm:$0xff] %vm7540, %v7097
  %7581 = vst.msk [vmem:[%s12 + $0x140] sm:$0xff] %vm7540, %v7102
  %7582 = vst.msk [vmem:[%s12 + $0x148] sm:$0xff] %vm7540, %v7107
  %7583 = vst.msk [vmem:[%s12 + $0x150] sm:$0xff] %vm7540, %v7112
  %7584 = vst.msk [vmem:[%s12 + $0x158] sm:$0xff] %vm7540, %v7117
  %7585 = vst.msk [vmem:[%s12 + $0x160] sm:$0xff] %vm7540, %v7122
  %7586 = vst.msk [vmem:[%s12 + $0x168] sm:$0xff] %vm7540, %v7127
  %7587 = vst.msk [vmem:[%s12 + $0x170] sm:$0xff] %vm7540, %v7132
  %7588 = vst.msk [vmem:[%s12 + $0x178] sm:$0xff] %vm7540, %v7137
  %7589 = vst.msk [vmem:[%s12 + $0x180] sm:$0xff] %vm7540, %v7142
  %7590 = vst.msk [vmem:[%s12 + $0x188] sm:$0xff] %vm7540, %v7147
  %7591 = vst.msk [vmem:[%s12 + $0x190] sm:$0xff] %vm7540, %v7152
  %7592 = vst.msk [vmem:[%s12 + $0x198] sm:$0xff] %vm7540, %v7157
  %7593 = vst.msk [vmem:[%s12 + $0x1a0] sm:$0xff] %vm7540, %v7162
  %7594 = vst.msk [vmem:[%s12 + $0x1a8] sm:$0xff] %vm7540, %v7167
  %7595 = vst.msk [vmem:[%s12 + $0x1b0] sm:$0xff] %vm7540, %v7172
  %7596 = vst.msk [vmem:[%s12 + $0x1b8] sm:$0xff] %vm7540, %v7177
  %7597 = vst.msk [vmem:[%s12 + $0x1c0] sm:$0xff] %vm7540, %v7182
  %7598 = vst.msk [vmem:[%s12 + $0x1c8] sm:$0xff] %vm7540, %v7187
  %7599 = vst.msk [vmem:[%s12 + $0x1d0] sm:$0xff] %vm7540, %v7192
  %7600 = vst.msk [vmem:[%s12 + $0x1d8] sm:$0xff] %vm7540, %v7197
  %7601 = vst.msk [vmem:[%s12 + $0x1e0] sm:$0xff] %vm7540, %v7202
  %7602 = vst.msk [vmem:[%s12 + $0x1e8] sm:$0xff] %vm7540, %v7207
  %7603 = vst.msk [vmem:[%s12 + $0x1f0] sm:$0xff] %vm7540, %v7212
  %7604 = vst.msk [vmem:[%s12 + $0x1f8] sm:$0xff] %vm7540, %v7217
  %7605 = vst.msk [vmem:[%s12 + $0x200] sm:$0xff] %vm7540, %v7222
  %7606 = vst.msk [vmem:[%s12 + $0x208] sm:$0xff] %vm7540, %v7227
  %7607 = vst.msk [vmem:[%s12 + $0x210] sm:$0xff] %vm7540, %v7232
  %7608 = vst.msk [vmem:[%s12 + $0x218] sm:$0xff] %vm7540, %v7237
  %7609 = vst.msk [vmem:[%s12 + $0x220] sm:$0xff] %vm7540, %v7242
  %7610 = vst.msk [vmem:[%s12 + $0x228] sm:$0xff] %vm7540, %v7247
  %7611 = vst.msk [vmem:[%s12 + $0x230] sm:$0xff] %vm7540, %v7252
  %7612 = vst.msk [vmem:[%s12 + $0x238] sm:$0xff] %vm7540, %v7257
  %7613 = vst.msk [vmem:[%s12 + $0x240] sm:$0xff] %vm7540, %v7262
  %7614 = vst.msk [vmem:[%s12 + $0x248] sm:$0xff] %vm7540, %v7267
  %7615 = vst.msk [vmem:[%s12 + $0x250] sm:$0xff] %vm7540, %v7272
  %7616 = vst.msk [vmem:[%s12 + $0x258] sm:$0xff] %vm7540, %v7277
  %7617 = vst.msk [vmem:[%s12 + $0x260] sm:$0xff] %vm7540, %v7282
  %7618 = vst.msk [vmem:[%s12 + $0x268] sm:$0xff] %vm7540, %v7287
  %7619 = vst.msk [vmem:[%s12 + $0x270] sm:$0xff] %vm7540, %v7292
  %7620 = vst.msk [vmem:[%s12 + $0x278] sm:$0xff] %vm7540, %v7297
  %7621 = vst.msk [vmem:[%s12 + $0x280] sm:$0xff] %vm7540, %v7302
  %7622 = vst.msk [vmem:[%s12 + $0x288] sm:$0xff] %vm7540, %v7307
  %7623 = vst.msk [vmem:[%s12 + $0x290] sm:$0xff] %vm7540, %v7312
  %7624 = vst.msk [vmem:[%s12 + $0x298] sm:$0xff] %vm7540, %v7317
  %7625 = vst.msk [vmem:[%s12 + $0x2a0] sm:$0xff] %vm7540, %v7322
  %7626 = vst.msk [vmem:[%s12 + $0x2a8] sm:$0xff] %vm7540, %v7327
  %7627 = vst.msk [vmem:[%s12 + $0x2b0] sm:$0xff] %vm7540, %v7332
  %7628 = vst.msk [vmem:[%s12 + $0x2b8] sm:$0xff] %vm7540, %v7337
  %7629 = vst.msk [vmem:[%s12 + $0x2c0] sm:$0xff] %vm7540, %v7342
  %7630 = vst.msk [vmem:[%s12 + $0x2c8] sm:$0xff] %vm7540, %v7347
  %7631 = vst.msk [vmem:[%s12 + $0x2d0] sm:$0xff] %vm7540, %v7352
  %7632 = vst.msk [vmem:[%s12 + $0x2d8] sm:$0xff] %vm7540, %v7357
  %7633 = vst.msk [vmem:[%s12 + $0x2e0] sm:$0xff] %vm7540, %v7362
  %7634 = vst.msk [vmem:[%s12 + $0x2e8] sm:$0xff] %vm7540, %v7367
  %7635 = vst.msk [vmem:[%s12 + $0x2f0] sm:$0xff] %vm7540, %v7372
  %7636 = vst.msk [vmem:[%s12 + $0x2f8] sm:$0xff] %vm7540, %v7377
  %7637 = vst.msk [vmem:[%s12 + $0x300] sm:$0xff] %vm7540, %v7382
  %7638 = vst.msk [vmem:[%s12 + $0x308] sm:$0xff] %vm7540, %v7387
  %7639 = vst.msk [vmem:[%s12 + $0x310] sm:$0xff] %vm7540, %v7392
  %7640 = vst.msk [vmem:[%s12 + $0x318] sm:$0xff] %vm7540, %v7397
  %7641 = vst.msk [vmem:[%s12 + $0x320] sm:$0xff] %vm7540, %v7402
  %7642 = vst.msk [vmem:[%s12 + $0x328] sm:$0xff] %vm7540, %v7407
  %7643 = vst.msk [vmem:[%s12 + $0x330] sm:$0xff] %vm7540, %v7412
  %7644 = vst.msk [vmem:[%s12 + $0x338] sm:$0xff] %vm7540, %v7417
  %7645 = vst.msk [vmem:[%s12 + $0x340] sm:$0xff] %vm7540, %v7422
  %7646 = vst.msk [vmem:[%s12 + $0x348] sm:$0xff] %vm7540, %v7427
  %7647 = vst.msk [vmem:[%s12 + $0x350] sm:$0xff] %vm7540, %v7432
  %7648 = vst.msk [vmem:[%s12 + $0x358] sm:$0xff] %vm7540, %v7437
  %7649 = vst.msk [vmem:[%s12 + $0x360] sm:$0xff] %vm7540, %v7442
  %7650 = vst.msk [vmem:[%s12 + $0x368] sm:$0xff] %vm7540, %v7447
  %7651 = vst.msk [vmem:[%s12 + $0x370] sm:$0xff] %vm7540, %v7452
  %7652 = vst.msk [vmem:[%s12 + $0x378] sm:$0xff] %vm7540, %v7457
  %7653 = vst.msk [vmem:[%s12 + $0x380] sm:$0xff] %vm7540, %v7462
  %7654 = vst.msk [vmem:[%s12 + $0x388] sm:$0xff] %vm7540, %v7467
  %7655 = vst.msk [vmem:[%s12 + $0x390] sm:$0xff] %vm7540, %v7472
  %7656 = vst.msk [vmem:[%s12 + $0x398] sm:$0xff] %vm7540, %v7477
  %7657 = vst.msk [vmem:[%s12 + $0x3a0] sm:$0xff] %vm7540, %v7482
  %7658 = vst.msk [vmem:[%s12 + $0x3a8] sm:$0xff] %vm7540, %v7487
  %7659 = vst.msk [vmem:[%s12 + $0x3b0] sm:$0xff] %vm7540, %v7492
  %7660 = vst.msk [vmem:[%s12 + $0x3b8] sm:$0xff] %vm7540, %v7497
  %7661 = vst.msk [vmem:[%s12 + $0x3c0] sm:$0xff] %vm7540, %v7502
  %7662 = vst.msk [vmem:[%s12 + $0x3c8] sm:$0xff] %vm7540, %v7507
  %7663 = vst.msk [vmem:[%s12 + $0x3d0] sm:$0xff] %vm7540, %v7512
  %7664 = vst.msk [vmem:[%s12 + $0x3d8] sm:$0xff] %vm7540, %v7517
  %7665 = vst.msk [vmem:[%s12 + $0x3e0] sm:$0xff] %vm7540, %v7522
  %7666 = vst.msk [vmem:[%s12 + $0x3e8] sm:$0xff] %vm7540, %v7527
  %7667 = vst.msk [vmem:[%s12 + $0x3f0] sm:$0xff] %vm7540, %v7532
  %7668 = vst.msk [vmem:[%s12 + $0x3f8] sm:$0xff] %vm7540, %v7537
  %v7669 = vld [vmem:[%s11] sm:$0xff]
  %v7670 = vld [vmem:[%s11 + $0x8] sm:$0xff]
  %v7671 = vld [vmem:[%s11 + $0x10] sm:$0xff]
  %v7672 = vld [vmem:[%s11 + $0x18] sm:$0xff]
  %v7673 = vld [vmem:[%s11 + $0x20] sm:$0xff]
  %v7674 = vld [vmem:[%s11 + $0x28] sm:$0xff]
  %v7675 = vld [vmem:[%s11 + $0x30] sm:$0xff]
  %v7676 = vld [vmem:[%s11 + $0x38] sm:$0xff]
  %v7677 = vld [vmem:[%s11 + $0x40] sm:$0xff]
  %v7678 = vld [vmem:[%s11 + $0x48] sm:$0xff]
  %v7679 = vld [vmem:[%s11 + $0x50] sm:$0xff]
  %v7680 = vld [vmem:[%s11 + $0x58] sm:$0xff]
  %v7681 = vld [vmem:[%s11 + $0x60] sm:$0xff]
  %v7682 = vld [vmem:[%s11 + $0x68] sm:$0xff]
  %v7683 = vld [vmem:[%s11 + $0x70] sm:$0xff]
  %v7684 = vld [vmem:[%s11 + $0x78] sm:$0xff]
  %v7685 = vld [vmem:[%s11 + $0x80] sm:$0xff]
  %v7686 = vld [vmem:[%s11 + $0x88] sm:$0xff]
  %v7687 = vld [vmem:[%s11 + $0x90] sm:$0xff]
  %v7688 = vld [vmem:[%s11 + $0x98] sm:$0xff]
  %v7689 = vld [vmem:[%s11 + $0xa0] sm:$0xff]
  %v7690 = vld [vmem:[%s11 + $0xa8] sm:$0xff]
  %v7691 = vld [vmem:[%s11 + $0xb0] sm:$0xff]
  %v7692 = vld [vmem:[%s11 + $0xb8] sm:$0xff]
  %v7693 = vld [vmem:[%s11 + $0xc0] sm:$0xff]
  %v7694 = vld [vmem:[%s11 + $0xc8] sm:$0xff]
  %v7695 = vld [vmem:[%s11 + $0xd0] sm:$0xff]
  %v7696 = vld [vmem:[%s11 + $0xd8] sm:$0xff]
  %v7697 = vld [vmem:[%s11 + $0xe0] sm:$0xff]
  %v7698 = vld [vmem:[%s11 + $0xe8] sm:$0xff]
  %v7699 = vld [vmem:[%s11 + $0xf0] sm:$0xff]
  %v7700 = vld [vmem:[%s11 + $0xf8] sm:$0xff]
  %v7701 = vld [vmem:[%s11 + $0x100] sm:$0xff]
  %v7702 = vld [vmem:[%s11 + $0x108] sm:$0xff]
  %v7703 = vld [vmem:[%s11 + $0x110] sm:$0xff]
  %v7704 = vld [vmem:[%s11 + $0x118] sm:$0xff]
  %v7705 = vld [vmem:[%s11 + $0x120] sm:$0xff]
  %v7706 = vld [vmem:[%s11 + $0x128] sm:$0xff]
  %v7707 = vld [vmem:[%s11 + $0x130] sm:$0xff]
  %v7708 = vld [vmem:[%s11 + $0x138] sm:$0xff]
  %v7709 = vld [vmem:[%s11 + $0x140] sm:$0xff]
  %v7710 = vld [vmem:[%s11 + $0x148] sm:$0xff]
  %v7711 = vld [vmem:[%s11 + $0x150] sm:$0xff]
  %v7712 = vld [vmem:[%s11 + $0x158] sm:$0xff]
  %v7713 = vld [vmem:[%s11 + $0x160] sm:$0xff]
  %v7714 = vld [vmem:[%s11 + $0x168] sm:$0xff]
  %v7715 = vld [vmem:[%s11 + $0x170] sm:$0xff]
  %v7716 = vld [vmem:[%s11 + $0x178] sm:$0xff]
  %v7717 = vld [vmem:[%s11 + $0x180] sm:$0xff]
  %v7718 = vld [vmem:[%s11 + $0x188] sm:$0xff]
  %v7719 = vld [vmem:[%s11 + $0x190] sm:$0xff]
  %v7720 = vld [vmem:[%s11 + $0x198] sm:$0xff]
  %v7721 = vld [vmem:[%s11 + $0x1a0] sm:$0xff]
  %v7722 = vld [vmem:[%s11 + $0x1a8] sm:$0xff]
  %v7723 = vld [vmem:[%s11 + $0x1b0] sm:$0xff]
  %v7724 = vld [vmem:[%s11 + $0x1b8] sm:$0xff]
  %v7725 = vld [vmem:[%s11 + $0x1c0] sm:$0xff]
  %v7726 = vld [vmem:[%s11 + $0x1c8] sm:$0xff]
  %v7727 = vld [vmem:[%s11 + $0x1d0] sm:$0xff]
  %v7728 = vld [vmem:[%s11 + $0x1d8] sm:$0xff]
  %v7729 = vld [vmem:[%s11 + $0x1e0] sm:$0xff]
  %v7730 = vld [vmem:[%s11 + $0x1e8] sm:$0xff]
  %v7731 = vld [vmem:[%s11 + $0x1f0] sm:$0xff]
  %v7732 = vld [vmem:[%s11 + $0x1f8] sm:$0xff]
  %v7733 = vld [vmem:[%s11 + $0x200] sm:$0xff]
  %v7734 = vld [vmem:[%s11 + $0x208] sm:$0xff]
  %v7735 = vld [vmem:[%s11 + $0x210] sm:$0xff]
  %v7736 = vld [vmem:[%s11 + $0x218] sm:$0xff]
  %v7737 = vld [vmem:[%s11 + $0x220] sm:$0xff]
  %v7738 = vld [vmem:[%s11 + $0x228] sm:$0xff]
  %v7739 = vld [vmem:[%s11 + $0x230] sm:$0xff]
  %v7740 = vld [vmem:[%s11 + $0x238] sm:$0xff]
  %v7741 = vld [vmem:[%s11 + $0x240] sm:$0xff]
  %v7742 = vld [vmem:[%s11 + $0x248] sm:$0xff]
  %v7743 = vld [vmem:[%s11 + $0x250] sm:$0xff]
  %v7744 = vld [vmem:[%s11 + $0x258] sm:$0xff]
  %v7745 = vld [vmem:[%s11 + $0x260] sm:$0xff]
  %v7746 = vld [vmem:[%s11 + $0x268] sm:$0xff]
  %v7747 = vld [vmem:[%s11 + $0x270] sm:$0xff]
  %v7748 = vld [vmem:[%s11 + $0x278] sm:$0xff]
  %v7749 = vld [vmem:[%s11 + $0x280] sm:$0xff]
  %v7750 = vld [vmem:[%s11 + $0x288] sm:$0xff]
  %v7751 = vld [vmem:[%s11 + $0x290] sm:$0xff]
  %v7752 = vld [vmem:[%s11 + $0x298] sm:$0xff]
  %v7753 = vld [vmem:[%s11 + $0x2a0] sm:$0xff]
  %v7754 = vld [vmem:[%s11 + $0x2a8] sm:$0xff]
  %v7755 = vld [vmem:[%s11 + $0x2b0] sm:$0xff]
  %v7756 = vld [vmem:[%s11 + $0x2b8] sm:$0xff]
  %v7757 = vld [vmem:[%s11 + $0x2c0] sm:$0xff]
  %v7758 = vld [vmem:[%s11 + $0x2c8] sm:$0xff]
  %v7759 = vld [vmem:[%s11 + $0x2d0] sm:$0xff]
  %v7760 = vld [vmem:[%s11 + $0x2d8] sm:$0xff]
  %v7761 = vld [vmem:[%s11 + $0x2e0] sm:$0xff]
  %v7762 = vld [vmem:[%s11 + $0x2e8] sm:$0xff]
  %v7763 = vld [vmem:[%s11 + $0x2f0] sm:$0xff]
  %v7764 = vld [vmem:[%s11 + $0x2f8] sm:$0xff]
  %v7765 = vld [vmem:[%s11 + $0x300] sm:$0xff]
  %v7766 = vld [vmem:[%s11 + $0x308] sm:$0xff]
  %v7767 = vld [vmem:[%s11 + $0x310] sm:$0xff]
  %v7768 = vld [vmem:[%s11 + $0x318] sm:$0xff]
  %v7769 = vld [vmem:[%s11 + $0x320] sm:$0xff]
  %v7770 = vld [vmem:[%s11 + $0x328] sm:$0xff]
  %v7771 = vld [vmem:[%s11 + $0x330] sm:$0xff]
  %v7772 = vld [vmem:[%s11 + $0x338] sm:$0xff]
  %v7773 = vld [vmem:[%s11 + $0x340] sm:$0xff]
  %v7774 = vld [vmem:[%s11 + $0x348] sm:$0xff]
  %v7775 = vld [vmem:[%s11 + $0x350] sm:$0xff]
  %v7776 = vld [vmem:[%s11 + $0x358] sm:$0xff]
  %v7777 = vld [vmem:[%s11 + $0x360] sm:$0xff]
  %v7778 = vld [vmem:[%s11 + $0x368] sm:$0xff]
  %v7779 = vld [vmem:[%s11 + $0x370] sm:$0xff]
  %v7780 = vld [vmem:[%s11 + $0x378] sm:$0xff]
  %v7781 = vld [vmem:[%s11 + $0x380] sm:$0xff]
  %v7782 = vld [vmem:[%s11 + $0x388] sm:$0xff]
  %v7783 = vld [vmem:[%s11 + $0x390] sm:$0xff]
  %v7784 = vld [vmem:[%s11 + $0x398] sm:$0xff]
  %v7785 = vld [vmem:[%s11 + $0x3a0] sm:$0xff]
  %v7786 = vld [vmem:[%s11 + $0x3a8] sm:$0xff]
  %v7787 = vld [vmem:[%s11 + $0x3b0] sm:$0xff]
  %v7788 = vld [vmem:[%s11 + $0x3b8] sm:$0xff]
  %v7789 = vld [vmem:[%s11 + $0x3c0] sm:$0xff]
  %v7790 = vld [vmem:[%s11 + $0x3c8] sm:$0xff]
  %v7791 = vld [vmem:[%s11 + $0x3d0] sm:$0xff]
  %v7792 = vld [vmem:[%s11 + $0x3d8] sm:$0xff]
  %v7793 = vld [vmem:[%s11 + $0x3e0] sm:$0xff]
  %v7794 = vld [vmem:[%s11 + $0x3e8] sm:$0xff]
  %v7795 = vld [vmem:[%s11 + $0x3f0] sm:$0xff]
  %v7796 = vld [vmem:[%s11 + $0x3f8] sm:$0xff]
  %v7798 = vsel %vm6450, %v7669, 0
  %v7801 = vsel %vm6450, %v7670, 0
  %v7804 = vsel %vm6450, %v7671, 0
  %v7807 = vsel %vm6450, %v7672, 0
  %v7810 = vsel %vm6450, %v7673, 0
  %v7813 = vsel %vm6450, %v7674, 0
  %v7816 = vsel %vm6450, %v7675, 0
  %v7819 = vsel %vm6450, %v7676, 0
  %v7822 = vsel %vm6450, %v7677, 0
  %v7825 = vsel %vm6450, %v7678, 0
  %v7828 = vsel %vm6450, %v7679, 0
  %v7831 = vsel %vm6450, %v7680, 0
  %v7834 = vsel %vm6450, %v7681, 0
  %v7837 = vsel %vm6450, %v7682, 0
  %v7840 = vsel %vm6450, %v7683, 0
  %v7843 = vsel %vm6450, %v7684, 0
  %v7846 = vsel %vm6450, %v7685, 0
  %v7849 = vsel %vm6450, %v7686, 0
  %v7852 = vsel %vm6450, %v7687, 0
  %v7855 = vsel %vm6450, %v7688, 0
  %v7858 = vsel %vm6450, %v7689, 0
  %v7861 = vsel %vm6450, %v7690, 0
  %v7864 = vsel %vm6450, %v7691, 0
  %v7867 = vsel %vm6450, %v7692, 0
  %v7870 = vsel %vm6450, %v7693, 0
  %v7873 = vsel %vm6450, %v7694, 0
  %v7876 = vsel %vm6450, %v7695, 0
  %v7879 = vsel %vm6450, %v7696, 0
  %v7882 = vsel %vm6450, %v7697, 0
  %v7885 = vsel %vm6450, %v7698, 0
  %v7888 = vsel %vm6450, %v7699, 0
  %v7891 = vsel %vm6450, %v7700, 0
  %v7894 = vsel %vm6450, %v7701, 0
  %v7897 = vsel %vm6450, %v7702, 0
  %v7900 = vsel %vm6450, %v7703, 0
  %v7903 = vsel %vm6450, %v7704, 0
  %v7906 = vsel %vm6450, %v7705, 0
  %v7909 = vsel %vm6450, %v7706, 0
  %v7912 = vsel %vm6450, %v7707, 0
  %v7915 = vsel %vm6450, %v7708, 0
  %v7918 = vsel %vm6450, %v7709, 0
  %v7921 = vsel %vm6450, %v7710, 0
  %v7924 = vsel %vm6450, %v7711, 0
  %v7927 = vsel %vm6450, %v7712, 0
  %v7930 = vsel %vm6450, %v7713, 0
  %v7933 = vsel %vm6450, %v7714, 0
  %v7936 = vsel %vm6450, %v7715, 0
  %v7939 = vsel %vm6450, %v7716, 0
  %v7942 = vsel %vm6450, %v7717, 0
  %v7945 = vsel %vm6450, %v7718, 0
  %v7948 = vsel %vm6450, %v7719, 0
  %v7951 = vsel %vm6450, %v7720, 0
  %v7954 = vsel %vm6450, %v7721, 0
  %v7957 = vsel %vm6450, %v7722, 0
  %v7960 = vsel %vm6450, %v7723, 0
  %v7963 = vsel %vm6450, %v7724, 0
  %v7966 = vsel %vm6450, %v7725, 0
  %v7969 = vsel %vm6450, %v7726, 0
  %v7972 = vsel %vm6450, %v7727, 0
  %v7975 = vsel %vm6450, %v7728, 0
  %v7978 = vsel %vm6450, %v7729, 0
  %v7981 = vsel %vm6450, %v7730, 0
  %v7984 = vsel %vm6450, %v7731, 0
  %v7987 = vsel %vm6450, %v7732, 0
  %v7990 = vsel %vm6450, %v7733, 0
  %v7993 = vsel %vm6450, %v7734, 0
  %v7996 = vsel %vm6450, %v7735, 0
  %v7999 = vsel %vm6450, %v7736, 0
  %v8002 = vsel %vm6450, %v7737, 0
  %v8005 = vsel %vm6450, %v7738, 0
  %v8008 = vsel %vm6450, %v7739, 0
  %v8011 = vsel %vm6450, %v7740, 0
  %v8014 = vsel %vm6450, %v7741, 0
  %v8017 = vsel %vm6450, %v7742, 0
  %v8020 = vsel %vm6450, %v7743, 0
  %v8023 = vsel %vm6450, %v7744, 0
  %v8026 = vsel %vm6450, %v7745, 0
  %v8029 = vsel %vm6450, %v7746, 0
  %v8032 = vsel %vm6450, %v7747, 0
  %v8035 = vsel %vm6450, %v7748, 0
  %v8038 = vsel %vm6450, %v7749, 0
  %v8041 = vsel %vm6450, %v7750, 0
  %v8044 = vsel %vm6450, %v7751, 0
  %v8047 = vsel %vm6450, %v7752, 0
  %v8050 = vsel %vm6450, %v7753, 0
  %v8053 = vsel %vm6450, %v7754, 0
  %v8056 = vsel %vm6450, %v7755, 0
  %v8059 = vsel %vm6450, %v7756, 0
  %v8062 = vsel %vm6450, %v7757, 0
  %v8065 = vsel %vm6450, %v7758, 0
  %v8068 = vsel %vm6450, %v7759, 0
  %v8071 = vsel %vm6450, %v7760, 0
  %v8074 = vsel %vm6450, %v7761, 0
  %v8077 = vsel %vm6450, %v7762, 0
  %v8080 = vsel %vm6450, %v7763, 0
  %v8083 = vsel %vm6450, %v7764, 0
  %v8086 = vsel %vm6450, %v7765, 0
  %v8089 = vsel %vm6450, %v7766, 0
  %v8092 = vsel %vm6450, %v7767, 0
  %v8095 = vsel %vm6450, %v7768, 0
  %v8098 = vsel %vm6450, %v7769, 0
  %v8101 = vsel %vm6450, %v7770, 0
  %v8104 = vsel %vm6450, %v7771, 0
  %v8107 = vsel %vm6450, %v7772, 0
  %v8110 = vsel %vm6450, %v7773, 0
  %v8113 = vsel %vm6450, %v7774, 0
  %v8116 = vsel %vm6450, %v7775, 0
  %v8119 = vsel %vm6450, %v7776, 0
  %v8122 = vsel %vm6450, %v7777, 0
  %v8125 = vsel %vm6450, %v7778, 0
  %v8128 = vsel %vm6450, %v7779, 0
  %v8131 = vsel %vm6450, %v7780, 0
  %v8134 = vsel %vm6450, %v7781, 0
  %v8137 = vsel %vm6450, %v7782, 0
  %v8140 = vsel %vm6450, %v7783, 0
  %v8143 = vsel %vm6450, %v7784, 0
  %v8146 = vsel %vm6450, %v7785, 0
  %v8149 = vsel %vm6450, %v7786, 0
  %v8152 = vsel %vm6450, %v7787, 0
  %v8155 = vsel %vm6450, %v7788, 0
  %v8158 = vsel %vm6450, %v7789, 0
  %v8161 = vsel %vm6450, %v7790, 0
  %v8164 = vsel %vm6450, %v7791, 0
  %v8167 = vsel %vm6450, %v7792, 0
  %v8170 = vsel %vm6450, %v7793, 0
  %v8173 = vsel %vm6450, %v7794, 0
  %v8176 = vsel %vm6450, %v7795, 0
  %v8179 = vsel %vm6450, %v7796, 0
  %8181 = vmatprep.subr.mxu0 0.0
  %8182 = vmatpush1.msra.mxu0 0.0
  %8183 = vmatprep.subr.mxu0 0.0
  %8184 = vmatpush1.msra.mxu0 0.0
  %8185 = vmatprep.subr.mxu0 0.0
  %8186 = vmatpush1.msra.mxu0 0.0
  %8187 = vmatprep.subr.mxu0 0.0
  %8188 = vmatpush1.msra.mxu0 0.0
  %8189 = vmatprep.subr.mxu0 0.0
  %8190 = vmatpush1.msra.mxu0 0.0
  %8191 = vmatprep.subr.mxu0 0.0
  %8192 = vmatpush1.msra.mxu0 0.0
  %8193 = vmatprep.subr.mxu0 0.0
  %8194 = vmatpush1.msra.mxu0 0.0
  %8195 = vmatprep.subr.mxu0 0.0
  %8196 = vmatpush1.msra.mxu0 0.0
  %8197 = vmatprep.subr.mxu0 0.0
  %8198 = vmatpush1.msra.mxu0 0.0
  %8199 = vmatprep.subr.mxu0 0.0
  %8200 = vmatpush1.msra.mxu0 0.0
  %8201 = vmatprep.subr.mxu0 0.0
  %8202 = vmatpush1.msra.mxu0 0.0
  %8203 = vmatprep.subr.mxu0 0.0
  %8204 = vmatpush1.msra.mxu0 0.0
  %8205 = vmatprep.subr.mxu0 0.0
  %8206 = vmatpush1.msra.mxu0 0.0
  %8207 = vmatprep.subr.mxu0 0.0
  %8208 = vmatpush1.msra.mxu0 0.0
  %8209 = vmatprep.subr.mxu0 0.0
  %8210 = vmatpush1.msra.mxu0 %v6319
  %8211 = vmatprep.subr.mxu0 0.0
  %8212 = vmatpush1.msra.mxu0 %v6316
  %8213 = vmatprep.subr.mxu0 0.0
  %8214 = vmatpush2.msra.mxu0 0.0
  %8215 = vmatprep.subr.mxu0 0.0
  %8216 = vmatpush2.msra.mxu0 0.0
  %8217 = vmatprep.subr.mxu0 0.0
  %8218 = vmatpush2.msra.mxu0 0.0
  %8219 = vmatprep.subr.mxu0 0.0
  %8220 = vmatpush2.msra.mxu0 0.0
  %8221 = vmatprep.subr.mxu0 0.0
  %8222 = vmatpush2.msra.mxu0 0.0
  %8223 = vmatprep.subr.mxu0 0.0
  %8224 = vmatpush2.msra.mxu0 0.0
  %8225 = vmatprep.subr.mxu0 0.0
  %8226 = vmatpush2.msra.mxu0 0.0
  %8227 = vmatprep.subr.mxu0 0.0
  %8228 = vmatpush2.msra.mxu0 0.0
  %8229 = vmatprep.subr.mxu0 0.0
  %8230 = vmatpush2.msra.mxu0 0.0
  %8231 = vmatprep.subr.mxu0 0.0
  %8232 = vmatpush2.msra.mxu0 0.0
  %8233 = vmatprep.subr.mxu0 0.0
  %8234 = vmatpush2.msra.mxu0 0.0
  %8235 = vmatprep.subr.mxu0 0.0
  %8236 = vmatpush2.msra.mxu0 0.0
  %8237 = vmatprep.subr.mxu0 0.0
  %8238 = vmatpush2.msra.mxu0 0.0
  %8239 = vmatprep.subr.mxu0 0.0
  %8240 = vmatpush2.msra.mxu0 0.0
  %8241 = vmatprep.subr.mxu0 0.0
  %8242 = vmatpush2.msra.mxu0 0.0
  %8243 = vmatprep.subr.mxu0 0.0
  %8244 = vmatpush2.msra.mxu0 0.0
  %8245 = vmatprep.mubr.f32.mxu0 0.0
  %8246 = vmatmul.mubr.f32.gmra.mxu0 %v7798
  %v8247 = vpop.f32.mrf.mxu0
  %v8248 = vadd.f32 0.0, %v8247
  %v8249 = vpop.f32.mrf.mxu0
  %8250 = vmatprep.mubr.f32.mxu0 0.0
  %8251 = vmatmul.mubr.f32.gmra.mxu0 %v7801
  %v8252 = vpop.f32.mrf.mxu0
  %v8253 = vadd.f32 0.0, %v8252
  %v8254 = vpop.f32.mrf.mxu0
  %8255 = vmatprep.mubr.f32.mxu0 0.0
  %8256 = vmatmul.mubr.f32.gmra.mxu0 %v7804
  %v8257 = vpop.f32.mrf.mxu0
  %v8258 = vadd.f32 0.0, %v8257
  %v8259 = vpop.f32.mrf.mxu0
  %8260 = vmatprep.mubr.f32.mxu0 0.0
  %8261 = vmatmul.mubr.f32.gmra.mxu0 %v7807
  %v8262 = vpop.f32.mrf.mxu0
  %v8263 = vadd.f32 0.0, %v8262
  %v8264 = vpop.f32.mrf.mxu0
  %8265 = vmatprep.mubr.f32.mxu0 0.0
  %8266 = vmatmul.mubr.f32.gmra.mxu0 %v7810
  %v8267 = vpop.f32.mrf.mxu0
  %v8268 = vadd.f32 0.0, %v8267
  %v8269 = vpop.f32.mrf.mxu0
  %8270 = vmatprep.mubr.f32.mxu0 0.0
  %8271 = vmatmul.mubr.f32.gmra.mxu0 %v7813
  %v8272 = vpop.f32.mrf.mxu0
  %v8273 = vadd.f32 0.0, %v8272
  %v8274 = vpop.f32.mrf.mxu0
  %8275 = vmatprep.mubr.f32.mxu0 0.0
  %8276 = vmatmul.mubr.f32.gmra.mxu0 %v7816
  %v8277 = vpop.f32.mrf.mxu0
  %v8278 = vadd.f32 0.0, %v8277
  %v8279 = vpop.f32.mrf.mxu0
  %8280 = vmatprep.mubr.f32.mxu0 0.0
  %8281 = vmatmul.mubr.f32.gmra.mxu0 %v7819
  %v8282 = vpop.f32.mrf.mxu0
  %v8283 = vadd.f32 0.0, %v8282
  %v8284 = vpop.f32.mrf.mxu0
  %8285 = vmatprep.mubr.f32.mxu0 0.0
  %8286 = vmatmul.mubr.f32.gmra.mxu0 %v7822
  %v8287 = vpop.f32.mrf.mxu0
  %v8288 = vadd.f32 0.0, %v8287
  %v8289 = vpop.f32.mrf.mxu0
  %8290 = vmatprep.mubr.f32.mxu0 0.0
  %8291 = vmatmul.mubr.f32.gmra.mxu0 %v7825
  %v8292 = vpop.f32.mrf.mxu0
  %v8293 = vadd.f32 0.0, %v8292
  %v8294 = vpop.f32.mrf.mxu0
  %8295 = vmatprep.mubr.f32.mxu0 0.0
  %8296 = vmatmul.mubr.f32.gmra.mxu0 %v7828
  %v8297 = vpop.f32.mrf.mxu0
  %v8298 = vadd.f32 0.0, %v8297
  %v8299 = vpop.f32.mrf.mxu0
  %8300 = vmatprep.mubr.f32.mxu0 0.0
  %8301 = vmatmul.mubr.f32.gmra.mxu0 %v7831
  %v8302 = vpop.f32.mrf.mxu0
  %v8303 = vadd.f32 0.0, %v8302
  %v8304 = vpop.f32.mrf.mxu0
  %8305 = vmatprep.mubr.f32.mxu0 0.0
  %8306 = vmatmul.mubr.f32.gmra.mxu0 %v7834
  %v8307 = vpop.f32.mrf.mxu0
  %v8308 = vadd.f32 0.0, %v8307
  %v8309 = vpop.f32.mrf.mxu0
  %8310 = vmatprep.mubr.f32.mxu0 0.0
  %8311 = vmatmul.mubr.f32.gmra.mxu0 %v7837
  %v8312 = vpop.f32.mrf.mxu0
  %v8313 = vadd.f32 0.0, %v8312
  %v8314 = vpop.f32.mrf.mxu0
  %8315 = vmatprep.mubr.f32.mxu0 0.0
  %8316 = vmatmul.mubr.f32.gmra.mxu0 %v7840
  %v8317 = vpop.f32.mrf.mxu0
  %v8318 = vadd.f32 0.0, %v8317
  %v8319 = vpop.f32.mrf.mxu0
  %8320 = vmatprep.mubr.f32.mxu0 0.0
  %8321 = vmatmul.mubr.f32.gmra.mxu0 %v7843
  %v8322 = vpop.f32.mrf.mxu0
  %v8323 = vadd.f32 0.0, %v8322
  %v8324 = vpop.f32.mrf.mxu0
  %8325 = vmatprep.mubr.f32.mxu0 0.0
  %8326 = vmatmul.mubr.f32.gmra.mxu0 %v7846
  %v8327 = vpop.f32.mrf.mxu0
  %v8328 = vadd.f32 0.0, %v8327
  %v8329 = vpop.f32.mrf.mxu0
  %8330 = vmatprep.mubr.f32.mxu0 0.0
  %8331 = vmatmul.mubr.f32.gmra.mxu0 %v7849
  %v8332 = vpop.f32.mrf.mxu0
  %v8333 = vadd.f32 0.0, %v8332
  %v8334 = vpop.f32.mrf.mxu0
  %8335 = vmatprep.mubr.f32.mxu0 0.0
  %8336 = vmatmul.mubr.f32.gmra.mxu0 %v7852
  %v8337 = vpop.f32.mrf.mxu0
  %v8338 = vadd.f32 0.0, %v8337
  %v8339 = vpop.f32.mrf.mxu0
  %8340 = vmatprep.mubr.f32.mxu0 0.0
  %8341 = vmatmul.mubr.f32.gmra.mxu0 %v7855
  %v8342 = vpop.f32.mrf.mxu0
  %v8343 = vadd.f32 0.0, %v8342
  %v8344 = vpop.f32.mrf.mxu0
  %8345 = vmatprep.mubr.f32.mxu0 0.0
  %8346 = vmatmul.mubr.f32.gmra.mxu0 %v7858
  %v8347 = vpop.f32.mrf.mxu0
  %v8348 = vadd.f32 0.0, %v8347
  %v8349 = vpop.f32.mrf.mxu0
  %8350 = vmatprep.mubr.f32.mxu0 0.0
  %8351 = vmatmul.mubr.f32.gmra.mxu0 %v7861
  %v8352 = vpop.f32.mrf.mxu0
  %v8353 = vadd.f32 0.0, %v8352
  %v8354 = vpop.f32.mrf.mxu0
  %8355 = vmatprep.mubr.f32.mxu0 0.0
  %8356 = vmatmul.mubr.f32.gmra.mxu0 %v7864
  %v8357 = vpop.f32.mrf.mxu0
  %v8358 = vadd.f32 0.0, %v8357
  %v8359 = vpop.f32.mrf.mxu0
  %8360 = vmatprep.mubr.f32.mxu0 0.0
  %8361 = vmatmul.mubr.f32.gmra.mxu0 %v7867
  %v8362 = vpop.f32.mrf.mxu0
  %v8363 = vadd.f32 0.0, %v8362
  %v8364 = vpop.f32.mrf.mxu0
  %8365 = vmatprep.mubr.f32.mxu0 0.0
  %8366 = vmatmul.mubr.f32.gmra.mxu0 %v7870
  %v8367 = vpop.f32.mrf.mxu0
  %v8368 = vadd.f32 0.0, %v8367
  %v8369 = vpop.f32.mrf.mxu0
  %8370 = vmatprep.mubr.f32.mxu0 0.0
  %8371 = vmatmul.mubr.f32.gmra.mxu0 %v7873
  %v8372 = vpop.f32.mrf.mxu0
  %v8373 = vadd.f32 0.0, %v8372
  %v8374 = vpop.f32.mrf.mxu0
  %8375 = vmatprep.mubr.f32.mxu0 0.0
  %8376 = vmatmul.mubr.f32.gmra.mxu0 %v7876
  %v8377 = vpop.f32.mrf.mxu0
  %v8378 = vadd.f32 0.0, %v8377
  %v8379 = vpop.f32.mrf.mxu0
  %8380 = vmatprep.mubr.f32.mxu0 0.0
  %8381 = vmatmul.mubr.f32.gmra.mxu0 %v7879
  %v8382 = vpop.f32.mrf.mxu0
  %v8383 = vadd.f32 0.0, %v8382
  %v8384 = vpop.f32.mrf.mxu0
  %8385 = vmatprep.mubr.f32.mxu0 0.0
  %8386 = vmatmul.mubr.f32.gmra.mxu0 %v7882
  %v8387 = vpop.f32.mrf.mxu0
  %v8388 = vadd.f32 0.0, %v8387
  %v8389 = vpop.f32.mrf.mxu0
  %8390 = vmatprep.mubr.f32.mxu0 0.0
  %8391 = vmatmul.mubr.f32.gmra.mxu0 %v7885
  %v8392 = vpop.f32.mrf.mxu0
  %v8393 = vadd.f32 0.0, %v8392
  %v8394 = vpop.f32.mrf.mxu0
  %8395 = vmatprep.mubr.f32.mxu0 0.0
  %8396 = vmatmul.mubr.f32.gmra.mxu0 %v7888
  %v8397 = vpop.f32.mrf.mxu0
  %v8398 = vadd.f32 0.0, %v8397
  %v8399 = vpop.f32.mrf.mxu0
  %8400 = vmatprep.mubr.f32.mxu0 0.0
  %8401 = vmatmul.mubr.f32.gmra.mxu0 %v7891
  %v8402 = vpop.f32.mrf.mxu0
  %v8403 = vadd.f32 0.0, %v8402
  %v8404 = vpop.f32.mrf.mxu0
  %8405 = vmatprep.mubr.f32.mxu0 0.0
  %8406 = vmatmul.mubr.f32.gmra.mxu0 %v7894
  %v8407 = vpop.f32.mrf.mxu0
  %v8408 = vadd.f32 0.0, %v8407
  %v8409 = vpop.f32.mrf.mxu0
  %8410 = vmatprep.mubr.f32.mxu0 0.0
  %8411 = vmatmul.mubr.f32.gmra.mxu0 %v7897
  %v8412 = vpop.f32.mrf.mxu0
  %v8413 = vadd.f32 0.0, %v8412
  %v8414 = vpop.f32.mrf.mxu0
  %8415 = vmatprep.mubr.f32.mxu0 0.0
  %8416 = vmatmul.mubr.f32.gmra.mxu0 %v7900
  %v8417 = vpop.f32.mrf.mxu0
  %v8418 = vadd.f32 0.0, %v8417
  %v8419 = vpop.f32.mrf.mxu0
  %8420 = vmatprep.mubr.f32.mxu0 0.0
  %8421 = vmatmul.mubr.f32.gmra.mxu0 %v7903
  %v8422 = vpop.f32.mrf.mxu0
  %v8423 = vadd.f32 0.0, %v8422
  %v8424 = vpop.f32.mrf.mxu0
  %8425 = vmatprep.mubr.f32.mxu0 0.0
  %8426 = vmatmul.mubr.f32.gmra.mxu0 %v7906
  %v8427 = vpop.f32.mrf.mxu0
  %v8428 = vadd.f32 0.0, %v8427
  %v8429 = vpop.f32.mrf.mxu0
  %8430 = vmatprep.mubr.f32.mxu0 0.0
  %8431 = vmatmul.mubr.f32.gmra.mxu0 %v7909
  %v8432 = vpop.f32.mrf.mxu0
  %v8433 = vadd.f32 0.0, %v8432
  %v8434 = vpop.f32.mrf.mxu0
  %8435 = vmatprep.mubr.f32.mxu0 0.0
  %8436 = vmatmul.mubr.f32.gmra.mxu0 %v7912
  %v8437 = vpop.f32.mrf.mxu0
  %v8438 = vadd.f32 0.0, %v8437
  %v8439 = vpop.f32.mrf.mxu0
  %8440 = vmatprep.mubr.f32.mxu0 0.0
  %8441 = vmatmul.mubr.f32.gmra.mxu0 %v7915
  %v8442 = vpop.f32.mrf.mxu0
  %v8443 = vadd.f32 0.0, %v8442
  %v8444 = vpop.f32.mrf.mxu0
  %8445 = vmatprep.mubr.f32.mxu0 0.0
  %8446 = vmatmul.mubr.f32.gmra.mxu0 %v7918
  %v8447 = vpop.f32.mrf.mxu0
  %v8448 = vadd.f32 0.0, %v8447
  %v8449 = vpop.f32.mrf.mxu0
  %8450 = vmatprep.mubr.f32.mxu0 0.0
  %8451 = vmatmul.mubr.f32.gmra.mxu0 %v7921
  %v8452 = vpop.f32.mrf.mxu0
  %v8453 = vadd.f32 0.0, %v8452
  %v8454 = vpop.f32.mrf.mxu0
  %8455 = vmatprep.mubr.f32.mxu0 0.0
  %8456 = vmatmul.mubr.f32.gmra.mxu0 %v7924
  %v8457 = vpop.f32.mrf.mxu0
  %v8458 = vadd.f32 0.0, %v8457
  %v8459 = vpop.f32.mrf.mxu0
  %8460 = vmatprep.mubr.f32.mxu0 0.0
  %8461 = vmatmul.mubr.f32.gmra.mxu0 %v7927
  %v8462 = vpop.f32.mrf.mxu0
  %v8463 = vadd.f32 0.0, %v8462
  %v8464 = vpop.f32.mrf.mxu0
  %8465 = vmatprep.mubr.f32.mxu0 0.0
  %8466 = vmatmul.mubr.f32.gmra.mxu0 %v7930
  %v8467 = vpop.f32.mrf.mxu0
  %v8468 = vadd.f32 0.0, %v8467
  %v8469 = vpop.f32.mrf.mxu0
  %8470 = vmatprep.mubr.f32.mxu0 0.0
  %8471 = vmatmul.mubr.f32.gmra.mxu0 %v7933
  %v8472 = vpop.f32.mrf.mxu0
  %v8473 = vadd.f32 0.0, %v8472
  %v8474 = vpop.f32.mrf.mxu0
  %8475 = vmatprep.mubr.f32.mxu0 0.0
  %8476 = vmatmul.mubr.f32.gmra.mxu0 %v7936
  %v8477 = vpop.f32.mrf.mxu0
  %v8478 = vadd.f32 0.0, %v8477
  %v8479 = vpop.f32.mrf.mxu0
  %8480 = vmatprep.mubr.f32.mxu0 0.0
  %8481 = vmatmul.mubr.f32.gmra.mxu0 %v7939
  %v8482 = vpop.f32.mrf.mxu0
  %v8483 = vadd.f32 0.0, %v8482
  %v8484 = vpop.f32.mrf.mxu0
  %8485 = vmatprep.mubr.f32.mxu0 0.0
  %8486 = vmatmul.mubr.f32.gmra.mxu0 %v7942
  %v8487 = vpop.f32.mrf.mxu0
  %v8488 = vadd.f32 0.0, %v8487
  %v8489 = vpop.f32.mrf.mxu0
  %8490 = vmatprep.mubr.f32.mxu0 0.0
  %8491 = vmatmul.mubr.f32.gmra.mxu0 %v7945
  %v8492 = vpop.f32.mrf.mxu0
  %v8493 = vadd.f32 0.0, %v8492
  %v8494 = vpop.f32.mrf.mxu0
  %8495 = vmatprep.mubr.f32.mxu0 0.0
  %8496 = vmatmul.mubr.f32.gmra.mxu0 %v7948
  %v8497 = vpop.f32.mrf.mxu0
  %v8498 = vadd.f32 0.0, %v8497
  %v8499 = vpop.f32.mrf.mxu0
  %8500 = vmatprep.mubr.f32.mxu0 0.0
  %8501 = vmatmul.mubr.f32.gmra.mxu0 %v7951
  %v8502 = vpop.f32.mrf.mxu0
  %v8503 = vadd.f32 0.0, %v8502
  %v8504 = vpop.f32.mrf.mxu0
  %8505 = vmatprep.mubr.f32.mxu0 0.0
  %8506 = vmatmul.mubr.f32.gmra.mxu0 %v7954
  %v8507 = vpop.f32.mrf.mxu0
  %v8508 = vadd.f32 0.0, %v8507
  %v8509 = vpop.f32.mrf.mxu0
  %8510 = vmatprep.mubr.f32.mxu0 0.0
  %8511 = vmatmul.mubr.f32.gmra.mxu0 %v7957
  %v8512 = vpop.f32.mrf.mxu0
  %v8513 = vadd.f32 0.0, %v8512
  %v8514 = vpop.f32.mrf.mxu0
  %8515 = vmatprep.mubr.f32.mxu0 0.0
  %8516 = vmatmul.mubr.f32.gmra.mxu0 %v7960
  %v8517 = vpop.f32.mrf.mxu0
  %v8518 = vadd.f32 0.0, %v8517
  %v8519 = vpop.f32.mrf.mxu0
  %8520 = vmatprep.mubr.f32.mxu0 0.0
  %8521 = vmatmul.mubr.f32.gmra.mxu0 %v7963
  %v8522 = vpop.f32.mrf.mxu0
  %v8523 = vadd.f32 0.0, %v8522
  %v8524 = vpop.f32.mrf.mxu0
  %8525 = vmatprep.mubr.f32.mxu0 0.0
  %8526 = vmatmul.mubr.f32.gmra.mxu0 %v7966
  %v8527 = vpop.f32.mrf.mxu0
  %v8528 = vadd.f32 0.0, %v8527
  %v8529 = vpop.f32.mrf.mxu0
  %8530 = vmatprep.mubr.f32.mxu0 0.0
  %8531 = vmatmul.mubr.f32.gmra.mxu0 %v7969
  %v8532 = vpop.f32.mrf.mxu0
  %v8533 = vadd.f32 0.0, %v8532
  %v8534 = vpop.f32.mrf.mxu0
  %8535 = vmatprep.mubr.f32.mxu0 0.0
  %8536 = vmatmul.mubr.f32.gmra.mxu0 %v7972
  %v8537 = vpop.f32.mrf.mxu0
  %v8538 = vadd.f32 0.0, %v8537
  %v8539 = vpop.f32.mrf.mxu0
  %8540 = vmatprep.mubr.f32.mxu0 0.0
  %8541 = vmatmul.mubr.f32.gmra.mxu0 %v7975
  %v8542 = vpop.f32.mrf.mxu0
  %v8543 = vadd.f32 0.0, %v8542
  %v8544 = vpop.f32.mrf.mxu0
  %8545 = vmatprep.mubr.f32.mxu0 0.0
  %8546 = vmatmul.mubr.f32.gmra.mxu0 %v7978
  %v8547 = vpop.f32.mrf.mxu0
  %v8548 = vadd.f32 0.0, %v8547
  %v8549 = vpop.f32.mrf.mxu0
  %8550 = vmatprep.mubr.f32.mxu0 0.0
  %8551 = vmatmul.mubr.f32.gmra.mxu0 %v7981
  %v8552 = vpop.f32.mrf.mxu0
  %v8553 = vadd.f32 0.0, %v8552
  %v8554 = vpop.f32.mrf.mxu0
  %8555 = vmatprep.mubr.f32.mxu0 0.0
  %8556 = vmatmul.mubr.f32.gmra.mxu0 %v7984
  %v8557 = vpop.f32.mrf.mxu0
  %v8558 = vadd.f32 0.0, %v8557
  %v8559 = vpop.f32.mrf.mxu0
  %8560 = vmatprep.mubr.f32.mxu0 0.0
  %8561 = vmatmul.mubr.f32.gmra.mxu0 %v7987
  %v8562 = vpop.f32.mrf.mxu0
  %v8563 = vadd.f32 0.0, %v8562
  %v8564 = vpop.f32.mrf.mxu0
  %8565 = vmatprep.mubr.f32.mxu0 0.0
  %8566 = vmatmul.mubr.f32.gmra.mxu0 %v7990
  %v8567 = vpop.f32.mrf.mxu0
  %v8568 = vadd.f32 0.0, %v8567
  %v8569 = vpop.f32.mrf.mxu0
  %8570 = vmatprep.mubr.f32.mxu0 0.0
  %8571 = vmatmul.mubr.f32.gmra.mxu0 %v7993
  %v8572 = vpop.f32.mrf.mxu0
  %v8573 = vadd.f32 0.0, %v8572
  %v8574 = vpop.f32.mrf.mxu0
  %8575 = vmatprep.mubr.f32.mxu0 0.0
  %8576 = vmatmul.mubr.f32.gmra.mxu0 %v7996
  %v8577 = vpop.f32.mrf.mxu0
  %v8578 = vadd.f32 0.0, %v8577
  %v8579 = vpop.f32.mrf.mxu0
  %8580 = vmatprep.mubr.f32.mxu0 0.0
  %8581 = vmatmul.mubr.f32.gmra.mxu0 %v7999
  %v8582 = vpop.f32.mrf.mxu0
  %v8583 = vadd.f32 0.0, %v8582
  %v8584 = vpop.f32.mrf.mxu0
  %8585 = vmatprep.mubr.f32.mxu0 0.0
  %8586 = vmatmul.mubr.f32.gmra.mxu0 %v8002
  %v8587 = vpop.f32.mrf.mxu0
  %v8588 = vadd.f32 0.0, %v8587
  %v8589 = vpop.f32.mrf.mxu0
  %8590 = vmatprep.mubr.f32.mxu0 0.0
  %8591 = vmatmul.mubr.f32.gmra.mxu0 %v8005
  %v8592 = vpop.f32.mrf.mxu0
  %v8593 = vadd.f32 0.0, %v8592
  %v8594 = vpop.f32.mrf.mxu0
  %8595 = vmatprep.mubr.f32.mxu0 0.0
  %8596 = vmatmul.mubr.f32.gmra.mxu0 %v8008
  %v8597 = vpop.f32.mrf.mxu0
  %v8598 = vadd.f32 0.0, %v8597
  %v8599 = vpop.f32.mrf.mxu0
  %8600 = vmatprep.mubr.f32.mxu0 0.0
  %8601 = vmatmul.mubr.f32.gmra.mxu0 %v8011
  %v8602 = vpop.f32.mrf.mxu0
  %v8603 = vadd.f32 0.0, %v8602
  %v8604 = vpop.f32.mrf.mxu0
  %8605 = vmatprep.mubr.f32.mxu0 0.0
  %8606 = vmatmul.mubr.f32.gmra.mxu0 %v8014
  %v8607 = vpop.f32.mrf.mxu0
  %v8608 = vadd.f32 0.0, %v8607
  %v8609 = vpop.f32.mrf.mxu0
  %8610 = vmatprep.mubr.f32.mxu0 0.0
  %8611 = vmatmul.mubr.f32.gmra.mxu0 %v8017
  %v8612 = vpop.f32.mrf.mxu0
  %v8613 = vadd.f32 0.0, %v8612
  %v8614 = vpop.f32.mrf.mxu0
  %8615 = vmatprep.mubr.f32.mxu0 0.0
  %8616 = vmatmul.mubr.f32.gmra.mxu0 %v8020
  %v8617 = vpop.f32.mrf.mxu0
  %v8618 = vadd.f32 0.0, %v8617
  %v8619 = vpop.f32.mrf.mxu0
  %8620 = vmatprep.mubr.f32.mxu0 0.0
  %8621 = vmatmul.mubr.f32.gmra.mxu0 %v8023
  %v8622 = vpop.f32.mrf.mxu0
  %v8623 = vadd.f32 0.0, %v8622
  %v8624 = vpop.f32.mrf.mxu0
  %8625 = vmatprep.mubr.f32.mxu0 0.0
  %8626 = vmatmul.mubr.f32.gmra.mxu0 %v8026
  %v8627 = vpop.f32.mrf.mxu0
  %v8628 = vadd.f32 0.0, %v8627
  %v8629 = vpop.f32.mrf.mxu0
  %8630 = vmatprep.mubr.f32.mxu0 0.0
  %8631 = vmatmul.mubr.f32.gmra.mxu0 %v8029
  %v8632 = vpop.f32.mrf.mxu0
  %v8633 = vadd.f32 0.0, %v8632
  %v8634 = vpop.f32.mrf.mxu0
  %8635 = vmatprep.mubr.f32.mxu0 0.0
  %8636 = vmatmul.mubr.f32.gmra.mxu0 %v8032
  %v8637 = vpop.f32.mrf.mxu0
  %v8638 = vadd.f32 0.0, %v8637
  %v8639 = vpop.f32.mrf.mxu0
  %8640 = vmatprep.mubr.f32.mxu0 0.0
  %8641 = vmatmul.mubr.f32.gmra.mxu0 %v8035
  %v8642 = vpop.f32.mrf.mxu0
  %v8643 = vadd.f32 0.0, %v8642
  %v8644 = vpop.f32.mrf.mxu0
  %8645 = vmatprep.mubr.f32.mxu0 0.0
  %8646 = vmatmul.mubr.f32.gmra.mxu0 %v8038
  %v8647 = vpop.f32.mrf.mxu0
  %v8648 = vadd.f32 0.0, %v8647
  %v8649 = vpop.f32.mrf.mxu0
  %8650 = vmatprep.mubr.f32.mxu0 0.0
  %8651 = vmatmul.mubr.f32.gmra.mxu0 %v8041
  %v8652 = vpop.f32.mrf.mxu0
  %v8653 = vadd.f32 0.0, %v8652
  %v8654 = vpop.f32.mrf.mxu0
  %8655 = vmatprep.mubr.f32.mxu0 0.0
  %8656 = vmatmul.mubr.f32.gmra.mxu0 %v8044
  %v8657 = vpop.f32.mrf.mxu0
  %v8658 = vadd.f32 0.0, %v8657
  %v8659 = vpop.f32.mrf.mxu0
  %8660 = vmatprep.mubr.f32.mxu0 0.0
  %8661 = vmatmul.mubr.f32.gmra.mxu0 %v8047
  %v8662 = vpop.f32.mrf.mxu0
  %v8663 = vadd.f32 0.0, %v8662
  %v8664 = vpop.f32.mrf.mxu0
  %8665 = vmatprep.mubr.f32.mxu0 0.0
  %8666 = vmatmul.mubr.f32.gmra.mxu0 %v8050
  %v8667 = vpop.f32.mrf.mxu0
  %v8668 = vadd.f32 0.0, %v8667
  %v8669 = vpop.f32.mrf.mxu0
  %8670 = vmatprep.mubr.f32.mxu0 0.0
  %8671 = vmatmul.mubr.f32.gmra.mxu0 %v8053
  %v8672 = vpop.f32.mrf.mxu0
  %v8673 = vadd.f32 0.0, %v8672
  %v8674 = vpop.f32.mrf.mxu0
  %8675 = vmatprep.mubr.f32.mxu0 0.0
  %8676 = vmatmul.mubr.f32.gmra.mxu0 %v8056
  %v8677 = vpop.f32.mrf.mxu0
  %v8678 = vadd.f32 0.0, %v8677
  %v8679 = vpop.f32.mrf.mxu0
  %8680 = vmatprep.mubr.f32.mxu0 0.0
  %8681 = vmatmul.mubr.f32.gmra.mxu0 %v8059
  %v8682 = vpop.f32.mrf.mxu0
  %v8683 = vadd.f32 0.0, %v8682
  %v8684 = vpop.f32.mrf.mxu0
  %8685 = vmatprep.mubr.f32.mxu0 0.0
  %8686 = vmatmul.mubr.f32.gmra.mxu0 %v8062
  %v8687 = vpop.f32.mrf.mxu0
  %v8688 = vadd.f32 0.0, %v8687
  %v8689 = vpop.f32.mrf.mxu0
  %8690 = vmatprep.mubr.f32.mxu0 0.0
  %8691 = vmatmul.mubr.f32.gmra.mxu0 %v8065
  %v8692 = vpop.f32.mrf.mxu0
  %v8693 = vadd.f32 0.0, %v8692
  %v8694 = vpop.f32.mrf.mxu0
  %8695 = vmatprep.mubr.f32.mxu0 0.0
  %8696 = vmatmul.mubr.f32.gmra.mxu0 %v8068
  %v8697 = vpop.f32.mrf.mxu0
  %v8698 = vadd.f32 0.0, %v8697
  %v8699 = vpop.f32.mrf.mxu0
  %8700 = vmatprep.mubr.f32.mxu0 0.0
  %8701 = vmatmul.mubr.f32.gmra.mxu0 %v8071
  %v8702 = vpop.f32.mrf.mxu0
  %v8703 = vadd.f32 0.0, %v8702
  %v8704 = vpop.f32.mrf.mxu0
  %8705 = vmatprep.mubr.f32.mxu0 0.0
  %8706 = vmatmul.mubr.f32.gmra.mxu0 %v8074
  %v8707 = vpop.f32.mrf.mxu0
  %v8708 = vadd.f32 0.0, %v8707
  %v8709 = vpop.f32.mrf.mxu0
  %8710 = vmatprep.mubr.f32.mxu0 0.0
  %8711 = vmatmul.mubr.f32.gmra.mxu0 %v8077
  %v8712 = vpop.f32.mrf.mxu0
  %v8713 = vadd.f32 0.0, %v8712
  %v8714 = vpop.f32.mrf.mxu0
  %8715 = vmatprep.mubr.f32.mxu0 0.0
  %8716 = vmatmul.mubr.f32.gmra.mxu0 %v8080
  %v8717 = vpop.f32.mrf.mxu0
  %v8718 = vadd.f32 0.0, %v8717
  %v8719 = vpop.f32.mrf.mxu0
  %8720 = vmatprep.mubr.f32.mxu0 0.0
  %8721 = vmatmul.mubr.f32.gmra.mxu0 %v8083
  %v8722 = vpop.f32.mrf.mxu0
  %v8723 = vadd.f32 0.0, %v8722
  %v8724 = vpop.f32.mrf.mxu0
  %8725 = vmatprep.mubr.f32.mxu0 0.0
  %8726 = vmatmul.mubr.f32.gmra.mxu0 %v8086
  %v8727 = vpop.f32.mrf.mxu0
  %v8728 = vadd.f32 0.0, %v8727
  %v8729 = vpop.f32.mrf.mxu0
  %8730 = vmatprep.mubr.f32.mxu0 0.0
  %8731 = vmatmul.mubr.f32.gmra.mxu0 %v8089
  %v8732 = vpop.f32.mrf.mxu0
  %v8733 = vadd.f32 0.0, %v8732
  %v8734 = vpop.f32.mrf.mxu0
  %8735 = vmatprep.mubr.f32.mxu0 0.0
  %8736 = vmatmul.mubr.f32.gmra.mxu0 %v8092
  %v8737 = vpop.f32.mrf.mxu0
  %v8738 = vadd.f32 0.0, %v8737
  %v8739 = vpop.f32.mrf.mxu0
  %8740 = vmatprep.mubr.f32.mxu0 0.0
  %8741 = vmatmul.mubr.f32.gmra.mxu0 %v8095
  %v8742 = vpop.f32.mrf.mxu0
  %v8743 = vadd.f32 0.0, %v8742
  %v8744 = vpop.f32.mrf.mxu0
  %8745 = vmatprep.mubr.f32.mxu0 0.0
  %8746 = vmatmul.mubr.f32.gmra.mxu0 %v8098
  %v8747 = vpop.f32.mrf.mxu0
  %v8748 = vadd.f32 0.0, %v8747
  %v8749 = vpop.f32.mrf.mxu0
  %8750 = vmatprep.mubr.f32.mxu0 0.0
  %8751 = vmatmul.mubr.f32.gmra.mxu0 %v8101
  %v8752 = vpop.f32.mrf.mxu0
  %v8753 = vadd.f32 0.0, %v8752
  %v8754 = vpop.f32.mrf.mxu0
  %8755 = vmatprep.mubr.f32.mxu0 0.0
  %8756 = vmatmul.mubr.f32.gmra.mxu0 %v8104
  %v8757 = vpop.f32.mrf.mxu0
  %v8758 = vadd.f32 0.0, %v8757
  %v8759 = vpop.f32.mrf.mxu0
  %8760 = vmatprep.mubr.f32.mxu0 0.0
  %8761 = vmatmul.mubr.f32.gmra.mxu0 %v8107
  %v8762 = vpop.f32.mrf.mxu0
  %v8763 = vadd.f32 0.0, %v8762
  %v8764 = vpop.f32.mrf.mxu0
  %8765 = vmatprep.mubr.f32.mxu0 0.0
  %8766 = vmatmul.mubr.f32.gmra.mxu0 %v8110
  %v8767 = vpop.f32.mrf.mxu0
  %v8768 = vadd.f32 0.0, %v8767
  %v8769 = vpop.f32.mrf.mxu0
  %8770 = vmatprep.mubr.f32.mxu0 0.0
  %8771 = vmatmul.mubr.f32.gmra.mxu0 %v8113
  %v8772 = vpop.f32.mrf.mxu0
  %v8773 = vadd.f32 0.0, %v8772
  %v8774 = vpop.f32.mrf.mxu0
  %8775 = vmatprep.mubr.f32.mxu0 0.0
  %8776 = vmatmul.mubr.f32.gmra.mxu0 %v8116
  %v8777 = vpop.f32.mrf.mxu0
  %v8778 = vadd.f32 0.0, %v8777
  %v8779 = vpop.f32.mrf.mxu0
  %8780 = vmatprep.mubr.f32.mxu0 0.0
  %8781 = vmatmul.mubr.f32.gmra.mxu0 %v8119
  %v8782 = vpop.f32.mrf.mxu0
  %v8783 = vadd.f32 0.0, %v8782
  %v8784 = vpop.f32.mrf.mxu0
  %8785 = vmatprep.mubr.f32.mxu0 0.0
  %8786 = vmatmul.mubr.f32.gmra.mxu0 %v8122
  %v8787 = vpop.f32.mrf.mxu0
  %v8788 = vadd.f32 0.0, %v8787
  %v8789 = vpop.f32.mrf.mxu0
  %8790 = vmatprep.mubr.f32.mxu0 0.0
  %8791 = vmatmul.mubr.f32.gmra.mxu0 %v8125
  %v8792 = vpop.f32.mrf.mxu0
  %v8793 = vadd.f32 0.0, %v8792
  %v8794 = vpop.f32.mrf.mxu0
  %8795 = vmatprep.mubr.f32.mxu0 0.0
  %8796 = vmatmul.mubr.f32.gmra.mxu0 %v8128
  %v8797 = vpop.f32.mrf.mxu0
  %v8798 = vadd.f32 0.0, %v8797
  %v8799 = vpop.f32.mrf.mxu0
  %8800 = vmatprep.mubr.f32.mxu0 0.0
  %8801 = vmatmul.mubr.f32.gmra.mxu0 %v8131
  %v8802 = vpop.f32.mrf.mxu0
  %v8803 = vadd.f32 0.0, %v8802
  %v8804 = vpop.f32.mrf.mxu0
  %8805 = vmatprep.mubr.f32.mxu0 0.0
  %8806 = vmatmul.mubr.f32.gmra.mxu0 %v8134
  %v8807 = vpop.f32.mrf.mxu0
  %v8808 = vadd.f32 0.0, %v8807
  %v8809 = vpop.f32.mrf.mxu0
  %8810 = vmatprep.mubr.f32.mxu0 0.0
  %8811 = vmatmul.mubr.f32.gmra.mxu0 %v8137
  %v8812 = vpop.f32.mrf.mxu0
  %v8813 = vadd.f32 0.0, %v8812
  %v8814 = vpop.f32.mrf.mxu0
  %8815 = vmatprep.mubr.f32.mxu0 0.0
  %8816 = vmatmul.mubr.f32.gmra.mxu0 %v8140
  %v8817 = vpop.f32.mrf.mxu0
  %v8818 = vadd.f32 0.0, %v8817
  %v8819 = vpop.f32.mrf.mxu0
  %8820 = vmatprep.mubr.f32.mxu0 0.0
  %8821 = vmatmul.mubr.f32.gmra.mxu0 %v8143
  %v8822 = vpop.f32.mrf.mxu0
  %v8823 = vadd.f32 0.0, %v8822
  %v8824 = vpop.f32.mrf.mxu0
  %8825 = vmatprep.mubr.f32.mxu0 0.0
  %8826 = vmatmul.mubr.f32.gmra.mxu0 %v8146
  %v8827 = vpop.f32.mrf.mxu0
  %v8828 = vadd.f32 0.0, %v8827
  %v8829 = vpop.f32.mrf.mxu0
  %8830 = vmatprep.mubr.f32.mxu0 0.0
  %8831 = vmatmul.mubr.f32.gmra.mxu0 %v8149
  %v8832 = vpop.f32.mrf.mxu0
  %v8833 = vadd.f32 0.0, %v8832
  %v8834 = vpop.f32.mrf.mxu0
  %8835 = vmatprep.mubr.f32.mxu0 0.0
  %8836 = vmatmul.mubr.f32.gmra.mxu0 %v8152
  %v8837 = vpop.f32.mrf.mxu0
  %v8838 = vadd.f32 0.0, %v8837
  %v8839 = vpop.f32.mrf.mxu0
  %8840 = vmatprep.mubr.f32.mxu0 0.0
  %8841 = vmatmul.mubr.f32.gmra.mxu0 %v8155
  %v8842 = vpop.f32.mrf.mxu0
  %v8843 = vadd.f32 0.0, %v8842
  %v8844 = vpop.f32.mrf.mxu0
  %8845 = vmatprep.mubr.f32.mxu0 0.0
  %8846 = vmatmul.mubr.f32.gmra.mxu0 %v8158
  %v8847 = vpop.f32.mrf.mxu0
  %v8848 = vadd.f32 0.0, %v8847
  %v8849 = vpop.f32.mrf.mxu0
  %8850 = vmatprep.mubr.f32.mxu0 0.0
  %8851 = vmatmul.mubr.f32.gmra.mxu0 %v8161
  %v8852 = vpop.f32.mrf.mxu0
  %v8853 = vadd.f32 0.0, %v8852
  %v8854 = vpop.f32.mrf.mxu0
  %8855 = vmatprep.mubr.f32.mxu0 0.0
  %8856 = vmatmul.mubr.f32.gmra.mxu0 %v8164
  %v8857 = vpop.f32.mrf.mxu0
  %v8858 = vadd.f32 0.0, %v8857
  %v8859 = vpop.f32.mrf.mxu0
  %8860 = vmatprep.mubr.f32.mxu0 0.0
  %8861 = vmatmul.mubr.f32.gmra.mxu0 %v8167
  %v8862 = vpop.f32.mrf.mxu0
  %v8863 = vadd.f32 0.0, %v8862
  %v8864 = vpop.f32.mrf.mxu0
  %8865 = vmatprep.mubr.f32.mxu0 0.0
  %8866 = vmatmul.mubr.f32.gmra.mxu0 %v8170
  %v8867 = vpop.f32.mrf.mxu0
  %v8868 = vadd.f32 0.0, %v8867
  %v8869 = vpop.f32.mrf.mxu0
  %8870 = vmatprep.mubr.f32.mxu0 0.0
  %8871 = vmatmul.mubr.f32.gmra.mxu0 %v8173
  %v8872 = vpop.f32.mrf.mxu0
  %v8873 = vadd.f32 0.0, %v8872
  %v8874 = vpop.f32.mrf.mxu0
  %8875 = vmatprep.mubr.f32.mxu0 0.0
  %8876 = vmatmul.mubr.f32.gmra.mxu0 %v8176
  %v8877 = vpop.f32.mrf.mxu0
  %v8878 = vadd.f32 0.0, %v8877
  %v8879 = vpop.f32.mrf.mxu0
  %8880 = vmatprep.mubr.f32.mxu0 0.0
  %8881 = vmatmul.mubr.f32.gmra.mxu0 %v8179
  %v8882 = vpop.f32.mrf.mxu0
  %v8883 = vadd.f32 0.0, %v8882
  %v8884 = vpop.f32.mrf.mxu0
  %8885 = vdwg.mxu0
  %s8886 = scalar_lea.vmem %s12, 1024
  %8887 = vst.msk [vmem:[%s8886] sm:$0xff] %vm7540, %v8248
  %8888 = vst.msk [vmem:[%s8886 + $0x8] sm:$0xff] %vm7540, %v8253
  %8889 = vst.msk [vmem:[%s8886 + $0x10] sm:$0xff] %vm7540, %v8258
  %8890 = vst.msk [vmem:[%s8886 + $0x18] sm:$0xff] %vm7540, %v8263
  %8891 = vst.msk [vmem:[%s8886 + $0x20] sm:$0xff] %vm7540, %v8268
  %8892 = vst.msk [vmem:[%s8886 + $0x28] sm:$0xff] %vm7540, %v8273
  %8893 = vst.msk [vmem:[%s8886 + $0x30] sm:$0xff] %vm7540, %v8278
  %8894 = vst.msk [vmem:[%s8886 + $0x38] sm:$0xff] %vm7540, %v8283
  %8895 = vst.msk [vmem:[%s8886 + $0x40] sm:$0xff] %vm7540, %v8288
  %8896 = vst.msk [vmem:[%s8886 + $0x48] sm:$0xff] %vm7540, %v8293
  %8897 = vst.msk [vmem:[%s8886 + $0x50] sm:$0xff] %vm7540, %v8298
  %8898 = vst.msk [vmem:[%s8886 + $0x58] sm:$0xff] %vm7540, %v8303
  %8899 = vst.msk [vmem:[%s8886 + $0x60] sm:$0xff] %vm7540, %v8308
  %8900 = vst.msk [vmem:[%s8886 + $0x68] sm:$0xff] %vm7540, %v8313
  %8901 = vst.msk [vmem:[%s8886 + $0x70] sm:$0xff] %vm7540, %v8318
  %8902 = vst.msk [vmem:[%s8886 + $0x78] sm:$0xff] %vm7540, %v8323
  %8903 = vst.msk [vmem:[%s8886 + $0x80] sm:$0xff] %vm7540, %v8328
  %8904 = vst.msk [vmem:[%s8886 + $0x88] sm:$0xff] %vm7540, %v8333
  %8905 = vst.msk [vmem:[%s8886 + $0x90] sm:$0xff] %vm7540, %v8338
  %8906 = vst.msk [vmem:[%s8886 + $0x98] sm:$0xff] %vm7540, %v8343
  %8907 = vst.msk [vmem:[%s8886 + $0xa0] sm:$0xff] %vm7540, %v8348
  %8908 = vst.msk [vmem:[%s8886 + $0xa8] sm:$0xff] %vm7540, %v8353
  %8909 = vst.msk [vmem:[%s8886 + $0xb0] sm:$0xff] %vm7540, %v8358
  %8910 = vst.msk [vmem:[%s8886 + $0xb8] sm:$0xff] %vm7540, %v8363
  %8911 = vst.msk [vmem:[%s8886 + $0xc0] sm:$0xff] %vm7540, %v8368
  %8912 = vst.msk [vmem:[%s8886 + $0xc8] sm:$0xff] %vm7540, %v8373
  %8913 = vst.msk [vmem:[%s8886 + $0xd0] sm:$0xff] %vm7540, %v8378
  %8914 = vst.msk [vmem:[%s8886 + $0xd8] sm:$0xff] %vm7540, %v8383
  %8915 = vst.msk [vmem:[%s8886 + $0xe0] sm:$0xff] %vm7540, %v8388
  %8916 = vst.msk [vmem:[%s8886 + $0xe8] sm:$0xff] %vm7540, %v8393
  %8917 = vst.msk [vmem:[%s8886 + $0xf0] sm:$0xff] %vm7540, %v8398
  %8918 = vst.msk [vmem:[%s8886 + $0xf8] sm:$0xff] %vm7540, %v8403
  %8919 = vst.msk [vmem:[%s8886 + $0x100] sm:$0xff] %vm7540, %v8408
  %8920 = vst.msk [vmem:[%s8886 + $0x108] sm:$0xff] %vm7540, %v8413
  %8921 = vst.msk [vmem:[%s8886 + $0x110] sm:$0xff] %vm7540, %v8418
  %8922 = vst.msk [vmem:[%s8886 + $0x118] sm:$0xff] %vm7540, %v8423
  %8923 = vst.msk [vmem:[%s8886 + $0x120] sm:$0xff] %vm7540, %v8428
  %8924 = vst.msk [vmem:[%s8886 + $0x128] sm:$0xff] %vm7540, %v8433
  %8925 = vst.msk [vmem:[%s8886 + $0x130] sm:$0xff] %vm7540, %v8438
  %8926 = vst.msk [vmem:[%s8886 + $0x138] sm:$0xff] %vm7540, %v8443
  %8927 = vst.msk [vmem:[%s8886 + $0x140] sm:$0xff] %vm7540, %v8448
  %8928 = vst.msk [vmem:[%s8886 + $0x148] sm:$0xff] %vm7540, %v8453
  %8929 = vst.msk [vmem:[%s8886 + $0x150] sm:$0xff] %vm7540, %v8458
  %8930 = vst.msk [vmem:[%s8886 + $0x158] sm:$0xff] %vm7540, %v8463
  %8931 = vst.msk [vmem:[%s8886 + $0x160] sm:$0xff] %vm7540, %v8468
  %8932 = vst.msk [vmem:[%s8886 + $0x168] sm:$0xff] %vm7540, %v8473
  %8933 = vst.msk [vmem:[%s8886 + $0x170] sm:$0xff] %vm7540, %v8478
  %8934 = vst.msk [vmem:[%s8886 + $0x178] sm:$0xff] %vm7540, %v8483
  %8935 = vst.msk [vmem:[%s8886 + $0x180] sm:$0xff] %vm7540, %v8488
  %8936 = vst.msk [vmem:[%s8886 + $0x188] sm:$0xff] %vm7540, %v8493
  %8937 = vst.msk [vmem:[%s8886 + $0x190] sm:$0xff] %vm7540, %v8498
  %8938 = vst.msk [vmem:[%s8886 + $0x198] sm:$0xff] %vm7540, %v8503
  %8939 = vst.msk [vmem:[%s8886 + $0x1a0] sm:$0xff] %vm7540, %v8508
  %8940 = vst.msk [vmem:[%s8886 + $0x1a8] sm:$0xff] %vm7540, %v8513
  %8941 = vst.msk [vmem:[%s8886 + $0x1b0] sm:$0xff] %vm7540, %v8518
  %8942 = vst.msk [vmem:[%s8886 + $0x1b8] sm:$0xff] %vm7540, %v8523
  %8943 = vst.msk [vmem:[%s8886 + $0x1c0] sm:$0xff] %vm7540, %v8528
  %8944 = vst.msk [vmem:[%s8886 + $0x1c8] sm:$0xff] %vm7540, %v8533
  %8945 = vst.msk [vmem:[%s8886 + $0x1d0] sm:$0xff] %vm7540, %v8538
  %8946 = vst.msk [vmem:[%s8886 + $0x1d8] sm:$0xff] %vm7540, %v8543
  %8947 = vst.msk [vmem:[%s8886 + $0x1e0] sm:$0xff] %vm7540, %v8548
  %8948 = vst.msk [vmem:[%s8886 + $0x1e8] sm:$0xff] %vm7540, %v8553
  %8949 = vst.msk [vmem:[%s8886 + $0x1f0] sm:$0xff] %vm7540, %v8558
  %8950 = vst.msk [vmem:[%s8886 + $0x1f8] sm:$0xff] %vm7540, %v8563
  %8951 = vst.msk [vmem:[%s8886 + $0x200] sm:$0xff] %vm7540, %v8568
  %8952 = vst.msk [vmem:[%s8886 + $0x208] sm:$0xff] %vm7540, %v8573
  %8953 = vst.msk [vmem:[%s8886 + $0x210] sm:$0xff] %vm7540, %v8578
  %8954 = vst.msk [vmem:[%s8886 + $0x218] sm:$0xff] %vm7540, %v8583
  %8955 = vst.msk [vmem:[%s8886 + $0x220] sm:$0xff] %vm7540, %v8588
  %8956 = vst.msk [vmem:[%s8886 + $0x228] sm:$0xff] %vm7540, %v8593
  %8957 = vst.msk [vmem:[%s8886 + $0x230] sm:$0xff] %vm7540, %v8598
  %8958 = vst.msk [vmem:[%s8886 + $0x238] sm:$0xff] %vm7540, %v8603
  %8959 = vst.msk [vmem:[%s8886 + $0x240] sm:$0xff] %vm7540, %v8608
  %8960 = vst.msk [vmem:[%s8886 + $0x248] sm:$0xff] %vm7540, %v8613
  %8961 = vst.msk [vmem:[%s8886 + $0x250] sm:$0xff] %vm7540, %v8618
  %8962 = vst.msk [vmem:[%s8886 + $0x258] sm:$0xff] %vm7540, %v8623
  %8963 = vst.msk [vmem:[%s8886 + $0x260] sm:$0xff] %vm7540, %v8628
  %8964 = vst.msk [vmem:[%s8886 + $0x268] sm:$0xff] %vm7540, %v8633
  %8965 = vst.msk [vmem:[%s8886 + $0x270] sm:$0xff] %vm7540, %v8638
  %8966 = vst.msk [vmem:[%s8886 + $0x278] sm:$0xff] %vm7540, %v8643
  %8967 = vst.msk [vmem:[%s8886 + $0x280] sm:$0xff] %vm7540, %v8648
  %8968 = vst.msk [vmem:[%s8886 + $0x288] sm:$0xff] %vm7540, %v8653
  %8969 = vst.msk [vmem:[%s8886 + $0x290] sm:$0xff] %vm7540, %v8658
  %8970 = vst.msk [vmem:[%s8886 + $0x298] sm:$0xff] %vm7540, %v8663
  %8971 = vst.msk [vmem:[%s8886 + $0x2a0] sm:$0xff] %vm7540, %v8668
  %8972 = vst.msk [vmem:[%s8886 + $0x2a8] sm:$0xff] %vm7540, %v8673
  %8973 = vst.msk [vmem:[%s8886 + $0x2b0] sm:$0xff] %vm7540, %v8678
  %8974 = vst.msk [vmem:[%s8886 + $0x2b8] sm:$0xff] %vm7540, %v8683
  %8975 = vst.msk [vmem:[%s8886 + $0x2c0] sm:$0xff] %vm7540, %v8688
  %8976 = vst.msk [vmem:[%s8886 + $0x2c8] sm:$0xff] %vm7540, %v8693
  %8977 = vst.msk [vmem:[%s8886 + $0x2d0] sm:$0xff] %vm7540, %v8698
  %8978 = vst.msk [vmem:[%s8886 + $0x2d8] sm:$0xff] %vm7540, %v8703
  %8979 = vst.msk [vmem:[%s8886 + $0x2e0] sm:$0xff] %vm7540, %v8708
  %8980 = vst.msk [vmem:[%s8886 + $0x2e8] sm:$0xff] %vm7540, %v8713
  %8981 = vst.msk [vmem:[%s8886 + $0x2f0] sm:$0xff] %vm7540, %v8718
  %8982 = vst.msk [vmem:[%s8886 + $0x2f8] sm:$0xff] %vm7540, %v8723
  %8983 = vst.msk [vmem:[%s8886 + $0x300] sm:$0xff] %vm7540, %v8728
  %8984 = vst.msk [vmem:[%s8886 + $0x308] sm:$0xff] %vm7540, %v8733
  %8985 = vst.msk [vmem:[%s8886 + $0x310] sm:$0xff] %vm7540, %v8738
  %8986 = vst.msk [vmem:[%s8886 + $0x318] sm:$0xff] %vm7540, %v8743
  %8987 = vst.msk [vmem:[%s8886 + $0x320] sm:$0xff] %vm7540, %v8748
  %8988 = vst.msk [vmem:[%s8886 + $0x328] sm:$0xff] %vm7540, %v8753
  %8989 = vst.msk [vmem:[%s8886 + $0x330] sm:$0xff] %vm7540, %v8758
  %8990 = vst.msk [vmem:[%s8886 + $0x338] sm:$0xff] %vm7540, %v8763
  %8991 = vst.msk [vmem:[%s8886 + $0x340] sm:$0xff] %vm7540, %v8768
  %8992 = vst.msk [vmem:[%s8886 + $0x348] sm:$0xff] %vm7540, %v8773
  %8993 = vst.msk [vmem:[%s8886 + $0x350] sm:$0xff] %vm7540, %v8778
  %8994 = vst.msk [vmem:[%s8886 + $0x358] sm:$0xff] %vm7540, %v8783
  %8995 = vst.msk [vmem:[%s8886 + $0x360] sm:$0xff] %vm7540, %v8788
  %8996 = vst.msk [vmem:[%s8886 + $0x368] sm:$0xff] %vm7540, %v8793
  %8997 = vst.msk [vmem:[%s8886 + $0x370] sm:$0xff] %vm7540, %v8798
  %8998 = vst.msk [vmem:[%s8886 + $0x378] sm:$0xff] %vm7540, %v8803
  %8999 = vst.msk [vmem:[%s8886 + $0x380] sm:$0xff] %vm7540, %v8808
  %9000 = vst.msk [vmem:[%s8886 + $0x388] sm:$0xff] %vm7540, %v8813
  %9001 = vst.msk [vmem:[%s8886 + $0x390] sm:$0xff] %vm7540, %v8818
  %9002 = vst.msk [vmem:[%s8886 + $0x398] sm:$0xff] %vm7540, %v8823
  %9003 = vst.msk [vmem:[%s8886 + $0x3a0] sm:$0xff] %vm7540, %v8828
  %9004 = vst.msk [vmem:[%s8886 + $0x3a8] sm:$0xff] %vm7540, %v8833
  %9005 = vst.msk [vmem:[%s8886 + $0x3b0] sm:$0xff] %vm7540, %v8838
  %9006 = vst.msk [vmem:[%s8886 + $0x3b8] sm:$0xff] %vm7540, %v8843
  %9007 = vst.msk [vmem:[%s8886 + $0x3c0] sm:$0xff] %vm7540, %v8848
  %9008 = vst.msk [vmem:[%s8886 + $0x3c8] sm:$0xff] %vm7540, %v8853
  %9009 = vst.msk [vmem:[%s8886 + $0x3d0] sm:$0xff] %vm7540, %v8858
  %9010 = vst.msk [vmem:[%s8886 + $0x3d8] sm:$0xff] %vm7540, %v8863
  %9011 = vst.msk [vmem:[%s8886 + $0x3e0] sm:$0xff] %vm7540, %v8868
  %9012 = vst.msk [vmem:[%s8886 + $0x3e8] sm:$0xff] %vm7540, %v8873
  %9013 = vst.msk [vmem:[%s8886 + $0x3f0] sm:$0xff] %vm7540, %v8878
  %9014 = vst.msk [vmem:[%s8886 + $0x3f8] sm:$0xff] %vm7540, %v8883
  // Predicated region
  $region50: #{_lambda_.9} parent=0 // pred_check
    _
  $region51: #{_lambda_.9} parent=0 // pred_check_branch
    %9016 = sbr.rel (0) target = $region53
  $region52: #{_lambda_.9} parent=0 // pred_region
    _
  $region53: #{_lambda_.9} parent=0 // pred_fallthru
    _
  // Predicated region
  $region54: #{_lambda_.9} parent=0 // pred_check
    _
  $region55: #{_lambda_.9} parent=0 // pred_check_branch
    %9018 = sbr.rel (0) target = $region57
  $region56: #{_lambda_.9} parent=0 // pred_region
    _
  $region57: #{_lambda_.9} parent=0 // pred_fallthru
    _

</llo_original>
